<compile_context>
chip_gen: v7x
topology: tpu7x:2x2x1
jax: 0.10.0
libtpu: 0.0.40
codegen_flags: <defaults>
</compile_context>

<pallas_src>
import jax
import jax.numpy as jnp
from jax import lax
from jax.experimental import pallas as pl
from jax.experimental.pallas import tpu as pltpu


# ----------------------------- Pallas kernels ------------------------------

def _conv3d_stats_kernel(x0_ref, x1_ref, x2_ref, w_ref, b_ref,
                         y_ref, s1_ref, s2_ref):
    # x*_ref : (1, 1, H+2, W+2, Cin) bf16 -- padded depth slices d, d+1, d+2
    # w_ref  : (27*Cin, Cout) bf16, rows ordered (kd, kh, kw, ci)
    # b_ref  : (1, Cout) f32
    # y_ref  : (1, 1, H*W, Cout) bf16   -- conv output for this depth slice
    # s1/s2  : (1, 1, 1, Cout) f32      -- partial GroupNorm sums (fused epilogue)
    Hp, Wp, Cin = x0_ref.shape[2:]
    H, W = Hp - 2, Wp - 2
    HW = H * W
    Cout = w_ref.shape[1]

    acc = jnp.zeros((HW, Cout), jnp.float32)
    tap = 0
    for x_ref in (x0_ref, x1_ref, x2_ref):            # kd = 0, 1, 2
        for kh in range(3):
            for kw in range(3):
                win = x_ref[0, 0, kh:kh + H, kw:kw + W, :].reshape(HW, Cin)
                acc += jnp.dot(win, w_ref[tap * Cin:(tap + 1) * Cin, :],
                               preferred_element_type=jnp.float32)
                tap += 1

    acc += b_ref[...]                                  # (1, Cout) broadcast
    y_bf = acc.astype(jnp.bfloat16)
    y_ref[0, 0] = y_bf

    # GroupNorm partial statistics on the exact stored (bf16) values.
    yq = y_bf.astype(jnp.float32)
    s1_ref[0, 0] = jnp.sum(yq, axis=0, keepdims=True)
    s2_ref[0, 0] = jnp.sum(yq * yq, axis=0, keepdims=True)


def _gn_relu_kernel(y_ref, sc_ref, sh_ref, o_ref):
    # y_ref: (1, r_tile, 128) bf16; sc/sh: (1, 1, 128) f32
    # o_ref: (1, r_tile, 128) {bf16 | f32}
    y = y_ref[0].astype(jnp.float32)                   # f32 math (v5e-friendly)
    o_ref[0] = jnp.maximum(y * sc_ref[0] + sh_ref[0], 0.0).astype(o_ref.dtype)


# ------------------------------ wrappers ------------------------------------

def _conv3d_fused(x_pad, w_mat, bias, *, N, D, H, W, Cin, Cout):
    Hp, Wp = H + 2, W + 2
    HW = H * W

    def x_spec(off):
        return pl.BlockSpec((1, 1, Hp, Wp, Cin),
                            lambda n, d, off=off: (n, d + off, 0, 0, 0))

    return pl.pallas_call(
        _conv3d_stats_kernel,
        out_shape=(jax.ShapeDtypeStruct((N, D, HW, Cout), jnp.bfloat16),
                   jax.ShapeDtypeStruct((N, D, 1, Cout), jnp.float32),
                   jax.ShapeDtypeStruct((N, D, 1, Cout), jnp.float32)),
        grid_spec=pltpu.PrefetchScalarGridSpec(
            num_scalar_prefetch=0,
            grid=(N, D),
            in_specs=[
                x_spec(0), x_spec(1), x_spec(2),
                pl.BlockSpec((27 * Cin, Cout), lambda n, d: (0, 0)),
                pl.BlockSpec((1, Cout), lambda n, d: (0, 0)),
            ],
            out_specs=[
                pl.BlockSpec((1, 1, HW, Cout), lambda n, d: (n, d, 0, 0)),
                pl.BlockSpec((1, 1, 1, Cout), lambda n, d: (n, d, 0, 0)),
                pl.BlockSpec((1, 1, 1, Cout), lambda n, d: (n, d, 0, 0)),
            ]),
        compiler_params=pltpu.CompilerParams(
            dimension_semantics=("parallel", "parallel"),
            vmem_limit_bytes=32 * 1024 * 1024),
    )(x_pad, x_pad, x_pad, w_mat, bias)


def _gn_relu(y_flat, scale_row, shift_row, *, N, R, out_dtype):
    r_tile = R
    for cand in (2048, 1024, 512, 256, 128, 64, 32, 16, 8):
        if R % cand == 0:
            r_tile = cand
            break
    return pl.pallas_call(
        _gn_relu_kernel,
        out_shape=jax.ShapeDtypeStruct((N, R, 128), out_dtype),
        grid_spec=pltpu.PrefetchScalarGridSpec(
            num_scalar_prefetch=0,
            grid=(N, R // r_tile),
            in_specs=[
                pl.BlockSpec((1, r_tile, 128), lambda n, r: (n, r, 0)),
                pl.BlockSpec((1, 1, 128), lambda n, r: (n, 0, 0)),
                pl.BlockSpec((1, 1, 128), lambda n, r: (n, 0, 0)),
            ],
            out_specs=pl.BlockSpec((1, r_tile, 128), lambda n, r: (n, r, 0))),
        compiler_params=pltpu.CompilerParams(
            dimension_semantics=("parallel", "parallel"),
            vmem_limit_bytes=32 * 1024 * 1024),
    )(y_flat, scale_row, shift_row)


def _conv_block(x, w, b, gamma, beta, *, groups=4, eps=1e-5,
                out_dtype=jnp.float32):
    """Conv3d(k=3, p=1, s=1) -> GroupNorm(groups) -> ReLU, channels-last in/out."""
    N, D, H, W, Cin = x.shape
    Cout = w.shape[0]
    HW = H * W
    Cg = Cout // groups
    assert Cout % groups == 0
    assert 128 % Cout == 0 and (D * HW * Cout) % 128 == 0
    # TODO(synk): add a (HW, C)-blocked fallback for channel counts where 128 % C != 0.

    # Cast first, then pad: halves the HBM traffic of the XLA zero-pad.
    x_pad = jnp.pad(x.astype(jnp.bfloat16),
                    ((0, 0), (1, 1), (1, 1), (1, 1), (0, 0)))
    # PyTorch weight (Cout, Cin, kd, kh, kw) -> (kd, kh, kw, Cin, Cout) -> (27*Cin, Cout)
    w_mat = jnp.transpose(w, (2, 3, 4, 1, 0)).reshape(27 * Cin, Cout).astype(jnp.bfloat16)
    bias = b.reshape(1, Cout).astype(jnp.float32)

    y, s1, s2 = _conv3d_fused(x_pad, w_mat, bias, N=N, D=D, H=H, W=W,
                              Cin=Cin, Cout=Cout)

    # Tiny per-sample group-statistics combine ((N, C) numbers) in plain JAX.
    S1 = s1.reshape(N, D, Cout).sum(axis=1)              # (N, C)  sum(y)
    S2 = s2.reshape(N, D, Cout).sum(axis=1)              # (N, C)  sum(y^2)
    g1 = S1.reshape(N, groups, Cg).sum(axis=2)           # (N, G)
    g2 = S2.reshape(N, groups, Cg).sum(axis=2)           # (N, G)
    cnt = float(D * HW * Cg)
    mean = g1 / cnt
    var = jnp.maximum(g2 / cnt - mean * mean, 0.0)       # clamp: keeps rsqrt finite
    inv = lax.rsqrt(var + eps)
    scale_c = gamma[None, :] * jnp.repeat(inv, Cg, axis=1)             # (N, C)
    shift_c = beta[None, :] - jnp.repeat(mean, Cg, axis=1) * scale_c   # (N, C)

    # Lane-dense normalize + ReLU: view y as rows of 128 lanes (128/C spatial
    # positions x C channels); the per-row scale/shift pattern is tile(., 128/C).
    rep = 128 // Cout
    R = (D * HW * Cout) // 128
    y_flat = y.reshape(N, R, 128)                         # contiguous, free reshape
    scale_row = jnp.tile(scale_c, (1, rep)).reshape(N, 1, 128).astype(jnp.float32)
    shift_row = jnp.tile(shift_c, (1, rep)).reshape(N, 1, 128).astype(jnp.float32)
    out_flat = _gn_relu(y_flat, scale_row, shift_row, N=N, R=R, out_dtype=out_dtype)
    return out_flat.reshape(N, D, H, W, Cout)


def unet_conv3_forward(x_ncdhw, params):
    x = jnp.transpose(x_ncdhw, (0, 2, 3, 4, 1))           # NCDHW -> NDHWC
    # Block 1's output only feeds block 2's bf16 conv, so keep it bf16 in HBM.
    x = _conv_block(x, params["w1"], params["b1"], params["g1"], params["be1"],
                    out_dtype=jnp.bfloat16)
    x = _conv_block(x, params["w2"], params["b2"], params["g2"], params["be2"],
                    out_dtype=jnp.float32)
    return jnp.transpose(x, (0, 4, 1, 2, 3))              # NDHWC -> NCDHW


# --------------------------- pure-JAX reference -----------------------------
# Uses the same bf16 quantization points as the kernel path (bf16 MXU operands,
# f32 accumulation, bf16 conv intermediate, bf16 inter-block activation — the
# conv ref casts its input to bf16, which is exactly the block-1 output
# quantization point of the kernel path).

def _conv3d_ref(x, w, b):
    w_dhwio = jnp.transpose(w, (2, 3, 4, 1, 0)).astype(jnp.bfloat16)
    out = lax.conv_general_dilated(
        x.astype(jnp.bfloat16), w_dhwio, window_strides=(1, 1, 1),
        padding=((1, 1), (1, 1), (1, 1)),
        dimension_numbers=("NDHWC", "DHWIO", "NDHWC"),
        preferred_element_type=jnp.float32)
    out = out + b
    return out.astype(jnp.bfloat16).astype(jnp.float32)


def _gn_relu_ref(x, gamma, beta, groups=4, eps=1e-5):
    N, D, H, W, C = x.shape
    xg = x.reshape(N, D, H, W, groups, C // groups)
    mean = xg.mean(axis=(1, 2, 3, 5), keepdims=True)
    var = ((xg - mean) ** 2).mean(axis=(1, 2, 3, 5), keepdims=True)
    xn = ((xg - mean) / jnp.sqrt(var + eps)).reshape(N, D, H, W, C)
    return jnp.maximum(xn * gamma + beta, 0.0)


def unet_conv3_ref(x_ncdhw, params):
    x = jnp.transpose(x_ncdhw, (0, 2, 3, 4, 1))
    x = _gn_relu_ref(_conv3d_ref(x, params["w1"], params["b1"]),
                     params["g1"], params["be1"])
    x = _gn_relu_ref(_conv3d_ref(x, params["w2"], params["b2"]),
                     params["g2"], params["be2"])
    return jnp.transpose(x, (0, 4, 1, 2, 3))


# --------------------------------- main --------------------------------------

if __name__ == "__main__":
    N, Cin, Cout = 2, 4, 8        # out_size must be divisible by GroupNorm groups=4
    D = H = W = 8

    key = jax.random.PRNGKey(0)
    k = jax.random.split(key, 9)
    params = {
        "w1": 0.1 * jax.random.normal(k[0], (Cout, Cin, 3, 3, 3), jnp.float32),
        "b1": 0.1 * jax.random.normal(k[1], (Cout,), jnp.float32),
        "g1": 1.0 + 0.1 * jax.random.normal(k[2], (Cout,), jnp.float32),
        "be1": 0.1 * jax.random.normal(k[3], (Cout,), jnp.float32),
        "w2": 0.1 * jax.random.normal(k[4], (Cout, Cout, 3, 3, 3), jnp.float32),
        "b2": 0.1 * jax.random.normal(k[5], (Cout,), jnp.float32),
        "g2": 1.0 + 0.1 * jax.random.normal(k[6], (Cout,), jnp.float32),
        "be2": 0.1 * jax.random.normal(k[7], (Cout,), jnp.float32),
    }
    x = jax.random.normal(k[8], (N, Cin, D, H, W), jnp.float32)   # NCDHW like PyTorch

    out = jax.block_until_ready(jax.jit(unet_conv3_forward)(x, params))
    ref = jax.block_until_ready(unet_conv3_ref(x, params))

    assert out.shape == (N, Cout, D, H, W), out.shape
    max_err = float(jnp.abs(out - ref).max())
    # bf16 MXU operands + bf16 intermediates -> tolerate ~1 bf16 ulp per element.
    assert jnp.allclose(out, ref, rtol=2e-2, atol=2e-2), max_err
    print("KERNEL_OK")
</pallas_src>

<mosaic_0001>
module attributes {stable_mosaic.version = 11 : i64} {
  func.func @_conv3d_stats_kernel(%arg0: i32, %arg1: i32, %arg2: memref<1x1x10x10x4xbf16, #tpu.memory_space<vmem>>, %arg3: memref<1x1x10x10x4xbf16, #tpu.memory_space<vmem>>, %arg4: memref<1x1x10x10x4xbf16, #tpu.memory_space<vmem>>, %arg5: memref<108x8xbf16, #tpu.memory_space<vmem>>, %arg6: memref<1x8xf32, #tpu.memory_space<vmem>>, %arg7: memref<1x1x64x8xbf16, #tpu.memory_space<vmem>>, %arg8: memref<1x1x1x8xf32, #tpu.memory_space<vmem>>, %arg9: memref<1x1x1x8xf32, #tpu.memory_space<vmem>>) attributes {dimension_semantics = [#tpu.dimension_semantics<parallel>, #tpu.dimension_semantics<parallel>], iteration_bounds = array<i64: 2, 8>, scalar_prefetch = 0 : i64, scratch_operands = 0 : i64, tpu.core_type = #tpu.core_type<tc>, window_params = [{transform_indices = @transform_0, window_bounds = array<i64: 1, 1, 10, 10, 4>}, {transform_indices = @transform_1, window_bounds = array<i64: 1, 1, 10, 10, 4>}, {transform_indices = @transform_2, window_bounds = array<i64: 1, 1, 10, 10, 4>}, {pipeline_mode = #tpu.pipeline_mode<synchronous>, transform_indices = @transform_3, window_bounds = array<i64: 108, 8>}, {pipeline_mode = #tpu.pipeline_mode<synchronous>, transform_indices = @transform_4, window_bounds = array<i64: 1, 8>}, {transform_indices = @transform_5, window_bounds = array<i64: 1, 1, 64, 8>}, {transform_indices = @transform_6, window_bounds = array<i64: 1, 1, 1, 8>}, {transform_indices = @transform_7, window_bounds = array<i64: 1, 1, 1, 8>}]} {
    %cst = arith.constant 0.000000e+00 : f32
    %0 = vector.broadcast %cst : f32 to vector<64x8xf32>
    %c0 = arith.constant 0 : index
    %c0_0 = arith.constant 0 : index
    %c0_1 = arith.constant 0 : index
    %c0_2 = arith.constant 0 : index
    %c0_3 = arith.constant 0 : index
    %1 = vector.load %arg2[%c0, %c0_0, %c0_1, %c0_2, %c0_3] : memref<1x1x10x10x4xbf16, #tpu.memory_space<vmem>>, vector<1x1x8x8x4xbf16>
    %2 = vector.shape_cast %1 : vector<1x1x8x8x4xbf16> to vector<8x8x4xbf16>
    %3 = vector.shape_cast %2 : vector<8x8x4xbf16> to vector<64x4xbf16>
    %c0_4 = arith.constant 0 : index
    %c0_5 = arith.constant 0 : index
    %4 = vector.load %arg5[%c0_4, %c0_5] : memref<108x8xbf16, #tpu.memory_space<vmem>>, vector<4x8xbf16>
    %cst_6 = arith.constant dense<0.000000e+00> : vector<64x8xf32>
    %5 = tpu.matmul %3, %4, %cst_6 {dimension_numbers = #tpu.dot_dimension_numbers<[1], [0], [0], [1], [0, 0, 1, 1], [], []>} : vector<64x4xbf16>, vector<4x8xbf16>, vector<64x8xf32> -> vector<64x8xf32>
    %6 = arith.addf %0, %5 : vector<64x8xf32>
    %c0_7 = arith.constant 0 : index
    %c0_8 = arith.constant 0 : index
    %c0_9 = arith.constant 0 : index
    %c1 = arith.constant 1 : index
    %c0_10 = arith.constant 0 : index
    %7 = vector.load %arg2[%c0_7, %c0_8, %c0_9, %c1, %c0_10] : memref<1x1x10x10x4xbf16, #tpu.memory_space<vmem>>, vector<1x1x8x8x4xbf16>
    %8 = vector.shape_cast %7 : vector<1x1x8x8x4xbf16> to vector<8x8x4xbf16>
    %9 = vector.shape_cast %8 : vector<8x8x4xbf16> to vector<64x4xbf16>
    %c4 = arith.constant 4 : index
    %c0_11 = arith.constant 0 : index
    %10 = vector.load %arg5[%c4, %c0_11] : memref<108x8xbf16, #tpu.memory_space<vmem>>, vector<4x8xbf16>
    %cst_12 = arith.constant dense<0.000000e+00> : vector<64x8xf32>
    %11 = tpu.matmul %9, %10, %cst_12 {dimension_numbers = #tpu.dot_dimension_numbers<[1], [0], [0], [1], [0, 0, 1, 1], [], []>} : vector<64x4xbf16>, vector<4x8xbf16>, vector<64x8xf32> -> vector<64x8xf32>
    %12 = arith.addf %6, %11 : vector<64x8xf32>
    %c0_13 = arith.constant 0 : index
    %c0_14 = arith.constant 0 : index
    %c0_15 = arith.constant 0 : index
    %c2 = arith.constant 2 : index
    %c0_16 = arith.constant 0 : index
    %13 = vector.load %arg2[%c0_13, %c0_14, %c0_15, %c2, %c0_16] : memref<1x1x10x10x4xbf16, #tpu.memory_space<vmem>>, vector<1x1x8x8x4xbf16>
    %14 = vector.shape_cast %13 : vector<1x1x8x8x4xbf16> to vector<8x8x4xbf16>
    %15 = vector.shape_cast %14 : vector<8x8x4xbf16> to vector<64x4xbf16>
    %c8 = arith.constant 8 : index
    %c0_17 = arith.constant 0 : index
    %16 = vector.load %arg5[%c8, %c0_17] : memref<108x8xbf16, #tpu.memory_space<vmem>>, vector<4x8xbf16>
    %cst_18 = arith.constant dense<0.000000e+00> : vector<64x8xf32>
    %17 = tpu.matmul %15, %16, %cst_18 {dimension_numbers = #tpu.dot_dimension_numbers<[1], [0], [0], [1], [0, 0, 1, 1], [], []>} : vector<64x4xbf16>, vector<4x8xbf16>, vector<64x8xf32> -> vector<64x8xf32>
    %18 = arith.addf %12, %17 : vector<64x8xf32>
    %c0_19 = arith.constant 0 : index
    %c0_20 = arith.constant 0 : index
    %c1_21 = arith.constant 1 : index
    %c0_22 = arith.constant 0 : index
    %c0_23 = arith.constant 0 : index
    %19 = vector.load %arg2[%c0_19, %c0_20, %c1_21, %c0_22, %c0_23] : memref<1x1x10x10x4xbf16, #tpu.memory_space<vmem>>, vector<1x1x8x8x4xbf16>
    %20 = vector.shape_cast %19 : vector<1x1x8x8x4xbf16> to vector<8x8x4xbf16>
    %21 = vector.shape_cast %20 : vector<8x8x4xbf16> to vector<64x4xbf16>
    %c12 = arith.constant 12 : index
    %c0_24 = arith.constant 0 : index
    %22 = vector.load %arg5[%c12, %c0_24] : memref<108x8xbf16, #tpu.memory_space<vmem>>, vector<4x8xbf16>
    %cst_25 = arith.constant dense<0.000000e+00> : vector<64x8xf32>
    %23 = tpu.matmul %21, %22, %cst_25 {dimension_numbers = #tpu.dot_dimension_numbers<[1], [0], [0], [1], [0, 0, 1, 1], [], []>} : vector<64x4xbf16>, vector<4x8xbf16>, vector<64x8xf32> -> vector<64x8xf32>
    %24 = arith.addf %18, %23 : vector<64x8xf32>
    %c0_26 = arith.constant 0 : index
    %c0_27 = arith.constant 0 : index
    %c1_28 = arith.constant 1 : index
    %c1_29 = arith.constant 1 : index
    %c0_30 = arith.constant 0 : index
    %25 = vector.load %arg2[%c0_26, %c0_27, %c1_28, %c1_29, %c0_30] : memref<1x1x10x10x4xbf16, #tpu.memory_space<vmem>>, vector<1x1x8x8x4xbf16>
    %26 = vector.shape_cast %25 : vector<1x1x8x8x4xbf16> to vector<8x8x4xbf16>
    %27 = vector.shape_cast %26 : vector<8x8x4xbf16> to vector<64x4xbf16>
    %c16 = arith.constant 16 : index
    %c0_31 = arith.constant 0 : index
    %28 = vector.load %arg5[%c16, %c0_31] : memref<108x8xbf16, #tpu.memory_space<vmem>>, vector<4x8xbf16>
    %cst_32 = arith.constant dense<0.000000e+00> : vector<64x8xf32>
    %29 = tpu.matmul %27, %28, %cst_32 {dimension_numbers = #tpu.dot_dimension_numbers<[1], [0], [0], [1], [0, 0, 1, 1], [], []>} : vector<64x4xbf16>, vector<4x8xbf16>, vector<64x8xf32> -> vector<64x8xf32>
    %30 = arith.addf %24, %29 : vector<64x8xf32>
    %c0_33 = arith.constant 0 : index
    %c0_34 = arith.constant 0 : index
    %c1_35 = arith.constant 1 : index
    %c2_36 = arith.constant 2 : index
    %c0_37 = arith.constant 0 : index
    %31 = vector.load %arg2[%c0_33, %c0_34, %c1_35, %c2_36, %c0_37] : memref<1x1x10x10x4xbf16, #tpu.memory_space<vmem>>, vector<1x1x8x8x4xbf16>
    %32 = vector.shape_cast %31 : vector<1x1x8x8x4xbf16> to vector<8x8x4xbf16>
    %33 = vector.shape_cast %32 : vector<8x8x4xbf16> to vector<64x4xbf16>
    %c20 = arith.constant 20 : index
    %c0_38 = arith.constant 0 : index
    %34 = vector.load %arg5[%c20, %c0_38] : memref<108x8xbf16, #tpu.memory_space<vmem>>, vector<4x8xbf16>
    %cst_39 = arith.constant dense<0.000000e+00> : vector<64x8xf32>
    %35 = tpu.matmul %33, %34, %cst_39 {dimension_numbers = #tpu.dot_dimension_numbers<[1], [0], [0], [1], [0, 0, 1, 1], [], []>} : vector<64x4xbf16>, vector<4x8xbf16>, vector<64x8xf32> -> vector<64x8xf32>
    %36 = arith.addf %30, %35 : vector<64x8xf32>
    %c0_40 = arith.constant 0 : index
    %c0_41 = arith.constant 0 : index
    %c2_42 = arith.constant 2 : index
    %c0_43 = arith.constant 0 : index
    %c0_44 = arith.constant 0 : index
    %37 = vector.load %arg2[%c0_40, %c0_41, %c2_42, %c0_43, %c0_44] : memref<1x1x10x10x4xbf16, #tpu.memory_space<vmem>>, vector<1x1x8x8x4xbf16>
    %38 = vector.shape_cast %37 : vector<1x1x8x8x4xbf16> to vector<8x8x4xbf16>
    %39 = vector.shape_cast %38 : vector<8x8x4xbf16> to vector<64x4xbf16>
    %c24 = arith.constant 24 : index
    %c0_45 = arith.constant 0 : index
    %40 = vector.load %arg5[%c24, %c0_45] : memref<108x8xbf16, #tpu.memory_space<vmem>>, vector<4x8xbf16>
    %cst_46 = arith.constant dense<0.000000e+00> : vector<64x8xf32>
    %41 = tpu.matmul %39, %40, %cst_46 {dimension_numbers = #tpu.dot_dimension_numbers<[1], [0], [0], [1], [0, 0, 1, 1], [], []>} : vector<64x4xbf16>, vector<4x8xbf16>, vector<64x8xf32> -> vector<64x8xf32>
    %42 = arith.addf %36, %41 : vector<64x8xf32>
    %c0_47 = arith.constant 0 : index
    %c0_48 = arith.constant 0 : index
    %c2_49 = arith.constant 2 : index
    %c1_50 = arith.constant 1 : index
    %c0_51 = arith.constant 0 : index
    %43 = vector.load %arg2[%c0_47, %c0_48, %c2_49, %c1_50, %c0_51] : memref<1x1x10x10x4xbf16, #tpu.memory_space<vmem>>, vector<1x1x8x8x4xbf16>
    %44 = vector.shape_cast %43 : vector<1x1x8x8x4xbf16> to vector<8x8x4xbf16>
    %45 = vector.shape_cast %44 : vector<8x8x4xbf16> to vector<64x4xbf16>
    %c28 = arith.constant 28 : index
    %c0_52 = arith.constant 0 : index
    %46 = vector.load %arg5[%c28, %c0_52] : memref<108x8xbf16, #tpu.memory_space<vmem>>, vector<4x8xbf16>
    %cst_53 = arith.constant dense<0.000000e+00> : vector<64x8xf32>
    %47 = tpu.matmul %45, %46, %cst_53 {dimension_numbers = #tpu.dot_dimension_numbers<[1], [0], [0], [1], [0, 0, 1, 1], [], []>} : vector<64x4xbf16>, vector<4x8xbf16>, vector<64x8xf32> -> vector<64x8xf32>
    %48 = arith.addf %42, %47 : vector<64x8xf32>
    %c0_54 = arith.constant 0 : index
    %c0_55 = arith.constant 0 : index
    %c2_56 = arith.constant 2 : index
    %c2_57 = arith.constant 2 : index
    %c0_58 = arith.constant 0 : index
    %49 = vector.load %arg2[%c0_54, %c0_55, %c2_56, %c2_57, %c0_58] : memref<1x1x10x10x4xbf16, #tpu.memory_space<vmem>>, vector<1x1x8x8x4xbf16>
    %50 = vector.shape_cast %49 : vector<1x1x8x8x4xbf16> to vector<8x8x4xbf16>
    %51 = vector.shape_cast %50 : vector<8x8x4xbf16> to vector<64x4xbf16>
    %c32 = arith.constant 32 : index
    %c0_59 = arith.constant 0 : index
    %52 = vector.load %arg5[%c32, %c0_59] : memref<108x8xbf16, #tpu.memory_space<vmem>>, vector<4x8xbf16>
    %cst_60 = arith.constant dense<0.000000e+00> : vector<64x8xf32>
    %53 = tpu.matmul %51, %52, %cst_60 {dimension_numbers = #tpu.dot_dimension_numbers<[1], [0], [0], [1], [0, 0, 1, 1], [], []>} : vector<64x4xbf16>, vector<4x8xbf16>, vector<64x8xf32> -> vector<64x8xf32>
    %54 = arith.addf %48, %53 : vector<64x8xf32>
    %c0_61 = arith.constant 0 : index
    %c0_62 = arith.constant 0 : index
    %c0_63 = arith.constant 0 : index
    %c0_64 = arith.constant 0 : index
    %c0_65 = arith.constant 0 : index
    %55 = vector.load %arg3[%c0_61, %c0_62, %c0_63, %c0_64, %c0_65] : memref<1x1x10x10x4xbf16, #tpu.memory_space<vmem>>, vector<1x1x8x8x4xbf16>
    %56 = vector.shape_cast %55 : vector<1x1x8x8x4xbf16> to vector<8x8x4xbf16>
    %57 = vector.shape_cast %56 : vector<8x8x4xbf16> to vector<64x4xbf16>
    %c36 = arith.constant 36 : index
    %c0_66 = arith.constant 0 : index
    %58 = vector.load %arg5[%c36, %c0_66] : memref<108x8xbf16, #tpu.memory_space<vmem>>, vector<4x8xbf16>
    %cst_67 = arith.constant dense<0.000000e+00> : vector<64x8xf32>
    %59 = tpu.matmul %57, %58, %cst_67 {dimension_numbers = #tpu.dot_dimension_numbers<[1], [0], [0], [1], [0, 0, 1, 1], [], []>} : vector<64x4xbf16>, vector<4x8xbf16>, vector<64x8xf32> -> vector<64x8xf32>
    %60 = arith.addf %54, %59 : vector<64x8xf32>
    %c0_68 = arith.constant 0 : index
    %c0_69 = arith.constant 0 : index
    %c0_70 = arith.constant 0 : index
    %c1_71 = arith.constant 1 : index
    %c0_72 = arith.constant 0 : index
    %61 = vector.load %arg3[%c0_68, %c0_69, %c0_70, %c1_71, %c0_72] : memref<1x1x10x10x4xbf16, #tpu.memory_space<vmem>>, vector<1x1x8x8x4xbf16>
    %62 = vector.shape_cast %61 : vector<1x1x8x8x4xbf16> to vector<8x8x4xbf16>
    %63 = vector.shape_cast %62 : vector<8x8x4xbf16> to vector<64x4xbf16>
    %c40 = arith.constant 40 : index
    %c0_73 = arith.constant 0 : index
    %64 = vector.load %arg5[%c40, %c0_73] : memref<108x8xbf16, #tpu.memory_space<vmem>>, vector<4x8xbf16>
    %cst_74 = arith.constant dense<0.000000e+00> : vector<64x8xf32>
    %65 = tpu.matmul %63, %64, %cst_74 {dimension_numbers = #tpu.dot_dimension_numbers<[1], [0], [0], [1], [0, 0, 1, 1], [], []>} : vector<64x4xbf16>, vector<4x8xbf16>, vector<64x8xf32> -> vector<64x8xf32>
    %66 = arith.addf %60, %65 : vector<64x8xf32>
    %c0_75 = arith.constant 0 : index
    %c0_76 = arith.constant 0 : index
    %c0_77 = arith.constant 0 : index
    %c2_78 = arith.constant 2 : index
    %c0_79 = arith.constant 0 : index
    %67 = vector.load %arg3[%c0_75, %c0_76, %c0_77, %c2_78, %c0_79] : memref<1x1x10x10x4xbf16, #tpu.memory_space<vmem>>, vector<1x1x8x8x4xbf16>
    %68 = vector.shape_cast %67 : vector<1x1x8x8x4xbf16> to vector<8x8x4xbf16>
    %69 = vector.shape_cast %68 : vector<8x8x4xbf16> to vector<64x4xbf16>
    %c44 = arith.constant 44 : index
    %c0_80 = arith.constant 0 : index
    %70 = vector.load %arg5[%c44, %c0_80] : memref<108x8xbf16, #tpu.memory_space<vmem>>, vector<4x8xbf16>
    %cst_81 = arith.constant dense<0.000000e+00> : vector<64x8xf32>
    %71 = tpu.matmul %69, %70, %cst_81 {dimension_numbers = #tpu.dot_dimension_numbers<[1], [0], [0], [1], [0, 0, 1, 1], [], []>} : vector<64x4xbf16>, vector<4x8xbf16>, vector<64x8xf32> -> vector<64x8xf32>
    %72 = arith.addf %66, %71 : vector<64x8xf32>
    %c0_82 = arith.constant 0 : index
    %c0_83 = arith.constant 0 : index
    %c1_84 = arith.constant 1 : index
    %c0_85 = arith.constant 0 : index
    %c0_86 = arith.constant 0 : index
    %73 = vector.load %arg3[%c0_82, %c0_83, %c1_84, %c0_85, %c0_86] : memref<1x1x10x10x4xbf16, #tpu.memory_space<vmem>>, vector<1x1x8x8x4xbf16>
    %74 = vector.shape_cast %73 : vector<1x1x8x8x4xbf16> to vector<8x8x4xbf16>
    %75 = vector.shape_cast %74 : vector<8x8x4xbf16> to vector<64x4xbf16>
    %c48 = arith.constant 48 : index
    %c0_87 = arith.constant 0 : index
    %76 = vector.load %arg5[%c48, %c0_87] : memref<108x8xbf16, #tpu.memory_space<vmem>>, vector<4x8xbf16>
    %cst_88 = arith.constant dense<0.000000e+00> : vector<64x8xf32>
    %77 = tpu.matmul %75, %76, %cst_88 {dimension_numbers = #tpu.dot_dimension_numbers<[1], [0], [0], [1], [0, 0, 1, 1], [], []>} : vector<64x4xbf16>, vector<4x8xbf16>, vector<64x8xf32> -> vector<64x8xf32>
    %78 = arith.addf %72, %77 : vector<64x8xf32>
    %c0_89 = arith.constant 0 : index
    %c0_90 = arith.constant 0 : index
    %c1_91 = arith.constant 1 : index
    %c1_92 = arith.constant 1 : index
    %c0_93 = arith.constant 0 : index
    %79 = vector.load %arg3[%c0_89, %c0_90, %c1_91, %c1_92, %c0_93] : memref<1x1x10x10x4xbf16, #tpu.memory_space<vmem>>, vector<1x1x8x8x4xbf16>
    %80 = vector.shape_cast %79 : vector<1x1x8x8x4xbf16> to vector<8x8x4xbf16>
    %81 = vector.shape_cast %80 : vector<8x8x4xbf16> to vector<64x4xbf16>
    %c52 = arith.constant 52 : index
    %c0_94 = arith.constant 0 : index
    %82 = vector.load %arg5[%c52, %c0_94] : memref<108x8xbf16, #tpu.memory_space<vmem>>, vector<4x8xbf16>
    %cst_95 = arith.constant dense<0.000000e+00> : vector<64x8xf32>
    %83 = tpu.matmul %81, %82, %cst_95 {dimension_numbers = #tpu.dot_dimension_numbers<[1], [0], [0], [1], [0, 0, 1, 1], [], []>} : vector<64x4xbf16>, vector<4x8xbf16>, vector<64x8xf32> -> vector<64x8xf32>
    %84 = arith.addf %78, %83 : vector<64x8xf32>
    %c0_96 = arith.constant 0 : index
    %c0_97 = arith.constant 0 : index
    %c1_98 = arith.constant 1 : index
    %c2_99 = arith.constant 2 : index
    %c0_100 = arith.constant 0 : index
    %85 = vector.load %arg3[%c0_96, %c0_97, %c1_98, %c2_99, %c0_100] : memref<1x1x10x10x4xbf16, #tpu.memory_space<vmem>>, vector<1x1x8x8x4xbf16>
    %86 = vector.shape_cast %85 : vector<1x1x8x8x4xbf16> to vector<8x8x4xbf16>
    %87 = vector.shape_cast %86 : vector<8x8x4xbf16> to vector<64x4xbf16>
    %c56 = arith.constant 56 : index
    %c0_101 = arith.constant 0 : index
    %88 = vector.load %arg5[%c56, %c0_101] : memref<108x8xbf16, #tpu.memory_space<vmem>>, vector<4x8xbf16>
    %cst_102 = arith.constant dense<0.000000e+00> : vector<64x8xf32>
    %89 = tpu.matmul %87, %88, %cst_102 {dimension_numbers = #tpu.dot_dimension_numbers<[1], [0], [0], [1], [0, 0, 1, 1], [], []>} : vector<64x4xbf16>, vector<4x8xbf16>, vector<64x8xf32> -> vector<64x8xf32>
    %90 = arith.addf %84, %89 : vector<64x8xf32>
    %c0_103 = arith.constant 0 : index
    %c0_104 = arith.constant 0 : index
    %c2_105 = arith.constant 2 : index
    %c0_106 = arith.constant 0 : index
    %c0_107 = arith.constant 0 : index
    %91 = vector.load %arg3[%c0_103, %c0_104, %c2_105, %c0_106, %c0_107] : memref<1x1x10x10x4xbf16, #tpu.memory_space<vmem>>, vector<1x1x8x8x4xbf16>
    %92 = vector.shape_cast %91 : vector<1x1x8x8x4xbf16> to vector<8x8x4xbf16>
    %93 = vector.shape_cast %92 : vector<8x8x4xbf16> to vector<64x4xbf16>
    %c60 = arith.constant 60 : index
    %c0_108 = arith.constant 0 : index
    %94 = vector.load %arg5[%c60, %c0_108] : memref<108x8xbf16, #tpu.memory_space<vmem>>, vector<4x8xbf16>
    %cst_109 = arith.constant dense<0.000000e+00> : vector<64x8xf32>
    %95 = tpu.matmul %93, %94, %cst_109 {dimension_numbers = #tpu.dot_dimension_numbers<[1], [0], [0], [1], [0, 0, 1, 1], [], []>} : vector<64x4xbf16>, vector<4x8xbf16>, vector<64x8xf32> -> vector<64x8xf32>
    %96 = arith.addf %90, %95 : vector<64x8xf32>
    %c0_110 = arith.constant 0 : index
    %c0_111 = arith.constant 0 : index
    %c2_112 = arith.constant 2 : index
    %c1_113 = arith.constant 1 : index
    %c0_114 = arith.constant 0 : index
    %97 = vector.load %arg3[%c0_110, %c0_111, %c2_112, %c1_113, %c0_114] : memref<1x1x10x10x4xbf16, #tpu.memory_space<vmem>>, vector<1x1x8x8x4xbf16>
    %98 = vector.shape_cast %97 : vector<1x1x8x8x4xbf16> to vector<8x8x4xbf16>
    %99 = vector.shape_cast %98 : vector<8x8x4xbf16> to vector<64x4xbf16>
    %c64 = arith.constant 64 : index
    %c0_115 = arith.constant 0 : index
    %100 = vector.load %arg5[%c64, %c0_115] : memref<108x8xbf16, #tpu.memory_space<vmem>>, vector<4x8xbf16>
    %cst_116 = arith.constant dense<0.000000e+00> : vector<64x8xf32>
    %101 = tpu.matmul %99, %100, %cst_116 {dimension_numbers = #tpu.dot_dimension_numbers<[1], [0], [0], [1], [0, 0, 1, 1], [], []>} : vector<64x4xbf16>, vector<4x8xbf16>, vector<64x8xf32> -> vector<64x8xf32>
    %102 = arith.addf %96, %101 : vector<64x8xf32>
    %c0_117 = arith.constant 0 : index
    %c0_118 = arith.constant 0 : index
    %c2_119 = arith.constant 2 : index
    %c2_120 = arith.constant 2 : index
    %c0_121 = arith.constant 0 : index
    %103 = vector.load %arg3[%c0_117, %c0_118, %c2_119, %c2_120, %c0_121] : memref<1x1x10x10x4xbf16, #tpu.memory_space<vmem>>, vector<1x1x8x8x4xbf16>
    %104 = vector.shape_cast %103 : vector<1x1x8x8x4xbf16> to vector<8x8x4xbf16>
    %105 = vector.shape_cast %104 : vector<8x8x4xbf16> to vector<64x4xbf16>
    %c68 = arith.constant 68 : index
    %c0_122 = arith.constant 0 : index
    %106 = vector.load %arg5[%c68, %c0_122] : memref<108x8xbf16, #tpu.memory_space<vmem>>, vector<4x8xbf16>
    %cst_123 = arith.constant dense<0.000000e+00> : vector<64x8xf32>
    %107 = tpu.matmul %105, %106, %cst_123 {dimension_numbers = #tpu.dot_dimension_numbers<[1], [0], [0], [1], [0, 0, 1, 1], [], []>} : vector<64x4xbf16>, vector<4x8xbf16>, vector<64x8xf32> -> vector<64x8xf32>
    %108 = arith.addf %102, %107 : vector<64x8xf32>
    %c0_124 = arith.constant 0 : index
    %c0_125 = arith.constant 0 : index
    %c0_126 = arith.constant 0 : index
    %c0_127 = arith.constant 0 : index
    %c0_128 = arith.constant 0 : index
    %109 = vector.load %arg4[%c0_124, %c0_125, %c0_126, %c0_127, %c0_128] : memref<1x1x10x10x4xbf16, #tpu.memory_space<vmem>>, vector<1x1x8x8x4xbf16>
    %110 = vector.shape_cast %109 : vector<1x1x8x8x4xbf16> to vector<8x8x4xbf16>
    %111 = vector.shape_cast %110 : vector<8x8x4xbf16> to vector<64x4xbf16>
    %c72 = arith.constant 72 : index
    %c0_129 = arith.constant 0 : index
    %112 = vector.load %arg5[%c72, %c0_129] : memref<108x8xbf16, #tpu.memory_space<vmem>>, vector<4x8xbf16>
    %cst_130 = arith.constant dense<0.000000e+00> : vector<64x8xf32>
    %113 = tpu.matmul %111, %112, %cst_130 {dimension_numbers = #tpu.dot_dimension_numbers<[1], [0], [0], [1], [0, 0, 1, 1], [], []>} : vector<64x4xbf16>, vector<4x8xbf16>, vector<64x8xf32> -> vector<64x8xf32>
    %114 = arith.addf %108, %113 : vector<64x8xf32>
    %c0_131 = arith.constant 0 : index
    %c0_132 = arith.constant 0 : index
    %c0_133 = arith.constant 0 : index
    %c1_134 = arith.constant 1 : index
    %c0_135 = arith.constant 0 : index
    %115 = vector.load %arg4[%c0_131, %c0_132, %c0_133, %c1_134, %c0_135] : memref<1x1x10x10x4xbf16, #tpu.memory_space<vmem>>, vector<1x1x8x8x4xbf16>
    %116 = vector.shape_cast %115 : vector<1x1x8x8x4xbf16> to vector<8x8x4xbf16>
    %117 = vector.shape_cast %116 : vector<8x8x4xbf16> to vector<64x4xbf16>
    %c76 = arith.constant 76 : index
    %c0_136 = arith.constant 0 : index
    %118 = vector.load %arg5[%c76, %c0_136] : memref<108x8xbf16, #tpu.memory_space<vmem>>, vector<4x8xbf16>
    %cst_137 = arith.constant dense<0.000000e+00> : vector<64x8xf32>
    %119 = tpu.matmul %117, %118, %cst_137 {dimension_numbers = #tpu.dot_dimension_numbers<[1], [0], [0], [1], [0, 0, 1, 1], [], []>} : vector<64x4xbf16>, vector<4x8xbf16>, vector<64x8xf32> -> vector<64x8xf32>
    %120 = arith.addf %114, %119 : vector<64x8xf32>
    %c0_138 = arith.constant 0 : index
    %c0_139 = arith.constant 0 : index
    %c0_140 = arith.constant 0 : index
    %c2_141 = arith.constant 2 : index
    %c0_142 = arith.constant 0 : index
    %121 = vector.load %arg4[%c0_138, %c0_139, %c0_140, %c2_141, %c0_142] : memref<1x1x10x10x4xbf16, #tpu.memory_space<vmem>>, vector<1x1x8x8x4xbf16>
    %122 = vector.shape_cast %121 : vector<1x1x8x8x4xbf16> to vector<8x8x4xbf16>
    %123 = vector.shape_cast %122 : vector<8x8x4xbf16> to vector<64x4xbf16>
    %c80 = arith.constant 80 : index
    %c0_143 = arith.constant 0 : index
    %124 = vector.load %arg5[%c80, %c0_143] : memref<108x8xbf16, #tpu.memory_space<vmem>>, vector<4x8xbf16>
    %cst_144 = arith.constant dense<0.000000e+00> : vector<64x8xf32>
    %125 = tpu.matmul %123, %124, %cst_144 {dimension_numbers = #tpu.dot_dimension_numbers<[1], [0], [0], [1], [0, 0, 1, 1], [], []>} : vector<64x4xbf16>, vector<4x8xbf16>, vector<64x8xf32> -> vector<64x8xf32>
    %126 = arith.addf %120, %125 : vector<64x8xf32>
    %c0_145 = arith.constant 0 : index
    %c0_146 = arith.constant 0 : index
    %c1_147 = arith.constant 1 : index
    %c0_148 = arith.constant 0 : index
    %c0_149 = arith.constant 0 : index
    %127 = vector.load %arg4[%c0_145, %c0_146, %c1_147, %c0_148, %c0_149] : memref<1x1x10x10x4xbf16, #tpu.memory_space<vmem>>, vector<1x1x8x8x4xbf16>
    %128 = vector.shape_cast %127 : vector<1x1x8x8x4xbf16> to vector<8x8x4xbf16>
    %129 = vector.shape_cast %128 : vector<8x8x4xbf16> to vector<64x4xbf16>
    %c84 = arith.constant 84 : index
    %c0_150 = arith.constant 0 : index
    %130 = vector.load %arg5[%c84, %c0_150] : memref<108x8xbf16, #tpu.memory_space<vmem>>, vector<4x8xbf16>
    %cst_151 = arith.constant dense<0.000000e+00> : vector<64x8xf32>
    %131 = tpu.matmul %129, %130, %cst_151 {dimension_numbers = #tpu.dot_dimension_numbers<[1], [0], [0], [1], [0, 0, 1, 1], [], []>} : vector<64x4xbf16>, vector<4x8xbf16>, vector<64x8xf32> -> vector<64x8xf32>
    %132 = arith.addf %126, %131 : vector<64x8xf32>
    %c0_152 = arith.constant 0 : index
    %c0_153 = arith.constant 0 : index
    %c1_154 = arith.constant 1 : index
    %c1_155 = arith.constant 1 : index
    %c0_156 = arith.constant 0 : index
    %133 = vector.load %arg4[%c0_152, %c0_153, %c1_154, %c1_155, %c0_156] : memref<1x1x10x10x4xbf16, #tpu.memory_space<vmem>>, vector<1x1x8x8x4xbf16>
    %134 = vector.shape_cast %133 : vector<1x1x8x8x4xbf16> to vector<8x8x4xbf16>
    %135 = vector.shape_cast %134 : vector<8x8x4xbf16> to vector<64x4xbf16>
    %c88 = arith.constant 88 : index
    %c0_157 = arith.constant 0 : index
    %136 = vector.load %arg5[%c88, %c0_157] : memref<108x8xbf16, #tpu.memory_space<vmem>>, vector<4x8xbf16>
    %cst_158 = arith.constant dense<0.000000e+00> : vector<64x8xf32>
    %137 = tpu.matmul %135, %136, %cst_158 {dimension_numbers = #tpu.dot_dimension_numbers<[1], [0], [0], [1], [0, 0, 1, 1], [], []>} : vector<64x4xbf16>, vector<4x8xbf16>, vector<64x8xf32> -> vector<64x8xf32>
    %138 = arith.addf %132, %137 : vector<64x8xf32>
    %c0_159 = arith.constant 0 : index
    %c0_160 = arith.constant 0 : index
    %c1_161 = arith.constant 1 : index
    %c2_162 = arith.constant 2 : index
    %c0_163 = arith.constant 0 : index
    %139 = vector.load %arg4[%c0_159, %c0_160, %c1_161, %c2_162, %c0_163] : memref<1x1x10x10x4xbf16, #tpu.memory_space<vmem>>, vector<1x1x8x8x4xbf16>
    %140 = vector.shape_cast %139 : vector<1x1x8x8x4xbf16> to vector<8x8x4xbf16>
    %141 = vector.shape_cast %140 : vector<8x8x4xbf16> to vector<64x4xbf16>
    %c92 = arith.constant 92 : index
    %c0_164 = arith.constant 0 : index
    %142 = vector.load %arg5[%c92, %c0_164] : memref<108x8xbf16, #tpu.memory_space<vmem>>, vector<4x8xbf16>
    %cst_165 = arith.constant dense<0.000000e+00> : vector<64x8xf32>
    %143 = tpu.matmul %141, %142, %cst_165 {dimension_numbers = #tpu.dot_dimension_numbers<[1], [0], [0], [1], [0, 0, 1, 1], [], []>} : vector<64x4xbf16>, vector<4x8xbf16>, vector<64x8xf32> -> vector<64x8xf32>
    %144 = arith.addf %138, %143 : vector<64x8xf32>
    %c0_166 = arith.constant 0 : index
    %c0_167 = arith.constant 0 : index
    %c2_168 = arith.constant 2 : index
    %c0_169 = arith.constant 0 : index
    %c0_170 = arith.constant 0 : index
    %145 = vector.load %arg4[%c0_166, %c0_167, %c2_168, %c0_169, %c0_170] : memref<1x1x10x10x4xbf16, #tpu.memory_space<vmem>>, vector<1x1x8x8x4xbf16>
    %146 = vector.shape_cast %145 : vector<1x1x8x8x4xbf16> to vector<8x8x4xbf16>
    %147 = vector.shape_cast %146 : vector<8x8x4xbf16> to vector<64x4xbf16>
    %c96 = arith.constant 96 : index
    %c0_171 = arith.constant 0 : index
    %148 = vector.load %arg5[%c96, %c0_171] : memref<108x8xbf16, #tpu.memory_space<vmem>>, vector<4x8xbf16>
    %cst_172 = arith.constant dense<0.000000e+00> : vector<64x8xf32>
    %149 = tpu.matmul %147, %148, %cst_172 {dimension_numbers = #tpu.dot_dimension_numbers<[1], [0], [0], [1], [0, 0, 1, 1], [], []>} : vector<64x4xbf16>, vector<4x8xbf16>, vector<64x8xf32> -> vector<64x8xf32>
    %150 = arith.addf %144, %149 : vector<64x8xf32>
    %c0_173 = arith.constant 0 : index
    %c0_174 = arith.constant 0 : index
    %c2_175 = arith.constant 2 : index
    %c1_176 = arith.constant 1 : index
    %c0_177 = arith.constant 0 : index
    %151 = vector.load %arg4[%c0_173, %c0_174, %c2_175, %c1_176, %c0_177] : memref<1x1x10x10x4xbf16, #tpu.memory_space<vmem>>, vector<1x1x8x8x4xbf16>
    %152 = vector.shape_cast %151 : vector<1x1x8x8x4xbf16> to vector<8x8x4xbf16>
    %153 = vector.shape_cast %152 : vector<8x8x4xbf16> to vector<64x4xbf16>
    %c100 = arith.constant 100 : index
    %c0_178 = arith.constant 0 : index
    %154 = vector.load %arg5[%c100, %c0_178] : memref<108x8xbf16, #tpu.memory_space<vmem>>, vector<4x8xbf16>
    %cst_179 = arith.constant dense<0.000000e+00> : vector<64x8xf32>
    %155 = tpu.matmul %153, %154, %cst_179 {dimension_numbers = #tpu.dot_dimension_numbers<[1], [0], [0], [1], [0, 0, 1, 1], [], []>} : vector<64x4xbf16>, vector<4x8xbf16>, vector<64x8xf32> -> vector<64x8xf32>
    %156 = arith.addf %150, %155 : vector<64x8xf32>
    %c0_180 = arith.constant 0 : index
    %c0_181 = arith.constant 0 : index
    %c2_182 = arith.constant 2 : index
    %c2_183 = arith.constant 2 : index
    %c0_184 = arith.constant 0 : index
    %157 = vector.load %arg4[%c0_180, %c0_181, %c2_182, %c2_183, %c0_184] : memref<1x1x10x10x4xbf16, #tpu.memory_space<vmem>>, vector<1x1x8x8x4xbf16>
    %158 = vector.shape_cast %157 : vector<1x1x8x8x4xbf16> to vector<8x8x4xbf16>
    %159 = vector.shape_cast %158 : vector<8x8x4xbf16> to vector<64x4xbf16>
    %c104 = arith.constant 104 : index
    %c0_185 = arith.constant 0 : index
    %160 = vector.load %arg5[%c104, %c0_185] : memref<108x8xbf16, #tpu.memory_space<vmem>>, vector<4x8xbf16>
    %cst_186 = arith.constant dense<0.000000e+00> : vector<64x8xf32>
    %161 = tpu.matmul %159, %160, %cst_186 {dimension_numbers = #tpu.dot_dimension_numbers<[1], [0], [0], [1], [0, 0, 1, 1], [], []>} : vector<64x4xbf16>, vector<4x8xbf16>, vector<64x8xf32> -> vector<64x8xf32>
    %162 = arith.addf %156, %161 : vector<64x8xf32>
    %c0_187 = arith.constant 0 : index
    %c0_188 = arith.constant 0 : index
    %163 = vector.load %arg6[%c0_187, %c0_188] : memref<1x8xf32, #tpu.memory_space<vmem>>, vector<1x8xf32>
    %164 = vector.broadcast %163 : vector<1x8xf32> to vector<64x8xf32>
    %165 = arith.addf %162, %164 : vector<64x8xf32>
    %166 = arith.truncf %165 : vector<64x8xf32> to vector<64x8xbf16>
    %c0_189 = arith.constant 0 : index
    %c0_190 = arith.constant 0 : index
    %c0_191 = arith.constant 0 : index
    %c0_192 = arith.constant 0 : index
    %167 = vector.load %arg7[%c0_189, %c0_190, %c0_191, %c0_192] : memref<1x1x64x8xbf16, #tpu.memory_space<vmem>>, vector<1x1x64x8xbf16>
    %168 = vector.shape_cast %167 : vector<1x1x64x8xbf16> to vector<64x8xbf16>
    %169 = vector.shape_cast %166 : vector<64x8xbf16> to vector<1x1x64x8xbf16>
    tpu.vector_store %arg7[%c0_189, %c0_190, %c0_191, %c0_192], %169 {strides = array<i32>} : memref<1x1x64x8xbf16, #tpu.memory_space<vmem>>, vector<1x1x64x8xbf16>,
    %170 = arith.extf %166 : vector<64x8xbf16> to vector<64x8xf32>
    %cst_193 = arith.constant dense<0.000000e+00> : vector<8xf32>
    %171 = vector.multi_reduction <add>, %170, %cst_193 [0] : vector<64x8xf32> to vector<8xf32>
    %172 = vector.shape_cast %171 : vector<8xf32> to vector<1x8xf32>
    %c0_194 = arith.constant 0 : index
    %c0_195 = arith.constant 0 : index
    %c0_196 = arith.constant 0 : index
    %c0_197 = arith.constant 0 : index
    %173 = vector.load %arg8[%c0_194, %c0_195, %c0_196, %c0_197] : memref<1x1x1x8xf32, #tpu.memory_space<vmem>>, vector<1x1x1x8xf32>
    %174 = vector.shape_cast %173 : vector<1x1x1x8xf32> to vector<1x8xf32>
    %175 = vector.shape_cast %172 : vector<1x8xf32> to vector<1x1x1x8xf32>
    tpu.vector_store %arg8[%c0_194, %c0_195, %c0_196, %c0_197], %175 {strides = array<i32>} : memref<1x1x1x8xf32, #tpu.memory_space<vmem>>, vector<1x1x1x8xf32>,
    %176 = arith.mulf %170, %170 : vector<64x8xf32>
    %cst_198 = arith.constant dense<0.000000e+00> : vector<8xf32>
    %177 = vector.multi_reduction <add>, %176, %cst_198 [0] : vector<64x8xf32> to vector<8xf32>
    %178 = vector.shape_cast %177 : vector<8xf32> to vector<1x8xf32>
    %c0_199 = arith.constant 0 : index
    %c0_200 = arith.constant 0 : index
    %c0_201 = arith.constant 0 : index
    %c0_202 = arith.constant 0 : index
    %179 = vector.load %arg9[%c0_199, %c0_200, %c0_201, %c0_202] : memref<1x1x1x8xf32, #tpu.memory_space<vmem>>, vector<1x1x1x8xf32>
    %180 = vector.shape_cast %179 : vector<1x1x1x8xf32> to vector<1x8xf32>
    %181 = vector.shape_cast %178 : vector<1x8xf32> to vector<1x1x1x8xf32>
    tpu.vector_store %arg9[%c0_199, %c0_200, %c0_201, %c0_202], %181 {strides = array<i32>} : memref<1x1x1x8xf32, #tpu.memory_space<vmem>>, vector<1x1x1x8xf32>,
    return
  }
  func.func @transform_0(%arg0: i32, %arg1: i32) -> (i32, i32, i32, i32, i32) {
    %c0_i32 = arith.constant 0 : i32
    %0 = arith.addi %arg1, %c0_i32 : i32
    %c0_i32_0 = arith.constant 0 : i32
    %c0_i32_1 = arith.constant 0 : i32
    %c0_i32_2 = arith.constant 0 : i32
    %c0_i32_3 = arith.constant 0 : i32
    return %arg0, %0, %c0_i32_0, %c0_i32_1, %c0_i32_2 : i32, i32, i32, i32, i32
  }
  func.func @transform_1(%arg0: i32, %arg1: i32) -> (i32, i32, i32, i32, i32) {
    %c1_i32 = arith.constant 1 : i32
    %0 = arith.addi %arg1, %c1_i32 : i32
    %c0_i32 = arith.constant 0 : i32
    %c0_i32_0 = arith.constant 0 : i32
    %c0_i32_1 = arith.constant 0 : i32
    %c0_i32_2 = arith.constant 0 : i32
    return %arg0, %0, %c0_i32, %c0_i32_0, %c0_i32_1 : i32, i32, i32, i32, i32
  }
  func.func @transform_2(%arg0: i32, %arg1: i32) -> (i32, i32, i32, i32, i32) {
    %c2_i32 = arith.constant 2 : i32
    %0 = arith.addi %arg1, %c2_i32 : i32
    %c0_i32 = arith.constant 0 : i32
    %c0_i32_0 = arith.constant 0 : i32
    %c0_i32_1 = arith.constant 0 : i32
    %c0_i32_2 = arith.constant 0 : i32
    return %arg0, %0, %c0_i32, %c0_i32_0, %c0_i32_1 : i32, i32, i32, i32, i32
  }
  func.func @transform_3(%arg0: i32, %arg1: i32) -> (i32, i32) {
    %c0_i32 = arith.constant 0 : i32
    %c0_i32_0 = arith.constant 0 : i32
    %c0_i32_1 = arith.constant 0 : i32
    return %c0_i32, %c0_i32_0 : i32, i32
  }
  func.func @transform_4(%arg0: i32, %arg1: i32) -> (i32, i32) {
    %c0_i32 = arith.constant 0 : i32
    %c0_i32_0 = arith.constant 0 : i32
    %c0_i32_1 = arith.constant 0 : i32
    return %c0_i32, %c0_i32_0 : i32, i32
  }
  func.func @transform_5(%arg0: i32, %arg1: i32) -> (i32, i32, i32, i32) {
    %c0_i32 = arith.constant 0 : i32
    %c0_i32_0 = arith.constant 0 : i32
    %c0_i32_1 = arith.constant 0 : i32
    return %arg0, %arg1, %c0_i32, %c0_i32_0 : i32, i32, i32, i32
  }
  func.func @transform_6(%arg0: i32, %arg1: i32) -> (i32, i32, i32, i32) {
    %c0_i32 = arith.constant 0 : i32
    %c0_i32_0 = arith.constant 0 : i32
    %c0_i32_1 = arith.constant 0 : i32
    return %arg0, %arg1, %c0_i32, %c0_i32_0 : i32, i32, i32, i32
  }
  func.func @transform_7(%arg0: i32, %arg1: i32) -> (i32, i32, i32, i32) {
    %c0_i32 = arith.constant 0 : i32
    %c0_i32_0 = arith.constant 0 : i32
    %c0_i32_1 = arith.constant 0 : i32
    return %arg0, %arg1, %c0_i32, %c0_i32_0 : i32, i32, i32, i32
  }
}

module attributes {stable_mosaic.version = 11 : i64} {
  func.func @_gn_relu_kernel(%arg0: i32, %arg1: i32, %arg2: memref<1x32x128xbf16, #tpu.memory_space<vmem>>, %arg3: memref<1x1x128xf32, #tpu.memory_space<vmem>>, %arg4: memref<1x1x128xf32, #tpu.memory_space<vmem>>, %arg5: memref<1x32x128xbf16, #tpu.memory_space<vmem>>) attributes {dimension_semantics = [#tpu.dimension_semantics<parallel>, #tpu.dimension_semantics<parallel>], iteration_bounds = array<i64: 2, 1>, scalar_prefetch = 0 : i64, scratch_operands = 0 : i64, tpu.core_type = #tpu.core_type<tc>, window_params = [{transform_indices = @transform_0, window_bounds = array<i64: 1, 32, 128>}, {transform_indices = @transform_1, window_bounds = array<i64: 1, 1, 128>}, {transform_indices = @transform_2, window_bounds = array<i64: 1, 1, 128>}, {transform_indices = @transform_3, window_bounds = array<i64: 1, 32, 128>}]} {
    %c0 = arith.constant 0 : index
    %c0_0 = arith.constant 0 : index
    %c0_1 = arith.constant 0 : index
    %0 = vector.load %arg2[%c0, %c0_0, %c0_1] : memref<1x32x128xbf16, #tpu.memory_space<vmem>>, vector<1x32x128xbf16>
    %1 = vector.shape_cast %0 : vector<1x32x128xbf16> to vector<32x128xbf16>
    %2 = arith.extf %1 : vector<32x128xbf16> to vector<32x128xf32>
    %c0_2 = arith.constant 0 : index
    %c0_3 = arith.constant 0 : index
    %c0_4 = arith.constant 0 : index
    %3 = vector.load %arg3[%c0_2, %c0_3, %c0_4] : memref<1x1x128xf32, #tpu.memory_space<vmem>>, vector<1x1x128xf32>
    %4 = vector.shape_cast %3 : vector<1x1x128xf32> to vector<1x128xf32>
    %5 = vector.broadcast %4 : vector<1x128xf32> to vector<32x128xf32>
    %6 = arith.mulf %2, %5 : vector<32x128xf32>
    %c0_5 = arith.constant 0 : index
    %c0_6 = arith.constant 0 : index
    %c0_7 = arith.constant 0 : index
    %7 = vector.load %arg4[%c0_5, %c0_6, %c0_7] : memref<1x1x128xf32, #tpu.memory_space<vmem>>, vector<1x1x128xf32>
    %8 = vector.shape_cast %7 : vector<1x1x128xf32> to vector<1x128xf32>
    %9 = vector.broadcast %8 : vector<1x128xf32> to vector<32x128xf32>
    %10 = arith.addf %6, %9 : vector<32x128xf32>
    %cst = arith.constant 0.000000e+00 : f32
    %11 = vector.broadcast %cst : f32 to vector<32x128xf32>
    %12 = arith.maximumf %10, %11 : vector<32x128xf32>
    %13 = arith.truncf %12 : vector<32x128xf32> to vector<32x128xbf16>
    %c0_8 = arith.constant 0 : index
    %c0_9 = arith.constant 0 : index
    %c0_10 = arith.constant 0 : index
    %14 = vector.load %arg5[%c0_8, %c0_9, %c0_10] : memref<1x32x128xbf16, #tpu.memory_space<vmem>>, vector<1x32x128xbf16>
    %15 = vector.shape_cast %14 : vector<1x32x128xbf16> to vector<32x128xbf16>
    %16 = vector.shape_cast %13 : vector<32x128xbf16> to vector<1x32x128xbf16>
    tpu.vector_store %arg5[%c0_8, %c0_9, %c0_10], %16 {strides = array<i32>} : memref<1x32x128xbf16, #tpu.memory_space<vmem>>, vector<1x32x128xbf16>,
    return
  }
  func.func @transform_0(%arg0: i32, %arg1: i32) -> (i32, i32, i32) {
    %c0_i32 = arith.constant 0 : i32
    %c0_i32_0 = arith.constant 0 : i32
    return %arg0, %arg1, %c0_i32 : i32, i32, i32
  }
  func.func @transform_1(%arg0: i32, %arg1: i32) -> (i32, i32, i32) {
    %c0_i32 = arith.constant 0 : i32
    %c0_i32_0 = arith.constant 0 : i32
    %c0_i32_1 = arith.constant 0 : i32
    return %arg0, %c0_i32, %c0_i32_0 : i32, i32, i32
  }
  func.func @transform_2(%arg0: i32, %arg1: i32) -> (i32, i32, i32) {
    %c0_i32 = arith.constant 0 : i32
    %c0_i32_0 = arith.constant 0 : i32
    %c0_i32_1 = arith.constant 0 : i32
    return %arg0, %c0_i32, %c0_i32_0 : i32, i32, i32
  }
  func.func @transform_3(%arg0: i32, %arg1: i32) -> (i32, i32, i32) {
    %c0_i32 = arith.constant 0 : i32
    %c0_i32_0 = arith.constant 0 : i32
    return %arg0, %arg1, %c0_i32 : i32, i32, i32
  }
}

module attributes {stable_mosaic.version = 11 : i64} {
  func.func @_gn_relu_kernel(%arg0: i32, %arg1: i32, %arg2: memref<1x32x128xbf16, #tpu.memory_space<vmem>>, %arg3: memref<1x1x128xf32, #tpu.memory_space<vmem>>, %arg4: memref<1x1x128xf32, #tpu.memory_space<vmem>>, %arg5: memref<1x32x128xf32, #tpu.memory_space<vmem>>) attributes {dimension_semantics = [#tpu.dimension_semantics<parallel>, #tpu.dimension_semantics<parallel>], iteration_bounds = array<i64: 2, 1>, scalar_prefetch = 0 : i64, scratch_operands = 0 : i64, tpu.core_type = #tpu.core_type<tc>, window_params = [{transform_indices = @transform_0, window_bounds = array<i64: 1, 32, 128>}, {transform_indices = @transform_1, window_bounds = array<i64: 1, 1, 128>}, {transform_indices = @transform_2, window_bounds = array<i64: 1, 1, 128>}, {transform_indices = @transform_3, window_bounds = array<i64: 1, 32, 128>}]} {
    %c0 = arith.constant 0 : index
    %c0_0 = arith.constant 0 : index
    %c0_1 = arith.constant 0 : index
    %0 = vector.load %arg2[%c0, %c0_0, %c0_1] : memref<1x32x128xbf16, #tpu.memory_space<vmem>>, vector<1x32x128xbf16>
    %1 = vector.shape_cast %0 : vector<1x32x128xbf16> to vector<32x128xbf16>
    %2 = arith.extf %1 : vector<32x128xbf16> to vector<32x128xf32>
    %c0_2 = arith.constant 0 : index
    %c0_3 = arith.constant 0 : index
    %c0_4 = arith.constant 0 : index
    %3 = vector.load %arg3[%c0_2, %c0_3, %c0_4] : memref<1x1x128xf32, #tpu.memory_space<vmem>>, vector<1x1x128xf32>
    %4 = vector.shape_cast %3 : vector<1x1x128xf32> to vector<1x128xf32>
    %5 = vector.broadcast %4 : vector<1x128xf32> to vector<32x128xf32>
    %6 = arith.mulf %2, %5 : vector<32x128xf32>
    %c0_5 = arith.constant 0 : index
    %c0_6 = arith.constant 0 : index
    %c0_7 = arith.constant 0 : index
    %7 = vector.load %arg4[%c0_5, %c0_6, %c0_7] : memref<1x1x128xf32, #tpu.memory_space<vmem>>, vector<1x1x128xf32>
    %8 = vector.shape_cast %7 : vector<1x1x128xf32> to vector<1x128xf32>
    %9 = vector.broadcast %8 : vector<1x128xf32> to vector<32x128xf32>
    %10 = arith.addf %6, %9 : vector<32x128xf32>
    %cst = arith.constant 0.000000e+00 : f32
    %11 = vector.broadcast %cst : f32 to vector<32x128xf32>
    %12 = arith.maximumf %10, %11 : vector<32x128xf32>
    %c0_8 = arith.constant 0 : index
    %c0_9 = arith.constant 0 : index
    %c0_10 = arith.constant 0 : index
    %13 = vector.load %arg5[%c0_8, %c0_9, %c0_10] : memref<1x32x128xf32, #tpu.memory_space<vmem>>, vector<1x32x128xf32>
    %14 = vector.shape_cast %13 : vector<1x32x128xf32> to vector<32x128xf32>
    %15 = vector.shape_cast %12 : vector<32x128xf32> to vector<1x32x128xf32>
    tpu.vector_store %arg5[%c0_8, %c0_9, %c0_10], %15 {strides = array<i32>} : memref<1x32x128xf32, #tpu.memory_space<vmem>>, vector<1x32x128xf32>,
    return
  }
  func.func @transform_0(%arg0: i32, %arg1: i32) -> (i32, i32, i32) {
    %c0_i32 = arith.constant 0 : i32
    %c0_i32_0 = arith.constant 0 : i32
    return %arg0, %arg1, %c0_i32 : i32, i32, i32
  }
  func.func @transform_1(%arg0: i32, %arg1: i32) -> (i32, i32, i32) {
    %c0_i32 = arith.constant 0 : i32
    %c0_i32_0 = arith.constant 0 : i32
    %c0_i32_1 = arith.constant 0 : i32
    return %arg0, %c0_i32, %c0_i32_0 : i32, i32, i32
  }
  func.func @transform_2(%arg0: i32, %arg1: i32) -> (i32, i32, i32) {
    %c0_i32 = arith.constant 0 : i32
    %c0_i32_0 = arith.constant 0 : i32
    %c0_i32_1 = arith.constant 0 : i32
    return %arg0, %c0_i32, %c0_i32_0 : i32, i32, i32
  }
  func.func @transform_3(%arg0: i32, %arg1: i32) -> (i32, i32, i32) {
    %c0_i32 = arith.constant 0 : i32
    %c0_i32_0 = arith.constant 0 : i32
    return %arg0, %arg1, %c0_i32 : i32, i32, i32
  }
}

module attributes {stable_mosaic.version = 11 : i64} {
  func.func @_conv3d_stats_kernel(%arg0: i32, %arg1: i32, %arg2: memref<1x1x10x10x8xbf16, #tpu.memory_space<vmem>>, %arg3: memref<1x1x10x10x8xbf16, #tpu.memory_space<vmem>>, %arg4: memref<1x1x10x10x8xbf16, #tpu.memory_space<vmem>>, %arg5: memref<216x8xbf16, #tpu.memory_space<vmem>>, %arg6: memref<1x8xf32, #tpu.memory_space<vmem>>, %arg7: memref<1x1x64x8xbf16, #tpu.memory_space<vmem>>, %arg8: memref<1x1x1x8xf32, #tpu.memory_space<vmem>>, %arg9: memref<1x1x1x8xf32, #tpu.memory_space<vmem>>) attributes {dimension_semantics = [#tpu.dimension_semantics<parallel>, #tpu.dimension_semantics<parallel>], iteration_bounds = array<i64: 2, 8>, scalar_prefetch = 0 : i64, scratch_operands = 0 : i64, tpu.core_type = #tpu.core_type<tc>, window_params = [{transform_indices = @transform_0, window_bounds = array<i64: 1, 1, 10, 10, 8>}, {transform_indices = @transform_1, window_bounds = array<i64: 1, 1, 10, 10, 8>}, {transform_indices = @transform_2, window_bounds = array<i64: 1, 1, 10, 10, 8>}, {pipeline_mode = #tpu.pipeline_mode<synchronous>, transform_indices = @transform_3, window_bounds = array<i64: 216, 8>}, {pipeline_mode = #tpu.pipeline_mode<synchronous>, transform_indices = @transform_4, window_bounds = array<i64: 1, 8>}, {transform_indices = @transform_5, window_bounds = array<i64: 1, 1, 64, 8>}, {transform_indices = @transform_6, window_bounds = array<i64: 1, 1, 1, 8>}, {transform_indices = @transform_7, window_bounds = array<i64: 1, 1, 1, 8>}]} {
    %cst = arith.constant 0.000000e+00 : f32
    %0 = vector.broadcast %cst : f32 to vector<64x8xf32>
    %c0 = arith.constant 0 : index
    %c0_0 = arith.constant 0 : index
    %c0_1 = arith.constant 0 : index
    %c0_2 = arith.constant 0 : index
    %c0_3 = arith.constant 0 : index
    %1 = vector.load %arg2[%c0, %c0_0, %c0_1, %c0_2, %c0_3] : memref<1x1x10x10x8xbf16, #tpu.memory_space<vmem>>, vector<1x1x8x8x8xbf16>
    %2 = vector.shape_cast %1 : vector<1x1x8x8x8xbf16> to vector<8x8x8xbf16>
    %3 = vector.shape_cast %2 : vector<8x8x8xbf16> to vector<64x8xbf16>
    %c0_4 = arith.constant 0 : index
    %c0_5 = arith.constant 0 : index
    %4 = vector.load %arg5[%c0_4, %c0_5] : memref<216x8xbf16, #tpu.memory_space<vmem>>, vector<8x8xbf16>
    %cst_6 = arith.constant dense<0.000000e+00> : vector<64x8xf32>
    %5 = tpu.matmul %3, %4, %cst_6 {dimension_numbers = #tpu.dot_dimension_numbers<[1], [0], [0], [1], [0, 0, 1, 1], [], []>} : vector<64x8xbf16>, vector<8x8xbf16>, vector<64x8xf32> -> vector<64x8xf32>
    %6 = arith.addf %0, %5 : vector<64x8xf32>
    %c0_7 = arith.constant 0 : index
    %c0_8 = arith.constant 0 : index
    %c0_9 = arith.constant 0 : index
    %c1 = arith.constant 1 : index
    %c0_10 = arith.constant 0 : index
    %7 = vector.load %arg2[%c0_7, %c0_8, %c0_9, %c1, %c0_10] : memref<1x1x10x10x8xbf16, #tpu.memory_space<vmem>>, vector<1x1x8x8x8xbf16>
    %8 = vector.shape_cast %7 : vector<1x1x8x8x8xbf16> to vector<8x8x8xbf16>
    %9 = vector.shape_cast %8 : vector<8x8x8xbf16> to vector<64x8xbf16>
    %c8 = arith.constant 8 : index
    %c0_11 = arith.constant 0 : index
    %10 = vector.load %arg5[%c8, %c0_11] : memref<216x8xbf16, #tpu.memory_space<vmem>>, vector<8x8xbf16>
    %cst_12 = arith.constant dense<0.000000e+00> : vector<64x8xf32>
    %11 = tpu.matmul %9, %10, %cst_12 {dimension_numbers = #tpu.dot_dimension_numbers<[1], [0], [0], [1], [0, 0, 1, 1], [], []>} : vector<64x8xbf16>, vector<8x8xbf16>, vector<64x8xf32> -> vector<64x8xf32>
    %12 = arith.addf %6, %11 : vector<64x8xf32>
    %c0_13 = arith.constant 0 : index
    %c0_14 = arith.constant 0 : index
    %c0_15 = arith.constant 0 : index
    %c2 = arith.constant 2 : index
    %c0_16 = arith.constant 0 : index
    %13 = vector.load %arg2[%c0_13, %c0_14, %c0_15, %c2, %c0_16] : memref<1x1x10x10x8xbf16, #tpu.memory_space<vmem>>, vector<1x1x8x8x8xbf16>
    %14 = vector.shape_cast %13 : vector<1x1x8x8x8xbf16> to vector<8x8x8xbf16>
    %15 = vector.shape_cast %14 : vector<8x8x8xbf16> to vector<64x8xbf16>
    %c16 = arith.constant 16 : index
    %c0_17 = arith.constant 0 : index
    %16 = vector.load %arg5[%c16, %c0_17] : memref<216x8xbf16, #tpu.memory_space<vmem>>, vector<8x8xbf16>
    %cst_18 = arith.constant dense<0.000000e+00> : vector<64x8xf32>
    %17 = tpu.matmul %15, %16, %cst_18 {dimension_numbers = #tpu.dot_dimension_numbers<[1], [0], [0], [1], [0, 0, 1, 1], [], []>} : vector<64x8xbf16>, vector<8x8xbf16>, vector<64x8xf32> -> vector<64x8xf32>
    %18 = arith.addf %12, %17 : vector<64x8xf32>
    %c0_19 = arith.constant 0 : index
    %c0_20 = arith.constant 0 : index
    %c1_21 = arith.constant 1 : index
    %c0_22 = arith.constant 0 : index
    %c0_23 = arith.constant 0 : index
    %19 = vector.load %arg2[%c0_19, %c0_20, %c1_21, %c0_22, %c0_23] : memref<1x1x10x10x8xbf16, #tpu.memory_space<vmem>>, vector<1x1x8x8x8xbf16>
    %20 = vector.shape_cast %19 : vector<1x1x8x8x8xbf16> to vector<8x8x8xbf16>
    %21 = vector.shape_cast %20 : vector<8x8x8xbf16> to vector<64x8xbf16>
    %c24 = arith.constant 24 : index
    %c0_24 = arith.constant 0 : index
    %22 = vector.load %arg5[%c24, %c0_24] : memref<216x8xbf16, #tpu.memory_space<vmem>>, vector<8x8xbf16>
    %cst_25 = arith.constant dense<0.000000e+00> : vector<64x8xf32>
    %23 = tpu.matmul %21, %22, %cst_25 {dimension_numbers = #tpu.dot_dimension_numbers<[1], [0], [0], [1], [0, 0, 1, 1], [], []>} : vector<64x8xbf16>, vector<8x8xbf16>, vector<64x8xf32> -> vector<64x8xf32>
    %24 = arith.addf %18, %23 : vector<64x8xf32>
    %c0_26 = arith.constant 0 : index
    %c0_27 = arith.constant 0 : index
    %c1_28 = arith.constant 1 : index
    %c1_29 = arith.constant 1 : index
    %c0_30 = arith.constant 0 : index
    %25 = vector.load %arg2[%c0_26, %c0_27, %c1_28, %c1_29, %c0_30] : memref<1x1x10x10x8xbf16, #tpu.memory_space<vmem>>, vector<1x1x8x8x8xbf16>
    %26 = vector.shape_cast %25 : vector<1x1x8x8x8xbf16> to vector<8x8x8xbf16>
    %27 = vector.shape_cast %26 : vector<8x8x8xbf16> to vector<64x8xbf16>
    %c32 = arith.constant 32 : index
    %c0_31 = arith.constant 0 : index
    %28 = vector.load %arg5[%c32, %c0_31] : memref<216x8xbf16, #tpu.memory_space<vmem>>, vector<8x8xbf16>
    %cst_32 = arith.constant dense<0.000000e+00> : vector<64x8xf32>
    %29 = tpu.matmul %27, %28, %cst_32 {dimension_numbers = #tpu.dot_dimension_numbers<[1], [0], [0], [1], [0, 0, 1, 1], [], []>} : vector<64x8xbf16>, vector<8x8xbf16>, vector<64x8xf32> -> vector<64x8xf32>
    %30 = arith.addf %24, %29 : vector<64x8xf32>
    %c0_33 = arith.constant 0 : index
    %c0_34 = arith.constant 0 : index
    %c1_35 = arith.constant 1 : index
    %c2_36 = arith.constant 2 : index
    %c0_37 = arith.constant 0 : index
    %31 = vector.load %arg2[%c0_33, %c0_34, %c1_35, %c2_36, %c0_37] : memref<1x1x10x10x8xbf16, #tpu.memory_space<vmem>>, vector<1x1x8x8x8xbf16>
    %32 = vector.shape_cast %31 : vector<1x1x8x8x8xbf16> to vector<8x8x8xbf16>
    %33 = vector.shape_cast %32 : vector<8x8x8xbf16> to vector<64x8xbf16>
    %c40 = arith.constant 40 : index
    %c0_38 = arith.constant 0 : index
    %34 = vector.load %arg5[%c40, %c0_38] : memref<216x8xbf16, #tpu.memory_space<vmem>>, vector<8x8xbf16>
    %cst_39 = arith.constant dense<0.000000e+00> : vector<64x8xf32>
    %35 = tpu.matmul %33, %34, %cst_39 {dimension_numbers = #tpu.dot_dimension_numbers<[1], [0], [0], [1], [0, 0, 1, 1], [], []>} : vector<64x8xbf16>, vector<8x8xbf16>, vector<64x8xf32> -> vector<64x8xf32>
    %36 = arith.addf %30, %35 : vector<64x8xf32>
    %c0_40 = arith.constant 0 : index
    %c0_41 = arith.constant 0 : index
    %c2_42 = arith.constant 2 : index
    %c0_43 = arith.constant 0 : index
    %c0_44 = arith.constant 0 : index
    %37 = vector.load %arg2[%c0_40, %c0_41, %c2_42, %c0_43, %c0_44] : memref<1x1x10x10x8xbf16, #tpu.memory_space<vmem>>, vector<1x1x8x8x8xbf16>
    %38 = vector.shape_cast %37 : vector<1x1x8x8x8xbf16> to vector<8x8x8xbf16>
    %39 = vector.shape_cast %38 : vector<8x8x8xbf16> to vector<64x8xbf16>
    %c48 = arith.constant 48 : index
    %c0_45 = arith.constant 0 : index
    %40 = vector.load %arg5[%c48, %c0_45] : memref<216x8xbf16, #tpu.memory_space<vmem>>, vector<8x8xbf16>
    %cst_46 = arith.constant dense<0.000000e+00> : vector<64x8xf32>
    %41 = tpu.matmul %39, %40, %cst_46 {dimension_numbers = #tpu.dot_dimension_numbers<[1], [0], [0], [1], [0, 0, 1, 1], [], []>} : vector<64x8xbf16>, vector<8x8xbf16>, vector<64x8xf32> -> vector<64x8xf32>
    %42 = arith.addf %36, %41 : vector<64x8xf32>
    %c0_47 = arith.constant 0 : index
    %c0_48 = arith.constant 0 : index
    %c2_49 = arith.constant 2 : index
    %c1_50 = arith.constant 1 : index
    %c0_51 = arith.constant 0 : index
    %43 = vector.load %arg2[%c0_47, %c0_48, %c2_49, %c1_50, %c0_51] : memref<1x1x10x10x8xbf16, #tpu.memory_space<vmem>>, vector<1x1x8x8x8xbf16>
    %44 = vector.shape_cast %43 : vector<1x1x8x8x8xbf16> to vector<8x8x8xbf16>
    %45 = vector.shape_cast %44 : vector<8x8x8xbf16> to vector<64x8xbf16>
    %c56 = arith.constant 56 : index
    %c0_52 = arith.constant 0 : index
    %46 = vector.load %arg5[%c56, %c0_52] : memref<216x8xbf16, #tpu.memory_space<vmem>>, vector<8x8xbf16>
    %cst_53 = arith.constant dense<0.000000e+00> : vector<64x8xf32>
    %47 = tpu.matmul %45, %46, %cst_53 {dimension_numbers = #tpu.dot_dimension_numbers<[1], [0], [0], [1], [0, 0, 1, 1], [], []>} : vector<64x8xbf16>, vector<8x8xbf16>, vector<64x8xf32> -> vector<64x8xf32>
    %48 = arith.addf %42, %47 : vector<64x8xf32>
    %c0_54 = arith.constant 0 : index
    %c0_55 = arith.constant 0 : index
    %c2_56 = arith.constant 2 : index
    %c2_57 = arith.constant 2 : index
    %c0_58 = arith.constant 0 : index
    %49 = vector.load %arg2[%c0_54, %c0_55, %c2_56, %c2_57, %c0_58] : memref<1x1x10x10x8xbf16, #tpu.memory_space<vmem>>, vector<1x1x8x8x8xbf16>
    %50 = vector.shape_cast %49 : vector<1x1x8x8x8xbf16> to vector<8x8x8xbf16>
    %51 = vector.shape_cast %50 : vector<8x8x8xbf16> to vector<64x8xbf16>
    %c64 = arith.constant 64 : index
    %c0_59 = arith.constant 0 : index
    %52 = vector.load %arg5[%c64, %c0_59] : memref<216x8xbf16, #tpu.memory_space<vmem>>, vector<8x8xbf16>
    %cst_60 = arith.constant dense<0.000000e+00> : vector<64x8xf32>
    %53 = tpu.matmul %51, %52, %cst_60 {dimension_numbers = #tpu.dot_dimension_numbers<[1], [0], [0], [1], [0, 0, 1, 1], [], []>} : vector<64x8xbf16>, vector<8x8xbf16>, vector<64x8xf32> -> vector<64x8xf32>
    %54 = arith.addf %48, %53 : vector<64x8xf32>
    %c0_61 = arith.constant 0 : index
    %c0_62 = arith.constant 0 : index
    %c0_63 = arith.constant 0 : index
    %c0_64 = arith.constant 0 : index
    %c0_65 = arith.constant 0 : index
    %55 = vector.load %arg3[%c0_61, %c0_62, %c0_63, %c0_64, %c0_65] : memref<1x1x10x10x8xbf16, #tpu.memory_space<vmem>>, vector<1x1x8x8x8xbf16>
    %56 = vector.shape_cast %55 : vector<1x1x8x8x8xbf16> to vector<8x8x8xbf16>
    %57 = vector.shape_cast %56 : vector<8x8x8xbf16> to vector<64x8xbf16>
    %c72 = arith.constant 72 : index
    %c0_66 = arith.constant 0 : index
    %58 = vector.load %arg5[%c72, %c0_66] : memref<216x8xbf16, #tpu.memory_space<vmem>>, vector<8x8xbf16>
    %cst_67 = arith.constant dense<0.000000e+00> : vector<64x8xf32>
    %59 = tpu.matmul %57, %58, %cst_67 {dimension_numbers = #tpu.dot_dimension_numbers<[1], [0], [0], [1], [0, 0, 1, 1], [], []>} : vector<64x8xbf16>, vector<8x8xbf16>, vector<64x8xf32> -> vector<64x8xf32>
    %60 = arith.addf %54, %59 : vector<64x8xf32>
    %c0_68 = arith.constant 0 : index
    %c0_69 = arith.constant 0 : index
    %c0_70 = arith.constant 0 : index
    %c1_71 = arith.constant 1 : index
    %c0_72 = arith.constant 0 : index
    %61 = vector.load %arg3[%c0_68, %c0_69, %c0_70, %c1_71, %c0_72] : memref<1x1x10x10x8xbf16, #tpu.memory_space<vmem>>, vector<1x1x8x8x8xbf16>
    %62 = vector.shape_cast %61 : vector<1x1x8x8x8xbf16> to vector<8x8x8xbf16>
    %63 = vector.shape_cast %62 : vector<8x8x8xbf16> to vector<64x8xbf16>
    %c80 = arith.constant 80 : index
    %c0_73 = arith.constant 0 : index
    %64 = vector.load %arg5[%c80, %c0_73] : memref<216x8xbf16, #tpu.memory_space<vmem>>, vector<8x8xbf16>
    %cst_74 = arith.constant dense<0.000000e+00> : vector<64x8xf32>
    %65 = tpu.matmul %63, %64, %cst_74 {dimension_numbers = #tpu.dot_dimension_numbers<[1], [0], [0], [1], [0, 0, 1, 1], [], []>} : vector<64x8xbf16>, vector<8x8xbf16>, vector<64x8xf32> -> vector<64x8xf32>
    %66 = arith.addf %60, %65 : vector<64x8xf32>
    %c0_75 = arith.constant 0 : index
    %c0_76 = arith.constant 0 : index
    %c0_77 = arith.constant 0 : index
    %c2_78 = arith.constant 2 : index
    %c0_79 = arith.constant 0 : index
    %67 = vector.load %arg3[%c0_75, %c0_76, %c0_77, %c2_78, %c0_79] : memref<1x1x10x10x8xbf16, #tpu.memory_space<vmem>>, vector<1x1x8x8x8xbf16>
    %68 = vector.shape_cast %67 : vector<1x1x8x8x8xbf16> to vector<8x8x8xbf16>
    %69 = vector.shape_cast %68 : vector<8x8x8xbf16> to vector<64x8xbf16>
    %c88 = arith.constant 88 : index
    %c0_80 = arith.constant 0 : index
    %70 = vector.load %arg5[%c88, %c0_80] : memref<216x8xbf16, #tpu.memory_space<vmem>>, vector<8x8xbf16>
    %cst_81 = arith.constant dense<0.000000e+00> : vector<64x8xf32>
    %71 = tpu.matmul %69, %70, %cst_81 {dimension_numbers = #tpu.dot_dimension_numbers<[1], [0], [0], [1], [0, 0, 1, 1], [], []>} : vector<64x8xbf16>, vector<8x8xbf16>, vector<64x8xf32> -> vector<64x8xf32>
    %72 = arith.addf %66, %71 : vector<64x8xf32>
    %c0_82 = arith.constant 0 : index
    %c0_83 = arith.constant 0 : index
    %c1_84 = arith.constant 1 : index
    %c0_85 = arith.constant 0 : index
    %c0_86 = arith.constant 0 : index
    %73 = vector.load %arg3[%c0_82, %c0_83, %c1_84, %c0_85, %c0_86] : memref<1x1x10x10x8xbf16, #tpu.memory_space<vmem>>, vector<1x1x8x8x8xbf16>
    %74 = vector.shape_cast %73 : vector<1x1x8x8x8xbf16> to vector<8x8x8xbf16>
    %75 = vector.shape_cast %74 : vector<8x8x8xbf16> to vector<64x8xbf16>
    %c96 = arith.constant 96 : index
    %c0_87 = arith.constant 0 : index
    %76 = vector.load %arg5[%c96, %c0_87] : memref<216x8xbf16, #tpu.memory_space<vmem>>, vector<8x8xbf16>
    %cst_88 = arith.constant dense<0.000000e+00> : vector<64x8xf32>
    %77 = tpu.matmul %75, %76, %cst_88 {dimension_numbers = #tpu.dot_dimension_numbers<[1], [0], [0], [1], [0, 0, 1, 1], [], []>} : vector<64x8xbf16>, vector<8x8xbf16>, vector<64x8xf32> -> vector<64x8xf32>
    %78 = arith.addf %72, %77 : vector<64x8xf32>
    %c0_89 = arith.constant 0 : index
    %c0_90 = arith.constant 0 : index
    %c1_91 = arith.constant 1 : index
    %c1_92 = arith.constant 1 : index
    %c0_93 = arith.constant 0 : index
    %79 = vector.load %arg3[%c0_89, %c0_90, %c1_91, %c1_92, %c0_93] : memref<1x1x10x10x8xbf16, #tpu.memory_space<vmem>>, vector<1x1x8x8x8xbf16>
    %80 = vector.shape_cast %79 : vector<1x1x8x8x8xbf16> to vector<8x8x8xbf16>
    %81 = vector.shape_cast %80 : vector<8x8x8xbf16> to vector<64x8xbf16>
    %c104 = arith.constant 104 : index
    %c0_94 = arith.constant 0 : index
    %82 = vector.load %arg5[%c104, %c0_94] : memref<216x8xbf16, #tpu.memory_space<vmem>>, vector<8x8xbf16>
    %cst_95 = arith.constant dense<0.000000e+00> : vector<64x8xf32>
    %83 = tpu.matmul %81, %82, %cst_95 {dimension_numbers = #tpu.dot_dimension_numbers<[1], [0], [0], [1], [0, 0, 1, 1], [], []>} : vector<64x8xbf16>, vector<8x8xbf16>, vector<64x8xf32> -> vector<64x8xf32>
    %84 = arith.addf %78, %83 : vector<64x8xf32>
    %c0_96 = arith.constant 0 : index
    %c0_97 = arith.constant 0 : index
    %c1_98 = arith.constant 1 : index
    %c2_99 = arith.constant 2 : index
    %c0_100 = arith.constant 0 : index
    %85 = vector.load %arg3[%c0_96, %c0_97, %c1_98, %c2_99, %c0_100] : memref<1x1x10x10x8xbf16, #tpu.memory_space<vmem>>, vector<1x1x8x8x8xbf16>
    %86 = vector.shape_cast %85 : vector<1x1x8x8x8xbf16> to vector<8x8x8xbf16>
    %87 = vector.shape_cast %86 : vector<8x8x8xbf16> to vector<64x8xbf16>
    %c112 = arith.constant 112 : index
    %c0_101 = arith.constant 0 : index
    %88 = vector.load %arg5[%c112, %c0_101] : memref<216x8xbf16, #tpu.memory_space<vmem>>, vector<8x8xbf16>
    %cst_102 = arith.constant dense<0.000000e+00> : vector<64x8xf32>
    %89 = tpu.matmul %87, %88, %cst_102 {dimension_numbers = #tpu.dot_dimension_numbers<[1], [0], [0], [1], [0, 0, 1, 1], [], []>} : vector<64x8xbf16>, vector<8x8xbf16>, vector<64x8xf32> -> vector<64x8xf32>
    %90 = arith.addf %84, %89 : vector<64x8xf32>
    %c0_103 = arith.constant 0 : index
    %c0_104 = arith.constant 0 : index
    %c2_105 = arith.constant 2 : index
    %c0_106 = arith.constant 0 : index
    %c0_107 = arith.constant 0 : index
    %91 = vector.load %arg3[%c0_103, %c0_104, %c2_105, %c0_106, %c0_107] : memref<1x1x10x10x8xbf16, #tpu.memory_space<vmem>>, vector<1x1x8x8x8xbf16>
    %92 = vector.shape_cast %91 : vector<1x1x8x8x8xbf16> to vector<8x8x8xbf16>
    %93 = vector.shape_cast %92 : vector<8x8x8xbf16> to vector<64x8xbf16>
    %c120 = arith.constant 120 : index
    %c0_108 = arith.constant 0 : index
    %94 = vector.load %arg5[%c120, %c0_108] : memref<216x8xbf16, #tpu.memory_space<vmem>>, vector<8x8xbf16>
    %cst_109 = arith.constant dense<0.000000e+00> : vector<64x8xf32>
    %95 = tpu.matmul %93, %94, %cst_109 {dimension_numbers = #tpu.dot_dimension_numbers<[1], [0], [0], [1], [0, 0, 1, 1], [], []>} : vector<64x8xbf16>, vector<8x8xbf16>, vector<64x8xf32> -> vector<64x8xf32>
    %96 = arith.addf %90, %95 : vector<64x8xf32>
    %c0_110 = arith.constant 0 : index
    %c0_111 = arith.constant 0 : index
    %c2_112 = arith.constant 2 : index
    %c1_113 = arith.constant 1 : index
    %c0_114 = arith.constant 0 : index
    %97 = vector.load %arg3[%c0_110, %c0_111, %c2_112, %c1_113, %c0_114] : memref<1x1x10x10x8xbf16, #tpu.memory_space<vmem>>, vector<1x1x8x8x8xbf16>
    %98 = vector.shape_cast %97 : vector<1x1x8x8x8xbf16> to vector<8x8x8xbf16>
    %99 = vector.shape_cast %98 : vector<8x8x8xbf16> to vector<64x8xbf16>
    %c128 = arith.constant 128 : index
    %c0_115 = arith.constant 0 : index
    %100 = vector.load %arg5[%c128, %c0_115] : memref<216x8xbf16, #tpu.memory_space<vmem>>, vector<8x8xbf16>
    %cst_116 = arith.constant dense<0.000000e+00> : vector<64x8xf32>
    %101 = tpu.matmul %99, %100, %cst_116 {dimension_numbers = #tpu.dot_dimension_numbers<[1], [0], [0], [1], [0, 0, 1, 1], [], []>} : vector<64x8xbf16>, vector<8x8xbf16>, vector<64x8xf32> -> vector<64x8xf32>
    %102 = arith.addf %96, %101 : vector<64x8xf32>
    %c0_117 = arith.constant 0 : index
    %c0_118 = arith.constant 0 : index
    %c2_119 = arith.constant 2 : index
    %c2_120 = arith.constant 2 : index
    %c0_121 = arith.constant 0 : index
    %103 = vector.load %arg3[%c0_117, %c0_118, %c2_119, %c2_120, %c0_121] : memref<1x1x10x10x8xbf16, #tpu.memory_space<vmem>>, vector<1x1x8x8x8xbf16>
    %104 = vector.shape_cast %103 : vector<1x1x8x8x8xbf16> to vector<8x8x8xbf16>
    %105 = vector.shape_cast %104 : vector<8x8x8xbf16> to vector<64x8xbf16>
    %c136 = arith.constant 136 : index
    %c0_122 = arith.constant 0 : index
    %106 = vector.load %arg5[%c136, %c0_122] : memref<216x8xbf16, #tpu.memory_space<vmem>>, vector<8x8xbf16>
    %cst_123 = arith.constant dense<0.000000e+00> : vector<64x8xf32>
    %107 = tpu.matmul %105, %106, %cst_123 {dimension_numbers = #tpu.dot_dimension_numbers<[1], [0], [0], [1], [0, 0, 1, 1], [], []>} : vector<64x8xbf16>, vector<8x8xbf16>, vector<64x8xf32> -> vector<64x8xf32>
    %108 = arith.addf %102, %107 : vector<64x8xf32>
    %c0_124 = arith.constant 0 : index
    %c0_125 = arith.constant 0 : index
    %c0_126 = arith.constant 0 : index
    %c0_127 = arith.constant 0 : index
    %c0_128 = arith.constant 0 : index
    %109 = vector.load %arg4[%c0_124, %c0_125, %c0_126, %c0_127, %c0_128] : memref<1x1x10x10x8xbf16, #tpu.memory_space<vmem>>, vector<1x1x8x8x8xbf16>
    %110 = vector.shape_cast %109 : vector<1x1x8x8x8xbf16> to vector<8x8x8xbf16>
    %111 = vector.shape_cast %110 : vector<8x8x8xbf16> to vector<64x8xbf16>
    %c144 = arith.constant 144 : index
    %c0_129 = arith.constant 0 : index
    %112 = vector.load %arg5[%c144, %c0_129] : memref<216x8xbf16, #tpu.memory_space<vmem>>, vector<8x8xbf16>
    %cst_130 = arith.constant dense<0.000000e+00> : vector<64x8xf32>
    %113 = tpu.matmul %111, %112, %cst_130 {dimension_numbers = #tpu.dot_dimension_numbers<[1], [0], [0], [1], [0, 0, 1, 1], [], []>} : vector<64x8xbf16>, vector<8x8xbf16>, vector<64x8xf32> -> vector<64x8xf32>
    %114 = arith.addf %108, %113 : vector<64x8xf32>
    %c0_131 = arith.constant 0 : index
    %c0_132 = arith.constant 0 : index
    %c0_133 = arith.constant 0 : index
    %c1_134 = arith.constant 1 : index
    %c0_135 = arith.constant 0 : index
    %115 = vector.load %arg4[%c0_131, %c0_132, %c0_133, %c1_134, %c0_135] : memref<1x1x10x10x8xbf16, #tpu.memory_space<vmem>>, vector<1x1x8x8x8xbf16>
    %116 = vector.shape_cast %115 : vector<1x1x8x8x8xbf16> to vector<8x8x8xbf16>
    %117 = vector.shape_cast %116 : vector<8x8x8xbf16> to vector<64x8xbf16>
    %c152 = arith.constant 152 : index
    %c0_136 = arith.constant 0 : index
    %118 = vector.load %arg5[%c152, %c0_136] : memref<216x8xbf16, #tpu.memory_space<vmem>>, vector<8x8xbf16>
    %cst_137 = arith.constant dense<0.000000e+00> : vector<64x8xf32>
    %119 = tpu.matmul %117, %118, %cst_137 {dimension_numbers = #tpu.dot_dimension_numbers<[1], [0], [0], [1], [0, 0, 1, 1], [], []>} : vector<64x8xbf16>, vector<8x8xbf16>, vector<64x8xf32> -> vector<64x8xf32>
    %120 = arith.addf %114, %119 : vector<64x8xf32>
    %c0_138 = arith.constant 0 : index
    %c0_139 = arith.constant 0 : index
    %c0_140 = arith.constant 0 : index
    %c2_141 = arith.constant 2 : index
    %c0_142 = arith.constant 0 : index
    %121 = vector.load %arg4[%c0_138, %c0_139, %c0_140, %c2_141, %c0_142] : memref<1x1x10x10x8xbf16, #tpu.memory_space<vmem>>, vector<1x1x8x8x8xbf16>
    %122 = vector.shape_cast %121 : vector<1x1x8x8x8xbf16> to vector<8x8x8xbf16>
    %123 = vector.shape_cast %122 : vector<8x8x8xbf16> to vector<64x8xbf16>
    %c160 = arith.constant 160 : index
    %c0_143 = arith.constant 0 : index
    %124 = vector.load %arg5[%c160, %c0_143] : memref<216x8xbf16, #tpu.memory_space<vmem>>, vector<8x8xbf16>
    %cst_144 = arith.constant dense<0.000000e+00> : vector<64x8xf32>
    %125 = tpu.matmul %123, %124, %cst_144 {dimension_numbers = #tpu.dot_dimension_numbers<[1], [0], [0], [1], [0, 0, 1, 1], [], []>} : vector<64x8xbf16>, vector<8x8xbf16>, vector<64x8xf32> -> vector<64x8xf32>
    %126 = arith.addf %120, %125 : vector<64x8xf32>
    %c0_145 = arith.constant 0 : index
    %c0_146 = arith.constant 0 : index
    %c1_147 = arith.constant 1 : index
    %c0_148 = arith.constant 0 : index
    %c0_149 = arith.constant 0 : index
    %127 = vector.load %arg4[%c0_145, %c0_146, %c1_147, %c0_148, %c0_149] : memref<1x1x10x10x8xbf16, #tpu.memory_space<vmem>>, vector<1x1x8x8x8xbf16>
    %128 = vector.shape_cast %127 : vector<1x1x8x8x8xbf16> to vector<8x8x8xbf16>
    %129 = vector.shape_cast %128 : vector<8x8x8xbf16> to vector<64x8xbf16>
    %c168 = arith.constant 168 : index
    %c0_150 = arith.constant 0 : index
    %130 = vector.load %arg5[%c168, %c0_150] : memref<216x8xbf16, #tpu.memory_space<vmem>>, vector<8x8xbf16>
    %cst_151 = arith.constant dense<0.000000e+00> : vector<64x8xf32>
    %131 = tpu.matmul %129, %130, %cst_151 {dimension_numbers = #tpu.dot_dimension_numbers<[1], [0], [0], [1], [0, 0, 1, 1], [], []>} : vector<64x8xbf16>, vector<8x8xbf16>, vector<64x8xf32> -> vector<64x8xf32>
    %132 = arith.addf %126, %131 : vector<64x8xf32>
    %c0_152 = arith.constant 0 : index
    %c0_153 = arith.constant 0 : index
    %c1_154 = arith.constant 1 : index
    %c1_155 = arith.constant 1 : index
    %c0_156 = arith.constant 0 : index
    %133 = vector.load %arg4[%c0_152, %c0_153, %c1_154, %c1_155, %c0_156] : memref<1x1x10x10x8xbf16, #tpu.memory_space<vmem>>, vector<1x1x8x8x8xbf16>
    %134 = vector.shape_cast %133 : vector<1x1x8x8x8xbf16> to vector<8x8x8xbf16>
    %135 = vector.shape_cast %134 : vector<8x8x8xbf16> to vector<64x8xbf16>
    %c176 = arith.constant 176 : index
    %c0_157 = arith.constant 0 : index
    %136 = vector.load %arg5[%c176, %c0_157] : memref<216x8xbf16, #tpu.memory_space<vmem>>, vector<8x8xbf16>
    %cst_158 = arith.constant dense<0.000000e+00> : vector<64x8xf32>
    %137 = tpu.matmul %135, %136, %cst_158 {dimension_numbers = #tpu.dot_dimension_numbers<[1], [0], [0], [1], [0, 0, 1, 1], [], []>} : vector<64x8xbf16>, vector<8x8xbf16>, vector<64x8xf32> -> vector<64x8xf32>
    %138 = arith.addf %132, %137 : vector<64x8xf32>
    %c0_159 = arith.constant 0 : index
    %c0_160 = arith.constant 0 : index
    %c1_161 = arith.constant 1 : index
    %c2_162 = arith.constant 2 : index
    %c0_163 = arith.constant 0 : index
    %139 = vector.load %arg4[%c0_159, %c0_160, %c1_161, %c2_162, %c0_163] : memref<1x1x10x10x8xbf16, #tpu.memory_space<vmem>>, vector<1x1x8x8x8xbf16>
    %140 = vector.shape_cast %139 : vector<1x1x8x8x8xbf16> to vector<8x8x8xbf16>
    %141 = vector.shape_cast %140 : vector<8x8x8xbf16> to vector<64x8xbf16>
    %c184 = arith.constant 184 : index
    %c0_164 = arith.constant 0 : index
    %142 = vector.load %arg5[%c184, %c0_164] : memref<216x8xbf16, #tpu.memory_space<vmem>>, vector<8x8xbf16>
    %cst_165 = arith.constant dense<0.000000e+00> : vector<64x8xf32>
    %143 = tpu.matmul %141, %142, %cst_165 {dimension_numbers = #tpu.dot_dimension_numbers<[1], [0], [0], [1], [0, 0, 1, 1], [], []>} : vector<64x8xbf16>, vector<8x8xbf16>, vector<64x8xf32> -> vector<64x8xf32>
    %144 = arith.addf %138, %143 : vector<64x8xf32>
    %c0_166 = arith.constant 0 : index
    %c0_167 = arith.constant 0 : index
    %c2_168 = arith.constant 2 : index
    %c0_169 = arith.constant 0 : index
    %c0_170 = arith.constant 0 : index
    %145 = vector.load %arg4[%c0_166, %c0_167, %c2_168, %c0_169, %c0_170] : memref<1x1x10x10x8xbf16, #tpu.memory_space<vmem>>, vector<1x1x8x8x8xbf16>
    %146 = vector.shape_cast %145 : vector<1x1x8x8x8xbf16> to vector<8x8x8xbf16>
    %147 = vector.shape_cast %146 : vector<8x8x8xbf16> to vector<64x8xbf16>
    %c192 = arith.constant 192 : index
    %c0_171 = arith.constant 0 : index
    %148 = vector.load %arg5[%c192, %c0_171] : memref<216x8xbf16, #tpu.memory_space<vmem>>, vector<8x8xbf16>
    %cst_172 = arith.constant dense<0.000000e+00> : vector<64x8xf32>
    %149 = tpu.matmul %147, %148, %cst_172 {dimension_numbers = #tpu.dot_dimension_numbers<[1], [0], [0], [1], [0, 0, 1, 1], [], []>} : vector<64x8xbf16>, vector<8x8xbf16>, vector<64x8xf32> -> vector<64x8xf32>
    %150 = arith.addf %144, %149 : vector<64x8xf32>
    %c0_173 = arith.constant 0 : index
    %c0_174 = arith.constant 0 : index
    %c2_175 = arith.constant 2 : index
    %c1_176 = arith.constant 1 : index
    %c0_177 = arith.constant 0 : index
    %151 = vector.load %arg4[%c0_173, %c0_174, %c2_175, %c1_176, %c0_177] : memref<1x1x10x10x8xbf16, #tpu.memory_space<vmem>>, vector<1x1x8x8x8xbf16>
    %152 = vector.shape_cast %151 : vector<1x1x8x8x8xbf16> to vector<8x8x8xbf16>
    %153 = vector.shape_cast %152 : vector<8x8x8xbf16> to vector<64x8xbf16>
    %c200 = arith.constant 200 : index
    %c0_178 = arith.constant 0 : index
    %154 = vector.load %arg5[%c200, %c0_178] : memref<216x8xbf16, #tpu.memory_space<vmem>>, vector<8x8xbf16>
    %cst_179 = arith.constant dense<0.000000e+00> : vector<64x8xf32>
    %155 = tpu.matmul %153, %154, %cst_179 {dimension_numbers = #tpu.dot_dimension_numbers<[1], [0], [0], [1], [0, 0, 1, 1], [], []>} : vector<64x8xbf16>, vector<8x8xbf16>, vector<64x8xf32> -> vector<64x8xf32>
    %156 = arith.addf %150, %155 : vector<64x8xf32>
    %c0_180 = arith.constant 0 : index
    %c0_181 = arith.constant 0 : index
    %c2_182 = arith.constant 2 : index
    %c2_183 = arith.constant 2 : index
    %c0_184 = arith.constant 0 : index
    %157 = vector.load %arg4[%c0_180, %c0_181, %c2_182, %c2_183, %c0_184] : memref<1x1x10x10x8xbf16, #tpu.memory_space<vmem>>, vector<1x1x8x8x8xbf16>
    %158 = vector.shape_cast %157 : vector<1x1x8x8x8xbf16> to vector<8x8x8xbf16>
    %159 = vector.shape_cast %158 : vector<8x8x8xbf16> to vector<64x8xbf16>
    %c208 = arith.constant 208 : index
    %c0_185 = arith.constant 0 : index
    %160 = vector.load %arg5[%c208, %c0_185] : memref<216x8xbf16, #tpu.memory_space<vmem>>, vector<8x8xbf16>
    %cst_186 = arith.constant dense<0.000000e+00> : vector<64x8xf32>
    %161 = tpu.matmul %159, %160, %cst_186 {dimension_numbers = #tpu.dot_dimension_numbers<[1], [0], [0], [1], [0, 0, 1, 1], [], []>} : vector<64x8xbf16>, vector<8x8xbf16>, vector<64x8xf32> -> vector<64x8xf32>
    %162 = arith.addf %156, %161 : vector<64x8xf32>
    %c0_187 = arith.constant 0 : index
    %c0_188 = arith.constant 0 : index
    %163 = vector.load %arg6[%c0_187, %c0_188] : memref<1x8xf32, #tpu.memory_space<vmem>>, vector<1x8xf32>
    %164 = vector.broadcast %163 : vector<1x8xf32> to vector<64x8xf32>
    %165 = arith.addf %162, %164 : vector<64x8xf32>
    %166 = arith.truncf %165 : vector<64x8xf32> to vector<64x8xbf16>
    %c0_189 = arith.constant 0 : index
    %c0_190 = arith.constant 0 : index
    %c0_191 = arith.constant 0 : index
    %c0_192 = arith.constant 0 : index
    %167 = vector.load %arg7[%c0_189, %c0_190, %c0_191, %c0_192] : memref<1x1x64x8xbf16, #tpu.memory_space<vmem>>, vector<1x1x64x8xbf16>
    %168 = vector.shape_cast %167 : vector<1x1x64x8xbf16> to vector<64x8xbf16>
    %169 = vector.shape_cast %166 : vector<64x8xbf16> to vector<1x1x64x8xbf16>
    tpu.vector_store %arg7[%c0_189, %c0_190, %c0_191, %c0_192], %169 {strides = array<i32>} : memref<1x1x64x8xbf16, #tpu.memory_space<vmem>>, vector<1x1x64x8xbf16>,
    %170 = arith.extf %166 : vector<64x8xbf16> to vector<64x8xf32>
    %cst_193 = arith.constant dense<0.000000e+00> : vector<8xf32>
    %171 = vector.multi_reduction <add>, %170, %cst_193 [0] : vector<64x8xf32> to vector<8xf32>
    %172 = vector.shape_cast %171 : vector<8xf32> to vector<1x8xf32>
    %c0_194 = arith.constant 0 : index
    %c0_195 = arith.constant 0 : index
    %c0_196 = arith.constant 0 : index
    %c0_197 = arith.constant 0 : index
    %173 = vector.load %arg8[%c0_194, %c0_195, %c0_196, %c0_197] : memref<1x1x1x8xf32, #tpu.memory_space<vmem>>, vector<1x1x1x8xf32>
    %174 = vector.shape_cast %173 : vector<1x1x1x8xf32> to vector<1x8xf32>
    %175 = vector.shape_cast %172 : vector<1x8xf32> to vector<1x1x1x8xf32>
    tpu.vector_store %arg8[%c0_194, %c0_195, %c0_196, %c0_197], %175 {strides = array<i32>} : memref<1x1x1x8xf32, #tpu.memory_space<vmem>>, vector<1x1x1x8xf32>,
    %176 = arith.mulf %170, %170 : vector<64x8xf32>
    %cst_198 = arith.constant dense<0.000000e+00> : vector<8xf32>
    %177 = vector.multi_reduction <add>, %176, %cst_198 [0] : vector<64x8xf32> to vector<8xf32>
    %178 = vector.shape_cast %177 : vector<8xf32> to vector<1x8xf32>
    %c0_199 = arith.constant 0 : index
    %c0_200 = arith.constant 0 : index
    %c0_201 = arith.constant 0 : index
    %c0_202 = arith.constant 0 : index
    %179 = vector.load %arg9[%c0_199, %c0_200, %c0_201, %c0_202] : memref<1x1x1x8xf32, #tpu.memory_space<vmem>>, vector<1x1x1x8xf32>
    %180 = vector.shape_cast %179 : vector<1x1x1x8xf32> to vector<1x8xf32>
    %181 = vector.shape_cast %178 : vector<1x8xf32> to vector<1x1x1x8xf32>
    tpu.vector_store %arg9[%c0_199, %c0_200, %c0_201, %c0_202], %181 {strides = array<i32>} : memref<1x1x1x8xf32, #tpu.memory_space<vmem>>, vector<1x1x1x8xf32>,
    return
  }
  func.func @transform_0(%arg0: i32, %arg1: i32) -> (i32, i32, i32, i32, i32) {
    %c0_i32 = arith.constant 0 : i32
    %0 = arith.addi %arg1, %c0_i32 : i32
    %c0_i32_0 = arith.constant 0 : i32
    %c0_i32_1 = arith.constant 0 : i32
    %c0_i32_2 = arith.constant 0 : i32
    %c0_i32_3 = arith.constant 0 : i32
    return %arg0, %0, %c0_i32_0, %c0_i32_1, %c0_i32_2 : i32, i32, i32, i32, i32
  }
  func.func @transform_1(%arg0: i32, %arg1: i32) -> (i32, i32, i32, i32, i32) {
    %c1_i32 = arith.constant 1 : i32
    %0 = arith.addi %arg1, %c1_i32 : i32
    %c0_i32 = arith.constant 0 : i32
    %c0_i32_0 = arith.constant 0 : i32
    %c0_i32_1 = arith.constant 0 : i32
    %c0_i32_2 = arith.constant 0 : i32
    return %arg0, %0, %c0_i32, %c0_i32_0, %c0_i32_1 : i32, i32, i32, i32, i32
  }
  func.func @transform_2(%arg0: i32, %arg1: i32) -> (i32, i32, i32, i32, i32) {
    %c2_i32 = arith.constant 2 : i32
    %0 = arith.addi %arg1, %c2_i32 : i32
    %c0_i32 = arith.constant 0 : i32
    %c0_i32_0 = arith.constant 0 : i32
    %c0_i32_1 = arith.constant 0 : i32
    %c0_i32_2 = arith.constant 0 : i32
    return %arg0, %0, %c0_i32, %c0_i32_0, %c0_i32_1 : i32, i32, i32, i32, i32
  }
  func.func @transform_3(%arg0: i32, %arg1: i32) -> (i32, i32) {
    %c0_i32 = arith.constant 0 : i32
    %c0_i32_0 = arith.constant 0 : i32
    %c0_i32_1 = arith.constant 0 : i32
    return %c0_i32, %c0_i32_0 : i32, i32
  }
  func.func @transform_4(%arg0: i32, %arg1: i32) -> (i32, i32) {
    %c0_i32 = arith.constant 0 : i32
    %c0_i32_0 = arith.constant 0 : i32
    %c0_i32_1 = arith.constant 0 : i32
    return %c0_i32, %c0_i32_0 : i32, i32
  }
  func.func @transform_5(%arg0: i32, %arg1: i32) -> (i32, i32, i32, i32) {
    %c0_i32 = arith.constant 0 : i32
    %c0_i32_0 = arith.constant 0 : i32
    %c0_i32_1 = arith.constant 0 : i32
    return %arg0, %arg1, %c0_i32, %c0_i32_0 : i32, i32, i32, i32
  }
  func.func @transform_6(%arg0: i32, %arg1: i32) -> (i32, i32, i32, i32) {
    %c0_i32 = arith.constant 0 : i32
    %c0_i32_0 = arith.constant 0 : i32
    %c0_i32_1 = arith.constant 0 : i32
    return %arg0, %arg1, %c0_i32, %c0_i32_0 : i32, i32, i32, i32
  }
  func.func @transform_7(%arg0: i32, %arg1: i32) -> (i32, i32, i32, i32) {
    %c0_i32 = arith.constant 0 : i32
    %c0_i32_0 = arith.constant 0 : i32
    %c0_i32_1 = arith.constant 0 : i32
    return %arg0, %arg1, %c0_i32, %c0_i32_0 : i32, i32, i32, i32
  }
}

</mosaic_0001>

<llo_original>
// kernel: unet_conv3_forward.5
$region0: #{unet_conv3_forward.5}
  #allocation0 [shape = 'u32[]', space=smem, size = 0x4, offset = 0x4, fixed_abs, tag = 'smem constant byte address 0x4 - core index']
  #allocation1 [shape = 'u32[144,128]{1,0:T(1,128)}', space=vmem, size = 0x12000, scoped, tag = 'internal scratch']
  %s0 = inlined_call_operand.vmem [shape: bf16[2,32,128], index: 0, kind: input, shape index: {}]
  %s1 = inlined_call_operand.vmem [shape: f32[2,1,128], index: 1, kind: input, shape index: {}]
  %s2 = inlined_call_operand.vmem [shape: f32[2,1,128], index: 2, kind: input, shape index: {}]
  %s3 = inlined_call_operand.vmem [shape: bf16[2,32,128], index: 3, kind: output, shape index: {}]
  %s4 = sld [smem:[#allocation0]]
  $region45: #{unet_conv3_forward.5} parent=0
    _
  %s6 = ssub.s32 1, %s4
  %s7 = scalar_select 0, %s6, %s4
  loop: start=0, step=1, limit=4
  $region2: #{unet_conv3_forward.5} parent=0 // loop_pre_header
    _
  $region3: #{unet_conv3_forward.5} parent=0 // loop_header
    %s9 = sphi 0, %s13
    %p10 = scmp.ge.s32.totalorder %s9, 4
    %s16 = sphi 0, %s28
    %s17 = sphi 0, %s24
    %s18 = sphi 0, %s16
    %s19 = sphi 0, %s17
    %s20 = sphi 0, %s18
    %s21 = sphi 0, %s19
    %s33 = sphi 0, %s35
    %s36 = sphi 0, %s33
    %s37 = sphi 0, %s36
    %s53 = sphi 0, %s37
    %s59 = sphi 0, %s61
    %s62 = sphi 0, %s59
    %s63 = sphi 0, %s62
    %s79 = sphi 0, %s63
    %s85 = sphi 0, %s87
    %s88 = sphi 0, %s85
    %s89 = sphi 0, %s88
    %s105 = sphi 0, %s89
    %s113 = sphi 0, %s115
    %s116 = sphi 0, %s113
    %s117 = sphi 0, %s116
    %s133 = sphi 0, %s117
  $region4: #{unet_conv3_forward.5} parent=0 // loop_header_branch
    %12 = sbr.rel (%p10) target = $region8
  $region5: #{unet_conv3_forward.5} parent=0 // loop_body
    %s14 = ssub.s32 %s9, 1
    %s15 = ssub.s32 %s9, 2
    %s22 = sadd.s32 1, %s17
    %p23 = scmp.ge.s32.totalorder %s22, 1
    %s24 = scalar_select %p23, 0, %s22
    %s25 = sadd.s32 1, %s16
    %s26 = scalar_select %p23, %s25, %s16
    %p27 = scmp.ge.s32.totalorder %s26, 2
    %s28 = scalar_select %p27, 0, %s26
    %s29 = ssub.s32 %s16, %s28
    %s30 = ssub.s32 %s17, %s24
    %s31 = sor.u32 %s29, %s30
    %p32 = scmp.eq.s32.totalorder %s31, 0
    %s34 = sadd.s32 %s33, 1
    %s35 = scalar_select %p32, %s33, %s34
    %p38 = pneg %p32
    %p39 = scmp.eq.s32.totalorder %s9, 1
    %p40 = por %p38, %p39
    %p41 = scmp.ne.s32.totalorder %s33, %s36
    %p42 = scmp.eq.s32.totalorder %s9, 0
    %p43 = por %p41, %p42
    %p44 = scmp.ne.s32.totalorder %s33, %s36
    %p45 = scmp.eq.s32.totalorder %s14, 1
    %p46 = por %p44, %p45
    %p47 = scmp.ne.s32.totalorder %s36, %s37
    %p48 = scmp.eq.s32.totalorder %s14, 0
    %p49 = por %p47, %p48
    %p50 = scmp.ne.s32.totalorder %s36, %s37
    %p51 = scmp.eq.s32.totalorder %s15, 1
    %p52 = por %p50, %p51
    %p54 = scmp.ne.s32.totalorder %s37, %s53
    %p55 = scmp.eq.s32.totalorder %s15, 0
    %p56 = por %p54, %p55
    %s57 = ssub.s32 %s16, %s28
    %p58 = scmp.eq.s32.totalorder %s57, 0
    %s60 = sadd.s32 %s59, 1
    %s61 = scalar_select %p58, %s59, %s60
    %p64 = pneg %p58
    %p65 = scmp.eq.s32.totalorder %s9, 1
    %p66 = por %p64, %p65
    %p67 = scmp.ne.s32.totalorder %s59, %s62
    %p68 = scmp.eq.s32.totalorder %s9, 0
    %p69 = por %p67, %p68
    %p70 = scmp.ne.s32.totalorder %s59, %s62
    %p71 = scmp.eq.s32.totalorder %s14, 1
    %p72 = por %p70, %p71
    %p73 = scmp.ne.s32.totalorder %s62, %s63
    %p74 = scmp.eq.s32.totalorder %s14, 0
    %p75 = por %p73, %p74
    %p76 = scmp.ne.s32.totalorder %s62, %s63
    %p77 = scmp.eq.s32.totalorder %s15, 1
    %p78 = por %p76, %p77
    %p80 = scmp.ne.s32.totalorder %s63, %s79
    %p81 = scmp.eq.s32.totalorder %s15, 0
    %p82 = por %p80, %p81
    %s83 = ssub.s32 %s16, %s28
    %p84 = scmp.eq.s32.totalorder %s83, 0
    %s86 = sadd.s32 %s85, 1
    %s87 = scalar_select %p84, %s85, %s86
    %p90 = pneg %p84
    %p91 = scmp.eq.s32.totalorder %s9, 1
    %p92 = por %p90, %p91
    %p93 = scmp.ne.s32.totalorder %s85, %s88
    %p94 = scmp.eq.s32.totalorder %s9, 0
    %p95 = por %p93, %p94
    %p96 = scmp.ne.s32.totalorder %s85, %s88
    %p97 = scmp.eq.s32.totalorder %s14, 1
    %p98 = por %p96, %p97
    %p99 = scmp.ne.s32.totalorder %s88, %s89
    %p100 = scmp.eq.s32.totalorder %s14, 0
    %p101 = por %p99, %p100
    %p102 = scmp.ne.s32.totalorder %s88, %s89
    %p103 = scmp.eq.s32.totalorder %s15, 1
    %p104 = por %p102, %p103
    %p106 = scmp.ne.s32.totalorder %s89, %s105
    %p107 = scmp.eq.s32.totalorder %s15, 0
    %p108 = por %p106, %p107
    %s109 = ssub.s32 %s16, %s28
    %s110 = ssub.s32 %s17, %s24
    %s111 = sor.u32 %s109, %s110
    %p112 = scmp.eq.s32.totalorder %s111, 0
    %s114 = sadd.s32 %s113, 1
    %s115 = scalar_select %p112, %s113, %s114
    %p118 = pneg %p112
    %p119 = scmp.eq.s32.totalorder %s9, 1
    %p120 = por %p118, %p119
    %p121 = scmp.ne.s32.totalorder %s113, %s116
    %p122 = scmp.eq.s32.totalorder %s9, 0
    %p123 = por %p121, %p122
    %p124 = scmp.ne.s32.totalorder %s113, %s116
    %p125 = scmp.eq.s32.totalorder %s14, 1
    %p126 = por %p124, %p125
    %p127 = scmp.ne.s32.totalorder %s116, %s117
    %p128 = scmp.eq.s32.totalorder %s14, 0
    %p129 = por %p127, %p128
    %p130 = scmp.ne.s32.totalorder %s116, %s117
    %p131 = scmp.eq.s32.totalorder %s15, 1
    %p132 = por %p130, %p131
    %p134 = scmp.ne.s32.totalorder %s117, %s133
    %p135 = scmp.eq.s32.totalorder %s15, 0
    %p136 = por %p134, %p135
    %p137 = scmp.le.s32.totalorder 1, %s9
    %p138 = scmp.lt.s32.totalorder %s9, 3
    %p139 = pnand %p137, %p138
    %p140 = pneg %p139
    // Predicated region
    $region9: #{unet_conv3_forward.5} parent=5 // pred_check
      _
    $region10: #{unet_conv3_forward.5} parent=5 // pred_check_branch
      %142 = sbr.rel (%p139) target = $region12
    $region11: #{unet_conv3_forward.5} parent=5 // pred_region
      %s143 = ssub.s32 %s9, 1
    $region12: #{unet_conv3_forward.5} parent=5 // pred_fallthru
      _
    %p144 = scmp.lt.s32.totalorder %s9, 2
    // Predicated region
    $region13: #{unet_conv3_forward.5} parent=5 // pred_check
      %p145 = pneg %p144
    $region14: #{unet_conv3_forward.5} parent=5 // pred_check_branch
      %147 = sbr.rel (%p145) target = $region16
    $region15: #{unet_conv3_forward.5} parent=5 // pred_region
      // Predicated region
      $region17: #{unet_conv3_forward.5} parent=15 // pred_check
        %p148 = pneg %p43
      $region18: #{unet_conv3_forward.5} parent=15 // pred_check_branch
        %150 = sbr.rel (%p148) target = $region20
      $region19: #{unet_conv3_forward.5} parent=15 // pred_region
        %s151 = smul.u32 4, %s17
        %p152 = scmp.lt.s32.totalorder %s16, 1
        %s153 = scalar_select %p152, %s16, 1
        %p154 = scmp.lt.s32.totalorder %s151, 3
        %s155 = scalar_select %p154, %s151, 3
        %s156 = smul.addr %s153, 4
        %s157 = sadd.s32 %s155, %s156
        %s158 = smul.addr %s157, 4
        %s159 = scalar_lea.vmem %s0, %s158
        %s160 = smul.u32 4, %s17
      $region20: #{unet_conv3_forward.5} parent=15 // pred_fallthru
        _
      // Predicated region
      $region21: #{unet_conv3_forward.5} parent=15 // pred_check
        %p161 = pneg %p69
      $region22: #{unet_conv3_forward.5} parent=15 // pred_check_branch
        %163 = sbr.rel (%p161) target = $region24
      $region23: #{unet_conv3_forward.5} parent=15 // pred_region
        %p164 = scmp.lt.s32.totalorder %s16, 1
        %s165 = scalar_select %p164, %s16, 1
        %s166 = scalar_lea.vmem %s1, %s165
      $region24: #{unet_conv3_forward.5} parent=15 // pred_fallthru
        _
      // Predicated region
      $region25: #{unet_conv3_forward.5} parent=15 // pred_check
        %p167 = pneg %p95
      $region26: #{unet_conv3_forward.5} parent=15 // pred_check_branch
        %169 = sbr.rel (%p167) target = $region28
      $region27: #{unet_conv3_forward.5} parent=15 // pred_region
        %p170 = scmp.lt.s32.totalorder %s16, 1
        %s171 = scalar_select %p170, %s16, 1
        %s172 = scalar_lea.vmem %s2, %s171
      $region28: #{unet_conv3_forward.5} parent=15 // pred_fallthru
        _
    $region16: #{unet_conv3_forward.5} parent=5 // pred_fallthru
      _
    %p173 = scmp.le.s32.totalorder 1, %s9
    %p174 = scmp.lt.s32.totalorder %s9, 3
    %p175 = pnand %p173, %p174
    %p176 = pneg %p175
    // Predicated region
    $region29: #{unet_conv3_forward.5} parent=5 // pred_check
      _
    $region30: #{unet_conv3_forward.5} parent=5 // pred_check_branch
      %178 = sbr.rel (%p175) target = $region32
    $region31: #{unet_conv3_forward.5} parent=5 // pred_region
      %s179 = ssub.s32 %s9, 1
      %s180 = smul.u32 4, %s19
      %p181 = scmp.lt.s32.totalorder %s18, 1
      %s182 = scalar_select %p181, %s18, 1
      %p183 = scmp.lt.s32.totalorder %s180, 3
      %s184 = scalar_select %p183, %s180, 3
      %s185 = smul.addr %s182, 4
      %s186 = sadd.s32 %s184, %s185
      %s187 = smul.addr %s186, 4
      %s188 = scalar_lea.vmem %s0, %s187
      %p189 = pneg %p49
      %p190 = pneg %p46
      %p191 = scmp.lt.s32.totalorder %s18, 1
      %s192 = scalar_select %p191, %s18, 1
      %s193 = scalar_lea.vmem %s1, %s192
      %p194 = pneg %p75
      %p195 = pneg %p72
      %p196 = scmp.lt.s32.totalorder %s18, 1
      %s197 = scalar_select %p196, %s18, 1
      %s198 = scalar_lea.vmem %s2, %s197
      %p199 = pneg %p101
      %p200 = pneg %p98
      %p201 = pneg %p129
      %p202 = pneg %p126
      %s203 = smul.u32 4, %s19
      %p204 = scmp.lt.s32.totalorder %s18, 1
      %s205 = scalar_select %p204, %s18, 1
      %p206 = scmp.lt.s32.totalorder %s203, 3
      %s207 = scalar_select %p206, %s203, 3
      %s208 = smul.addr %s205, 4
      %s209 = sadd.s32 %s207, %s208
      %s210 = smul.addr %s209, 4
      %s211 = scalar_lea.vmem %s3, %s210
      %s212 = smul.u32 4, %s19
      %p213 = scmp.lt.s32.totalorder %s18, 1
      %s214 = scalar_select %p213, %s18, 1
      %p215 = scmp.lt.s32.totalorder %s212, 3
      %s216 = scalar_select %p215, %s212, 3
      %s217 = smul.addr %s214, 4
      %s218 = sadd.s32 %s216, %s217
      %s219 = smul.addr %s218, 4
      %s220 = scalar_lea.vmem %s0, %s219
      %s221 = smul.u32 4, %s19
      %p222 = scmp.lt.s32.totalorder %s18, 1
      %s223 = scalar_select %p222, %s18, 1
      %s224 = scalar_lea.vmem %s1, %s223
      %p225 = scmp.lt.s32.totalorder %s18, 1
      %s226 = scalar_select %p225, %s18, 1
      %s227 = scalar_lea.vmem %s2, %s226
      %s228 = smul.u32 4, %s19
      %p229 = scmp.lt.s32.totalorder %s18, 1
      %s230 = scalar_select %p229, %s18, 1
      %p231 = scmp.lt.s32.totalorder %s228, 3
      %s232 = scalar_select %p231, %s228, 3
      %s233 = smul.addr %s230, 4
      %s234 = sadd.s32 %s232, %s233
      %s235 = smul.addr %s234, 4
      %s236 = scalar_lea.vmem %s3, %s235
      %s237 = smul.u32 4, %s19
      %v238 = vld [vmem:[%s220] sm:$0xf]
      %v239 = vld [vmem:[%s220 + $0x4] sm:$0xf]
      %v240 = vld [vmem:[%s220 + $0x8] sm:$0xf]
      %v241 = vld [vmem:[%s220 + $0xc] sm:$0xf]
      %v242 = vunpack.c.l.bf16 %v238
      %v243 = vunpack.c.l.bf16 %v239
      %v244 = vunpack.c.l.bf16 %v240
      %v245 = vunpack.c.l.bf16 %v241
      %v246 = vld [vmem:[%s224] sm:$0x1]
      %v248 = vlaneseq
      %v249 = vshrl.u32 %v248, 7
      %v250 = vsub.s32 0, %v249
      %v251 = vrot.slane %v246, %v250
      %v253 = vmul.f32 %v242, %v251
      %v254 = vmul.f32 %v243, %v251
      %v255 = vmul.f32 %v244, %v251
      %v256 = vmul.f32 %v245, %v251
      %v257 = vld [vmem:[%s227] sm:$0x1]
      %v259 = vlaneseq
      %v260 = vshrl.u32 %v259, 7
      %v261 = vsub.s32 0, %v260
      %v262 = vrot.slane %v257, %v261
      %v264 = vadd.f32 %v253, %v262
      %v265 = vadd.f32 %v254, %v262
      %v266 = vadd.f32 %v255, %v262
      %v267 = vadd.f32 %v256, %v262
      %v268 = vmax.f32 %v264, 0.0
      %v269 = vmax.f32 %v265, 0.0
      %v270 = vmax.f32 %v266, 0.0
      %v271 = vmax.f32 %v267, 0.0
      %v272 = vpack.c.bf16 %v269, %v268
      %v273 = vpack.c.bf16 %v271, %v270
      %v276 = vunpack.c.l.b16 %v272
      %v277 = vunpack.c.h.b16 %v272
      %v278 = vunpack.c.l.b16 %v273
      %v279 = vunpack.c.h.b16 %v273
      %v280 = vpack.c.b16 %v276, %v276
      %v281 = vpack.c.b16 %v277, %v277
      %v282 = vpack.c.b16 %v278, %v278
      %v283 = vpack.c.b16 %v279, %v279
      %288 = vst [vmem:[%s236] sm:$0xf] %v280
      %289 = vst [vmem:[%s236 + $0x4] sm:$0xf] %v281
      %290 = vst [vmem:[%s236 + $0x8] sm:$0xf] %v282
      %291 = vst [vmem:[%s236 + $0xc] sm:$0xf] %v283
      %s292 = smul.u32 4, %s19
      %p293 = scmp.lt.s32.totalorder %s18, 1
      %s294 = scalar_select %p293, %s18, 1
      %p295 = scmp.lt.s32.totalorder %s292, 3
      %s296 = scalar_select %p295, %s292, 3
      %s297 = smul.addr %s294, 4
      %s298 = sadd.s32 %s296, %s297
      %s299 = smul.addr %s298, 4
      %s300 = scalar_lea.vmem %s3, %s299
      // Predicated region
      $region33: #{unet_conv3_forward.5} parent=31 // pred_check
        %p301 = pneg %p126
      $region34: #{unet_conv3_forward.5} parent=31 // pred_check_branch
        %303 = sbr.rel (%p301) target = $region36
      $region35: #{unet_conv3_forward.5} parent=31 // pred_region
        %s304 = smul.u32 4, %s19
      $region36: #{unet_conv3_forward.5} parent=31 // pred_fallthru
        _
    $region32: #{unet_conv3_forward.5} parent=5 // pred_fallthru
      _
    %p305 = scmp.le.s32.totalorder 2, %s9
    // Predicated region
    $region37: #{unet_conv3_forward.5} parent=5 // pred_check
      %p306 = pneg %p305
    $region38: #{unet_conv3_forward.5} parent=5 // pred_check_branch
      %308 = sbr.rel (%p306) target = $region40
    $region39: #{unet_conv3_forward.5} parent=5 // pred_region
      %s309 = ssub.s32 %s9, 2
      // Predicated region
      $region41: #{unet_conv3_forward.5} parent=39 // pred_check
        %p310 = pneg %p132
      $region42: #{unet_conv3_forward.5} parent=39 // pred_check_branch
        %312 = sbr.rel (%p310) target = $region44
      $region43: #{unet_conv3_forward.5} parent=39 // pred_region
        %s313 = smul.u32 4, %s21
        %p314 = scmp.lt.s32.totalorder %s20, 1
        %s315 = scalar_select %p314, %s20, 1
        %p316 = scmp.lt.s32.totalorder %s313, 3
        %s317 = scalar_select %p316, %s313, 3
        %s318 = smul.addr %s315, 4
        %s319 = sadd.s32 %s317, %s318
        %s320 = smul.addr %s319, 4
        %s321 = scalar_lea.vmem %s3, %s320
      $region44: #{unet_conv3_forward.5} parent=39 // pred_fallthru
        _
    $region40: #{unet_conv3_forward.5} parent=5 // pred_fallthru
      _
  $region6: #{unet_conv3_forward.5} parent=0 // loop_footer
    %s13 = sadd.s32 1, %s9
  $region7: #{unet_conv3_forward.5} parent=0 // loop_footer_branch
    %8 = sbr.rel target = $region3
  $region8: #{unet_conv3_forward.5} parent=0 // loop_exit
    _

// kernel: unet_conv3_forward.7
$region0: #{unet_conv3_forward.7}
  #allocation0 [shape = 'u32[]', space=smem, size = 0x4, offset = 0x4, fixed_abs, tag = 'smem constant byte address 0x4 - core index']
  #allocation1 [shape = 'u32[144,128]{1,0:T(1,128)}', space=vmem, size = 0x12000, scoped, tag = 'internal scratch']
  %s0 = inlined_call_operand.vmem [shape: bf16[2,32,128], index: 0, kind: input, shape index: {}]
  %s1 = inlined_call_operand.vmem [shape: f32[2,1,128], index: 1, kind: input, shape index: {}]
  %s2 = inlined_call_operand.vmem [shape: f32[2,1,128], index: 2, kind: input, shape index: {}]
  %s3 = inlined_call_operand.vmem [shape: f32[2,32,128], index: 3, kind: output, shape index: {}]
  %s4 = sld [smem:[#allocation0]]
  $region45: #{unet_conv3_forward.7} parent=0
    _
  %s6 = ssub.s32 1, %s4
  %s7 = scalar_select 0, %s6, %s4
  loop: start=0, step=1, limit=4
  $region2: #{unet_conv3_forward.7} parent=0 // loop_pre_header
    _
  $region3: #{unet_conv3_forward.7} parent=0 // loop_header
    %s9 = sphi 0, %s13
    %p10 = scmp.ge.s32.totalorder %s9, 4
    %s16 = sphi 0, %s28
    %s17 = sphi 0, %s24
    %s18 = sphi 0, %s16
    %s19 = sphi 0, %s17
    %s20 = sphi 0, %s18
    %s21 = sphi 0, %s19
    %s33 = sphi 0, %s35
    %s36 = sphi 0, %s33
    %s37 = sphi 0, %s36
    %s53 = sphi 0, %s37
    %s59 = sphi 0, %s61
    %s62 = sphi 0, %s59
    %s63 = sphi 0, %s62
    %s79 = sphi 0, %s63
    %s85 = sphi 0, %s87
    %s88 = sphi 0, %s85
    %s89 = sphi 0, %s88
    %s105 = sphi 0, %s89
    %s113 = sphi 0, %s115
    %s116 = sphi 0, %s113
    %s117 = sphi 0, %s116
    %s133 = sphi 0, %s117
  $region4: #{unet_conv3_forward.7} parent=0 // loop_header_branch
    %12 = sbr.rel (%p10) target = $region8
  $region5: #{unet_conv3_forward.7} parent=0 // loop_body
    %s14 = ssub.s32 %s9, 1
    %s15 = ssub.s32 %s9, 2
    %s22 = sadd.s32 1, %s17
    %p23 = scmp.ge.s32.totalorder %s22, 1
    %s24 = scalar_select %p23, 0, %s22
    %s25 = sadd.s32 1, %s16
    %s26 = scalar_select %p23, %s25, %s16
    %p27 = scmp.ge.s32.totalorder %s26, 2
    %s28 = scalar_select %p27, 0, %s26
    %s29 = ssub.s32 %s16, %s28
    %s30 = ssub.s32 %s17, %s24
    %s31 = sor.u32 %s29, %s30
    %p32 = scmp.eq.s32.totalorder %s31, 0
    %s34 = sadd.s32 %s33, 1
    %s35 = scalar_select %p32, %s33, %s34
    %p38 = pneg %p32
    %p39 = scmp.eq.s32.totalorder %s9, 1
    %p40 = por %p38, %p39
    %p41 = scmp.ne.s32.totalorder %s33, %s36
    %p42 = scmp.eq.s32.totalorder %s9, 0
    %p43 = por %p41, %p42
    %p44 = scmp.ne.s32.totalorder %s33, %s36
    %p45 = scmp.eq.s32.totalorder %s14, 1
    %p46 = por %p44, %p45
    %p47 = scmp.ne.s32.totalorder %s36, %s37
    %p48 = scmp.eq.s32.totalorder %s14, 0
    %p49 = por %p47, %p48
    %p50 = scmp.ne.s32.totalorder %s36, %s37
    %p51 = scmp.eq.s32.totalorder %s15, 1
    %p52 = por %p50, %p51
    %p54 = scmp.ne.s32.totalorder %s37, %s53
    %p55 = scmp.eq.s32.totalorder %s15, 0
    %p56 = por %p54, %p55
    %s57 = ssub.s32 %s16, %s28
    %p58 = scmp.eq.s32.totalorder %s57, 0
    %s60 = sadd.s32 %s59, 1
    %s61 = scalar_select %p58, %s59, %s60
    %p64 = pneg %p58
    %p65 = scmp.eq.s32.totalorder %s9, 1
    %p66 = por %p64, %p65
    %p67 = scmp.ne.s32.totalorder %s59, %s62
    %p68 = scmp.eq.s32.totalorder %s9, 0
    %p69 = por %p67, %p68
    %p70 = scmp.ne.s32.totalorder %s59, %s62
    %p71 = scmp.eq.s32.totalorder %s14, 1
    %p72 = por %p70, %p71
    %p73 = scmp.ne.s32.totalorder %s62, %s63
    %p74 = scmp.eq.s32.totalorder %s14, 0
    %p75 = por %p73, %p74
    %p76 = scmp.ne.s32.totalorder %s62, %s63
    %p77 = scmp.eq.s32.totalorder %s15, 1
    %p78 = por %p76, %p77
    %p80 = scmp.ne.s32.totalorder %s63, %s79
    %p81 = scmp.eq.s32.totalorder %s15, 0
    %p82 = por %p80, %p81
    %s83 = ssub.s32 %s16, %s28
    %p84 = scmp.eq.s32.totalorder %s83, 0
    %s86 = sadd.s32 %s85, 1
    %s87 = scalar_select %p84, %s85, %s86
    %p90 = pneg %p84
    %p91 = scmp.eq.s32.totalorder %s9, 1
    %p92 = por %p90, %p91
    %p93 = scmp.ne.s32.totalorder %s85, %s88
    %p94 = scmp.eq.s32.totalorder %s9, 0
    %p95 = por %p93, %p94
    %p96 = scmp.ne.s32.totalorder %s85, %s88
    %p97 = scmp.eq.s32.totalorder %s14, 1
    %p98 = por %p96, %p97
    %p99 = scmp.ne.s32.totalorder %s88, %s89
    %p100 = scmp.eq.s32.totalorder %s14, 0
    %p101 = por %p99, %p100
    %p102 = scmp.ne.s32.totalorder %s88, %s89
    %p103 = scmp.eq.s32.totalorder %s15, 1
    %p104 = por %p102, %p103
    %p106 = scmp.ne.s32.totalorder %s89, %s105
    %p107 = scmp.eq.s32.totalorder %s15, 0
    %p108 = por %p106, %p107
    %s109 = ssub.s32 %s16, %s28
    %s110 = ssub.s32 %s17, %s24
    %s111 = sor.u32 %s109, %s110
    %p112 = scmp.eq.s32.totalorder %s111, 0
    %s114 = sadd.s32 %s113, 1
    %s115 = scalar_select %p112, %s113, %s114
    %p118 = pneg %p112
    %p119 = scmp.eq.s32.totalorder %s9, 1
    %p120 = por %p118, %p119
    %p121 = scmp.ne.s32.totalorder %s113, %s116
    %p122 = scmp.eq.s32.totalorder %s9, 0
    %p123 = por %p121, %p122
    %p124 = scmp.ne.s32.totalorder %s113, %s116
    %p125 = scmp.eq.s32.totalorder %s14, 1
    %p126 = por %p124, %p125
    %p127 = scmp.ne.s32.totalorder %s116, %s117
    %p128 = scmp.eq.s32.totalorder %s14, 0
    %p129 = por %p127, %p128
    %p130 = scmp.ne.s32.totalorder %s116, %s117
    %p131 = scmp.eq.s32.totalorder %s15, 1
    %p132 = por %p130, %p131
    %p134 = scmp.ne.s32.totalorder %s117, %s133
    %p135 = scmp.eq.s32.totalorder %s15, 0
    %p136 = por %p134, %p135
    %p137 = scmp.le.s32.totalorder 1, %s9
    %p138 = scmp.lt.s32.totalorder %s9, 3
    %p139 = pnand %p137, %p138
    %p140 = pneg %p139
    // Predicated region
    $region9: #{unet_conv3_forward.7} parent=5 // pred_check
      _
    $region10: #{unet_conv3_forward.7} parent=5 // pred_check_branch
      %142 = sbr.rel (%p139) target = $region12
    $region11: #{unet_conv3_forward.7} parent=5 // pred_region
      %s143 = ssub.s32 %s9, 1
    $region12: #{unet_conv3_forward.7} parent=5 // pred_fallthru
      _
    %p144 = scmp.lt.s32.totalorder %s9, 2
    // Predicated region
    $region13: #{unet_conv3_forward.7} parent=5 // pred_check
      %p145 = pneg %p144
    $region14: #{unet_conv3_forward.7} parent=5 // pred_check_branch
      %147 = sbr.rel (%p145) target = $region16
    $region15: #{unet_conv3_forward.7} parent=5 // pred_region
      // Predicated region
      $region17: #{unet_conv3_forward.7} parent=15 // pred_check
        %p148 = pneg %p43
      $region18: #{unet_conv3_forward.7} parent=15 // pred_check_branch
        %150 = sbr.rel (%p148) target = $region20
      $region19: #{unet_conv3_forward.7} parent=15 // pred_region
        %s151 = smul.u32 4, %s17
        %p152 = scmp.lt.s32.totalorder %s16, 1
        %s153 = scalar_select %p152, %s16, 1
        %p154 = scmp.lt.s32.totalorder %s151, 3
        %s155 = scalar_select %p154, %s151, 3
        %s156 = smul.addr %s153, 4
        %s157 = sadd.s32 %s155, %s156
        %s158 = smul.addr %s157, 4
        %s159 = scalar_lea.vmem %s0, %s158
        %s160 = smul.u32 4, %s17
      $region20: #{unet_conv3_forward.7} parent=15 // pred_fallthru
        _
      // Predicated region
      $region21: #{unet_conv3_forward.7} parent=15 // pred_check
        %p161 = pneg %p69
      $region22: #{unet_conv3_forward.7} parent=15 // pred_check_branch
        %163 = sbr.rel (%p161) target = $region24
      $region23: #{unet_conv3_forward.7} parent=15 // pred_region
        %p164 = scmp.lt.s32.totalorder %s16, 1
        %s165 = scalar_select %p164, %s16, 1
        %s166 = scalar_lea.vmem %s1, %s165
      $region24: #{unet_conv3_forward.7} parent=15 // pred_fallthru
        _
      // Predicated region
      $region25: #{unet_conv3_forward.7} parent=15 // pred_check
        %p167 = pneg %p95
      $region26: #{unet_conv3_forward.7} parent=15 // pred_check_branch
        %169 = sbr.rel (%p167) target = $region28
      $region27: #{unet_conv3_forward.7} parent=15 // pred_region
        %p170 = scmp.lt.s32.totalorder %s16, 1
        %s171 = scalar_select %p170, %s16, 1
        %s172 = scalar_lea.vmem %s2, %s171
      $region28: #{unet_conv3_forward.7} parent=15 // pred_fallthru
        _
    $region16: #{unet_conv3_forward.7} parent=5 // pred_fallthru
      _
    %p173 = scmp.le.s32.totalorder 1, %s9
    %p174 = scmp.lt.s32.totalorder %s9, 3
    %p175 = pnand %p173, %p174
    %p176 = pneg %p175
    // Predicated region
    $region29: #{unet_conv3_forward.7} parent=5 // pred_check
      _
    $region30: #{unet_conv3_forward.7} parent=5 // pred_check_branch
      %178 = sbr.rel (%p175) target = $region32
    $region31: #{unet_conv3_forward.7} parent=5 // pred_region
      %s179 = ssub.s32 %s9, 1
      %s180 = smul.u32 4, %s19
      %p181 = scmp.lt.s32.totalorder %s18, 1
      %s182 = scalar_select %p181, %s18, 1
      %p183 = scmp.lt.s32.totalorder %s180, 3
      %s184 = scalar_select %p183, %s180, 3
      %s185 = smul.addr %s182, 4
      %s186 = sadd.s32 %s184, %s185
      %s187 = smul.addr %s186, 4
      %s188 = scalar_lea.vmem %s0, %s187
      %p189 = pneg %p49
      %p190 = pneg %p46
      %p191 = scmp.lt.s32.totalorder %s18, 1
      %s192 = scalar_select %p191, %s18, 1
      %s193 = scalar_lea.vmem %s1, %s192
      %p194 = pneg %p75
      %p195 = pneg %p72
      %p196 = scmp.lt.s32.totalorder %s18, 1
      %s197 = scalar_select %p196, %s18, 1
      %s198 = scalar_lea.vmem %s2, %s197
      %p199 = pneg %p101
      %p200 = pneg %p98
      %p201 = pneg %p129
      %p202 = pneg %p126
      %s203 = smul.u32 4, %s19
      %p204 = scmp.lt.s32.totalorder %s18, 1
      %s205 = scalar_select %p204, %s18, 1
      %p206 = scmp.lt.s32.totalorder %s203, 3
      %s207 = scalar_select %p206, %s203, 3
      %s208 = smul.addr %s205, 4
      %s209 = sadd.s32 %s207, %s208
      %s210 = smul.addr %s209, 8
      %s211 = scalar_lea.vmem %s3, %s210
      %s212 = smul.u32 4, %s19
      %p213 = scmp.lt.s32.totalorder %s18, 1
      %s214 = scalar_select %p213, %s18, 1
      %p215 = scmp.lt.s32.totalorder %s212, 3
      %s216 = scalar_select %p215, %s212, 3
      %s217 = smul.addr %s214, 4
      %s218 = sadd.s32 %s216, %s217
      %s219 = smul.addr %s218, 4
      %s220 = scalar_lea.vmem %s0, %s219
      %s221 = smul.u32 4, %s19
      %p222 = scmp.lt.s32.totalorder %s18, 1
      %s223 = scalar_select %p222, %s18, 1
      %s224 = scalar_lea.vmem %s1, %s223
      %p225 = scmp.lt.s32.totalorder %s18, 1
      %s226 = scalar_select %p225, %s18, 1
      %s227 = scalar_lea.vmem %s2, %s226
      %s228 = smul.u32 4, %s19
      %p229 = scmp.lt.s32.totalorder %s18, 1
      %s230 = scalar_select %p229, %s18, 1
      %p231 = scmp.lt.s32.totalorder %s228, 3
      %s232 = scalar_select %p231, %s228, 3
      %s233 = smul.addr %s230, 4
      %s234 = sadd.s32 %s232, %s233
      %s235 = smul.addr %s234, 8
      %s236 = scalar_lea.vmem %s3, %s235
      %s237 = smul.u32 4, %s19
      %v238 = vld [vmem:[%s220] sm:$0xf]
      %v239 = vld [vmem:[%s220 + $0x4] sm:$0xf]
      %v240 = vld [vmem:[%s220 + $0x8] sm:$0xf]
      %v241 = vld [vmem:[%s220 + $0xc] sm:$0xf]
      %v242 = vunpack.c.l.bf16 %v238
      %v243 = vunpack.c.l.bf16 %v239
      %v244 = vunpack.c.l.bf16 %v240
      %v245 = vunpack.c.l.bf16 %v241
      %v246 = vld [vmem:[%s224] sm:$0x1]
      %v248 = vlaneseq
      %v249 = vshrl.u32 %v248, 7
      %v250 = vsub.s32 0, %v249
      %v251 = vrot.slane %v246, %v250
      %v253 = vmul.f32 %v242, %v251
      %v254 = vmul.f32 %v243, %v251
      %v255 = vmul.f32 %v244, %v251
      %v256 = vmul.f32 %v245, %v251
      %v257 = vld [vmem:[%s227] sm:$0x1]
      %v259 = vlaneseq
      %v260 = vshrl.u32 %v259, 7
      %v261 = vsub.s32 0, %v260
      %v262 = vrot.slane %v257, %v261
      %v264 = vadd.f32 %v253, %v262
      %v265 = vadd.f32 %v254, %v262
      %v266 = vadd.f32 %v255, %v262
      %v267 = vadd.f32 %v256, %v262
      %v268 = vmax.f32 %v264, 0.0
      %v269 = vmax.f32 %v265, 0.0
      %v270 = vmax.f32 %v266, 0.0
      %v271 = vmax.f32 %v267, 0.0
      %272 = vst [vmem:[%s236] sm:$0xff] %v268
      %273 = vst [vmem:[%s236 + $0x8] sm:$0xff] %v269
      %274 = vst [vmem:[%s236 + $0x10] sm:$0xff] %v270
      %275 = vst [vmem:[%s236 + $0x18] sm:$0xff] %v271
      %s276 = smul.u32 4, %s19
      %p277 = scmp.lt.s32.totalorder %s18, 1
      %s278 = scalar_select %p277, %s18, 1
      %p279 = scmp.lt.s32.totalorder %s276, 3
      %s280 = scalar_select %p279, %s276, 3
      %s281 = smul.addr %s278, 4
      %s282 = sadd.s32 %s280, %s281
      %s283 = smul.addr %s282, 8
      %s284 = scalar_lea.vmem %s3, %s283
      // Predicated region
      $region33: #{unet_conv3_forward.7} parent=31 // pred_check
        %p285 = pneg %p126
      $region34: #{unet_conv3_forward.7} parent=31 // pred_check_branch
        %287 = sbr.rel (%p285) target = $region36
      $region35: #{unet_conv3_forward.7} parent=31 // pred_region
        %s288 = smul.u32 4, %s19
      $region36: #{unet_conv3_forward.7} parent=31 // pred_fallthru
        _
    $region32: #{unet_conv3_forward.7} parent=5 // pred_fallthru
      _
    %p289 = scmp.le.s32.totalorder 2, %s9
    // Predicated region
    $region37: #{unet_conv3_forward.7} parent=5 // pred_check
      %p290 = pneg %p289
    $region38: #{unet_conv3_forward.7} parent=5 // pred_check_branch
      %292 = sbr.rel (%p290) target = $region40
    $region39: #{unet_conv3_forward.7} parent=5 // pred_region
      %s293 = ssub.s32 %s9, 2
      // Predicated region
      $region41: #{unet_conv3_forward.7} parent=39 // pred_check
        %p294 = pneg %p132
      $region42: #{unet_conv3_forward.7} parent=39 // pred_check_branch
        %296 = sbr.rel (%p294) target = $region44
      $region43: #{unet_conv3_forward.7} parent=39 // pred_region
        %s297 = smul.u32 4, %s21
        %p298 = scmp.lt.s32.totalorder %s20, 1
        %s299 = scalar_select %p298, %s20, 1
        %p300 = scmp.lt.s32.totalorder %s297, 3
        %s301 = scalar_select %p300, %s297, 3
        %s302 = smul.addr %s299, 4
        %s303 = sadd.s32 %s301, %s302
        %s304 = smul.addr %s303, 8
        %s305 = scalar_lea.vmem %s3, %s304
      $region44: #{unet_conv3_forward.7} parent=39 // pred_fallthru
        _
    $region40: #{unet_conv3_forward.7} parent=5 // pred_fallthru
      _
  $region6: #{unet_conv3_forward.7} parent=0 // loop_footer
    %s13 = sadd.s32 1, %s9
  $region7: #{unet_conv3_forward.7} parent=0 // loop_footer_branch
    %8 = sbr.rel target = $region3
  $region8: #{unet_conv3_forward.7} parent=0 // loop_exit
    _

// kernel: unet_conv3_forward.4
$region0: #{unet_conv3_forward.4}
  #allocation0 [shape = 'u32[]', space=smem, size = 0x4, offset = 0x4, fixed_abs, tag = 'smem constant byte address 0x4 - core index']
  #allocation1 [shape = 'u32[144,128]{1,0:T(1,128)}', space=vmem, size = 0x12000, scoped, tag = 'internal scratch']
  %s0 = inlined_call_operand.vmem [shape: bf16[2,10,10,10,4], index: 0, kind: input, shape index: {}, may-alias: {0,1,2}]
  %s1 = inlined_call_operand.vmem [shape: bf16[2,10,10,10,4], index: 1, kind: input, shape index: {}, may-alias: {0,1,2}]
  %s2 = inlined_call_operand.vmem [shape: bf16[2,10,10,10,4], index: 2, kind: input, shape index: {}, may-alias: {0,1,2}]
  %s3 = inlined_call_operand.vmem [shape: bf16[108,8], index: 3, kind: input, shape index: {}]
  %s4 = inlined_call_operand.vmem [shape: f32[1,8], index: 4, kind: input, shape index: {}]
  %s5 = inlined_call_operand.vmem [shape: bf16[2,8,64,8], index: 5, kind: output, shape index: {0}]
  %s6 = inlined_call_operand.vmem [shape: f32[2,8,1,8], index: 6, kind: output, shape index: {1}]
  %s7 = inlined_call_operand.vmem [shape: f32[2,8,1,8], index: 7, kind: output, shape index: {2}]
  %8 = xla_tuple %s5, %s6, %s7
  %s9 = sld [smem:[#allocation0]]
  $region69: #{unet_conv3_forward.4} parent=0
    _
  %s11 = ssub.s32 1, %s9
  %s12 = scalar_select 0, %s11, %s9
  loop: start=0, step=1, limit=18
  $region2: #{unet_conv3_forward.4} parent=0 // loop_pre_header
    _
  $region3: #{unet_conv3_forward.4} parent=0 // loop_header
    %s14 = sphi 0, %s18
    %p15 = scmp.ge.s32.totalorder %s14, 18
    %s21 = sphi 0, %s33
    %s22 = sphi 0, %s29
    %s23 = sphi 0, %s21
    %s24 = sphi 0, %s22
    %s25 = sphi 0, %s23
    %s26 = sphi 0, %s24
    %s38 = sphi 0, %s40
    %s41 = sphi 0, %s38
    %s42 = sphi 0, %s41
    %s58 = sphi 0, %s42
    %s68 = sphi 0, %s70
    %s71 = sphi 0, %s68
    %s72 = sphi 0, %s71
    %s88 = sphi 0, %s72
    %s98 = sphi 0, %s100
    %s101 = sphi 0, %s98
    %s102 = sphi 0, %s101
    %s118 = sphi 0, %s102
    %s122 = sphi 0, %s122
    %s124 = sphi 0, %s122
    %s125 = sphi 0, %s124
    %s139 = sphi 0, %s125
    %s143 = sphi 0, %s143
    %s145 = sphi 0, %s143
    %s146 = sphi 0, %s145
    %s160 = sphi 0, %s146
    %s168 = sphi 0, %s170
    %s171 = sphi 0, %s168
    %s172 = sphi 0, %s171
    %s188 = sphi 0, %s172
    %s196 = sphi 0, %s198
    %s199 = sphi 0, %s196
    %s200 = sphi 0, %s199
    %s216 = sphi 0, %s200
    %s224 = sphi 0, %s226
    %s227 = sphi 0, %s224
    %s228 = sphi 0, %s227
    %s244 = sphi 0, %s228
  $region4: #{unet_conv3_forward.4} parent=0 // loop_header_branch
    %17 = sbr.rel (%p15) target = $region8
  $region5: #{unet_conv3_forward.4} parent=0 // loop_body
    %s19 = ssub.s32 %s14, 1
    %s20 = ssub.s32 %s14, 2
    %s27 = sadd.s32 1, %s22
    %p28 = scmp.ge.s32.totalorder %s27, 8
    %s29 = scalar_select %p28, 0, %s27
    %s30 = sadd.s32 1, %s21
    %s31 = scalar_select %p28, %s30, %s21
    %p32 = scmp.ge.s32.totalorder %s31, 2
    %s33 = scalar_select %p32, 0, %s31
    %s34 = ssub.s32 %s21, %s33
    %s35 = ssub.s32 %s22, %s29
    %s36 = sor.u32 %s34, %s35
    %p37 = scmp.eq.s32.totalorder %s36, 0
    %s39 = sadd.s32 %s38, 1
    %s40 = scalar_select %p37, %s38, %s39
    %p43 = pneg %p37
    %p44 = scmp.eq.s32.totalorder %s14, 15
    %p45 = por %p43, %p44
    %p46 = scmp.ne.s32.totalorder %s38, %s41
    %p47 = scmp.eq.s32.totalorder %s14, 0
    %p48 = por %p46, %p47
    %p49 = scmp.ne.s32.totalorder %s38, %s41
    %p50 = scmp.eq.s32.totalorder %s19, 15
    %p51 = por %p49, %p50
    %p52 = scmp.ne.s32.totalorder %s41, %s42
    %p53 = scmp.eq.s32.totalorder %s19, 0
    %p54 = por %p52, %p53
    %p55 = scmp.ne.s32.totalorder %s41, %s42
    %p56 = scmp.eq.s32.totalorder %s20, 15
    %p57 = por %p55, %p56
    %p59 = scmp.ne.s32.totalorder %s42, %s58
    %p60 = scmp.eq.s32.totalorder %s20, 0
    %p61 = por %p59, %p60
    %s62 = sadd.s32 %s22, 1
    %s63 = sadd.s32 %s29, 1
    %s64 = ssub.s32 %s21, %s33
    %s65 = ssub.s32 %s62, %s63
    %s66 = sor.u32 %s64, %s65
    %p67 = scmp.eq.s32.totalorder %s66, 0
    %s69 = sadd.s32 %s68, 1
    %s70 = scalar_select %p67, %s68, %s69
    %p73 = pneg %p67
    %p74 = scmp.eq.s32.totalorder %s14, 15
    %p75 = por %p73, %p74
    %p76 = scmp.ne.s32.totalorder %s68, %s71
    %p77 = scmp.eq.s32.totalorder %s14, 0
    %p78 = por %p76, %p77
    %p79 = scmp.ne.s32.totalorder %s68, %s71
    %p80 = scmp.eq.s32.totalorder %s19, 15
    %p81 = por %p79, %p80
    %p82 = scmp.ne.s32.totalorder %s71, %s72
    %p83 = scmp.eq.s32.totalorder %s19, 0
    %p84 = por %p82, %p83
    %p85 = scmp.ne.s32.totalorder %s71, %s72
    %p86 = scmp.eq.s32.totalorder %s20, 15
    %p87 = por %p85, %p86
    %p89 = scmp.ne.s32.totalorder %s72, %s88
    %p90 = scmp.eq.s32.totalorder %s20, 0
    %p91 = por %p89, %p90
    %s92 = sadd.s32 %s22, 2
    %s93 = sadd.s32 %s29, 2
    %s94 = ssub.s32 %s21, %s33
    %s95 = ssub.s32 %s92, %s93
    %s96 = sor.u32 %s94, %s95
    %p97 = scmp.eq.s32.totalorder %s96, 0
    %s99 = sadd.s32 %s98, 1
    %s100 = scalar_select %p97, %s98, %s99
    %p103 = pneg %p97
    %p104 = scmp.eq.s32.totalorder %s14, 15
    %p105 = por %p103, %p104
    %p106 = scmp.ne.s32.totalorder %s98, %s101
    %p107 = scmp.eq.s32.totalorder %s14, 0
    %p108 = por %p106, %p107
    %p109 = scmp.ne.s32.totalorder %s98, %s101
    %p110 = scmp.eq.s32.totalorder %s19, 15
    %p111 = por %p109, %p110
    %p112 = scmp.ne.s32.totalorder %s101, %s102
    %p113 = scmp.eq.s32.totalorder %s19, 0
    %p114 = por %p112, %p113
    %p115 = scmp.ne.s32.totalorder %s101, %s102
    %p116 = scmp.eq.s32.totalorder %s20, 15
    %p117 = por %p115, %p116
    %p119 = scmp.ne.s32.totalorder %s102, %s118
    %p120 = scmp.eq.s32.totalorder %s20, 0
    %p121 = por %p119, %p120
    %s123 = sadd.s32 %s122, 1
    %p126 = scmp.eq.s32.totalorder %s14, 15
    %p127 = scmp.ne.s32.totalorder %s122, %s124
    %p128 = scmp.eq.s32.totalorder %s14, 0
    %p129 = por %p127, %p128
    %p130 = scmp.ne.s32.totalorder %s122, %s124
    %p131 = scmp.eq.s32.totalorder %s19, 15
    %p132 = por %p130, %p131
    %p133 = scmp.ne.s32.totalorder %s124, %s125
    %p134 = scmp.eq.s32.totalorder %s19, 0
    %p135 = por %p133, %p134
    %p136 = scmp.ne.s32.totalorder %s124, %s125
    %p137 = scmp.eq.s32.totalorder %s20, 15
    %p138 = por %p136, %p137
    %p140 = scmp.ne.s32.totalorder %s125, %s139
    %p141 = scmp.eq.s32.totalorder %s20, 0
    %p142 = por %p140, %p141
    %s144 = sadd.s32 %s143, 1
    %p147 = scmp.eq.s32.totalorder %s14, 15
    %p148 = scmp.ne.s32.totalorder %s143, %s145
    %p149 = scmp.eq.s32.totalorder %s14, 0
    %p150 = por %p148, %p149
    %p151 = scmp.ne.s32.totalorder %s143, %s145
    %p152 = scmp.eq.s32.totalorder %s19, 15
    %p153 = por %p151, %p152
    %p154 = scmp.ne.s32.totalorder %s145, %s146
    %p155 = scmp.eq.s32.totalorder %s19, 0
    %p156 = por %p154, %p155
    %p157 = scmp.ne.s32.totalorder %s145, %s146
    %p158 = scmp.eq.s32.totalorder %s20, 15
    %p159 = por %p157, %p158
    %p161 = scmp.ne.s32.totalorder %s146, %s160
    %p162 = scmp.eq.s32.totalorder %s20, 0
    %p163 = por %p161, %p162
    %s164 = ssub.s32 %s21, %s33
    %s165 = ssub.s32 %s22, %s29
    %s166 = sor.u32 %s164, %s165
    %p167 = scmp.eq.s32.totalorder %s166, 0
    %s169 = sadd.s32 %s168, 1
    %s170 = scalar_select %p167, %s168, %s169
    %p173 = pneg %p167
    %p174 = scmp.eq.s32.totalorder %s14, 15
    %p175 = por %p173, %p174
    %p176 = scmp.ne.s32.totalorder %s168, %s171
    %p177 = scmp.eq.s32.totalorder %s14, 0
    %p178 = por %p176, %p177
    %p179 = scmp.ne.s32.totalorder %s168, %s171
    %p180 = scmp.eq.s32.totalorder %s19, 15
    %p181 = por %p179, %p180
    %p182 = scmp.ne.s32.totalorder %s171, %s172
    %p183 = scmp.eq.s32.totalorder %s19, 0
    %p184 = por %p182, %p183
    %p185 = scmp.ne.s32.totalorder %s171, %s172
    %p186 = scmp.eq.s32.totalorder %s20, 15
    %p187 = por %p185, %p186
    %p189 = scmp.ne.s32.totalorder %s172, %s188
    %p190 = scmp.eq.s32.totalorder %s20, 0
    %p191 = por %p189, %p190
    %s192 = ssub.s32 %s21, %s33
    %s193 = ssub.s32 %s22, %s29
    %s194 = sor.u32 %s192, %s193
    %p195 = scmp.eq.s32.totalorder %s194, 0
    %s197 = sadd.s32 %s196, 1
    %s198 = scalar_select %p195, %s196, %s197
    %p201 = pneg %p195
    %p202 = scmp.eq.s32.totalorder %s14, 15
    %p203 = por %p201, %p202
    %p204 = scmp.ne.s32.totalorder %s196, %s199
    %p205 = scmp.eq.s32.totalorder %s14, 0
    %p206 = por %p204, %p205
    %p207 = scmp.ne.s32.totalorder %s196, %s199
    %p208 = scmp.eq.s32.totalorder %s19, 15
    %p209 = por %p207, %p208
    %p210 = scmp.ne.s32.totalorder %s199, %s200
    %p211 = scmp.eq.s32.totalorder %s19, 0
    %p212 = por %p210, %p211
    %p213 = scmp.ne.s32.totalorder %s199, %s200
    %p214 = scmp.eq.s32.totalorder %s20, 15
    %p215 = por %p213, %p214
    %p217 = scmp.ne.s32.totalorder %s200, %s216
    %p218 = scmp.eq.s32.totalorder %s20, 0
    %p219 = por %p217, %p218
    %s220 = ssub.s32 %s21, %s33
    %s221 = ssub.s32 %s22, %s29
    %s222 = sor.u32 %s220, %s221
    %p223 = scmp.eq.s32.totalorder %s222, 0
    %s225 = sadd.s32 %s224, 1
    %s226 = scalar_select %p223, %s224, %s225
    %p229 = pneg %p223
    %p230 = scmp.eq.s32.totalorder %s14, 15
    %p231 = por %p229, %p230
    %p232 = scmp.ne.s32.totalorder %s224, %s227
    %p233 = scmp.eq.s32.totalorder %s14, 0
    %p234 = por %p232, %p233
    %p235 = scmp.ne.s32.totalorder %s224, %s227
    %p236 = scmp.eq.s32.totalorder %s19, 15
    %p237 = por %p235, %p236
    %p238 = scmp.ne.s32.totalorder %s227, %s228
    %p239 = scmp.eq.s32.totalorder %s19, 0
    %p240 = por %p238, %p239
    %p241 = scmp.ne.s32.totalorder %s227, %s228
    %p242 = scmp.eq.s32.totalorder %s20, 15
    %p243 = por %p241, %p242
    %p245 = scmp.ne.s32.totalorder %s228, %s244
    %p246 = scmp.eq.s32.totalorder %s20, 0
    %p247 = por %p245, %p246
    %p248 = scmp.le.s32.totalorder 1, %s14
    %p249 = scmp.lt.s32.totalorder %s14, 17
    %p250 = pnand %p248, %p249
    %p251 = pneg %p250
    // Predicated region
    $region9: #{unet_conv3_forward.4} parent=5 // pred_check
      _
    $region10: #{unet_conv3_forward.4} parent=5 // pred_check_branch
      %253 = sbr.rel (%p250) target = $region12
    $region11: #{unet_conv3_forward.4} parent=5 // pred_region
      %s254 = ssub.s32 %s14, 1
      // Predicated region
      $region13: #{unet_conv3_forward.4} parent=11 // pred_check
        %p255 = pneg %p135
      $region14: #{unet_conv3_forward.4} parent=11 // pred_check_branch
        %257 = sbr.rel (%p255) target = $region16
      $region15: #{unet_conv3_forward.4} parent=11 // pred_region
        _
      $region16: #{unet_conv3_forward.4} parent=11 // pred_fallthru
        _
      // Predicated region
      $region17: #{unet_conv3_forward.4} parent=11 // pred_check
        %p258 = pneg %p156
      $region18: #{unet_conv3_forward.4} parent=11 // pred_check_branch
        %260 = sbr.rel (%p258) target = $region20
      $region19: #{unet_conv3_forward.4} parent=11 // pred_region
        _
      $region20: #{unet_conv3_forward.4} parent=11 // pred_fallthru
        _
    $region12: #{unet_conv3_forward.4} parent=5 // pred_fallthru
      _
    %p261 = scmp.lt.s32.totalorder %s14, 16
    // Predicated region
    $region21: #{unet_conv3_forward.4} parent=5 // pred_check
      %p262 = pneg %p261
    $region22: #{unet_conv3_forward.4} parent=5 // pred_check_branch
      %264 = sbr.rel (%p262) target = $region24
    $region23: #{unet_conv3_forward.4} parent=5 // pred_region
      // Predicated region
      $region25: #{unet_conv3_forward.4} parent=23 // pred_check
        %p265 = pneg %p48
      $region26: #{unet_conv3_forward.4} parent=23 // pred_check_branch
        %267 = sbr.rel (%p265) target = $region28
      $region27: #{unet_conv3_forward.4} parent=23 // pred_region
        %p268 = scmp.lt.s32.totalorder %s21, 1
        %s269 = scalar_select %p268, %s21, 1
        %p270 = scmp.lt.s32.totalorder %s22, 9
        %s271 = scalar_select %p270, %s22, 9
        %s272 = smul.addr %s271, 20
        %s273 = smul.addr %s269, 200
        %s274 = sadd.s32 %s272, %s273
        %s275 = smul.addr %s274, 4
        %s276 = scalar_lea.vmem %s0, %s275
      $region28: #{unet_conv3_forward.4} parent=23 // pred_fallthru
        _
      // Predicated region
      $region29: #{unet_conv3_forward.4} parent=23 // pred_check
        %p277 = pneg %p78
      $region30: #{unet_conv3_forward.4} parent=23 // pred_check_branch
        %279 = sbr.rel (%p277) target = $region32
      $region31: #{unet_conv3_forward.4} parent=23 // pred_region
        %s280 = sadd.s32 %s22, 1
        %p281 = scmp.lt.s32.totalorder %s21, 1
        %s282 = scalar_select %p281, %s21, 1
        %p283 = scmp.lt.s32.totalorder %s280, 9
        %s284 = scalar_select %p283, %s280, 9
        %s285 = smul.addr %s284, 20
        %s286 = smul.addr %s282, 200
        %s287 = sadd.s32 %s285, %s286
        %s288 = smul.addr %s287, 4
        %s289 = scalar_lea.vmem %s1, %s288
        %s290 = sadd.s32 %s22, 1
      $region32: #{unet_conv3_forward.4} parent=23 // pred_fallthru
        _
      // Predicated region
      $region33: #{unet_conv3_forward.4} parent=23 // pred_check
        %p291 = pneg %p108
      $region34: #{unet_conv3_forward.4} parent=23 // pred_check_branch
        %293 = sbr.rel (%p291) target = $region36
      $region35: #{unet_conv3_forward.4} parent=23 // pred_region
        %s294 = sadd.s32 %s22, 2
        %p295 = scmp.lt.s32.totalorder %s21, 1
        %s296 = scalar_select %p295, %s21, 1
        %p297 = scmp.lt.s32.totalorder %s294, 9
        %s298 = scalar_select %p297, %s294, 9
        %s299 = smul.addr %s298, 20
        %s300 = smul.addr %s296, 200
        %s301 = sadd.s32 %s299, %s300
        %s302 = smul.addr %s301, 4
        %s303 = scalar_lea.vmem %s2, %s302
        %s304 = sadd.s32 %s22, 2
      $region36: #{unet_conv3_forward.4} parent=23 // pred_fallthru
        _
    $region24: #{unet_conv3_forward.4} parent=5 // pred_fallthru
      _
    %p305 = scmp.le.s32.totalorder 1, %s14
    %p306 = scmp.lt.s32.totalorder %s14, 17
    %p307 = pnand %p305, %p306
    %p308 = pneg %p307
    // Predicated region
    $region37: #{unet_conv3_forward.4} parent=5 // pred_check
      _
    $region38: #{unet_conv3_forward.4} parent=5 // pred_check_branch
      %310 = sbr.rel (%p307) target = $region40
    $region39: #{unet_conv3_forward.4} parent=5 // pred_region
      %s311 = ssub.s32 %s14, 1
      %p312 = scmp.lt.s32.totalorder %s23, 1
      %s313 = scalar_select %p312, %s23, 1
      %p314 = scmp.lt.s32.totalorder %s24, 9
      %s315 = scalar_select %p314, %s24, 9
      %s316 = smul.addr %s315, 20
      %s317 = smul.addr %s313, 200
      %s318 = sadd.s32 %s316, %s317
      %s319 = smul.addr %s318, 4
      %s320 = scalar_lea.vmem %s0, %s319
      %p321 = pneg %p54
      %p322 = pneg %p51
      %s323 = sadd.s32 %s24, 1
      %p324 = scmp.lt.s32.totalorder %s23, 1
      %s325 = scalar_select %p324, %s23, 1
      %p326 = scmp.lt.s32.totalorder %s323, 9
      %s327 = scalar_select %p326, %s323, 9
      %s328 = smul.addr %s327, 20
      %s329 = smul.addr %s325, 200
      %s330 = sadd.s32 %s328, %s329
      %s331 = smul.addr %s330, 4
      %s332 = scalar_lea.vmem %s1, %s331
      %p333 = pneg %p84
      %p334 = pneg %p81
      %s335 = sadd.s32 %s24, 2
      %p336 = scmp.lt.s32.totalorder %s23, 1
      %s337 = scalar_select %p336, %s23, 1
      %p338 = scmp.lt.s32.totalorder %s335, 9
      %s339 = scalar_select %p338, %s335, 9
      %s340 = smul.addr %s339, 20
      %s341 = smul.addr %s337, 200
      %s342 = sadd.s32 %s340, %s341
      %s343 = smul.addr %s342, 4
      %s344 = scalar_lea.vmem %s2, %s343
      %p345 = pneg %p114
      %p346 = pneg %p111
      %p347 = pneg %p135
      %p348 = pneg %p132
      %p349 = pneg %p156
      %p350 = pneg %p153
      %p351 = pneg %p184
      %p352 = pneg %p181
      %p353 = scmp.lt.s32.totalorder %s23, 1
      %s354 = scalar_select %p353, %s23, 1
      %p355 = scmp.lt.s32.totalorder %s24, 7
      %s356 = scalar_select %p355, %s24, 7
      %s357 = smul.addr %s356, 8
      %s358 = smul.addr %s354, 64
      %s359 = sadd.s32 %s357, %s358
      %s360 = smul.addr %s359, 4
      %s361 = scalar_lea.vmem %s5, %s360
      %p362 = pneg %p212
      %p363 = pneg %p209
      %p364 = scmp.lt.s32.totalorder %s23, 1
      %s365 = scalar_select %p364, %s23, 1
      %p366 = scmp.lt.s32.totalorder %s24, 7
      %s367 = scalar_select %p366, %s24, 7
      %s368 = smul.addr %s365, 8
      %s369 = sadd.s32 %s367, %s368
      %s370 = scalar_lea.vmem %s6, %s369
      %p371 = pneg %p240
      %p372 = pneg %p237
      %p373 = scmp.lt.s32.totalorder %s23, 1
      %s374 = scalar_select %p373, %s23, 1
      %p375 = scmp.lt.s32.totalorder %s24, 7
      %s376 = scalar_select %p375, %s24, 7
      %s377 = smul.addr %s374, 8
      %s378 = sadd.s32 %s376, %s377
      %s379 = scalar_lea.vmem %s7, %s378
      %p380 = scmp.lt.s32.totalorder %s23, 1
      %s381 = scalar_select %p380, %s23, 1
      %p382 = scmp.lt.s32.totalorder %s24, 9
      %s383 = scalar_select %p382, %s24, 9
      %s384 = smul.addr %s383, 20
      %s385 = smul.addr %s381, 200
      %s386 = sadd.s32 %s384, %s385
      %s387 = smul.addr %s386, 4
      %s388 = scalar_lea.vmem %s0, %s387
      %s389 = sadd.s32 %s24, 1
      %p390 = scmp.lt.s32.totalorder %s23, 1
      %s391 = scalar_select %p390, %s23, 1
      %p392 = scmp.lt.s32.totalorder %s389, 9
      %s393 = scalar_select %p392, %s389, 9
      %s394 = smul.addr %s393, 20
      %s395 = smul.addr %s391, 200
      %s396 = sadd.s32 %s394, %s395
      %s397 = smul.addr %s396, 4
      %s398 = scalar_lea.vmem %s1, %s397
      %s399 = sadd.s32 %s24, 1
      %s400 = sadd.s32 %s24, 2
      %p401 = scmp.lt.s32.totalorder %s23, 1
      %s402 = scalar_select %p401, %s23, 1
      %p403 = scmp.lt.s32.totalorder %s400, 9
      %s404 = scalar_select %p403, %s400, 9
      %s405 = smul.addr %s404, 20
      %s406 = smul.addr %s402, 200
      %s407 = sadd.s32 %s405, %s406
      %s408 = smul.addr %s407, 4
      %s409 = scalar_lea.vmem %s2, %s408
      %s410 = sadd.s32 %s24, 2
      %p411 = scmp.lt.s32.totalorder %s23, 1
      %s412 = scalar_select %p411, %s23, 1
      %p413 = scmp.lt.s32.totalorder %s24, 7
      %s414 = scalar_select %p413, %s24, 7
      %s415 = smul.addr %s414, 8
      %s416 = smul.addr %s412, 64
      %s417 = sadd.s32 %s415, %s416
      %s418 = smul.addr %s417, 4
      %s419 = scalar_lea.vmem %s5, %s418
      %p420 = scmp.lt.s32.totalorder %s23, 1
      %s421 = scalar_select %p420, %s23, 1
      %p422 = scmp.lt.s32.totalorder %s24, 7
      %s423 = scalar_select %p422, %s24, 7
      %s424 = smul.addr %s421, 8
      %s425 = sadd.s32 %s423, %s424
      %s426 = scalar_lea.vmem %s6, %s425
      %p427 = scmp.lt.s32.totalorder %s23, 1
      %s428 = scalar_select %p427, %s23, 1
      %p429 = scmp.lt.s32.totalorder %s24, 7
      %s430 = scalar_select %p429, %s24, 7
      %s431 = smul.addr %s428, 8
      %s432 = sadd.s32 %s430, %s431
      %s433 = scalar_lea.vmem %s7, %s432
      %v435 = vld [vmem:[%s388] sm:$0xf]
      %v436 = vld [vmem:[%s388 + $0x8] sm:$0xf]
      %v437 = vld [vmem:[%s388 + $0x10] sm:$0xf]
      %v438 = vld [vmem:[%s388 + $0x18] sm:$0xf]
      %v439 = vld [vmem:[%s388 + $0x20] sm:$0xf]
      %v440 = vld [vmem:[%s388 + $0x28] sm:$0xf]
      %v441 = vld [vmem:[%s388 + $0x30] sm:$0xf]
      %v442 = vld [vmem:[%s388 + $0x38] sm:$0xf]
      %v443 = vld [vmem:[%s3] sm:$0x3]
      %v444 = vld [vmem:[%s388 + $0x4] sm:$0x1]
      %v445 = vld [vmem:[%s388 + $0xc] sm:$0x1]
      %v446 = vld [vmem:[%s388 + $0x14] sm:$0x1]
      %v447 = vld [vmem:[%s388 + $0x1c] sm:$0x1]
      %v448 = vld [vmem:[%s388 + $0x24] sm:$0x1]
      %v449 = vld [vmem:[%s388 + $0x2c] sm:$0x1]
      %v450 = vld [vmem:[%s388 + $0x34] sm:$0x1]
      %v451 = vld [vmem:[%s388 + $0x3c] sm:$0x1]
      %vm452 = vsmask.f32 3328
      %vm453 = vsmask.f32 7440
      %vm454 = vmor %vm452, %vm453
      %v456 = vshrl.u32 %v435, 16
      %v458 = vrot.slane %v456, 4
      %v459 = vshll.u32 %v435, 16
      %v461 = vrot.slane %v459, 5
      %v462 = vor.u32 %v458, %v461
      %v463 = vrot.slane %v462, 4
      %v465 = vshll.u32 %v444, 16
      %v467 = vrot.slane %v465, 5
      %v468 = vsel %vm454, %v463, %v467
      %v470 = vshrl.u32 %v436, 16
      %v472 = vrot.slane %v470, 4
      %v473 = vshll.u32 %v436, 16
      %v475 = vrot.slane %v473, 5
      %v476 = vor.u32 %v472, %v475
      %v477 = vrot.slane %v476, 4
      %v479 = vshll.u32 %v445, 16
      %v481 = vrot.slane %v479, 5
      %v482 = vsel %vm454, %v477, %v481
      %v484 = vshrl.u32 %v437, 16
      %v486 = vrot.slane %v484, 4
      %v487 = vshll.u32 %v437, 16
      %v489 = vrot.slane %v487, 5
      %v490 = vor.u32 %v486, %v489
      %v491 = vrot.slane %v490, 4
      %v493 = vshll.u32 %v446, 16
      %v495 = vrot.slane %v493, 5
      %v496 = vsel %vm454, %v491, %v495
      %v498 = vshrl.u32 %v438, 16
      %v500 = vrot.slane %v498, 4
      %v501 = vshll.u32 %v438, 16
      %v503 = vrot.slane %v501, 5
      %v504 = vor.u32 %v500, %v503
      %v505 = vrot.slane %v504, 4
      %v507 = vshll.u32 %v447, 16
      %v509 = vrot.slane %v507, 5
      %v510 = vsel %vm454, %v505, %v509
      %v512 = vshrl.u32 %v439, 16
      %v514 = vrot.slane %v512, 4
      %v515 = vshll.u32 %v439, 16
      %v517 = vrot.slane %v515, 5
      %v518 = vor.u32 %v514, %v517
      %v519 = vrot.slane %v518, 4
      %v521 = vshll.u32 %v448, 16
      %v523 = vrot.slane %v521, 5
      %v524 = vsel %vm454, %v519, %v523
      %v526 = vshrl.u32 %v440, 16
      %v528 = vrot.slane %v526, 4
      %v529 = vshll.u32 %v440, 16
      %v531 = vrot.slane %v529, 5
      %v532 = vor.u32 %v528, %v531
      %v533 = vrot.slane %v532, 4
      %v535 = vshll.u32 %v449, 16
      %v537 = vrot.slane %v535, 5
      %v538 = vsel %vm454, %v533, %v537
      %v540 = vshrl.u32 %v441, 16
      %v542 = vrot.slane %v540, 4
      %v543 = vshll.u32 %v441, 16
      %v545 = vrot.slane %v543, 5
      %v546 = vor.u32 %v542, %v545
      %v547 = vrot.slane %v546, 4
      %v549 = vshll.u32 %v450, 16
      %v551 = vrot.slane %v549, 5
      %v552 = vsel %vm454, %v547, %v551
      %v554 = vshrl.u32 %v442, 16
      %v556 = vrot.slane %v554, 4
      %v557 = vshll.u32 %v442, 16
      %v559 = vrot.slane %v557, 5
      %v560 = vor.u32 %v556, %v559
      %v561 = vrot.slane %v560, 4
      %v563 = vshll.u32 %v451, 16
      %v565 = vrot.slane %v563, 5
      %v566 = vsel %vm454, %v561, %v565
      %v567 = vld [vmem:[%s3] sm:$0xc]
      %v568 = vunpack.c.l.b16 %v468
      %v569 = vunpack.c.l.b16 %v482
      %v570 = vunpack.c.l.b16 %v496
      %v571 = vunpack.c.l.b16 %v510
      %v572 = vunpack.c.l.b16 %v524
      %v573 = vunpack.c.l.b16 %v538
      %v574 = vunpack.c.l.b16 %v552
      %v575 = vunpack.c.l.b16 %v566
      %v576 = vpack.c.b16 %v569, %v568
      %v577 = vpack.c.b16 %v571, %v570
      %v578 = vpack.c.b16 %v573, %v572
      %v579 = vpack.c.b16 %v575, %v574
      %v581 = vunpack.c.l.b16 %v567
      %v582 = vpack.c.b16 %v581, %v581
      %v583 = vrot.slane %v582, 2
      %vm584 = vcmask 31744
      %v586 = vsel %vm584, %v576, 0
      %v589 = vsel %vm584, %v577, 0
      %v592 = vsel %vm584, %v578, 0
      %v595 = vsel %vm584, %v579, 0
      %vm597 = vcmask 1041408
      %v599 = vsel %vm597, %v583, 0
      %601 = vmatprep.subr.bf16.mxu0 0
      %602 = vmatpush1.bf16.msra.mxu0 %v599
      %603 = vmatprep.subr.bf16.mxu0 0
      %604 = vmatpush1.bf16.msra.mxu0 0
      %605 = vmatprep.subr.bf16.mxu0 0
      %606 = vmatpush1.bf16.msra.mxu0 0
      %607 = vmatprep.subr.bf16.mxu0 0
      %608 = vmatpush1.bf16.msra.mxu0 0
      %609 = vmatprep.subr.bf16.mxu0 0
      %610 = vmatpush1.bf16.msra.mxu0 0
      %611 = vmatprep.subr.bf16.mxu0 0
      %612 = vmatpush1.bf16.msra.mxu0 0
      %613 = vmatprep.subr.bf16.mxu0 0
      %614 = vmatpush1.bf16.msra.mxu0 0
      %615 = vmatprep.subr.bf16.mxu0 0
      %616 = vmatpush1.bf16.msra.mxu0 0
      %617 = vmatprep.subr.bf16.mxu0 0
      %618 = vmatpush1.bf16.msra.mxu0 0
      %619 = vmatprep.subr.bf16.mxu0 0
      %620 = vmatpush1.bf16.msra.mxu0 0
      %621 = vmatprep.subr.bf16.mxu0 0
      %622 = vmatpush1.bf16.msra.mxu0 0
      %623 = vmatprep.subr.bf16.mxu0 0
      %624 = vmatpush1.bf16.msra.mxu0 0
      %625 = vmatprep.subr.bf16.mxu0 0
      %626 = vmatpush1.bf16.msra.mxu0 0
      %627 = vmatprep.subr.bf16.mxu0 0
      %628 = vmatpush1.bf16.msra.mxu0 0
      %629 = vmatprep.subr.bf16.mxu0 0
      %630 = vmatpush1.bf16.msra.mxu0 0
      %631 = vmatprep.subr.bf16.mxu0 0
      %632 = vmatpush1.bf16.msra.mxu0 0
      %633 = vmatprep.mubr.bf16.mxu0 0
      %634 = vmatmul.mubr.bf16.gmra.mrb[0].mxu0 %v586
      %v635 = vpop.f32.mrb[0].mxu0
      %v636 = vadd.f32 0.0, %v635
      %v637 = vpop.f32.mrb[0].mxu0
      %v638 = vpop.f32.mrb[0].mxu0
      %v639 = vadd.f32 0.0, %v638
      %v640 = vpop.f32.mrb[0].mxu0
      %641 = vmatprep.mubr.bf16.mxu0 0
      %642 = vmatmul.mubr.bf16.gmra.mrb[0].mxu0 %v589
      %v643 = vpop.f32.mrb[0].mxu0
      %v644 = vadd.f32 0.0, %v643
      %v645 = vpop.f32.mrb[0].mxu0
      %v646 = vpop.f32.mrb[0].mxu0
      %v647 = vadd.f32 0.0, %v646
      %v648 = vpop.f32.mrb[0].mxu0
      %649 = vmatprep.mubr.bf16.mxu0 0
      %650 = vmatmul.mubr.bf16.gmra.mrb[0].mxu0 %v592
      %v651 = vpop.f32.mrb[0].mxu0
      %v652 = vadd.f32 0.0, %v651
      %v653 = vpop.f32.mrb[0].mxu0
      %v654 = vpop.f32.mrb[0].mxu0
      %v655 = vadd.f32 0.0, %v654
      %v656 = vpop.f32.mrb[0].mxu0
      %657 = vmatprep.mubr.bf16.mxu0 0
      %658 = vmatmul.mubr.bf16.gmra.mrb[0].mxu0 %v595
      %v659 = vpop.f32.mrb[0].mxu0
      %v660 = vadd.f32 0.0, %v659
      %v661 = vpop.f32.mrb[0].mxu0
      %v662 = vpop.f32.mrb[0].mxu0
      %v663 = vadd.f32 0.0, %v662
      %v664 = vpop.f32.mrb[0].mxu0
      %665 = vdwg.mxu0
      %v674 = vunpack.c.l.b16 %v435
      %v675 = vunpack.c.l.b16 %v436
      %v676 = vunpack.c.l.b16 %v437
      %v677 = vunpack.c.l.b16 %v438
      %v678 = vunpack.c.l.b16 %v439
      %v679 = vunpack.c.l.b16 %v440
      %v680 = vunpack.c.l.b16 %v441
      %v681 = vunpack.c.l.b16 %v442
      %v682 = vpack.c.b16 %v675, %v674
      %v683 = vpack.c.b16 %v677, %v676
      %v684 = vpack.c.b16 %v679, %v678
      %v685 = vpack.c.b16 %v681, %v680
      %v687 = vsel %vm584, %v682, 0
      %v690 = vsel %vm584, %v683, 0
      %v693 = vsel %vm584, %v684, 0
      %v696 = vsel %vm584, %v685, 0
      %v699 = vsel %vm597, %v443, 0
      %701 = vmatprep.subr.bf16.mxu0 0
      %702 = vmatpush1.bf16.msra.mxu0 %v699
      %703 = vmatprep.subr.bf16.mxu0 0
      %704 = vmatpush1.bf16.msra.mxu0 0
      %705 = vmatprep.subr.bf16.mxu0 0
      %706 = vmatpush1.bf16.msra.mxu0 0
      %707 = vmatprep.subr.bf16.mxu0 0
      %708 = vmatpush1.bf16.msra.mxu0 0
      %709 = vmatprep.subr.bf16.mxu0 0
      %710 = vmatpush1.bf16.msra.mxu0 0
      %711 = vmatprep.subr.bf16.mxu0 0
      %712 = vmatpush1.bf16.msra.mxu0 0
      %713 = vmatprep.subr.bf16.mxu0 0
      %714 = vmatpush1.bf16.msra.mxu0 0
      %715 = vmatprep.subr.bf16.mxu0 0
      %716 = vmatpush1.bf16.msra.mxu0 0
      %717 = vmatprep.subr.bf16.mxu0 0
      %718 = vmatpush1.bf16.msra.mxu0 0
      %719 = vmatprep.subr.bf16.mxu0 0
      %720 = vmatpush1.bf16.msra.mxu0 0
      %721 = vmatprep.subr.bf16.mxu0 0
      %722 = vmatpush1.bf16.msra.mxu0 0
      %723 = vmatprep.subr.bf16.mxu0 0
      %724 = vmatpush1.bf16.msra.mxu0 0
      %725 = vmatprep.subr.bf16.mxu0 0
      %726 = vmatpush1.bf16.msra.mxu0 0
      %727 = vmatprep.subr.bf16.mxu0 0
      %728 = vmatpush1.bf16.msra.mxu0 0
      %729 = vmatprep.subr.bf16.mxu0 0
      %730 = vmatpush1.bf16.msra.mxu0 0
      %731 = vmatprep.subr.bf16.mxu0 0
      %732 = vmatpush1.bf16.msra.mxu0 0
      %733 = vmatprep.mubr.bf16.mxu0 0
      %734 = vmatmul.mubr.bf16.gmra.mrb[0].mxu0 %v687
      %v735 = vpop.f32.mrb[0].mxu0
      %v736 = vadd.f32 %v636, %v735
      %v737 = vpop.f32.mrb[0].mxu0
      %v738 = vpop.f32.mrb[0].mxu0
      %v739 = vadd.f32 %v639, %v738
      %v740 = vpop.f32.mrb[0].mxu0
      %741 = vmatprep.mubr.bf16.mxu0 0
      %742 = vmatmul.mubr.bf16.gmra.mrb[0].mxu0 %v690
      %v743 = vpop.f32.mrb[0].mxu0
      %v744 = vadd.f32 %v644, %v743
      %v745 = vpop.f32.mrb[0].mxu0
      %v746 = vpop.f32.mrb[0].mxu0
      %v747 = vadd.f32 %v647, %v746
      %v748 = vpop.f32.mrb[0].mxu0
      %749 = vmatprep.mubr.bf16.mxu0 0
      %750 = vmatmul.mubr.bf16.gmra.mrb[0].mxu0 %v693
      %v751 = vpop.f32.mrb[0].mxu0
      %v752 = vadd.f32 %v652, %v751
      %v753 = vpop.f32.mrb[0].mxu0
      %v754 = vpop.f32.mrb[0].mxu0
      %v755 = vadd.f32 %v655, %v754
      %v756 = vpop.f32.mrb[0].mxu0
      %757 = vmatprep.mubr.bf16.mxu0 0
      %758 = vmatmul.mubr.bf16.gmra.mrb[0].mxu0 %v696
      %v759 = vpop.f32.mrb[0].mxu0
      %v760 = vadd.f32 %v660, %v759
      %v761 = vpop.f32.mrb[0].mxu0
      %v762 = vpop.f32.mrb[0].mxu0
      %v763 = vadd.f32 %v663, %v762
      %v764 = vpop.f32.mrb[0].mxu0
      %765 = vdwg.mxu0
      %v766 = vld [vmem:[%s388] sm:$0xe]
      %v767 = vld [vmem:[%s388 + $0x8] sm:$0xe]
      %v768 = vld [vmem:[%s388 + $0x10] sm:$0xe]
      %v769 = vld [vmem:[%s388 + $0x18] sm:$0xe]
      %v770 = vld [vmem:[%s388 + $0x20] sm:$0xe]
      %v771 = vld [vmem:[%s388 + $0x28] sm:$0xe]
      %v772 = vld [vmem:[%s388 + $0x30] sm:$0xe]
      %v773 = vld [vmem:[%s388 + $0x38] sm:$0xe]
      %vm790 = vcmask 1042432
      %vm791 = vcmask 1046532
      %vm792 = vmor %vm790, %vm791
      %v793 = vrot.slane %v766, 5
      %v794 = vrot.slane %v793, 4
      %v795 = vrot.slane %v444, 5
      %v796 = vsel %vm792, %v794, %v795
      %v797 = vrot.slane %v767, 5
      %v798 = vrot.slane %v797, 4
      %v799 = vrot.slane %v445, 5
      %v800 = vsel %vm792, %v798, %v799
      %v801 = vrot.slane %v768, 5
      %v802 = vrot.slane %v801, 4
      %v803 = vrot.slane %v446, 5
      %v804 = vsel %vm792, %v802, %v803
      %v805 = vrot.slane %v769, 5
      %v806 = vrot.slane %v805, 4
      %v807 = vrot.slane %v447, 5
      %v808 = vsel %vm792, %v806, %v807
      %v809 = vrot.slane %v770, 5
      %v810 = vrot.slane %v809, 4
      %v811 = vrot.slane %v448, 5
      %v812 = vsel %vm792, %v810, %v811
      %v813 = vrot.slane %v771, 5
      %v814 = vrot.slane %v813, 4
      %v815 = vrot.slane %v449, 5
      %v816 = vsel %vm792, %v814, %v815
      %v817 = vrot.slane %v772, 5
      %v818 = vrot.slane %v817, 4
      %v819 = vrot.slane %v450, 5
      %v820 = vsel %vm792, %v818, %v819
      %v821 = vrot.slane %v773, 5
      %v822 = vrot.slane %v821, 4
      %v823 = vrot.slane %v451, 5
      %v824 = vsel %vm792, %v822, %v823
      %v825 = vld [vmem:[%s3 + $0x4] sm:$0x3]
      %v826 = vunpack.c.l.b16 %v796
      %v827 = vunpack.c.l.b16 %v800
      %v828 = vunpack.c.l.b16 %v804
      %v829 = vunpack.c.l.b16 %v808
      %v830 = vunpack.c.l.b16 %v812
      %v831 = vunpack.c.l.b16 %v816
      %v832 = vunpack.c.l.b16 %v820
      %v833 = vunpack.c.l.b16 %v824
      %v834 = vpack.c.b16 %v827, %v826
      %v835 = vpack.c.b16 %v829, %v828
      %v836 = vpack.c.b16 %v831, %v830
      %v837 = vpack.c.b16 %v833, %v832
      %v839 = vsel %vm584, %v834, 0
      %v842 = vsel %vm584, %v835, 0
      %v845 = vsel %vm584, %v836, 0
      %v848 = vsel %vm584, %v837, 0
      %v851 = vsel %vm597, %v825, 0
      %853 = vmatprep.subr.bf16.mxu0 0
      %854 = vmatpush1.bf16.msra.mxu0 %v851
      %855 = vmatprep.subr.bf16.mxu0 0
      %856 = vmatpush1.bf16.msra.mxu0 0
      %857 = vmatprep.subr.bf16.mxu0 0
      %858 = vmatpush1.bf16.msra.mxu0 0
      %859 = vmatprep.subr.bf16.mxu0 0
      %860 = vmatpush1.bf16.msra.mxu0 0
      %861 = vmatprep.subr.bf16.mxu0 0
      %862 = vmatpush1.bf16.msra.mxu0 0
      %863 = vmatprep.subr.bf16.mxu0 0
      %864 = vmatpush1.bf16.msra.mxu0 0
      %865 = vmatprep.subr.bf16.mxu0 0
      %866 = vmatpush1.bf16.msra.mxu0 0
      %867 = vmatprep.subr.bf16.mxu0 0
      %868 = vmatpush1.bf16.msra.mxu0 0
      %869 = vmatprep.subr.bf16.mxu0 0
      %870 = vmatpush1.bf16.msra.mxu0 0
      %871 = vmatprep.subr.bf16.mxu0 0
      %872 = vmatpush1.bf16.msra.mxu0 0
      %873 = vmatprep.subr.bf16.mxu0 0
      %874 = vmatpush1.bf16.msra.mxu0 0
      %875 = vmatprep.subr.bf16.mxu0 0
      %876 = vmatpush1.bf16.msra.mxu0 0
      %877 = vmatprep.subr.bf16.mxu0 0
      %878 = vmatpush1.bf16.msra.mxu0 0
      %879 = vmatprep.subr.bf16.mxu0 0
      %880 = vmatpush1.bf16.msra.mxu0 0
      %881 = vmatprep.subr.bf16.mxu0 0
      %882 = vmatpush1.bf16.msra.mxu0 0
      %883 = vmatprep.subr.bf16.mxu0 0
      %884 = vmatpush1.bf16.msra.mxu0 0
      %885 = vmatprep.mubr.bf16.mxu0 0
      %886 = vmatmul.mubr.bf16.gmra.mrb[0].mxu0 %v839
      %v887 = vpop.f32.mrb[0].mxu0
      %v888 = vadd.f32 0.0, %v887
      %v889 = vpop.f32.mrb[0].mxu0
      %v890 = vpop.f32.mrb[0].mxu0
      %v891 = vadd.f32 0.0, %v890
      %v892 = vpop.f32.mrb[0].mxu0
      %893 = vmatprep.mubr.bf16.mxu0 0
      %894 = vmatmul.mubr.bf16.gmra.mrb[0].mxu0 %v842
      %v895 = vpop.f32.mrb[0].mxu0
      %v896 = vadd.f32 0.0, %v895
      %v897 = vpop.f32.mrb[0].mxu0
      %v898 = vpop.f32.mrb[0].mxu0
      %v899 = vadd.f32 0.0, %v898
      %v900 = vpop.f32.mrb[0].mxu0
      %901 = vmatprep.mubr.bf16.mxu0 0
      %902 = vmatmul.mubr.bf16.gmra.mrb[0].mxu0 %v845
      %v903 = vpop.f32.mrb[0].mxu0
      %v904 = vadd.f32 0.0, %v903
      %v905 = vpop.f32.mrb[0].mxu0
      %v906 = vpop.f32.mrb[0].mxu0
      %v907 = vadd.f32 0.0, %v906
      %v908 = vpop.f32.mrb[0].mxu0
      %909 = vmatprep.mubr.bf16.mxu0 0
      %910 = vmatmul.mubr.bf16.gmra.mrb[0].mxu0 %v848
      %v911 = vpop.f32.mrb[0].mxu0
      %v912 = vadd.f32 0.0, %v911
      %v913 = vpop.f32.mrb[0].mxu0
      %v914 = vpop.f32.mrb[0].mxu0
      %v915 = vadd.f32 0.0, %v914
      %v916 = vpop.f32.mrb[0].mxu0
      %917 = vdwg.mxu0
      %v918 = vadd.f32 %v736, %v888
      %v919 = vadd.f32 %v739, %v891
      %v920 = vadd.f32 %v744, %v896
      %v921 = vadd.f32 %v747, %v899
      %v922 = vadd.f32 %v752, %v904
      %v923 = vadd.f32 %v755, %v907
      %v924 = vadd.f32 %v760, %v912
      %v925 = vadd.f32 %v763, %v915
      %s926 = scalar_lea.vmem %s388, 8
      %v927 = vld [vmem:[%s926] sm:$0xf]
      %v928 = vld [vmem:[%s926 + $0x8] sm:$0xf]
      %v929 = vld [vmem:[%s926 + $0x10] sm:$0xf]
      %v930 = vld [vmem:[%s926 + $0x18] sm:$0xf]
      %v931 = vld [vmem:[%s926 + $0x20] sm:$0xf]
      %v932 = vld [vmem:[%s926 + $0x28] sm:$0xf]
      %v933 = vld [vmem:[%s926 + $0x30] sm:$0xf]
      %v934 = vld [vmem:[%s926 + $0x38] sm:$0xf]
      %v935 = vld [vmem:[%s3 + $0x4] sm:$0xc]
      %v944 = vunpack.c.l.b16 %v927
      %v945 = vunpack.c.l.b16 %v928
      %v946 = vunpack.c.l.b16 %v929
      %v947 = vunpack.c.l.b16 %v930
      %v948 = vunpack.c.l.b16 %v931
      %v949 = vunpack.c.l.b16 %v932
      %v950 = vunpack.c.l.b16 %v933
      %v951 = vunpack.c.l.b16 %v934
      %v952 = vpack.c.b16 %v945, %v944
      %v953 = vpack.c.b16 %v947, %v946
      %v954 = vpack.c.b16 %v949, %v948
      %v955 = vpack.c.b16 %v951, %v950
      %v957 = vunpack.c.l.b16 %v935
      %v958 = vpack.c.b16 %v957, %v957
      %v959 = vrot.slane %v958, 2
      %v961 = vsel %vm584, %v952, 0
      %v964 = vsel %vm584, %v953, 0
      %v967 = vsel %vm584, %v954, 0
      %v970 = vsel %vm584, %v955, 0
      %v973 = vsel %vm597, %v959, 0
      %975 = vmatprep.subr.bf16.mxu0 0
      %976 = vmatpush1.bf16.msra.mxu0 %v973
      %977 = vmatprep.subr.bf16.mxu0 0
      %978 = vmatpush1.bf16.msra.mxu0 0
      %979 = vmatprep.subr.bf16.mxu0 0
      %980 = vmatpush1.bf16.msra.mxu0 0
      %981 = vmatprep.subr.bf16.mxu0 0
      %982 = vmatpush1.bf16.msra.mxu0 0
      %983 = vmatprep.subr.bf16.mxu0 0
      %984 = vmatpush1.bf16.msra.mxu0 0
      %985 = vmatprep.subr.bf16.mxu0 0
      %986 = vmatpush1.bf16.msra.mxu0 0
      %987 = vmatprep.subr.bf16.mxu0 0
      %988 = vmatpush1.bf16.msra.mxu0 0
      %989 = vmatprep.subr.bf16.mxu0 0
      %990 = vmatpush1.bf16.msra.mxu0 0
      %991 = vmatprep.subr.bf16.mxu0 0
      %992 = vmatpush1.bf16.msra.mxu0 0
      %993 = vmatprep.subr.bf16.mxu0 0
      %994 = vmatpush1.bf16.msra.mxu0 0
      %995 = vmatprep.subr.bf16.mxu0 0
      %996 = vmatpush1.bf16.msra.mxu0 0
      %997 = vmatprep.subr.bf16.mxu0 0
      %998 = vmatpush1.bf16.msra.mxu0 0
      %999 = vmatprep.subr.bf16.mxu0 0
      %1000 = vmatpush1.bf16.msra.mxu0 0
      %1001 = vmatprep.subr.bf16.mxu0 0
      %1002 = vmatpush1.bf16.msra.mxu0 0
      %1003 = vmatprep.subr.bf16.mxu0 0
      %1004 = vmatpush1.bf16.msra.mxu0 0
      %1005 = vmatprep.subr.bf16.mxu0 0
      %1006 = vmatpush1.bf16.msra.mxu0 0
      %1007 = vmatprep.mubr.bf16.mxu0 0
      %1008 = vmatmul.mubr.bf16.gmra.mrb[0].mxu0 %v961
      %v1009 = vpop.f32.mrb[0].mxu0
      %v1010 = vadd.f32 0.0, %v1009
      %v1011 = vpop.f32.mrb[0].mxu0
      %v1012 = vpop.f32.mrb[0].mxu0
      %v1013 = vadd.f32 0.0, %v1012
      %v1014 = vpop.f32.mrb[0].mxu0
      %1015 = vmatprep.mubr.bf16.mxu0 0
      %1016 = vmatmul.mubr.bf16.gmra.mrb[0].mxu0 %v964
      %v1017 = vpop.f32.mrb[0].mxu0
      %v1018 = vadd.f32 0.0, %v1017
      %v1019 = vpop.f32.mrb[0].mxu0
      %v1020 = vpop.f32.mrb[0].mxu0
      %v1021 = vadd.f32 0.0, %v1020
      %v1022 = vpop.f32.mrb[0].mxu0
      %1023 = vmatprep.mubr.bf16.mxu0 0
      %1024 = vmatmul.mubr.bf16.gmra.mrb[0].mxu0 %v967
      %v1025 = vpop.f32.mrb[0].mxu0
      %v1026 = vadd.f32 0.0, %v1025
      %v1027 = vpop.f32.mrb[0].mxu0
      %v1028 = vpop.f32.mrb[0].mxu0
      %v1029 = vadd.f32 0.0, %v1028
      %v1030 = vpop.f32.mrb[0].mxu0
      %1031 = vmatprep.mubr.bf16.mxu0 0
      %1032 = vmatmul.mubr.bf16.gmra.mrb[0].mxu0 %v970
      %v1033 = vpop.f32.mrb[0].mxu0
      %v1034 = vadd.f32 0.0, %v1033
      %v1035 = vpop.f32.mrb[0].mxu0
      %v1036 = vpop.f32.mrb[0].mxu0
      %v1037 = vadd.f32 0.0, %v1036
      %v1038 = vpop.f32.mrb[0].mxu0
      %1039 = vdwg.mxu0
      %v1040 = vadd.f32 %v918, %v1010
      %v1041 = vadd.f32 %v919, %v1013
      %v1042 = vadd.f32 %v920, %v1018
      %v1043 = vadd.f32 %v921, %v1021
      %v1044 = vadd.f32 %v922, %v1026
      %v1045 = vadd.f32 %v923, %v1029
      %v1046 = vadd.f32 %v924, %v1034
      %v1047 = vadd.f32 %v925, %v1037
      %v1048 = vld [vmem:[%s926] sm:$0xf]
      %v1049 = vld [vmem:[%s926 + $0x4] sm:$0x1]
      %v1050 = vld [vmem:[%s926 + $0x8] sm:$0xf]
      %v1051 = vld [vmem:[%s926 + $0xc] sm:$0x1]
      %v1052 = vld [vmem:[%s926 + $0x10] sm:$0xf]
      %v1053 = vld [vmem:[%s926 + $0x14] sm:$0x1]
      %v1054 = vld [vmem:[%s926 + $0x18] sm:$0xf]
      %v1055 = vld [vmem:[%s926 + $0x1c] sm:$0x1]
      %v1056 = vld [vmem:[%s926 + $0x20] sm:$0xf]
      %v1057 = vld [vmem:[%s926 + $0x24] sm:$0x1]
      %v1058 = vld [vmem:[%s926 + $0x28] sm:$0xf]
      %v1059 = vld [vmem:[%s926 + $0x2c] sm:$0x1]
      %v1060 = vld [vmem:[%s926 + $0x30] sm:$0xf]
      %v1061 = vld [vmem:[%s926 + $0x34] sm:$0x1]
      %v1062 = vld [vmem:[%s926 + $0x38] sm:$0xf]
      %v1063 = vld [vmem:[%s926 + $0x3c] sm:$0x1]
      %v1065 = vshrl.u32 %v1048, 16
      %v1067 = vrot.slane %v1065, 4
      %v1068 = vshll.u32 %v1048, 16
      %v1070 = vrot.slane %v1068, 5
      %v1071 = vor.u32 %v1067, %v1070
      %v1072 = vrot.slane %v1071, 4
      %v1074 = vshll.u32 %v1049, 16
      %v1076 = vrot.slane %v1074, 5
      %v1077 = vsel %vm454, %v1072, %v1076
      %v1079 = vshrl.u32 %v1050, 16
      %v1081 = vrot.slane %v1079, 4
      %v1082 = vshll.u32 %v1050, 16
      %v1084 = vrot.slane %v1082, 5
      %v1085 = vor.u32 %v1081, %v1084
      %v1086 = vrot.slane %v1085, 4
      %v1088 = vshll.u32 %v1051, 16
      %v1090 = vrot.slane %v1088, 5
      %v1091 = vsel %vm454, %v1086, %v1090
      %v1093 = vshrl.u32 %v1052, 16
      %v1095 = vrot.slane %v1093, 4
      %v1096 = vshll.u32 %v1052, 16
      %v1098 = vrot.slane %v1096, 5
      %v1099 = vor.u32 %v1095, %v1098
      %v1100 = vrot.slane %v1099, 4
      %v1102 = vshll.u32 %v1053, 16
      %v1104 = vrot.slane %v1102, 5
      %v1105 = vsel %vm454, %v1100, %v1104
      %v1107 = vshrl.u32 %v1054, 16
      %v1109 = vrot.slane %v1107, 4
      %v1110 = vshll.u32 %v1054, 16
      %v1112 = vrot.slane %v1110, 5
      %v1113 = vor.u32 %v1109, %v1112
      %v1114 = vrot.slane %v1113, 4
      %v1116 = vshll.u32 %v1055, 16
      %v1118 = vrot.slane %v1116, 5
      %v1119 = vsel %vm454, %v1114, %v1118
      %v1121 = vshrl.u32 %v1056, 16
      %v1123 = vrot.slane %v1121, 4
      %v1124 = vshll.u32 %v1056, 16
      %v1126 = vrot.slane %v1124, 5
      %v1127 = vor.u32 %v1123, %v1126
      %v1128 = vrot.slane %v1127, 4
      %v1130 = vshll.u32 %v1057, 16
      %v1132 = vrot.slane %v1130, 5
      %v1133 = vsel %vm454, %v1128, %v1132
      %v1135 = vshrl.u32 %v1058, 16
      %v1137 = vrot.slane %v1135, 4
      %v1138 = vshll.u32 %v1058, 16
      %v1140 = vrot.slane %v1138, 5
      %v1141 = vor.u32 %v1137, %v1140
      %v1142 = vrot.slane %v1141, 4
      %v1144 = vshll.u32 %v1059, 16
      %v1146 = vrot.slane %v1144, 5
      %v1147 = vsel %vm454, %v1142, %v1146
      %v1149 = vshrl.u32 %v1060, 16
      %v1151 = vrot.slane %v1149, 4
      %v1152 = vshll.u32 %v1060, 16
      %v1154 = vrot.slane %v1152, 5
      %v1155 = vor.u32 %v1151, %v1154
      %v1156 = vrot.slane %v1155, 4
      %v1158 = vshll.u32 %v1061, 16
      %v1160 = vrot.slane %v1158, 5
      %v1161 = vsel %vm454, %v1156, %v1160
      %v1163 = vshrl.u32 %v1062, 16
      %v1165 = vrot.slane %v1163, 4
      %v1166 = vshll.u32 %v1062, 16
      %v1168 = vrot.slane %v1166, 5
      %v1169 = vor.u32 %v1165, %v1168
      %v1170 = vrot.slane %v1169, 4
      %v1172 = vshll.u32 %v1063, 16
      %v1174 = vrot.slane %v1172, 5
      %v1175 = vsel %vm454, %v1170, %v1174
      %v1176 = vld [vmem:[%s3 + $0x8] sm:$0x3]
      %v1177 = vunpack.c.l.b16 %v1077
      %v1178 = vunpack.c.l.b16 %v1091
      %v1179 = vunpack.c.l.b16 %v1105
      %v1180 = vunpack.c.l.b16 %v1119
      %v1181 = vunpack.c.l.b16 %v1133
      %v1182 = vunpack.c.l.b16 %v1147
      %v1183 = vunpack.c.l.b16 %v1161
      %v1184 = vunpack.c.l.b16 %v1175
      %v1185 = vpack.c.b16 %v1178, %v1177
      %v1186 = vpack.c.b16 %v1180, %v1179
      %v1187 = vpack.c.b16 %v1182, %v1181
      %v1188 = vpack.c.b16 %v1184, %v1183
      %v1190 = vsel %vm584, %v1185, 0
      %v1193 = vsel %vm584, %v1186, 0
      %v1196 = vsel %vm584, %v1187, 0
      %v1199 = vsel %vm584, %v1188, 0
      %v1202 = vsel %vm597, %v1176, 0
      %1204 = vmatprep.subr.bf16.mxu0 0
      %1205 = vmatpush1.bf16.msra.mxu0 %v1202
      %1206 = vmatprep.subr.bf16.mxu0 0
      %1207 = vmatpush1.bf16.msra.mxu0 0
      %1208 = vmatprep.subr.bf16.mxu0 0
      %1209 = vmatpush1.bf16.msra.mxu0 0
      %1210 = vmatprep.subr.bf16.mxu0 0
      %1211 = vmatpush1.bf16.msra.mxu0 0
      %1212 = vmatprep.subr.bf16.mxu0 0
      %1213 = vmatpush1.bf16.msra.mxu0 0
      %1214 = vmatprep.subr.bf16.mxu0 0
      %1215 = vmatpush1.bf16.msra.mxu0 0
      %1216 = vmatprep.subr.bf16.mxu0 0
      %1217 = vmatpush1.bf16.msra.mxu0 0
      %1218 = vmatprep.subr.bf16.mxu0 0
      %1219 = vmatpush1.bf16.msra.mxu0 0
      %1220 = vmatprep.subr.bf16.mxu0 0
      %1221 = vmatpush1.bf16.msra.mxu0 0
      %1222 = vmatprep.subr.bf16.mxu0 0
      %1223 = vmatpush1.bf16.msra.mxu0 0
      %1224 = vmatprep.subr.bf16.mxu0 0
      %1225 = vmatpush1.bf16.msra.mxu0 0
      %1226 = vmatprep.subr.bf16.mxu0 0
      %1227 = vmatpush1.bf16.msra.mxu0 0
      %1228 = vmatprep.subr.bf16.mxu0 0
      %1229 = vmatpush1.bf16.msra.mxu0 0
      %1230 = vmatprep.subr.bf16.mxu0 0
      %1231 = vmatpush1.bf16.msra.mxu0 0
      %1232 = vmatprep.subr.bf16.mxu0 0
      %1233 = vmatpush1.bf16.msra.mxu0 0
      %1234 = vmatprep.subr.bf16.mxu0 0
      %1235 = vmatpush1.bf16.msra.mxu0 0
      %1236 = vmatprep.mubr.bf16.mxu0 0
      %1237 = vmatmul.mubr.bf16.gmra.mrb[0].mxu0 %v1190
      %v1238 = vpop.f32.mrb[0].mxu0
      %v1239 = vadd.f32 0.0, %v1238
      %v1240 = vpop.f32.mrb[0].mxu0
      %v1241 = vpop.f32.mrb[0].mxu0
      %v1242 = vadd.f32 0.0, %v1241
      %v1243 = vpop.f32.mrb[0].mxu0
      %1244 = vmatprep.mubr.bf16.mxu0 0
      %1245 = vmatmul.mubr.bf16.gmra.mrb[0].mxu0 %v1193
      %v1246 = vpop.f32.mrb[0].mxu0
      %v1247 = vadd.f32 0.0, %v1246
      %v1248 = vpop.f32.mrb[0].mxu0
      %v1249 = vpop.f32.mrb[0].mxu0
      %v1250 = vadd.f32 0.0, %v1249
      %v1251 = vpop.f32.mrb[0].mxu0
      %1252 = vmatprep.mubr.bf16.mxu0 0
      %1253 = vmatmul.mubr.bf16.gmra.mrb[0].mxu0 %v1196
      %v1254 = vpop.f32.mrb[0].mxu0
      %v1255 = vadd.f32 0.0, %v1254
      %v1256 = vpop.f32.mrb[0].mxu0
      %v1257 = vpop.f32.mrb[0].mxu0
      %v1258 = vadd.f32 0.0, %v1257
      %v1259 = vpop.f32.mrb[0].mxu0
      %1260 = vmatprep.mubr.bf16.mxu0 0
      %1261 = vmatmul.mubr.bf16.gmra.mrb[0].mxu0 %v1199
      %v1262 = vpop.f32.mrb[0].mxu0
      %v1263 = vadd.f32 0.0, %v1262
      %v1264 = vpop.f32.mrb[0].mxu0
      %v1265 = vpop.f32.mrb[0].mxu0
      %v1266 = vadd.f32 0.0, %v1265
      %v1267 = vpop.f32.mrb[0].mxu0
      %1268 = vdwg.mxu0
      %v1269 = vadd.f32 %v1040, %v1239
      %v1270 = vadd.f32 %v1041, %v1242
      %v1271 = vadd.f32 %v1042, %v1247
      %v1272 = vadd.f32 %v1043, %v1250
      %v1273 = vadd.f32 %v1044, %v1255
      %v1274 = vadd.f32 %v1045, %v1258
      %v1275 = vadd.f32 %v1046, %v1263
      %v1276 = vadd.f32 %v1047, %v1266
      %v1277 = vld [vmem:[%s926] sm:$0xe]
      %v1278 = vld [vmem:[%s926 + $0x8] sm:$0xe]
      %v1279 = vld [vmem:[%s926 + $0x10] sm:$0xe]
      %v1280 = vld [vmem:[%s926 + $0x18] sm:$0xe]
      %v1281 = vld [vmem:[%s926 + $0x20] sm:$0xe]
      %v1282 = vld [vmem:[%s926 + $0x28] sm:$0xe]
      %v1283 = vld [vmem:[%s926 + $0x30] sm:$0xe]
      %v1284 = vld [vmem:[%s926 + $0x38] sm:$0xe]
      %v1301 = vrot.slane %v1277, 5
      %v1302 = vrot.slane %v1301, 4
      %v1303 = vrot.slane %v1049, 5
      %v1304 = vsel %vm792, %v1302, %v1303
      %v1305 = vrot.slane %v1278, 5
      %v1306 = vrot.slane %v1305, 4
      %v1307 = vrot.slane %v1051, 5
      %v1308 = vsel %vm792, %v1306, %v1307
      %v1309 = vrot.slane %v1279, 5
      %v1310 = vrot.slane %v1309, 4
      %v1311 = vrot.slane %v1053, 5
      %v1312 = vsel %vm792, %v1310, %v1311
      %v1313 = vrot.slane %v1280, 5
      %v1314 = vrot.slane %v1313, 4
      %v1315 = vrot.slane %v1055, 5
      %v1316 = vsel %vm792, %v1314, %v1315
      %v1317 = vrot.slane %v1281, 5
      %v1318 = vrot.slane %v1317, 4
      %v1319 = vrot.slane %v1057, 5
      %v1320 = vsel %vm792, %v1318, %v1319
      %v1321 = vrot.slane %v1282, 5
      %v1322 = vrot.slane %v1321, 4
      %v1323 = vrot.slane %v1059, 5
      %v1324 = vsel %vm792, %v1322, %v1323
      %v1325 = vrot.slane %v1283, 5
      %v1326 = vrot.slane %v1325, 4
      %v1327 = vrot.slane %v1061, 5
      %v1328 = vsel %vm792, %v1326, %v1327
      %v1329 = vrot.slane %v1284, 5
      %v1330 = vrot.slane %v1329, 4
      %v1331 = vrot.slane %v1063, 5
      %v1332 = vsel %vm792, %v1330, %v1331
      %v1333 = vld [vmem:[%s3 + $0x8] sm:$0xc]
      %v1334 = vunpack.c.l.b16 %v1304
      %v1335 = vunpack.c.l.b16 %v1308
      %v1336 = vunpack.c.l.b16 %v1312
      %v1337 = vunpack.c.l.b16 %v1316
      %v1338 = vunpack.c.l.b16 %v1320
      %v1339 = vunpack.c.l.b16 %v1324
      %v1340 = vunpack.c.l.b16 %v1328
      %v1341 = vunpack.c.l.b16 %v1332
      %v1342 = vpack.c.b16 %v1335, %v1334
      %v1343 = vpack.c.b16 %v1337, %v1336
      %v1344 = vpack.c.b16 %v1339, %v1338
      %v1345 = vpack.c.b16 %v1341, %v1340
      %v1347 = vunpack.c.l.b16 %v1333
      %v1348 = vpack.c.b16 %v1347, %v1347
      %v1349 = vrot.slane %v1348, 2
      %v1351 = vsel %vm584, %v1342, 0
      %v1354 = vsel %vm584, %v1343, 0
      %v1357 = vsel %vm584, %v1344, 0
      %v1360 = vsel %vm584, %v1345, 0
      %v1363 = vsel %vm597, %v1349, 0
      %1365 = vmatprep.subr.bf16.mxu0 0
      %1366 = vmatpush1.bf16.msra.mxu0 %v1363
      %1367 = vmatprep.subr.bf16.mxu0 0
      %1368 = vmatpush1.bf16.msra.mxu0 0
      %1369 = vmatprep.subr.bf16.mxu0 0
      %1370 = vmatpush1.bf16.msra.mxu0 0
      %1371 = vmatprep.subr.bf16.mxu0 0
      %1372 = vmatpush1.bf16.msra.mxu0 0
      %1373 = vmatprep.subr.bf16.mxu0 0
      %1374 = vmatpush1.bf16.msra.mxu0 0
      %1375 = vmatprep.subr.bf16.mxu0 0
      %1376 = vmatpush1.bf16.msra.mxu0 0
      %1377 = vmatprep.subr.bf16.mxu0 0
      %1378 = vmatpush1.bf16.msra.mxu0 0
      %1379 = vmatprep.subr.bf16.mxu0 0
      %1380 = vmatpush1.bf16.msra.mxu0 0
      %1381 = vmatprep.subr.bf16.mxu0 0
      %1382 = vmatpush1.bf16.msra.mxu0 0
      %1383 = vmatprep.subr.bf16.mxu0 0
      %1384 = vmatpush1.bf16.msra.mxu0 0
      %1385 = vmatprep.subr.bf16.mxu0 0
      %1386 = vmatpush1.bf16.msra.mxu0 0
      %1387 = vmatprep.subr.bf16.mxu0 0
      %1388 = vmatpush1.bf16.msra.mxu0 0
      %1389 = vmatprep.subr.bf16.mxu0 0
      %1390 = vmatpush1.bf16.msra.mxu0 0
      %1391 = vmatprep.subr.bf16.mxu0 0
      %1392 = vmatpush1.bf16.msra.mxu0 0
      %1393 = vmatprep.subr.bf16.mxu0 0
      %1394 = vmatpush1.bf16.msra.mxu0 0
      %1395 = vmatprep.subr.bf16.mxu0 0
      %1396 = vmatpush1.bf16.msra.mxu0 0
      %1397 = vmatprep.mubr.bf16.mxu0 0
      %1398 = vmatmul.mubr.bf16.gmra.mrb[0].mxu0 %v1351
      %v1399 = vpop.f32.mrb[0].mxu0
      %v1400 = vadd.f32 0.0, %v1399
      %v1401 = vpop.f32.mrb[0].mxu0
      %v1402 = vpop.f32.mrb[0].mxu0
      %v1403 = vadd.f32 0.0, %v1402
      %v1404 = vpop.f32.mrb[0].mxu0
      %1405 = vmatprep.mubr.bf16.mxu0 0
      %1406 = vmatmul.mubr.bf16.gmra.mrb[0].mxu0 %v1354
      %v1407 = vpop.f32.mrb[0].mxu0
      %v1408 = vadd.f32 0.0, %v1407
      %v1409 = vpop.f32.mrb[0].mxu0
      %v1410 = vpop.f32.mrb[0].mxu0
      %v1411 = vadd.f32 0.0, %v1410
      %v1412 = vpop.f32.mrb[0].mxu0
      %1413 = vmatprep.mubr.bf16.mxu0 0
      %1414 = vmatmul.mubr.bf16.gmra.mrb[0].mxu0 %v1357
      %v1415 = vpop.f32.mrb[0].mxu0
      %v1416 = vadd.f32 0.0, %v1415
      %v1417 = vpop.f32.mrb[0].mxu0
      %v1418 = vpop.f32.mrb[0].mxu0
      %v1419 = vadd.f32 0.0, %v1418
      %v1420 = vpop.f32.mrb[0].mxu0
      %1421 = vmatprep.mubr.bf16.mxu0 0
      %1422 = vmatmul.mubr.bf16.gmra.mrb[0].mxu0 %v1360
      %v1423 = vpop.f32.mrb[0].mxu0
      %v1424 = vadd.f32 0.0, %v1423
      %v1425 = vpop.f32.mrb[0].mxu0
      %v1426 = vpop.f32.mrb[0].mxu0
      %v1427 = vadd.f32 0.0, %v1426
      %v1428 = vpop.f32.mrb[0].mxu0
      %1429 = vdwg.mxu0
      %v1430 = vadd.f32 %v1269, %v1400
      %v1431 = vadd.f32 %v1270, %v1403
      %v1432 = vadd.f32 %v1271, %v1408
      %v1433 = vadd.f32 %v1272, %v1411
      %v1434 = vadd.f32 %v1273, %v1416
      %v1435 = vadd.f32 %v1274, %v1419
      %v1436 = vadd.f32 %v1275, %v1424
      %v1437 = vadd.f32 %v1276, %v1427
      %s1438 = scalar_lea.vmem %s388, 16
      %v1439 = vld [vmem:[%s1438] sm:$0xf]
      %v1440 = vld [vmem:[%s1438 + $0x8] sm:$0xf]
      %v1441 = vld [vmem:[%s1438 + $0x10] sm:$0xf]
      %v1442 = vld [vmem:[%s1438 + $0x18] sm:$0xf]
      %v1443 = vld [vmem:[%s1438 + $0x20] sm:$0xf]
      %v1444 = vld [vmem:[%s1438 + $0x28] sm:$0xf]
      %v1445 = vld [vmem:[%s1438 + $0x30] sm:$0xf]
      %v1446 = vld [vmem:[%s1438 + $0x38] sm:$0xf]
      %v1447 = vld [vmem:[%s3 + $0xc] sm:$0x3]
      %v1456 = vunpack.c.l.b16 %v1439
      %v1457 = vunpack.c.l.b16 %v1440
      %v1458 = vunpack.c.l.b16 %v1441
      %v1459 = vunpack.c.l.b16 %v1442
      %v1460 = vunpack.c.l.b16 %v1443
      %v1461 = vunpack.c.l.b16 %v1444
      %v1462 = vunpack.c.l.b16 %v1445
      %v1463 = vunpack.c.l.b16 %v1446
      %v1464 = vpack.c.b16 %v1457, %v1456
      %v1465 = vpack.c.b16 %v1459, %v1458
      %v1466 = vpack.c.b16 %v1461, %v1460
      %v1467 = vpack.c.b16 %v1463, %v1462
      %v1469 = vsel %vm584, %v1464, 0
      %v1472 = vsel %vm584, %v1465, 0
      %v1475 = vsel %vm584, %v1466, 0
      %v1478 = vsel %vm584, %v1467, 0
      %v1481 = vsel %vm597, %v1447, 0
      %1483 = vmatprep.subr.bf16.mxu0 0
      %1484 = vmatpush1.bf16.msra.mxu0 %v1481
      %1485 = vmatprep.subr.bf16.mxu0 0
      %1486 = vmatpush1.bf16.msra.mxu0 0
      %1487 = vmatprep.subr.bf16.mxu0 0
      %1488 = vmatpush1.bf16.msra.mxu0 0
      %1489 = vmatprep.subr.bf16.mxu0 0
      %1490 = vmatpush1.bf16.msra.mxu0 0
      %1491 = vmatprep.subr.bf16.mxu0 0
      %1492 = vmatpush1.bf16.msra.mxu0 0
      %1493 = vmatprep.subr.bf16.mxu0 0
      %1494 = vmatpush1.bf16.msra.mxu0 0
      %1495 = vmatprep.subr.bf16.mxu0 0
      %1496 = vmatpush1.bf16.msra.mxu0 0
      %1497 = vmatprep.subr.bf16.mxu0 0
      %1498 = vmatpush1.bf16.msra.mxu0 0
      %1499 = vmatprep.subr.bf16.mxu0 0
      %1500 = vmatpush1.bf16.msra.mxu0 0
      %1501 = vmatprep.subr.bf16.mxu0 0
      %1502 = vmatpush1.bf16.msra.mxu0 0
      %1503 = vmatprep.subr.bf16.mxu0 0
      %1504 = vmatpush1.bf16.msra.mxu0 0
      %1505 = vmatprep.subr.bf16.mxu0 0
      %1506 = vmatpush1.bf16.msra.mxu0 0
      %1507 = vmatprep.subr.bf16.mxu0 0
      %1508 = vmatpush1.bf16.msra.mxu0 0
      %1509 = vmatprep.subr.bf16.mxu0 0
      %1510 = vmatpush1.bf16.msra.mxu0 0
      %1511 = vmatprep.subr.bf16.mxu0 0
      %1512 = vmatpush1.bf16.msra.mxu0 0
      %1513 = vmatprep.subr.bf16.mxu0 0
      %1514 = vmatpush1.bf16.msra.mxu0 0
      %1515 = vmatprep.mubr.bf16.mxu0 0
      %1516 = vmatmul.mubr.bf16.gmra.mrb[0].mxu0 %v1469
      %v1517 = vpop.f32.mrb[0].mxu0
      %v1518 = vadd.f32 0.0, %v1517
      %v1519 = vpop.f32.mrb[0].mxu0
      %v1520 = vpop.f32.mrb[0].mxu0
      %v1521 = vadd.f32 0.0, %v1520
      %v1522 = vpop.f32.mrb[0].mxu0
      %1523 = vmatprep.mubr.bf16.mxu0 0
      %1524 = vmatmul.mubr.bf16.gmra.mrb[0].mxu0 %v1472
      %v1525 = vpop.f32.mrb[0].mxu0
      %v1526 = vadd.f32 0.0, %v1525
      %v1527 = vpop.f32.mrb[0].mxu0
      %v1528 = vpop.f32.mrb[0].mxu0
      %v1529 = vadd.f32 0.0, %v1528
      %v1530 = vpop.f32.mrb[0].mxu0
      %1531 = vmatprep.mubr.bf16.mxu0 0
      %1532 = vmatmul.mubr.bf16.gmra.mrb[0].mxu0 %v1475
      %v1533 = vpop.f32.mrb[0].mxu0
      %v1534 = vadd.f32 0.0, %v1533
      %v1535 = vpop.f32.mrb[0].mxu0
      %v1536 = vpop.f32.mrb[0].mxu0
      %v1537 = vadd.f32 0.0, %v1536
      %v1538 = vpop.f32.mrb[0].mxu0
      %1539 = vmatprep.mubr.bf16.mxu0 0
      %1540 = vmatmul.mubr.bf16.gmra.mrb[0].mxu0 %v1478
      %v1541 = vpop.f32.mrb[0].mxu0
      %v1542 = vadd.f32 0.0, %v1541
      %v1543 = vpop.f32.mrb[0].mxu0
      %v1544 = vpop.f32.mrb[0].mxu0
      %v1545 = vadd.f32 0.0, %v1544
      %v1546 = vpop.f32.mrb[0].mxu0
      %1547 = vdwg.mxu0
      %v1548 = vadd.f32 %v1430, %v1518
      %v1549 = vadd.f32 %v1431, %v1521
      %v1550 = vadd.f32 %v1432, %v1526
      %v1551 = vadd.f32 %v1433, %v1529
      %v1552 = vadd.f32 %v1434, %v1534
      %v1553 = vadd.f32 %v1435, %v1537
      %v1554 = vadd.f32 %v1436, %v1542
      %v1555 = vadd.f32 %v1437, %v1545
      %v1556 = vld [vmem:[%s1438] sm:$0xf]
      %v1557 = vld [vmem:[%s1438 + $0x4] sm:$0x1]
      %v1558 = vld [vmem:[%s1438 + $0x8] sm:$0xf]
      %v1559 = vld [vmem:[%s1438 + $0xc] sm:$0x1]
      %v1560 = vld [vmem:[%s1438 + $0x10] sm:$0xf]
      %v1561 = vld [vmem:[%s1438 + $0x14] sm:$0x1]
      %v1562 = vld [vmem:[%s1438 + $0x18] sm:$0xf]
      %v1563 = vld [vmem:[%s1438 + $0x1c] sm:$0x1]
      %v1564 = vld [vmem:[%s1438 + $0x20] sm:$0xf]
      %v1565 = vld [vmem:[%s1438 + $0x24] sm:$0x1]
      %v1566 = vld [vmem:[%s1438 + $0x28] sm:$0xf]
      %v1567 = vld [vmem:[%s1438 + $0x2c] sm:$0x1]
      %v1568 = vld [vmem:[%s1438 + $0x30] sm:$0xf]
      %v1569 = vld [vmem:[%s1438 + $0x34] sm:$0x1]
      %v1570 = vld [vmem:[%s1438 + $0x38] sm:$0xf]
      %v1571 = vld [vmem:[%s1438 + $0x3c] sm:$0x1]
      %v1573 = vshrl.u32 %v1556, 16
      %v1575 = vrot.slane %v1573, 4
      %v1576 = vshll.u32 %v1556, 16
      %v1578 = vrot.slane %v1576, 5
      %v1579 = vor.u32 %v1575, %v1578
      %v1580 = vrot.slane %v1579, 4
      %v1582 = vshll.u32 %v1557, 16
      %v1584 = vrot.slane %v1582, 5
      %v1585 = vsel %vm454, %v1580, %v1584
      %v1587 = vshrl.u32 %v1558, 16
      %v1589 = vrot.slane %v1587, 4
      %v1590 = vshll.u32 %v1558, 16
      %v1592 = vrot.slane %v1590, 5
      %v1593 = vor.u32 %v1589, %v1592
      %v1594 = vrot.slane %v1593, 4
      %v1596 = vshll.u32 %v1559, 16
      %v1598 = vrot.slane %v1596, 5
      %v1599 = vsel %vm454, %v1594, %v1598
      %v1601 = vshrl.u32 %v1560, 16
      %v1603 = vrot.slane %v1601, 4
      %v1604 = vshll.u32 %v1560, 16
      %v1606 = vrot.slane %v1604, 5
      %v1607 = vor.u32 %v1603, %v1606
      %v1608 = vrot.slane %v1607, 4
      %v1610 = vshll.u32 %v1561, 16
      %v1612 = vrot.slane %v1610, 5
      %v1613 = vsel %vm454, %v1608, %v1612
      %v1615 = vshrl.u32 %v1562, 16
      %v1617 = vrot.slane %v1615, 4
      %v1618 = vshll.u32 %v1562, 16
      %v1620 = vrot.slane %v1618, 5
      %v1621 = vor.u32 %v1617, %v1620
      %v1622 = vrot.slane %v1621, 4
      %v1624 = vshll.u32 %v1563, 16
      %v1626 = vrot.slane %v1624, 5
      %v1627 = vsel %vm454, %v1622, %v1626
      %v1629 = vshrl.u32 %v1564, 16
      %v1631 = vrot.slane %v1629, 4
      %v1632 = vshll.u32 %v1564, 16
      %v1634 = vrot.slane %v1632, 5
      %v1635 = vor.u32 %v1631, %v1634
      %v1636 = vrot.slane %v1635, 4
      %v1638 = vshll.u32 %v1565, 16
      %v1640 = vrot.slane %v1638, 5
      %v1641 = vsel %vm454, %v1636, %v1640
      %v1643 = vshrl.u32 %v1566, 16
      %v1645 = vrot.slane %v1643, 4
      %v1646 = vshll.u32 %v1566, 16
      %v1648 = vrot.slane %v1646, 5
      %v1649 = vor.u32 %v1645, %v1648
      %v1650 = vrot.slane %v1649, 4
      %v1652 = vshll.u32 %v1567, 16
      %v1654 = vrot.slane %v1652, 5
      %v1655 = vsel %vm454, %v1650, %v1654
      %v1657 = vshrl.u32 %v1568, 16
      %v1659 = vrot.slane %v1657, 4
      %v1660 = vshll.u32 %v1568, 16
      %v1662 = vrot.slane %v1660, 5
      %v1663 = vor.u32 %v1659, %v1662
      %v1664 = vrot.slane %v1663, 4
      %v1666 = vshll.u32 %v1569, 16
      %v1668 = vrot.slane %v1666, 5
      %v1669 = vsel %vm454, %v1664, %v1668
      %v1671 = vshrl.u32 %v1570, 16
      %v1673 = vrot.slane %v1671, 4
      %v1674 = vshll.u32 %v1570, 16
      %v1676 = vrot.slane %v1674, 5
      %v1677 = vor.u32 %v1673, %v1676
      %v1678 = vrot.slane %v1677, 4
      %v1680 = vshll.u32 %v1571, 16
      %v1682 = vrot.slane %v1680, 5
      %v1683 = vsel %vm454, %v1678, %v1682
      %v1684 = vld [vmem:[%s3 + $0xc] sm:$0xc]
      %v1685 = vunpack.c.l.b16 %v1585
      %v1686 = vunpack.c.l.b16 %v1599
      %v1687 = vunpack.c.l.b16 %v1613
      %v1688 = vunpack.c.l.b16 %v1627
      %v1689 = vunpack.c.l.b16 %v1641
      %v1690 = vunpack.c.l.b16 %v1655
      %v1691 = vunpack.c.l.b16 %v1669
      %v1692 = vunpack.c.l.b16 %v1683
      %v1693 = vpack.c.b16 %v1686, %v1685
      %v1694 = vpack.c.b16 %v1688, %v1687
      %v1695 = vpack.c.b16 %v1690, %v1689
      %v1696 = vpack.c.b16 %v1692, %v1691
      %v1698 = vunpack.c.l.b16 %v1684
      %v1699 = vpack.c.b16 %v1698, %v1698
      %v1700 = vrot.slane %v1699, 2
      %v1702 = vsel %vm584, %v1693, 0
      %v1705 = vsel %vm584, %v1694, 0
      %v1708 = vsel %vm584, %v1695, 0
      %v1711 = vsel %vm584, %v1696, 0
      %v1714 = vsel %vm597, %v1700, 0
      %1716 = vmatprep.subr.bf16.mxu0 0
      %1717 = vmatpush1.bf16.msra.mxu0 %v1714
      %1718 = vmatprep.subr.bf16.mxu0 0
      %1719 = vmatpush1.bf16.msra.mxu0 0
      %1720 = vmatprep.subr.bf16.mxu0 0
      %1721 = vmatpush1.bf16.msra.mxu0 0
      %1722 = vmatprep.subr.bf16.mxu0 0
      %1723 = vmatpush1.bf16.msra.mxu0 0
      %1724 = vmatprep.subr.bf16.mxu0 0
      %1725 = vmatpush1.bf16.msra.mxu0 0
      %1726 = vmatprep.subr.bf16.mxu0 0
      %1727 = vmatpush1.bf16.msra.mxu0 0
      %1728 = vmatprep.subr.bf16.mxu0 0
      %1729 = vmatpush1.bf16.msra.mxu0 0
      %1730 = vmatprep.subr.bf16.mxu0 0
      %1731 = vmatpush1.bf16.msra.mxu0 0
      %1732 = vmatprep.subr.bf16.mxu0 0
      %1733 = vmatpush1.bf16.msra.mxu0 0
      %1734 = vmatprep.subr.bf16.mxu0 0
      %1735 = vmatpush1.bf16.msra.mxu0 0
      %1736 = vmatprep.subr.bf16.mxu0 0
      %1737 = vmatpush1.bf16.msra.mxu0 0
      %1738 = vmatprep.subr.bf16.mxu0 0
      %1739 = vmatpush1.bf16.msra.mxu0 0
      %1740 = vmatprep.subr.bf16.mxu0 0
      %1741 = vmatpush1.bf16.msra.mxu0 0
      %1742 = vmatprep.subr.bf16.mxu0 0
      %1743 = vmatpush1.bf16.msra.mxu0 0
      %1744 = vmatprep.subr.bf16.mxu0 0
      %1745 = vmatpush1.bf16.msra.mxu0 0
      %1746 = vmatprep.subr.bf16.mxu0 0
      %1747 = vmatpush1.bf16.msra.mxu0 0
      %1748 = vmatprep.mubr.bf16.mxu0 0
      %1749 = vmatmul.mubr.bf16.gmra.mrb[0].mxu0 %v1702
      %v1750 = vpop.f32.mrb[0].mxu0
      %v1751 = vadd.f32 0.0, %v1750
      %v1752 = vpop.f32.mrb[0].mxu0
      %v1753 = vpop.f32.mrb[0].mxu0
      %v1754 = vadd.f32 0.0, %v1753
      %v1755 = vpop.f32.mrb[0].mxu0
      %1756 = vmatprep.mubr.bf16.mxu0 0
      %1757 = vmatmul.mubr.bf16.gmra.mrb[0].mxu0 %v1705
      %v1758 = vpop.f32.mrb[0].mxu0
      %v1759 = vadd.f32 0.0, %v1758
      %v1760 = vpop.f32.mrb[0].mxu0
      %v1761 = vpop.f32.mrb[0].mxu0
      %v1762 = vadd.f32 0.0, %v1761
      %v1763 = vpop.f32.mrb[0].mxu0
      %1764 = vmatprep.mubr.bf16.mxu0 0
      %1765 = vmatmul.mubr.bf16.gmra.mrb[0].mxu0 %v1708
      %v1766 = vpop.f32.mrb[0].mxu0
      %v1767 = vadd.f32 0.0, %v1766
      %v1768 = vpop.f32.mrb[0].mxu0
      %v1769 = vpop.f32.mrb[0].mxu0
      %v1770 = vadd.f32 0.0, %v1769
      %v1771 = vpop.f32.mrb[0].mxu0
      %1772 = vmatprep.mubr.bf16.mxu0 0
      %1773 = vmatmul.mubr.bf16.gmra.mrb[0].mxu0 %v1711
      %v1774 = vpop.f32.mrb[0].mxu0
      %v1775 = vadd.f32 0.0, %v1774
      %v1776 = vpop.f32.mrb[0].mxu0
      %v1777 = vpop.f32.mrb[0].mxu0
      %v1778 = vadd.f32 0.0, %v1777
      %v1779 = vpop.f32.mrb[0].mxu0
      %1780 = vdwg.mxu0
      %v1781 = vadd.f32 %v1548, %v1751
      %v1782 = vadd.f32 %v1549, %v1754
      %v1783 = vadd.f32 %v1550, %v1759
      %v1784 = vadd.f32 %v1551, %v1762
      %v1785 = vadd.f32 %v1552, %v1767
      %v1786 = vadd.f32 %v1553, %v1770
      %v1787 = vadd.f32 %v1554, %v1775
      %v1788 = vadd.f32 %v1555, %v1778
      %v1789 = vld [vmem:[%s1438] sm:$0xe]
      %v1790 = vld [vmem:[%s1438 + $0x8] sm:$0xe]
      %v1791 = vld [vmem:[%s1438 + $0x10] sm:$0xe]
      %v1792 = vld [vmem:[%s1438 + $0x18] sm:$0xe]
      %v1793 = vld [vmem:[%s1438 + $0x20] sm:$0xe]
      %v1794 = vld [vmem:[%s1438 + $0x28] sm:$0xe]
      %v1795 = vld [vmem:[%s1438 + $0x30] sm:$0xe]
      %v1796 = vld [vmem:[%s1438 + $0x38] sm:$0xe]
      %v1813 = vrot.slane %v1789, 5
      %v1814 = vrot.slane %v1813, 4
      %v1815 = vrot.slane %v1557, 5
      %v1816 = vsel %vm792, %v1814, %v1815
      %v1817 = vrot.slane %v1790, 5
      %v1818 = vrot.slane %v1817, 4
      %v1819 = vrot.slane %v1559, 5
      %v1820 = vsel %vm792, %v1818, %v1819
      %v1821 = vrot.slane %v1791, 5
      %v1822 = vrot.slane %v1821, 4
      %v1823 = vrot.slane %v1561, 5
      %v1824 = vsel %vm792, %v1822, %v1823
      %v1825 = vrot.slane %v1792, 5
      %v1826 = vrot.slane %v1825, 4
      %v1827 = vrot.slane %v1563, 5
      %v1828 = vsel %vm792, %v1826, %v1827
      %v1829 = vrot.slane %v1793, 5
      %v1830 = vrot.slane %v1829, 4
      %v1831 = vrot.slane %v1565, 5
      %v1832 = vsel %vm792, %v1830, %v1831
      %v1833 = vrot.slane %v1794, 5
      %v1834 = vrot.slane %v1833, 4
      %v1835 = vrot.slane %v1567, 5
      %v1836 = vsel %vm792, %v1834, %v1835
      %v1837 = vrot.slane %v1795, 5
      %v1838 = vrot.slane %v1837, 4
      %v1839 = vrot.slane %v1569, 5
      %v1840 = vsel %vm792, %v1838, %v1839
      %v1841 = vrot.slane %v1796, 5
      %v1842 = vrot.slane %v1841, 4
      %v1843 = vrot.slane %v1571, 5
      %v1844 = vsel %vm792, %v1842, %v1843
      %v1845 = vld [vmem:[%s3 + $0x10] sm:$0x3]
      %v1846 = vunpack.c.l.b16 %v1816
      %v1847 = vunpack.c.l.b16 %v1820
      %v1848 = vunpack.c.l.b16 %v1824
      %v1849 = vunpack.c.l.b16 %v1828
      %v1850 = vunpack.c.l.b16 %v1832
      %v1851 = vunpack.c.l.b16 %v1836
      %v1852 = vunpack.c.l.b16 %v1840
      %v1853 = vunpack.c.l.b16 %v1844
      %v1854 = vpack.c.b16 %v1847, %v1846
      %v1855 = vpack.c.b16 %v1849, %v1848
      %v1856 = vpack.c.b16 %v1851, %v1850
      %v1857 = vpack.c.b16 %v1853, %v1852
      %v1859 = vsel %vm584, %v1854, 0
      %v1862 = vsel %vm584, %v1855, 0
      %v1865 = vsel %vm584, %v1856, 0
      %v1868 = vsel %vm584, %v1857, 0
      %v1871 = vsel %vm597, %v1845, 0
      %1873 = vmatprep.subr.bf16.mxu0 0
      %1874 = vmatpush1.bf16.msra.mxu0 %v1871
      %1875 = vmatprep.subr.bf16.mxu0 0
      %1876 = vmatpush1.bf16.msra.mxu0 0
      %1877 = vmatprep.subr.bf16.mxu0 0
      %1878 = vmatpush1.bf16.msra.mxu0 0
      %1879 = vmatprep.subr.bf16.mxu0 0
      %1880 = vmatpush1.bf16.msra.mxu0 0
      %1881 = vmatprep.subr.bf16.mxu0 0
      %1882 = vmatpush1.bf16.msra.mxu0 0
      %1883 = vmatprep.subr.bf16.mxu0 0
      %1884 = vmatpush1.bf16.msra.mxu0 0
      %1885 = vmatprep.subr.bf16.mxu0 0
      %1886 = vmatpush1.bf16.msra.mxu0 0
      %1887 = vmatprep.subr.bf16.mxu0 0
      %1888 = vmatpush1.bf16.msra.mxu0 0
      %1889 = vmatprep.subr.bf16.mxu0 0
      %1890 = vmatpush1.bf16.msra.mxu0 0
      %1891 = vmatprep.subr.bf16.mxu0 0
      %1892 = vmatpush1.bf16.msra.mxu0 0
      %1893 = vmatprep.subr.bf16.mxu0 0
      %1894 = vmatpush1.bf16.msra.mxu0 0
      %1895 = vmatprep.subr.bf16.mxu0 0
      %1896 = vmatpush1.bf16.msra.mxu0 0
      %1897 = vmatprep.subr.bf16.mxu0 0
      %1898 = vmatpush1.bf16.msra.mxu0 0
      %1899 = vmatprep.subr.bf16.mxu0 0
      %1900 = vmatpush1.bf16.msra.mxu0 0
      %1901 = vmatprep.subr.bf16.mxu0 0
      %1902 = vmatpush1.bf16.msra.mxu0 0
      %1903 = vmatprep.subr.bf16.mxu0 0
      %1904 = vmatpush1.bf16.msra.mxu0 0
      %1905 = vmatprep.mubr.bf16.mxu0 0
      %1906 = vmatmul.mubr.bf16.gmra.mrb[0].mxu0 %v1859
      %v1907 = vpop.f32.mrb[0].mxu0
      %v1908 = vadd.f32 0.0, %v1907
      %v1909 = vpop.f32.mrb[0].mxu0
      %v1910 = vpop.f32.mrb[0].mxu0
      %v1911 = vadd.f32 0.0, %v1910
      %v1912 = vpop.f32.mrb[0].mxu0
      %1913 = vmatprep.mubr.bf16.mxu0 0
      %1914 = vmatmul.mubr.bf16.gmra.mrb[0].mxu0 %v1862
      %v1915 = vpop.f32.mrb[0].mxu0
      %v1916 = vadd.f32 0.0, %v1915
      %v1917 = vpop.f32.mrb[0].mxu0
      %v1918 = vpop.f32.mrb[0].mxu0
      %v1919 = vadd.f32 0.0, %v1918
      %v1920 = vpop.f32.mrb[0].mxu0
      %1921 = vmatprep.mubr.bf16.mxu0 0
      %1922 = vmatmul.mubr.bf16.gmra.mrb[0].mxu0 %v1865
      %v1923 = vpop.f32.mrb[0].mxu0
      %v1924 = vadd.f32 0.0, %v1923
      %v1925 = vpop.f32.mrb[0].mxu0
      %v1926 = vpop.f32.mrb[0].mxu0
      %v1927 = vadd.f32 0.0, %v1926
      %v1928 = vpop.f32.mrb[0].mxu0
      %1929 = vmatprep.mubr.bf16.mxu0 0
      %1930 = vmatmul.mubr.bf16.gmra.mrb[0].mxu0 %v1868
      %v1931 = vpop.f32.mrb[0].mxu0
      %v1932 = vadd.f32 0.0, %v1931
      %v1933 = vpop.f32.mrb[0].mxu0
      %v1934 = vpop.f32.mrb[0].mxu0
      %v1935 = vadd.f32 0.0, %v1934
      %v1936 = vpop.f32.mrb[0].mxu0
      %1937 = vdwg.mxu0
      %v1938 = vadd.f32 %v1781, %v1908
      %v1939 = vadd.f32 %v1782, %v1911
      %v1940 = vadd.f32 %v1783, %v1916
      %v1941 = vadd.f32 %v1784, %v1919
      %v1942 = vadd.f32 %v1785, %v1924
      %v1943 = vadd.f32 %v1786, %v1927
      %v1944 = vadd.f32 %v1787, %v1932
      %v1945 = vadd.f32 %v1788, %v1935
      %v1946 = vld [vmem:[%s398] sm:$0xf]
      %v1947 = vld [vmem:[%s398 + $0x8] sm:$0xf]
      %v1948 = vld [vmem:[%s398 + $0x10] sm:$0xf]
      %v1949 = vld [vmem:[%s398 + $0x18] sm:$0xf]
      %v1950 = vld [vmem:[%s398 + $0x20] sm:$0xf]
      %v1951 = vld [vmem:[%s398 + $0x28] sm:$0xf]
      %v1952 = vld [vmem:[%s398 + $0x30] sm:$0xf]
      %v1953 = vld [vmem:[%s398 + $0x38] sm:$0xf]
      %v1954 = vld [vmem:[%s3 + $0x10] sm:$0xc]
      %v1963 = vunpack.c.l.b16 %v1946
      %v1964 = vunpack.c.l.b16 %v1947
      %v1965 = vunpack.c.l.b16 %v1948
      %v1966 = vunpack.c.l.b16 %v1949
      %v1967 = vunpack.c.l.b16 %v1950
      %v1968 = vunpack.c.l.b16 %v1951
      %v1969 = vunpack.c.l.b16 %v1952
      %v1970 = vunpack.c.l.b16 %v1953
      %v1971 = vpack.c.b16 %v1964, %v1963
      %v1972 = vpack.c.b16 %v1966, %v1965
      %v1973 = vpack.c.b16 %v1968, %v1967
      %v1974 = vpack.c.b16 %v1970, %v1969
      %v1976 = vunpack.c.l.b16 %v1954
      %v1977 = vpack.c.b16 %v1976, %v1976
      %v1978 = vrot.slane %v1977, 2
      %v1980 = vsel %vm584, %v1971, 0
      %v1983 = vsel %vm584, %v1972, 0
      %v1986 = vsel %vm584, %v1973, 0
      %v1989 = vsel %vm584, %v1974, 0
      %v1992 = vsel %vm597, %v1978, 0
      %1994 = vmatprep.subr.bf16.mxu0 0
      %1995 = vmatpush1.bf16.msra.mxu0 %v1992
      %1996 = vmatprep.subr.bf16.mxu0 0
      %1997 = vmatpush1.bf16.msra.mxu0 0
      %1998 = vmatprep.subr.bf16.mxu0 0
      %1999 = vmatpush1.bf16.msra.mxu0 0
      %2000 = vmatprep.subr.bf16.mxu0 0
      %2001 = vmatpush1.bf16.msra.mxu0 0
      %2002 = vmatprep.subr.bf16.mxu0 0
      %2003 = vmatpush1.bf16.msra.mxu0 0
      %2004 = vmatprep.subr.bf16.mxu0 0
      %2005 = vmatpush1.bf16.msra.mxu0 0
      %2006 = vmatprep.subr.bf16.mxu0 0
      %2007 = vmatpush1.bf16.msra.mxu0 0
      %2008 = vmatprep.subr.bf16.mxu0 0
      %2009 = vmatpush1.bf16.msra.mxu0 0
      %2010 = vmatprep.subr.bf16.mxu0 0
      %2011 = vmatpush1.bf16.msra.mxu0 0
      %2012 = vmatprep.subr.bf16.mxu0 0
      %2013 = vmatpush1.bf16.msra.mxu0 0
      %2014 = vmatprep.subr.bf16.mxu0 0
      %2015 = vmatpush1.bf16.msra.mxu0 0
      %2016 = vmatprep.subr.bf16.mxu0 0
      %2017 = vmatpush1.bf16.msra.mxu0 0
      %2018 = vmatprep.subr.bf16.mxu0 0
      %2019 = vmatpush1.bf16.msra.mxu0 0
      %2020 = vmatprep.subr.bf16.mxu0 0
      %2021 = vmatpush1.bf16.msra.mxu0 0
      %2022 = vmatprep.subr.bf16.mxu0 0
      %2023 = vmatpush1.bf16.msra.mxu0 0
      %2024 = vmatprep.subr.bf16.mxu0 0
      %2025 = vmatpush1.bf16.msra.mxu0 0
      %2026 = vmatprep.mubr.bf16.mxu0 0
      %2027 = vmatmul.mubr.bf16.gmra.mrb[0].mxu0 %v1980
      %v2028 = vpop.f32.mrb[0].mxu0
      %v2029 = vadd.f32 0.0, %v2028
      %v2030 = vpop.f32.mrb[0].mxu0
      %v2031 = vpop.f32.mrb[0].mxu0
      %v2032 = vadd.f32 0.0, %v2031
      %v2033 = vpop.f32.mrb[0].mxu0
      %2034 = vmatprep.mubr.bf16.mxu0 0
      %2035 = vmatmul.mubr.bf16.gmra.mrb[0].mxu0 %v1983
      %v2036 = vpop.f32.mrb[0].mxu0
      %v2037 = vadd.f32 0.0, %v2036
      %v2038 = vpop.f32.mrb[0].mxu0
      %v2039 = vpop.f32.mrb[0].mxu0
      %v2040 = vadd.f32 0.0, %v2039
      %v2041 = vpop.f32.mrb[0].mxu0
      %2042 = vmatprep.mubr.bf16.mxu0 0
      %2043 = vmatmul.mubr.bf16.gmra.mrb[0].mxu0 %v1986
      %v2044 = vpop.f32.mrb[0].mxu0
      %v2045 = vadd.f32 0.0, %v2044
      %v2046 = vpop.f32.mrb[0].mxu0
      %v2047 = vpop.f32.mrb[0].mxu0
      %v2048 = vadd.f32 0.0, %v2047
      %v2049 = vpop.f32.mrb[0].mxu0
      %2050 = vmatprep.mubr.bf16.mxu0 0
      %2051 = vmatmul.mubr.bf16.gmra.mrb[0].mxu0 %v1989
      %v2052 = vpop.f32.mrb[0].mxu0
      %v2053 = vadd.f32 0.0, %v2052
      %v2054 = vpop.f32.mrb[0].mxu0
      %v2055 = vpop.f32.mrb[0].mxu0
      %v2056 = vadd.f32 0.0, %v2055
      %v2057 = vpop.f32.mrb[0].mxu0
      %2058 = vdwg.mxu0
      %v2059 = vadd.f32 %v1938, %v2029
      %v2060 = vadd.f32 %v1939, %v2032
      %v2061 = vadd.f32 %v1940, %v2037
      %v2062 = vadd.f32 %v1941, %v2040
      %v2063 = vadd.f32 %v1942, %v2045
      %v2064 = vadd.f32 %v1943, %v2048
      %v2065 = vadd.f32 %v1944, %v2053
      %v2066 = vadd.f32 %v1945, %v2056
      %v2067 = vld [vmem:[%s398] sm:$0xf]
      %v2068 = vld [vmem:[%s398 + $0x4] sm:$0x1]
      %v2069 = vld [vmem:[%s398 + $0x8] sm:$0xf]
      %v2070 = vld [vmem:[%s398 + $0xc] sm:$0x1]
      %v2071 = vld [vmem:[%s398 + $0x10] sm:$0xf]
      %v2072 = vld [vmem:[%s398 + $0x14] sm:$0x1]
      %v2073 = vld [vmem:[%s398 + $0x18] sm:$0xf]
      %v2074 = vld [vmem:[%s398 + $0x1c] sm:$0x1]
      %v2075 = vld [vmem:[%s398 + $0x20] sm:$0xf]
      %v2076 = vld [vmem:[%s398 + $0x24] sm:$0x1]
      %v2077 = vld [vmem:[%s398 + $0x28] sm:$0xf]
      %v2078 = vld [vmem:[%s398 + $0x2c] sm:$0x1]
      %v2079 = vld [vmem:[%s398 + $0x30] sm:$0xf]
      %v2080 = vld [vmem:[%s398 + $0x34] sm:$0x1]
      %v2081 = vld [vmem:[%s398 + $0x38] sm:$0xf]
      %v2082 = vld [vmem:[%s398 + $0x3c] sm:$0x1]
      %v2084 = vshrl.u32 %v2067, 16
      %v2086 = vrot.slane %v2084, 4
      %v2087 = vshll.u32 %v2067, 16
      %v2089 = vrot.slane %v2087, 5
      %v2090 = vor.u32 %v2086, %v2089
      %v2091 = vrot.slane %v2090, 4
      %v2093 = vshll.u32 %v2068, 16
      %v2095 = vrot.slane %v2093, 5
      %v2096 = vsel %vm454, %v2091, %v2095
      %v2098 = vshrl.u32 %v2069, 16
      %v2100 = vrot.slane %v2098, 4
      %v2101 = vshll.u32 %v2069, 16
      %v2103 = vrot.slane %v2101, 5
      %v2104 = vor.u32 %v2100, %v2103
      %v2105 = vrot.slane %v2104, 4
      %v2107 = vshll.u32 %v2070, 16
      %v2109 = vrot.slane %v2107, 5
      %v2110 = vsel %vm454, %v2105, %v2109
      %v2112 = vshrl.u32 %v2071, 16
      %v2114 = vrot.slane %v2112, 4
      %v2115 = vshll.u32 %v2071, 16
      %v2117 = vrot.slane %v2115, 5
      %v2118 = vor.u32 %v2114, %v2117
      %v2119 = vrot.slane %v2118, 4
      %v2121 = vshll.u32 %v2072, 16
      %v2123 = vrot.slane %v2121, 5
      %v2124 = vsel %vm454, %v2119, %v2123
      %v2126 = vshrl.u32 %v2073, 16
      %v2128 = vrot.slane %v2126, 4
      %v2129 = vshll.u32 %v2073, 16
      %v2131 = vrot.slane %v2129, 5
      %v2132 = vor.u32 %v2128, %v2131
      %v2133 = vrot.slane %v2132, 4
      %v2135 = vshll.u32 %v2074, 16
      %v2137 = vrot.slane %v2135, 5
      %v2138 = vsel %vm454, %v2133, %v2137
      %v2140 = vshrl.u32 %v2075, 16
      %v2142 = vrot.slane %v2140, 4
      %v2143 = vshll.u32 %v2075, 16
      %v2145 = vrot.slane %v2143, 5
      %v2146 = vor.u32 %v2142, %v2145
      %v2147 = vrot.slane %v2146, 4
      %v2149 = vshll.u32 %v2076, 16
      %v2151 = vrot.slane %v2149, 5
      %v2152 = vsel %vm454, %v2147, %v2151
      %v2154 = vshrl.u32 %v2077, 16
      %v2156 = vrot.slane %v2154, 4
      %v2157 = vshll.u32 %v2077, 16
      %v2159 = vrot.slane %v2157, 5
      %v2160 = vor.u32 %v2156, %v2159
      %v2161 = vrot.slane %v2160, 4
      %v2163 = vshll.u32 %v2078, 16
      %v2165 = vrot.slane %v2163, 5
      %v2166 = vsel %vm454, %v2161, %v2165
      %v2168 = vshrl.u32 %v2079, 16
      %v2170 = vrot.slane %v2168, 4
      %v2171 = vshll.u32 %v2079, 16
      %v2173 = vrot.slane %v2171, 5
      %v2174 = vor.u32 %v2170, %v2173
      %v2175 = vrot.slane %v2174, 4
      %v2177 = vshll.u32 %v2080, 16
      %v2179 = vrot.slane %v2177, 5
      %v2180 = vsel %vm454, %v2175, %v2179
      %v2182 = vshrl.u32 %v2081, 16
      %v2184 = vrot.slane %v2182, 4
      %v2185 = vshll.u32 %v2081, 16
      %v2187 = vrot.slane %v2185, 5
      %v2188 = vor.u32 %v2184, %v2187
      %v2189 = vrot.slane %v2188, 4
      %v2191 = vshll.u32 %v2082, 16
      %v2193 = vrot.slane %v2191, 5
      %v2194 = vsel %vm454, %v2189, %v2193
      %v2195 = vld [vmem:[%s3 + $0x14] sm:$0x3]
      %v2196 = vunpack.c.l.b16 %v2096
      %v2197 = vunpack.c.l.b16 %v2110
      %v2198 = vunpack.c.l.b16 %v2124
      %v2199 = vunpack.c.l.b16 %v2138
      %v2200 = vunpack.c.l.b16 %v2152
      %v2201 = vunpack.c.l.b16 %v2166
      %v2202 = vunpack.c.l.b16 %v2180
      %v2203 = vunpack.c.l.b16 %v2194
      %v2204 = vpack.c.b16 %v2197, %v2196
      %v2205 = vpack.c.b16 %v2199, %v2198
      %v2206 = vpack.c.b16 %v2201, %v2200
      %v2207 = vpack.c.b16 %v2203, %v2202
      %v2209 = vsel %vm584, %v2204, 0
      %v2212 = vsel %vm584, %v2205, 0
      %v2215 = vsel %vm584, %v2206, 0
      %v2218 = vsel %vm584, %v2207, 0
      %v2221 = vsel %vm597, %v2195, 0
      %2223 = vmatprep.subr.bf16.mxu0 0
      %2224 = vmatpush1.bf16.msra.mxu0 %v2221
      %2225 = vmatprep.subr.bf16.mxu0 0
      %2226 = vmatpush1.bf16.msra.mxu0 0
      %2227 = vmatprep.subr.bf16.mxu0 0
      %2228 = vmatpush1.bf16.msra.mxu0 0
      %2229 = vmatprep.subr.bf16.mxu0 0
      %2230 = vmatpush1.bf16.msra.mxu0 0
      %2231 = vmatprep.subr.bf16.mxu0 0
      %2232 = vmatpush1.bf16.msra.mxu0 0
      %2233 = vmatprep.subr.bf16.mxu0 0
      %2234 = vmatpush1.bf16.msra.mxu0 0
      %2235 = vmatprep.subr.bf16.mxu0 0
      %2236 = vmatpush1.bf16.msra.mxu0 0
      %2237 = vmatprep.subr.bf16.mxu0 0
      %2238 = vmatpush1.bf16.msra.mxu0 0
      %2239 = vmatprep.subr.bf16.mxu0 0
      %2240 = vmatpush1.bf16.msra.mxu0 0
      %2241 = vmatprep.subr.bf16.mxu0 0
      %2242 = vmatpush1.bf16.msra.mxu0 0
      %2243 = vmatprep.subr.bf16.mxu0 0
      %2244 = vmatpush1.bf16.msra.mxu0 0
      %2245 = vmatprep.subr.bf16.mxu0 0
      %2246 = vmatpush1.bf16.msra.mxu0 0
      %2247 = vmatprep.subr.bf16.mxu0 0
      %2248 = vmatpush1.bf16.msra.mxu0 0
      %2249 = vmatprep.subr.bf16.mxu0 0
      %2250 = vmatpush1.bf16.msra.mxu0 0
      %2251 = vmatprep.subr.bf16.mxu0 0
      %2252 = vmatpush1.bf16.msra.mxu0 0
      %2253 = vmatprep.subr.bf16.mxu0 0
      %2254 = vmatpush1.bf16.msra.mxu0 0
      %2255 = vmatprep.mubr.bf16.mxu0 0
      %2256 = vmatmul.mubr.bf16.gmra.mrb[0].mxu0 %v2209
      %v2257 = vpop.f32.mrb[0].mxu0
      %v2258 = vadd.f32 0.0, %v2257
      %v2259 = vpop.f32.mrb[0].mxu0
      %v2260 = vpop.f32.mrb[0].mxu0
      %v2261 = vadd.f32 0.0, %v2260
      %v2262 = vpop.f32.mrb[0].mxu0
      %2263 = vmatprep.mubr.bf16.mxu0 0
      %2264 = vmatmul.mubr.bf16.gmra.mrb[0].mxu0 %v2212
      %v2265 = vpop.f32.mrb[0].mxu0
      %v2266 = vadd.f32 0.0, %v2265
      %v2267 = vpop.f32.mrb[0].mxu0
      %v2268 = vpop.f32.mrb[0].mxu0
      %v2269 = vadd.f32 0.0, %v2268
      %v2270 = vpop.f32.mrb[0].mxu0
      %2271 = vmatprep.mubr.bf16.mxu0 0
      %2272 = vmatmul.mubr.bf16.gmra.mrb[0].mxu0 %v2215
      %v2273 = vpop.f32.mrb[0].mxu0
      %v2274 = vadd.f32 0.0, %v2273
      %v2275 = vpop.f32.mrb[0].mxu0
      %v2276 = vpop.f32.mrb[0].mxu0
      %v2277 = vadd.f32 0.0, %v2276
      %v2278 = vpop.f32.mrb[0].mxu0
      %2279 = vmatprep.mubr.bf16.mxu0 0
      %2280 = vmatmul.mubr.bf16.gmra.mrb[0].mxu0 %v2218
      %v2281 = vpop.f32.mrb[0].mxu0
      %v2282 = vadd.f32 0.0, %v2281
      %v2283 = vpop.f32.mrb[0].mxu0
      %v2284 = vpop.f32.mrb[0].mxu0
      %v2285 = vadd.f32 0.0, %v2284
      %v2286 = vpop.f32.mrb[0].mxu0
      %2287 = vdwg.mxu0
      %v2288 = vadd.f32 %v2059, %v2258
      %v2289 = vadd.f32 %v2060, %v2261
      %v2290 = vadd.f32 %v2061, %v2266
      %v2291 = vadd.f32 %v2062, %v2269
      %v2292 = vadd.f32 %v2063, %v2274
      %v2293 = vadd.f32 %v2064, %v2277
      %v2294 = vadd.f32 %v2065, %v2282
      %v2295 = vadd.f32 %v2066, %v2285
      %v2296 = vld [vmem:[%s398] sm:$0xe]
      %v2297 = vld [vmem:[%s398 + $0x8] sm:$0xe]
      %v2298 = vld [vmem:[%s398 + $0x10] sm:$0xe]
      %v2299 = vld [vmem:[%s398 + $0x18] sm:$0xe]
      %v2300 = vld [vmem:[%s398 + $0x20] sm:$0xe]
      %v2301 = vld [vmem:[%s398 + $0x28] sm:$0xe]
      %v2302 = vld [vmem:[%s398 + $0x30] sm:$0xe]
      %v2303 = vld [vmem:[%s398 + $0x38] sm:$0xe]
      %v2320 = vrot.slane %v2296, 5
      %v2321 = vrot.slane %v2320, 4
      %v2322 = vrot.slane %v2068, 5
      %v2323 = vsel %vm792, %v2321, %v2322
      %v2324 = vrot.slane %v2297, 5
      %v2325 = vrot.slane %v2324, 4
      %v2326 = vrot.slane %v2070, 5
      %v2327 = vsel %vm792, %v2325, %v2326
      %v2328 = vrot.slane %v2298, 5
      %v2329 = vrot.slane %v2328, 4
      %v2330 = vrot.slane %v2072, 5
      %v2331 = vsel %vm792, %v2329, %v2330
      %v2332 = vrot.slane %v2299, 5
      %v2333 = vrot.slane %v2332, 4
      %v2334 = vrot.slane %v2074, 5
      %v2335 = vsel %vm792, %v2333, %v2334
      %v2336 = vrot.slane %v2300, 5
      %v2337 = vrot.slane %v2336, 4
      %v2338 = vrot.slane %v2076, 5
      %v2339 = vsel %vm792, %v2337, %v2338
      %v2340 = vrot.slane %v2301, 5
      %v2341 = vrot.slane %v2340, 4
      %v2342 = vrot.slane %v2078, 5
      %v2343 = vsel %vm792, %v2341, %v2342
      %v2344 = vrot.slane %v2302, 5
      %v2345 = vrot.slane %v2344, 4
      %v2346 = vrot.slane %v2080, 5
      %v2347 = vsel %vm792, %v2345, %v2346
      %v2348 = vrot.slane %v2303, 5
      %v2349 = vrot.slane %v2348, 4
      %v2350 = vrot.slane %v2082, 5
      %v2351 = vsel %vm792, %v2349, %v2350
      %v2352 = vld [vmem:[%s3 + $0x14] sm:$0xc]
      %v2353 = vunpack.c.l.b16 %v2323
      %v2354 = vunpack.c.l.b16 %v2327
      %v2355 = vunpack.c.l.b16 %v2331
      %v2356 = vunpack.c.l.b16 %v2335
      %v2357 = vunpack.c.l.b16 %v2339
      %v2358 = vunpack.c.l.b16 %v2343
      %v2359 = vunpack.c.l.b16 %v2347
      %v2360 = vunpack.c.l.b16 %v2351
      %v2361 = vpack.c.b16 %v2354, %v2353
      %v2362 = vpack.c.b16 %v2356, %v2355
      %v2363 = vpack.c.b16 %v2358, %v2357
      %v2364 = vpack.c.b16 %v2360, %v2359
      %v2366 = vunpack.c.l.b16 %v2352
      %v2367 = vpack.c.b16 %v2366, %v2366
      %v2368 = vrot.slane %v2367, 2
      %v2370 = vsel %vm584, %v2361, 0
      %v2373 = vsel %vm584, %v2362, 0
      %v2376 = vsel %vm584, %v2363, 0
      %v2379 = vsel %vm584, %v2364, 0
      %v2382 = vsel %vm597, %v2368, 0
      %2384 = vmatprep.subr.bf16.mxu0 0
      %2385 = vmatpush1.bf16.msra.mxu0 %v2382
      %2386 = vmatprep.subr.bf16.mxu0 0
      %2387 = vmatpush1.bf16.msra.mxu0 0
      %2388 = vmatprep.subr.bf16.mxu0 0
      %2389 = vmatpush1.bf16.msra.mxu0 0
      %2390 = vmatprep.subr.bf16.mxu0 0
      %2391 = vmatpush1.bf16.msra.mxu0 0
      %2392 = vmatprep.subr.bf16.mxu0 0
      %2393 = vmatpush1.bf16.msra.mxu0 0
      %2394 = vmatprep.subr.bf16.mxu0 0
      %2395 = vmatpush1.bf16.msra.mxu0 0
      %2396 = vmatprep.subr.bf16.mxu0 0
      %2397 = vmatpush1.bf16.msra.mxu0 0
      %2398 = vmatprep.subr.bf16.mxu0 0
      %2399 = vmatpush1.bf16.msra.mxu0 0
      %2400 = vmatprep.subr.bf16.mxu0 0
      %2401 = vmatpush1.bf16.msra.mxu0 0
      %2402 = vmatprep.subr.bf16.mxu0 0
      %2403 = vmatpush1.bf16.msra.mxu0 0
      %2404 = vmatprep.subr.bf16.mxu0 0
      %2405 = vmatpush1.bf16.msra.mxu0 0
      %2406 = vmatprep.subr.bf16.mxu0 0
      %2407 = vmatpush1.bf16.msra.mxu0 0
      %2408 = vmatprep.subr.bf16.mxu0 0
      %2409 = vmatpush1.bf16.msra.mxu0 0
      %2410 = vmatprep.subr.bf16.mxu0 0
      %2411 = vmatpush1.bf16.msra.mxu0 0
      %2412 = vmatprep.subr.bf16.mxu0 0
      %2413 = vmatpush1.bf16.msra.mxu0 0
      %2414 = vmatprep.subr.bf16.mxu0 0
      %2415 = vmatpush1.bf16.msra.mxu0 0
      %2416 = vmatprep.mubr.bf16.mxu0 0
      %2417 = vmatmul.mubr.bf16.gmra.mrb[0].mxu0 %v2370
      %v2418 = vpop.f32.mrb[0].mxu0
      %v2419 = vadd.f32 0.0, %v2418
      %v2420 = vpop.f32.mrb[0].mxu0
      %v2421 = vpop.f32.mrb[0].mxu0
      %v2422 = vadd.f32 0.0, %v2421
      %v2423 = vpop.f32.mrb[0].mxu0
      %2424 = vmatprep.mubr.bf16.mxu0 0
      %2425 = vmatmul.mubr.bf16.gmra.mrb[0].mxu0 %v2373
      %v2426 = vpop.f32.mrb[0].mxu0
      %v2427 = vadd.f32 0.0, %v2426
      %v2428 = vpop.f32.mrb[0].mxu0
      %v2429 = vpop.f32.mrb[0].mxu0
      %v2430 = vadd.f32 0.0, %v2429
      %v2431 = vpop.f32.mrb[0].mxu0
      %2432 = vmatprep.mubr.bf16.mxu0 0
      %2433 = vmatmul.mubr.bf16.gmra.mrb[0].mxu0 %v2376
      %v2434 = vpop.f32.mrb[0].mxu0
      %v2435 = vadd.f32 0.0, %v2434
      %v2436 = vpop.f32.mrb[0].mxu0
      %v2437 = vpop.f32.mrb[0].mxu0
      %v2438 = vadd.f32 0.0, %v2437
      %v2439 = vpop.f32.mrb[0].mxu0
      %2440 = vmatprep.mubr.bf16.mxu0 0
      %2441 = vmatmul.mubr.bf16.gmra.mrb[0].mxu0 %v2379
      %v2442 = vpop.f32.mrb[0].mxu0
      %v2443 = vadd.f32 0.0, %v2442
      %v2444 = vpop.f32.mrb[0].mxu0
      %v2445 = vpop.f32.mrb[0].mxu0
      %v2446 = vadd.f32 0.0, %v2445
      %v2447 = vpop.f32.mrb[0].mxu0
      %2448 = vdwg.mxu0
      %v2449 = vadd.f32 %v2288, %v2419
      %v2450 = vadd.f32 %v2289, %v2422
      %v2451 = vadd.f32 %v2290, %v2427
      %v2452 = vadd.f32 %v2291, %v2430
      %v2453 = vadd.f32 %v2292, %v2435
      %v2454 = vadd.f32 %v2293, %v2438
      %v2455 = vadd.f32 %v2294, %v2443
      %v2456 = vadd.f32 %v2295, %v2446
      %s2457 = scalar_lea.vmem %s398, 8
      %v2458 = vld [vmem:[%s2457] sm:$0xf]
      %v2459 = vld [vmem:[%s2457 + $0x8] sm:$0xf]
      %v2460 = vld [vmem:[%s2457 + $0x10] sm:$0xf]
      %v2461 = vld [vmem:[%s2457 + $0x18] sm:$0xf]
      %v2462 = vld [vmem:[%s2457 + $0x20] sm:$0xf]
      %v2463 = vld [vmem:[%s2457 + $0x28] sm:$0xf]
      %v2464 = vld [vmem:[%s2457 + $0x30] sm:$0xf]
      %v2465 = vld [vmem:[%s2457 + $0x38] sm:$0xf]
      %v2466 = vld [vmem:[%s3 + $0x18] sm:$0x3]
      %v2475 = vunpack.c.l.b16 %v2458
      %v2476 = vunpack.c.l.b16 %v2459
      %v2477 = vunpack.c.l.b16 %v2460
      %v2478 = vunpack.c.l.b16 %v2461
      %v2479 = vunpack.c.l.b16 %v2462
      %v2480 = vunpack.c.l.b16 %v2463
      %v2481 = vunpack.c.l.b16 %v2464
      %v2482 = vunpack.c.l.b16 %v2465
      %v2483 = vpack.c.b16 %v2476, %v2475
      %v2484 = vpack.c.b16 %v2478, %v2477
      %v2485 = vpack.c.b16 %v2480, %v2479
      %v2486 = vpack.c.b16 %v2482, %v2481
      %v2488 = vsel %vm584, %v2483, 0
      %v2491 = vsel %vm584, %v2484, 0
      %v2494 = vsel %vm584, %v2485, 0
      %v2497 = vsel %vm584, %v2486, 0
      %v2500 = vsel %vm597, %v2466, 0
      %2502 = vmatprep.subr.bf16.mxu0 0
      %2503 = vmatpush1.bf16.msra.mxu0 %v2500
      %2504 = vmatprep.subr.bf16.mxu0 0
      %2505 = vmatpush1.bf16.msra.mxu0 0
      %2506 = vmatprep.subr.bf16.mxu0 0
      %2507 = vmatpush1.bf16.msra.mxu0 0
      %2508 = vmatprep.subr.bf16.mxu0 0
      %2509 = vmatpush1.bf16.msra.mxu0 0
      %2510 = vmatprep.subr.bf16.mxu0 0
      %2511 = vmatpush1.bf16.msra.mxu0 0
      %2512 = vmatprep.subr.bf16.mxu0 0
      %2513 = vmatpush1.bf16.msra.mxu0 0
      %2514 = vmatprep.subr.bf16.mxu0 0
      %2515 = vmatpush1.bf16.msra.mxu0 0
      %2516 = vmatprep.subr.bf16.mxu0 0
      %2517 = vmatpush1.bf16.msra.mxu0 0
      %2518 = vmatprep.subr.bf16.mxu0 0
      %2519 = vmatpush1.bf16.msra.mxu0 0
      %2520 = vmatprep.subr.bf16.mxu0 0
      %2521 = vmatpush1.bf16.msra.mxu0 0
      %2522 = vmatprep.subr.bf16.mxu0 0
      %2523 = vmatpush1.bf16.msra.mxu0 0
      %2524 = vmatprep.subr.bf16.mxu0 0
      %2525 = vmatpush1.bf16.msra.mxu0 0
      %2526 = vmatprep.subr.bf16.mxu0 0
      %2527 = vmatpush1.bf16.msra.mxu0 0
      %2528 = vmatprep.subr.bf16.mxu0 0
      %2529 = vmatpush1.bf16.msra.mxu0 0
      %2530 = vmatprep.subr.bf16.mxu0 0
      %2531 = vmatpush1.bf16.msra.mxu0 0
      %2532 = vmatprep.subr.bf16.mxu0 0
      %2533 = vmatpush1.bf16.msra.mxu0 0
      %2534 = vmatprep.mubr.bf16.mxu0 0
      %2535 = vmatmul.mubr.bf16.gmra.mrb[0].mxu0 %v2488
      %v2536 = vpop.f32.mrb[0].mxu0
      %v2537 = vadd.f32 0.0, %v2536
      %v2538 = vpop.f32.mrb[0].mxu0
      %v2539 = vpop.f32.mrb[0].mxu0
      %v2540 = vadd.f32 0.0, %v2539
      %v2541 = vpop.f32.mrb[0].mxu0
      %2542 = vmatprep.mubr.bf16.mxu0 0
      %2543 = vmatmul.mubr.bf16.gmra.mrb[0].mxu0 %v2491
      %v2544 = vpop.f32.mrb[0].mxu0
      %v2545 = vadd.f32 0.0, %v2544
      %v2546 = vpop.f32.mrb[0].mxu0
      %v2547 = vpop.f32.mrb[0].mxu0
      %v2548 = vadd.f32 0.0, %v2547
      %v2549 = vpop.f32.mrb[0].mxu0
      %2550 = vmatprep.mubr.bf16.mxu0 0
      %2551 = vmatmul.mubr.bf16.gmra.mrb[0].mxu0 %v2494
      %v2552 = vpop.f32.mrb[0].mxu0
      %v2553 = vadd.f32 0.0, %v2552
      %v2554 = vpop.f32.mrb[0].mxu0
      %v2555 = vpop.f32.mrb[0].mxu0
      %v2556 = vadd.f32 0.0, %v2555
      %v2557 = vpop.f32.mrb[0].mxu0
      %2558 = vmatprep.mubr.bf16.mxu0 0
      %2559 = vmatmul.mubr.bf16.gmra.mrb[0].mxu0 %v2497
      %v2560 = vpop.f32.mrb[0].mxu0
      %v2561 = vadd.f32 0.0, %v2560
      %v2562 = vpop.f32.mrb[0].mxu0
      %v2563 = vpop.f32.mrb[0].mxu0
      %v2564 = vadd.f32 0.0, %v2563
      %v2565 = vpop.f32.mrb[0].mxu0
      %2566 = vdwg.mxu0
      %v2567 = vadd.f32 %v2449, %v2537
      %v2568 = vadd.f32 %v2450, %v2540
      %v2569 = vadd.f32 %v2451, %v2545
      %v2570 = vadd.f32 %v2452, %v2548
      %v2571 = vadd.f32 %v2453, %v2553
      %v2572 = vadd.f32 %v2454, %v2556
      %v2573 = vadd.f32 %v2455, %v2561
      %v2574 = vadd.f32 %v2456, %v2564
      %v2575 = vld [vmem:[%s2457] sm:$0xf]
      %v2576 = vld [vmem:[%s2457 + $0x4] sm:$0x1]
      %v2577 = vld [vmem:[%s2457 + $0x8] sm:$0xf]
      %v2578 = vld [vmem:[%s2457 + $0xc] sm:$0x1]
      %v2579 = vld [vmem:[%s2457 + $0x10] sm:$0xf]
      %v2580 = vld [vmem:[%s2457 + $0x14] sm:$0x1]
      %v2581 = vld [vmem:[%s2457 + $0x18] sm:$0xf]
      %v2582 = vld [vmem:[%s2457 + $0x1c] sm:$0x1]
      %v2583 = vld [vmem:[%s2457 + $0x20] sm:$0xf]
      %v2584 = vld [vmem:[%s2457 + $0x24] sm:$0x1]
      %v2585 = vld [vmem:[%s2457 + $0x28] sm:$0xf]
      %v2586 = vld [vmem:[%s2457 + $0x2c] sm:$0x1]
      %v2587 = vld [vmem:[%s2457 + $0x30] sm:$0xf]
      %v2588 = vld [vmem:[%s2457 + $0x34] sm:$0x1]
      %v2589 = vld [vmem:[%s2457 + $0x38] sm:$0xf]
      %v2590 = vld [vmem:[%s2457 + $0x3c] sm:$0x1]
      %v2592 = vshrl.u32 %v2575, 16
      %v2594 = vrot.slane %v2592, 4
      %v2595 = vshll.u32 %v2575, 16
      %v2597 = vrot.slane %v2595, 5
      %v2598 = vor.u32 %v2594, %v2597
      %v2599 = vrot.slane %v2598, 4
      %v2601 = vshll.u32 %v2576, 16
      %v2603 = vrot.slane %v2601, 5
      %v2604 = vsel %vm454, %v2599, %v2603
      %v2606 = vshrl.u32 %v2577, 16
      %v2608 = vrot.slane %v2606, 4
      %v2609 = vshll.u32 %v2577, 16
      %v2611 = vrot.slane %v2609, 5
      %v2612 = vor.u32 %v2608, %v2611
      %v2613 = vrot.slane %v2612, 4
      %v2615 = vshll.u32 %v2578, 16
      %v2617 = vrot.slane %v2615, 5
      %v2618 = vsel %vm454, %v2613, %v2617
      %v2620 = vshrl.u32 %v2579, 16
      %v2622 = vrot.slane %v2620, 4
      %v2623 = vshll.u32 %v2579, 16
      %v2625 = vrot.slane %v2623, 5
      %v2626 = vor.u32 %v2622, %v2625
      %v2627 = vrot.slane %v2626, 4
      %v2629 = vshll.u32 %v2580, 16
      %v2631 = vrot.slane %v2629, 5
      %v2632 = vsel %vm454, %v2627, %v2631
      %v2634 = vshrl.u32 %v2581, 16
      %v2636 = vrot.slane %v2634, 4
      %v2637 = vshll.u32 %v2581, 16
      %v2639 = vrot.slane %v2637, 5
      %v2640 = vor.u32 %v2636, %v2639
      %v2641 = vrot.slane %v2640, 4
      %v2643 = vshll.u32 %v2582, 16
      %v2645 = vrot.slane %v2643, 5
      %v2646 = vsel %vm454, %v2641, %v2645
      %v2648 = vshrl.u32 %v2583, 16
      %v2650 = vrot.slane %v2648, 4
      %v2651 = vshll.u32 %v2583, 16
      %v2653 = vrot.slane %v2651, 5
      %v2654 = vor.u32 %v2650, %v2653
      %v2655 = vrot.slane %v2654, 4
      %v2657 = vshll.u32 %v2584, 16
      %v2659 = vrot.slane %v2657, 5
      %v2660 = vsel %vm454, %v2655, %v2659
      %v2662 = vshrl.u32 %v2585, 16
      %v2664 = vrot.slane %v2662, 4
      %v2665 = vshll.u32 %v2585, 16
      %v2667 = vrot.slane %v2665, 5
      %v2668 = vor.u32 %v2664, %v2667
      %v2669 = vrot.slane %v2668, 4
      %v2671 = vshll.u32 %v2586, 16
      %v2673 = vrot.slane %v2671, 5
      %v2674 = vsel %vm454, %v2669, %v2673
      %v2676 = vshrl.u32 %v2587, 16
      %v2678 = vrot.slane %v2676, 4
      %v2679 = vshll.u32 %v2587, 16
      %v2681 = vrot.slane %v2679, 5
      %v2682 = vor.u32 %v2678, %v2681
      %v2683 = vrot.slane %v2682, 4
      %v2685 = vshll.u32 %v2588, 16
      %v2687 = vrot.slane %v2685, 5
      %v2688 = vsel %vm454, %v2683, %v2687
      %v2690 = vshrl.u32 %v2589, 16
      %v2692 = vrot.slane %v2690, 4
      %v2693 = vshll.u32 %v2589, 16
      %v2695 = vrot.slane %v2693, 5
      %v2696 = vor.u32 %v2692, %v2695
      %v2697 = vrot.slane %v2696, 4
      %v2699 = vshll.u32 %v2590, 16
      %v2701 = vrot.slane %v2699, 5
      %v2702 = vsel %vm454, %v2697, %v2701
      %v2703 = vld [vmem:[%s3 + $0x18] sm:$0xc]
      %v2704 = vunpack.c.l.b16 %v2604
      %v2705 = vunpack.c.l.b16 %v2618
      %v2706 = vunpack.c.l.b16 %v2632
      %v2707 = vunpack.c.l.b16 %v2646
      %v2708 = vunpack.c.l.b16 %v2660
      %v2709 = vunpack.c.l.b16 %v2674
      %v2710 = vunpack.c.l.b16 %v2688
      %v2711 = vunpack.c.l.b16 %v2702
      %v2712 = vpack.c.b16 %v2705, %v2704
      %v2713 = vpack.c.b16 %v2707, %v2706
      %v2714 = vpack.c.b16 %v2709, %v2708
      %v2715 = vpack.c.b16 %v2711, %v2710
      %v2717 = vunpack.c.l.b16 %v2703
      %v2718 = vpack.c.b16 %v2717, %v2717
      %v2719 = vrot.slane %v2718, 2
      %v2721 = vsel %vm584, %v2712, 0
      %v2724 = vsel %vm584, %v2713, 0
      %v2727 = vsel %vm584, %v2714, 0
      %v2730 = vsel %vm584, %v2715, 0
      %v2733 = vsel %vm597, %v2719, 0
      %2735 = vmatprep.subr.bf16.mxu0 0
      %2736 = vmatpush1.bf16.msra.mxu0 %v2733
      %2737 = vmatprep.subr.bf16.mxu0 0
      %2738 = vmatpush1.bf16.msra.mxu0 0
      %2739 = vmatprep.subr.bf16.mxu0 0
      %2740 = vmatpush1.bf16.msra.mxu0 0
      %2741 = vmatprep.subr.bf16.mxu0 0
      %2742 = vmatpush1.bf16.msra.mxu0 0
      %2743 = vmatprep.subr.bf16.mxu0 0
      %2744 = vmatpush1.bf16.msra.mxu0 0
      %2745 = vmatprep.subr.bf16.mxu0 0
      %2746 = vmatpush1.bf16.msra.mxu0 0
      %2747 = vmatprep.subr.bf16.mxu0 0
      %2748 = vmatpush1.bf16.msra.mxu0 0
      %2749 = vmatprep.subr.bf16.mxu0 0
      %2750 = vmatpush1.bf16.msra.mxu0 0
      %2751 = vmatprep.subr.bf16.mxu0 0
      %2752 = vmatpush1.bf16.msra.mxu0 0
      %2753 = vmatprep.subr.bf16.mxu0 0
      %2754 = vmatpush1.bf16.msra.mxu0 0
      %2755 = vmatprep.subr.bf16.mxu0 0
      %2756 = vmatpush1.bf16.msra.mxu0 0
      %2757 = vmatprep.subr.bf16.mxu0 0
      %2758 = vmatpush1.bf16.msra.mxu0 0
      %2759 = vmatprep.subr.bf16.mxu0 0
      %2760 = vmatpush1.bf16.msra.mxu0 0
      %2761 = vmatprep.subr.bf16.mxu0 0
      %2762 = vmatpush1.bf16.msra.mxu0 0
      %2763 = vmatprep.subr.bf16.mxu0 0
      %2764 = vmatpush1.bf16.msra.mxu0 0
      %2765 = vmatprep.subr.bf16.mxu0 0
      %2766 = vmatpush1.bf16.msra.mxu0 0
      %2767 = vmatprep.mubr.bf16.mxu0 0
      %2768 = vmatmul.mubr.bf16.gmra.mrb[0].mxu0 %v2721
      %v2769 = vpop.f32.mrb[0].mxu0
      %v2770 = vadd.f32 0.0, %v2769
      %v2771 = vpop.f32.mrb[0].mxu0
      %v2772 = vpop.f32.mrb[0].mxu0
      %v2773 = vadd.f32 0.0, %v2772
      %v2774 = vpop.f32.mrb[0].mxu0
      %2775 = vmatprep.mubr.bf16.mxu0 0
      %2776 = vmatmul.mubr.bf16.gmra.mrb[0].mxu0 %v2724
      %v2777 = vpop.f32.mrb[0].mxu0
      %v2778 = vadd.f32 0.0, %v2777
      %v2779 = vpop.f32.mrb[0].mxu0
      %v2780 = vpop.f32.mrb[0].mxu0
      %v2781 = vadd.f32 0.0, %v2780
      %v2782 = vpop.f32.mrb[0].mxu0
      %2783 = vmatprep.mubr.bf16.mxu0 0
      %2784 = vmatmul.mubr.bf16.gmra.mrb[0].mxu0 %v2727
      %v2785 = vpop.f32.mrb[0].mxu0
      %v2786 = vadd.f32 0.0, %v2785
      %v2787 = vpop.f32.mrb[0].mxu0
      %v2788 = vpop.f32.mrb[0].mxu0
      %v2789 = vadd.f32 0.0, %v2788
      %v2790 = vpop.f32.mrb[0].mxu0
      %2791 = vmatprep.mubr.bf16.mxu0 0
      %2792 = vmatmul.mubr.bf16.gmra.mrb[0].mxu0 %v2730
      %v2793 = vpop.f32.mrb[0].mxu0
      %v2794 = vadd.f32 0.0, %v2793
      %v2795 = vpop.f32.mrb[0].mxu0
      %v2796 = vpop.f32.mrb[0].mxu0
      %v2797 = vadd.f32 0.0, %v2796
      %v2798 = vpop.f32.mrb[0].mxu0
      %2799 = vdwg.mxu0
      %v2800 = vadd.f32 %v2567, %v2770
      %v2801 = vadd.f32 %v2568, %v2773
      %v2802 = vadd.f32 %v2569, %v2778
      %v2803 = vadd.f32 %v2570, %v2781
      %v2804 = vadd.f32 %v2571, %v2786
      %v2805 = vadd.f32 %v2572, %v2789
      %v2806 = vadd.f32 %v2573, %v2794
      %v2807 = vadd.f32 %v2574, %v2797
      %v2808 = vld [vmem:[%s2457] sm:$0xe]
      %v2809 = vld [vmem:[%s2457 + $0x8] sm:$0xe]
      %v2810 = vld [vmem:[%s2457 + $0x10] sm:$0xe]
      %v2811 = vld [vmem:[%s2457 + $0x18] sm:$0xe]
      %v2812 = vld [vmem:[%s2457 + $0x20] sm:$0xe]
      %v2813 = vld [vmem:[%s2457 + $0x28] sm:$0xe]
      %v2814 = vld [vmem:[%s2457 + $0x30] sm:$0xe]
      %v2815 = vld [vmem:[%s2457 + $0x38] sm:$0xe]
      %v2832 = vrot.slane %v2808, 5
      %v2833 = vrot.slane %v2832, 4
      %v2834 = vrot.slane %v2576, 5
      %v2835 = vsel %vm792, %v2833, %v2834
      %v2836 = vrot.slane %v2809, 5
      %v2837 = vrot.slane %v2836, 4
      %v2838 = vrot.slane %v2578, 5
      %v2839 = vsel %vm792, %v2837, %v2838
      %v2840 = vrot.slane %v2810, 5
      %v2841 = vrot.slane %v2840, 4
      %v2842 = vrot.slane %v2580, 5
      %v2843 = vsel %vm792, %v2841, %v2842
      %v2844 = vrot.slane %v2811, 5
      %v2845 = vrot.slane %v2844, 4
      %v2846 = vrot.slane %v2582, 5
      %v2847 = vsel %vm792, %v2845, %v2846
      %v2848 = vrot.slane %v2812, 5
      %v2849 = vrot.slane %v2848, 4
      %v2850 = vrot.slane %v2584, 5
      %v2851 = vsel %vm792, %v2849, %v2850
      %v2852 = vrot.slane %v2813, 5
      %v2853 = vrot.slane %v2852, 4
      %v2854 = vrot.slane %v2586, 5
      %v2855 = vsel %vm792, %v2853, %v2854
      %v2856 = vrot.slane %v2814, 5
      %v2857 = vrot.slane %v2856, 4
      %v2858 = vrot.slane %v2588, 5
      %v2859 = vsel %vm792, %v2857, %v2858
      %v2860 = vrot.slane %v2815, 5
      %v2861 = vrot.slane %v2860, 4
      %v2862 = vrot.slane %v2590, 5
      %v2863 = vsel %vm792, %v2861, %v2862
      %v2864 = vld [vmem:[%s3 + $0x1c] sm:$0x3]
      %v2865 = vunpack.c.l.b16 %v2835
      %v2866 = vunpack.c.l.b16 %v2839
      %v2867 = vunpack.c.l.b16 %v2843
      %v2868 = vunpack.c.l.b16 %v2847
      %v2869 = vunpack.c.l.b16 %v2851
      %v2870 = vunpack.c.l.b16 %v2855
      %v2871 = vunpack.c.l.b16 %v2859
      %v2872 = vunpack.c.l.b16 %v2863
      %v2873 = vpack.c.b16 %v2866, %v2865
      %v2874 = vpack.c.b16 %v2868, %v2867
      %v2875 = vpack.c.b16 %v2870, %v2869
      %v2876 = vpack.c.b16 %v2872, %v2871
      %v2878 = vsel %vm584, %v2873, 0
      %v2881 = vsel %vm584, %v2874, 0
      %v2884 = vsel %vm584, %v2875, 0
      %v2887 = vsel %vm584, %v2876, 0
      %v2890 = vsel %vm597, %v2864, 0
      %2892 = vmatprep.subr.bf16.mxu0 0
      %2893 = vmatpush1.bf16.msra.mxu0 %v2890
      %2894 = vmatprep.subr.bf16.mxu0 0
      %2895 = vmatpush1.bf16.msra.mxu0 0
      %2896 = vmatprep.subr.bf16.mxu0 0
      %2897 = vmatpush1.bf16.msra.mxu0 0
      %2898 = vmatprep.subr.bf16.mxu0 0
      %2899 = vmatpush1.bf16.msra.mxu0 0
      %2900 = vmatprep.subr.bf16.mxu0 0
      %2901 = vmatpush1.bf16.msra.mxu0 0
      %2902 = vmatprep.subr.bf16.mxu0 0
      %2903 = vmatpush1.bf16.msra.mxu0 0
      %2904 = vmatprep.subr.bf16.mxu0 0
      %2905 = vmatpush1.bf16.msra.mxu0 0
      %2906 = vmatprep.subr.bf16.mxu0 0
      %2907 = vmatpush1.bf16.msra.mxu0 0
      %2908 = vmatprep.subr.bf16.mxu0 0
      %2909 = vmatpush1.bf16.msra.mxu0 0
      %2910 = vmatprep.subr.bf16.mxu0 0
      %2911 = vmatpush1.bf16.msra.mxu0 0
      %2912 = vmatprep.subr.bf16.mxu0 0
      %2913 = vmatpush1.bf16.msra.mxu0 0
      %2914 = vmatprep.subr.bf16.mxu0 0
      %2915 = vmatpush1.bf16.msra.mxu0 0
      %2916 = vmatprep.subr.bf16.mxu0 0
      %2917 = vmatpush1.bf16.msra.mxu0 0
      %2918 = vmatprep.subr.bf16.mxu0 0
      %2919 = vmatpush1.bf16.msra.mxu0 0
      %2920 = vmatprep.subr.bf16.mxu0 0
      %2921 = vmatpush1.bf16.msra.mxu0 0
      %2922 = vmatprep.subr.bf16.mxu0 0
      %2923 = vmatpush1.bf16.msra.mxu0 0
      %2924 = vmatprep.mubr.bf16.mxu0 0
      %2925 = vmatmul.mubr.bf16.gmra.mrb[0].mxu0 %v2878
      %v2926 = vpop.f32.mrb[0].mxu0
      %v2927 = vadd.f32 0.0, %v2926
      %v2928 = vpop.f32.mrb[0].mxu0
      %v2929 = vpop.f32.mrb[0].mxu0
      %v2930 = vadd.f32 0.0, %v2929
      %v2931 = vpop.f32.mrb[0].mxu0
      %2932 = vmatprep.mubr.bf16.mxu0 0
      %2933 = vmatmul.mubr.bf16.gmra.mrb[0].mxu0 %v2881
      %v2934 = vpop.f32.mrb[0].mxu0
      %v2935 = vadd.f32 0.0, %v2934
      %v2936 = vpop.f32.mrb[0].mxu0
      %v2937 = vpop.f32.mrb[0].mxu0
      %v2938 = vadd.f32 0.0, %v2937
      %v2939 = vpop.f32.mrb[0].mxu0
      %2940 = vmatprep.mubr.bf16.mxu0 0
      %2941 = vmatmul.mubr.bf16.gmra.mrb[0].mxu0 %v2884
      %v2942 = vpop.f32.mrb[0].mxu0
      %v2943 = vadd.f32 0.0, %v2942
      %v2944 = vpop.f32.mrb[0].mxu0
      %v2945 = vpop.f32.mrb[0].mxu0
      %v2946 = vadd.f32 0.0, %v2945
      %v2947 = vpop.f32.mrb[0].mxu0
      %2948 = vmatprep.mubr.bf16.mxu0 0
      %2949 = vmatmul.mubr.bf16.gmra.mrb[0].mxu0 %v2887
      %v2950 = vpop.f32.mrb[0].mxu0
      %v2951 = vadd.f32 0.0, %v2950
      %v2952 = vpop.f32.mrb[0].mxu0
      %v2953 = vpop.f32.mrb[0].mxu0
      %v2954 = vadd.f32 0.0, %v2953
      %v2955 = vpop.f32.mrb[0].mxu0
      %2956 = vdwg.mxu0
      %v2957 = vadd.f32 %v2800, %v2927
      %v2958 = vadd.f32 %v2801, %v2930
      %v2959 = vadd.f32 %v2802, %v2935
      %v2960 = vadd.f32 %v2803, %v2938
      %v2961 = vadd.f32 %v2804, %v2943
      %v2962 = vadd.f32 %v2805, %v2946
      %v2963 = vadd.f32 %v2806, %v2951
      %v2964 = vadd.f32 %v2807, %v2954
      %s2965 = scalar_lea.vmem %s398, 16
      %v2966 = vld [vmem:[%s2965] sm:$0xf]
      %v2967 = vld [vmem:[%s2965 + $0x8] sm:$0xf]
      %v2968 = vld [vmem:[%s2965 + $0x10] sm:$0xf]
      %v2969 = vld [vmem:[%s2965 + $0x18] sm:$0xf]
      %v2970 = vld [vmem:[%s2965 + $0x20] sm:$0xf]
      %v2971 = vld [vmem:[%s2965 + $0x28] sm:$0xf]
      %v2972 = vld [vmem:[%s2965 + $0x30] sm:$0xf]
      %v2973 = vld [vmem:[%s2965 + $0x38] sm:$0xf]
      %v2974 = vld [vmem:[%s3 + $0x1c] sm:$0xc]
      %v2983 = vunpack.c.l.b16 %v2966
      %v2984 = vunpack.c.l.b16 %v2967
      %v2985 = vunpack.c.l.b16 %v2968
      %v2986 = vunpack.c.l.b16 %v2969
      %v2987 = vunpack.c.l.b16 %v2970
      %v2988 = vunpack.c.l.b16 %v2971
      %v2989 = vunpack.c.l.b16 %v2972
      %v2990 = vunpack.c.l.b16 %v2973
      %v2991 = vpack.c.b16 %v2984, %v2983
      %v2992 = vpack.c.b16 %v2986, %v2985
      %v2993 = vpack.c.b16 %v2988, %v2987
      %v2994 = vpack.c.b16 %v2990, %v2989
      %v2996 = vunpack.c.l.b16 %v2974
      %v2997 = vpack.c.b16 %v2996, %v2996
      %v2998 = vrot.slane %v2997, 2
      %v3000 = vsel %vm584, %v2991, 0
      %v3003 = vsel %vm584, %v2992, 0
      %v3006 = vsel %vm584, %v2993, 0
      %v3009 = vsel %vm584, %v2994, 0
      %v3012 = vsel %vm597, %v2998, 0
      %3014 = vmatprep.subr.bf16.mxu0 0
      %3015 = vmatpush1.bf16.msra.mxu0 %v3012
      %3016 = vmatprep.subr.bf16.mxu0 0
      %3017 = vmatpush1.bf16.msra.mxu0 0
      %3018 = vmatprep.subr.bf16.mxu0 0
      %3019 = vmatpush1.bf16.msra.mxu0 0
      %3020 = vmatprep.subr.bf16.mxu0 0
      %3021 = vmatpush1.bf16.msra.mxu0 0
      %3022 = vmatprep.subr.bf16.mxu0 0
      %3023 = vmatpush1.bf16.msra.mxu0 0
      %3024 = vmatprep.subr.bf16.mxu0 0
      %3025 = vmatpush1.bf16.msra.mxu0 0
      %3026 = vmatprep.subr.bf16.mxu0 0
      %3027 = vmatpush1.bf16.msra.mxu0 0
      %3028 = vmatprep.subr.bf16.mxu0 0
      %3029 = vmatpush1.bf16.msra.mxu0 0
      %3030 = vmatprep.subr.bf16.mxu0 0
      %3031 = vmatpush1.bf16.msra.mxu0 0
      %3032 = vmatprep.subr.bf16.mxu0 0
      %3033 = vmatpush1.bf16.msra.mxu0 0
      %3034 = vmatprep.subr.bf16.mxu0 0
      %3035 = vmatpush1.bf16.msra.mxu0 0
      %3036 = vmatprep.subr.bf16.mxu0 0
      %3037 = vmatpush1.bf16.msra.mxu0 0
      %3038 = vmatprep.subr.bf16.mxu0 0
      %3039 = vmatpush1.bf16.msra.mxu0 0
      %3040 = vmatprep.subr.bf16.mxu0 0
      %3041 = vmatpush1.bf16.msra.mxu0 0
      %3042 = vmatprep.subr.bf16.mxu0 0
      %3043 = vmatpush1.bf16.msra.mxu0 0
      %3044 = vmatprep.subr.bf16.mxu0 0
      %3045 = vmatpush1.bf16.msra.mxu0 0
      %3046 = vmatprep.mubr.bf16.mxu0 0
      %3047 = vmatmul.mubr.bf16.gmra.mrb[0].mxu0 %v3000
      %v3048 = vpop.f32.mrb[0].mxu0
      %v3049 = vadd.f32 0.0, %v3048
      %v3050 = vpop.f32.mrb[0].mxu0
      %v3051 = vpop.f32.mrb[0].mxu0
      %v3052 = vadd.f32 0.0, %v3051
      %v3053 = vpop.f32.mrb[0].mxu0
      %3054 = vmatprep.mubr.bf16.mxu0 0
      %3055 = vmatmul.mubr.bf16.gmra.mrb[0].mxu0 %v3003
      %v3056 = vpop.f32.mrb[0].mxu0
      %v3057 = vadd.f32 0.0, %v3056
      %v3058 = vpop.f32.mrb[0].mxu0
      %v3059 = vpop.f32.mrb[0].mxu0
      %v3060 = vadd.f32 0.0, %v3059
      %v3061 = vpop.f32.mrb[0].mxu0
      %3062 = vmatprep.mubr.bf16.mxu0 0
      %3063 = vmatmul.mubr.bf16.gmra.mrb[0].mxu0 %v3006
      %v3064 = vpop.f32.mrb[0].mxu0
      %v3065 = vadd.f32 0.0, %v3064
      %v3066 = vpop.f32.mrb[0].mxu0
      %v3067 = vpop.f32.mrb[0].mxu0
      %v3068 = vadd.f32 0.0, %v3067
      %v3069 = vpop.f32.mrb[0].mxu0
      %3070 = vmatprep.mubr.bf16.mxu0 0
      %3071 = vmatmul.mubr.bf16.gmra.mrb[0].mxu0 %v3009
      %v3072 = vpop.f32.mrb[0].mxu0
      %v3073 = vadd.f32 0.0, %v3072
      %v3074 = vpop.f32.mrb[0].mxu0
      %v3075 = vpop.f32.mrb[0].mxu0
      %v3076 = vadd.f32 0.0, %v3075
      %v3077 = vpop.f32.mrb[0].mxu0
      %3078 = vdwg.mxu0
      %v3079 = vadd.f32 %v2957, %v3049
      %v3080 = vadd.f32 %v2958, %v3052
      %v3081 = vadd.f32 %v2959, %v3057
      %v3082 = vadd.f32 %v2960, %v3060
      %v3083 = vadd.f32 %v2961, %v3065
      %v3084 = vadd.f32 %v2962, %v3068
      %v3085 = vadd.f32 %v2963, %v3073
      %v3086 = vadd.f32 %v2964, %v3076
      %v3087 = vld [vmem:[%s2965] sm:$0xf]
      %v3088 = vld [vmem:[%s2965 + $0x4] sm:$0x1]
      %v3089 = vld [vmem:[%s2965 + $0x8] sm:$0xf]
      %v3090 = vld [vmem:[%s2965 + $0xc] sm:$0x1]
      %v3091 = vld [vmem:[%s2965 + $0x10] sm:$0xf]
      %v3092 = vld [vmem:[%s2965 + $0x14] sm:$0x1]
      %v3093 = vld [vmem:[%s2965 + $0x18] sm:$0xf]
      %v3094 = vld [vmem:[%s2965 + $0x1c] sm:$0x1]
      %v3095 = vld [vmem:[%s2965 + $0x20] sm:$0xf]
      %v3096 = vld [vmem:[%s2965 + $0x24] sm:$0x1]
      %v3097 = vld [vmem:[%s2965 + $0x28] sm:$0xf]
      %v3098 = vld [vmem:[%s2965 + $0x2c] sm:$0x1]
      %v3099 = vld [vmem:[%s2965 + $0x30] sm:$0xf]
      %v3100 = vld [vmem:[%s2965 + $0x34] sm:$0x1]
      %v3101 = vld [vmem:[%s2965 + $0x38] sm:$0xf]
      %v3102 = vld [vmem:[%s2965 + $0x3c] sm:$0x1]
      %v3104 = vshrl.u32 %v3087, 16
      %v3106 = vrot.slane %v3104, 4
      %v3107 = vshll.u32 %v3087, 16
      %v3109 = vrot.slane %v3107, 5
      %v3110 = vor.u32 %v3106, %v3109
      %v3111 = vrot.slane %v3110, 4
      %v3113 = vshll.u32 %v3088, 16
      %v3115 = vrot.slane %v3113, 5
      %v3116 = vsel %vm454, %v3111, %v3115
      %v3118 = vshrl.u32 %v3089, 16
      %v3120 = vrot.slane %v3118, 4
      %v3121 = vshll.u32 %v3089, 16
      %v3123 = vrot.slane %v3121, 5
      %v3124 = vor.u32 %v3120, %v3123
      %v3125 = vrot.slane %v3124, 4
      %v3127 = vshll.u32 %v3090, 16
      %v3129 = vrot.slane %v3127, 5
      %v3130 = vsel %vm454, %v3125, %v3129
      %v3132 = vshrl.u32 %v3091, 16
      %v3134 = vrot.slane %v3132, 4
      %v3135 = vshll.u32 %v3091, 16
      %v3137 = vrot.slane %v3135, 5
      %v3138 = vor.u32 %v3134, %v3137
      %v3139 = vrot.slane %v3138, 4
      %v3141 = vshll.u32 %v3092, 16
      %v3143 = vrot.slane %v3141, 5
      %v3144 = vsel %vm454, %v3139, %v3143
      %v3146 = vshrl.u32 %v3093, 16
      %v3148 = vrot.slane %v3146, 4
      %v3149 = vshll.u32 %v3093, 16
      %v3151 = vrot.slane %v3149, 5
      %v3152 = vor.u32 %v3148, %v3151
      %v3153 = vrot.slane %v3152, 4
      %v3155 = vshll.u32 %v3094, 16
      %v3157 = vrot.slane %v3155, 5
      %v3158 = vsel %vm454, %v3153, %v3157
      %v3160 = vshrl.u32 %v3095, 16
      %v3162 = vrot.slane %v3160, 4
      %v3163 = vshll.u32 %v3095, 16
      %v3165 = vrot.slane %v3163, 5
      %v3166 = vor.u32 %v3162, %v3165
      %v3167 = vrot.slane %v3166, 4
      %v3169 = vshll.u32 %v3096, 16
      %v3171 = vrot.slane %v3169, 5
      %v3172 = vsel %vm454, %v3167, %v3171
      %v3174 = vshrl.u32 %v3097, 16
      %v3176 = vrot.slane %v3174, 4
      %v3177 = vshll.u32 %v3097, 16
      %v3179 = vrot.slane %v3177, 5
      %v3180 = vor.u32 %v3176, %v3179
      %v3181 = vrot.slane %v3180, 4
      %v3183 = vshll.u32 %v3098, 16
      %v3185 = vrot.slane %v3183, 5
      %v3186 = vsel %vm454, %v3181, %v3185
      %v3188 = vshrl.u32 %v3099, 16
      %v3190 = vrot.slane %v3188, 4
      %v3191 = vshll.u32 %v3099, 16
      %v3193 = vrot.slane %v3191, 5
      %v3194 = vor.u32 %v3190, %v3193
      %v3195 = vrot.slane %v3194, 4
      %v3197 = vshll.u32 %v3100, 16
      %v3199 = vrot.slane %v3197, 5
      %v3200 = vsel %vm454, %v3195, %v3199
      %v3202 = vshrl.u32 %v3101, 16
      %v3204 = vrot.slane %v3202, 4
      %v3205 = vshll.u32 %v3101, 16
      %v3207 = vrot.slane %v3205, 5
      %v3208 = vor.u32 %v3204, %v3207
      %v3209 = vrot.slane %v3208, 4
      %v3211 = vshll.u32 %v3102, 16
      %v3213 = vrot.slane %v3211, 5
      %v3214 = vsel %vm454, %v3209, %v3213
      %v3215 = vld [vmem:[%s3 + $0x20] sm:$0x3]
      %v3216 = vunpack.c.l.b16 %v3116
      %v3217 = vunpack.c.l.b16 %v3130
      %v3218 = vunpack.c.l.b16 %v3144
      %v3219 = vunpack.c.l.b16 %v3158
      %v3220 = vunpack.c.l.b16 %v3172
      %v3221 = vunpack.c.l.b16 %v3186
      %v3222 = vunpack.c.l.b16 %v3200
      %v3223 = vunpack.c.l.b16 %v3214
      %v3224 = vpack.c.b16 %v3217, %v3216
      %v3225 = vpack.c.b16 %v3219, %v3218
      %v3226 = vpack.c.b16 %v3221, %v3220
      %v3227 = vpack.c.b16 %v3223, %v3222
      %v3229 = vsel %vm584, %v3224, 0
      %v3232 = vsel %vm584, %v3225, 0
      %v3235 = vsel %vm584, %v3226, 0
      %v3238 = vsel %vm584, %v3227, 0
      %v3241 = vsel %vm597, %v3215, 0
      %3243 = vmatprep.subr.bf16.mxu0 0
      %3244 = vmatpush1.bf16.msra.mxu0 %v3241
      %3245 = vmatprep.subr.bf16.mxu0 0
      %3246 = vmatpush1.bf16.msra.mxu0 0
      %3247 = vmatprep.subr.bf16.mxu0 0
      %3248 = vmatpush1.bf16.msra.mxu0 0
      %3249 = vmatprep.subr.bf16.mxu0 0
      %3250 = vmatpush1.bf16.msra.mxu0 0
      %3251 = vmatprep.subr.bf16.mxu0 0
      %3252 = vmatpush1.bf16.msra.mxu0 0
      %3253 = vmatprep.subr.bf16.mxu0 0
      %3254 = vmatpush1.bf16.msra.mxu0 0
      %3255 = vmatprep.subr.bf16.mxu0 0
      %3256 = vmatpush1.bf16.msra.mxu0 0
      %3257 = vmatprep.subr.bf16.mxu0 0
      %3258 = vmatpush1.bf16.msra.mxu0 0
      %3259 = vmatprep.subr.bf16.mxu0 0
      %3260 = vmatpush1.bf16.msra.mxu0 0
      %3261 = vmatprep.subr.bf16.mxu0 0
      %3262 = vmatpush1.bf16.msra.mxu0 0
      %3263 = vmatprep.subr.bf16.mxu0 0
      %3264 = vmatpush1.bf16.msra.mxu0 0
      %3265 = vmatprep.subr.bf16.mxu0 0
      %3266 = vmatpush1.bf16.msra.mxu0 0
      %3267 = vmatprep.subr.bf16.mxu0 0
      %3268 = vmatpush1.bf16.msra.mxu0 0
      %3269 = vmatprep.subr.bf16.mxu0 0
      %3270 = vmatpush1.bf16.msra.mxu0 0
      %3271 = vmatprep.subr.bf16.mxu0 0
      %3272 = vmatpush1.bf16.msra.mxu0 0
      %3273 = vmatprep.subr.bf16.mxu0 0
      %3274 = vmatpush1.bf16.msra.mxu0 0
      %3275 = vmatprep.mubr.bf16.mxu0 0
      %3276 = vmatmul.mubr.bf16.gmra.mrb[0].mxu0 %v3229
      %v3277 = vpop.f32.mrb[0].mxu0
      %v3278 = vadd.f32 0.0, %v3277
      %v3279 = vpop.f32.mrb[0].mxu0
      %v3280 = vpop.f32.mrb[0].mxu0
      %v3281 = vadd.f32 0.0, %v3280
      %v3282 = vpop.f32.mrb[0].mxu0
      %3283 = vmatprep.mubr.bf16.mxu0 0
      %3284 = vmatmul.mubr.bf16.gmra.mrb[0].mxu0 %v3232
      %v3285 = vpop.f32.mrb[0].mxu0
      %v3286 = vadd.f32 0.0, %v3285
      %v3287 = vpop.f32.mrb[0].mxu0
      %v3288 = vpop.f32.mrb[0].mxu0
      %v3289 = vadd.f32 0.0, %v3288
      %v3290 = vpop.f32.mrb[0].mxu0
      %3291 = vmatprep.mubr.bf16.mxu0 0
      %3292 = vmatmul.mubr.bf16.gmra.mrb[0].mxu0 %v3235
      %v3293 = vpop.f32.mrb[0].mxu0
      %v3294 = vadd.f32 0.0, %v3293
      %v3295 = vpop.f32.mrb[0].mxu0
      %v3296 = vpop.f32.mrb[0].mxu0
      %v3297 = vadd.f32 0.0, %v3296
      %v3298 = vpop.f32.mrb[0].mxu0
      %3299 = vmatprep.mubr.bf16.mxu0 0
      %3300 = vmatmul.mubr.bf16.gmra.mrb[0].mxu0 %v3238
      %v3301 = vpop.f32.mrb[0].mxu0
      %v3302 = vadd.f32 0.0, %v3301
      %v3303 = vpop.f32.mrb[0].mxu0
      %v3304 = vpop.f32.mrb[0].mxu0
      %v3305 = vadd.f32 0.0, %v3304
      %v3306 = vpop.f32.mrb[0].mxu0
      %3307 = vdwg.mxu0
      %v3308 = vadd.f32 %v3079, %v3278
      %v3309 = vadd.f32 %v3080, %v3281
      %v3310 = vadd.f32 %v3081, %v3286
      %v3311 = vadd.f32 %v3082, %v3289
      %v3312 = vadd.f32 %v3083, %v3294
      %v3313 = vadd.f32 %v3084, %v3297
      %v3314 = vadd.f32 %v3085, %v3302
      %v3315 = vadd.f32 %v3086, %v3305
      %v3316 = vld [vmem:[%s2965] sm:$0xe]
      %v3317 = vld [vmem:[%s2965 + $0x8] sm:$0xe]
      %v3318 = vld [vmem:[%s2965 + $0x10] sm:$0xe]
      %v3319 = vld [vmem:[%s2965 + $0x18] sm:$0xe]
      %v3320 = vld [vmem:[%s2965 + $0x20] sm:$0xe]
      %v3321 = vld [vmem:[%s2965 + $0x28] sm:$0xe]
      %v3322 = vld [vmem:[%s2965 + $0x30] sm:$0xe]
      %v3323 = vld [vmem:[%s2965 + $0x38] sm:$0xe]
      %v3340 = vrot.slane %v3316, 5
      %v3341 = vrot.slane %v3340, 4
      %v3342 = vrot.slane %v3088, 5
      %v3343 = vsel %vm792, %v3341, %v3342
      %v3344 = vrot.slane %v3317, 5
      %v3345 = vrot.slane %v3344, 4
      %v3346 = vrot.slane %v3090, 5
      %v3347 = vsel %vm792, %v3345, %v3346
      %v3348 = vrot.slane %v3318, 5
      %v3349 = vrot.slane %v3348, 4
      %v3350 = vrot.slane %v3092, 5
      %v3351 = vsel %vm792, %v3349, %v3350
      %v3352 = vrot.slane %v3319, 5
      %v3353 = vrot.slane %v3352, 4
      %v3354 = vrot.slane %v3094, 5
      %v3355 = vsel %vm792, %v3353, %v3354
      %v3356 = vrot.slane %v3320, 5
      %v3357 = vrot.slane %v3356, 4
      %v3358 = vrot.slane %v3096, 5
      %v3359 = vsel %vm792, %v3357, %v3358
      %v3360 = vrot.slane %v3321, 5
      %v3361 = vrot.slane %v3360, 4
      %v3362 = vrot.slane %v3098, 5
      %v3363 = vsel %vm792, %v3361, %v3362
      %v3364 = vrot.slane %v3322, 5
      %v3365 = vrot.slane %v3364, 4
      %v3366 = vrot.slane %v3100, 5
      %v3367 = vsel %vm792, %v3365, %v3366
      %v3368 = vrot.slane %v3323, 5
      %v3369 = vrot.slane %v3368, 4
      %v3370 = vrot.slane %v3102, 5
      %v3371 = vsel %vm792, %v3369, %v3370
      %v3372 = vld [vmem:[%s3 + $0x20] sm:$0xc]
      %v3373 = vunpack.c.l.b16 %v3343
      %v3374 = vunpack.c.l.b16 %v3347
      %v3375 = vunpack.c.l.b16 %v3351
      %v3376 = vunpack.c.l.b16 %v3355
      %v3377 = vunpack.c.l.b16 %v3359
      %v3378 = vunpack.c.l.b16 %v3363
      %v3379 = vunpack.c.l.b16 %v3367
      %v3380 = vunpack.c.l.b16 %v3371
      %v3381 = vpack.c.b16 %v3374, %v3373
      %v3382 = vpack.c.b16 %v3376, %v3375
      %v3383 = vpack.c.b16 %v3378, %v3377
      %v3384 = vpack.c.b16 %v3380, %v3379
      %v3386 = vunpack.c.l.b16 %v3372
      %v3387 = vpack.c.b16 %v3386, %v3386
      %v3388 = vrot.slane %v3387, 2
      %v3390 = vsel %vm584, %v3381, 0
      %v3393 = vsel %vm584, %v3382, 0
      %v3396 = vsel %vm584, %v3383, 0
      %v3399 = vsel %vm584, %v3384, 0
      %v3402 = vsel %vm597, %v3388, 0
      %3404 = vmatprep.subr.bf16.mxu0 0
      %3405 = vmatpush1.bf16.msra.mxu0 %v3402
      %3406 = vmatprep.subr.bf16.mxu0 0
      %3407 = vmatpush1.bf16.msra.mxu0 0
      %3408 = vmatprep.subr.bf16.mxu0 0
      %3409 = vmatpush1.bf16.msra.mxu0 0
      %3410 = vmatprep.subr.bf16.mxu0 0
      %3411 = vmatpush1.bf16.msra.mxu0 0
      %3412 = vmatprep.subr.bf16.mxu0 0
      %3413 = vmatpush1.bf16.msra.mxu0 0
      %3414 = vmatprep.subr.bf16.mxu0 0
      %3415 = vmatpush1.bf16.msra.mxu0 0
      %3416 = vmatprep.subr.bf16.mxu0 0
      %3417 = vmatpush1.bf16.msra.mxu0 0
      %3418 = vmatprep.subr.bf16.mxu0 0
      %3419 = vmatpush1.bf16.msra.mxu0 0
      %3420 = vmatprep.subr.bf16.mxu0 0
      %3421 = vmatpush1.bf16.msra.mxu0 0
      %3422 = vmatprep.subr.bf16.mxu0 0
      %3423 = vmatpush1.bf16.msra.mxu0 0
      %3424 = vmatprep.subr.bf16.mxu0 0
      %3425 = vmatpush1.bf16.msra.mxu0 0
      %3426 = vmatprep.subr.bf16.mxu0 0
      %3427 = vmatpush1.bf16.msra.mxu0 0
      %3428 = vmatprep.subr.bf16.mxu0 0
      %3429 = vmatpush1.bf16.msra.mxu0 0
      %3430 = vmatprep.subr.bf16.mxu0 0
      %3431 = vmatpush1.bf16.msra.mxu0 0
      %3432 = vmatprep.subr.bf16.mxu0 0
      %3433 = vmatpush1.bf16.msra.mxu0 0
      %3434 = vmatprep.subr.bf16.mxu0 0
      %3435 = vmatpush1.bf16.msra.mxu0 0
      %3436 = vmatprep.mubr.bf16.mxu0 0
      %3437 = vmatmul.mubr.bf16.gmra.mrb[0].mxu0 %v3390
      %v3438 = vpop.f32.mrb[0].mxu0
      %v3439 = vadd.f32 0.0, %v3438
      %v3440 = vpop.f32.mrb[0].mxu0
      %v3441 = vpop.f32.mrb[0].mxu0
      %v3442 = vadd.f32 0.0, %v3441
      %v3443 = vpop.f32.mrb[0].mxu0
      %3444 = vmatprep.mubr.bf16.mxu0 0
      %3445 = vmatmul.mubr.bf16.gmra.mrb[0].mxu0 %v3393
      %v3446 = vpop.f32.mrb[0].mxu0
      %v3447 = vadd.f32 0.0, %v3446
      %v3448 = vpop.f32.mrb[0].mxu0
      %v3449 = vpop.f32.mrb[0].mxu0
      %v3450 = vadd.f32 0.0, %v3449
      %v3451 = vpop.f32.mrb[0].mxu0
      %3452 = vmatprep.mubr.bf16.mxu0 0
      %3453 = vmatmul.mubr.bf16.gmra.mrb[0].mxu0 %v3396
      %v3454 = vpop.f32.mrb[0].mxu0
      %v3455 = vadd.f32 0.0, %v3454
      %v3456 = vpop.f32.mrb[0].mxu0
      %v3457 = vpop.f32.mrb[0].mxu0
      %v3458 = vadd.f32 0.0, %v3457
      %v3459 = vpop.f32.mrb[0].mxu0
      %3460 = vmatprep.mubr.bf16.mxu0 0
      %3461 = vmatmul.mubr.bf16.gmra.mrb[0].mxu0 %v3399
      %v3462 = vpop.f32.mrb[0].mxu0
      %v3463 = vadd.f32 0.0, %v3462
      %v3464 = vpop.f32.mrb[0].mxu0
      %v3465 = vpop.f32.mrb[0].mxu0
      %v3466 = vadd.f32 0.0, %v3465
      %v3467 = vpop.f32.mrb[0].mxu0
      %3468 = vdwg.mxu0
      %v3469 = vadd.f32 %v3308, %v3439
      %v3470 = vadd.f32 %v3309, %v3442
      %v3471 = vadd.f32 %v3310, %v3447
      %v3472 = vadd.f32 %v3311, %v3450
      %v3473 = vadd.f32 %v3312, %v3455
      %v3474 = vadd.f32 %v3313, %v3458
      %v3475 = vadd.f32 %v3314, %v3463
      %v3476 = vadd.f32 %v3315, %v3466
      %v3477 = vld [vmem:[%s409] sm:$0xf]
      %v3478 = vld [vmem:[%s409 + $0x8] sm:$0xf]
      %v3479 = vld [vmem:[%s409 + $0x10] sm:$0xf]
      %v3480 = vld [vmem:[%s409 + $0x18] sm:$0xf]
      %v3481 = vld [vmem:[%s409 + $0x20] sm:$0xf]
      %v3482 = vld [vmem:[%s409 + $0x28] sm:$0xf]
      %v3483 = vld [vmem:[%s409 + $0x30] sm:$0xf]
      %v3484 = vld [vmem:[%s409 + $0x38] sm:$0xf]
      %v3485 = vld [vmem:[%s3 + $0x24] sm:$0x3]
      %v3494 = vunpack.c.l.b16 %v3477
      %v3495 = vunpack.c.l.b16 %v3478
      %v3496 = vunpack.c.l.b16 %v3479
      %v3497 = vunpack.c.l.b16 %v3480
      %v3498 = vunpack.c.l.b16 %v3481
      %v3499 = vunpack.c.l.b16 %v3482
      %v3500 = vunpack.c.l.b16 %v3483
      %v3501 = vunpack.c.l.b16 %v3484
      %v3502 = vpack.c.b16 %v3495, %v3494
      %v3503 = vpack.c.b16 %v3497, %v3496
      %v3504 = vpack.c.b16 %v3499, %v3498
      %v3505 = vpack.c.b16 %v3501, %v3500
      %v3507 = vsel %vm584, %v3502, 0
      %v3510 = vsel %vm584, %v3503, 0
      %v3513 = vsel %vm584, %v3504, 0
      %v3516 = vsel %vm584, %v3505, 0
      %v3519 = vsel %vm597, %v3485, 0
      %3521 = vmatprep.subr.bf16.mxu0 0
      %3522 = vmatpush1.bf16.msra.mxu0 %v3519
      %3523 = vmatprep.subr.bf16.mxu0 0
      %3524 = vmatpush1.bf16.msra.mxu0 0
      %3525 = vmatprep.subr.bf16.mxu0 0
      %3526 = vmatpush1.bf16.msra.mxu0 0
      %3527 = vmatprep.subr.bf16.mxu0 0
      %3528 = vmatpush1.bf16.msra.mxu0 0
      %3529 = vmatprep.subr.bf16.mxu0 0
      %3530 = vmatpush1.bf16.msra.mxu0 0
      %3531 = vmatprep.subr.bf16.mxu0 0
      %3532 = vmatpush1.bf16.msra.mxu0 0
      %3533 = vmatprep.subr.bf16.mxu0 0
      %3534 = vmatpush1.bf16.msra.mxu0 0
      %3535 = vmatprep.subr.bf16.mxu0 0
      %3536 = vmatpush1.bf16.msra.mxu0 0
      %3537 = vmatprep.subr.bf16.mxu0 0
      %3538 = vmatpush1.bf16.msra.mxu0 0
      %3539 = vmatprep.subr.bf16.mxu0 0
      %3540 = vmatpush1.bf16.msra.mxu0 0
      %3541 = vmatprep.subr.bf16.mxu0 0
      %3542 = vmatpush1.bf16.msra.mxu0 0
      %3543 = vmatprep.subr.bf16.mxu0 0
      %3544 = vmatpush1.bf16.msra.mxu0 0
      %3545 = vmatprep.subr.bf16.mxu0 0
      %3546 = vmatpush1.bf16.msra.mxu0 0
      %3547 = vmatprep.subr.bf16.mxu0 0
      %3548 = vmatpush1.bf16.msra.mxu0 0
      %3549 = vmatprep.subr.bf16.mxu0 0
      %3550 = vmatpush1.bf16.msra.mxu0 0
      %3551 = vmatprep.subr.bf16.mxu0 0
      %3552 = vmatpush1.bf16.msra.mxu0 0
      %3553 = vmatprep.mubr.bf16.mxu0 0
      %3554 = vmatmul.mubr.bf16.gmra.mrb[0].mxu0 %v3507
      %v3555 = vpop.f32.mrb[0].mxu0
      %v3556 = vadd.f32 0.0, %v3555
      %v3557 = vpop.f32.mrb[0].mxu0
      %v3558 = vpop.f32.mrb[0].mxu0
      %v3559 = vadd.f32 0.0, %v3558
      %v3560 = vpop.f32.mrb[0].mxu0
      %3561 = vmatprep.mubr.bf16.mxu0 0
      %3562 = vmatmul.mubr.bf16.gmra.mrb[0].mxu0 %v3510
      %v3563 = vpop.f32.mrb[0].mxu0
      %v3564 = vadd.f32 0.0, %v3563
      %v3565 = vpop.f32.mrb[0].mxu0
      %v3566 = vpop.f32.mrb[0].mxu0
      %v3567 = vadd.f32 0.0, %v3566
      %v3568 = vpop.f32.mrb[0].mxu0
      %3569 = vmatprep.mubr.bf16.mxu0 0
      %3570 = vmatmul.mubr.bf16.gmra.mrb[0].mxu0 %v3513
      %v3571 = vpop.f32.mrb[0].mxu0
      %v3572 = vadd.f32 0.0, %v3571
      %v3573 = vpop.f32.mrb[0].mxu0
      %v3574 = vpop.f32.mrb[0].mxu0
      %v3575 = vadd.f32 0.0, %v3574
      %v3576 = vpop.f32.mrb[0].mxu0
      %3577 = vmatprep.mubr.bf16.mxu0 0
      %3578 = vmatmul.mubr.bf16.gmra.mrb[0].mxu0 %v3516
      %v3579 = vpop.f32.mrb[0].mxu0
      %v3580 = vadd.f32 0.0, %v3579
      %v3581 = vpop.f32.mrb[0].mxu0
      %v3582 = vpop.f32.mrb[0].mxu0
      %v3583 = vadd.f32 0.0, %v3582
      %v3584 = vpop.f32.mrb[0].mxu0
      %3585 = vdwg.mxu0
      %v3586 = vadd.f32 %v3469, %v3556
      %v3587 = vadd.f32 %v3470, %v3559
      %v3588 = vadd.f32 %v3471, %v3564
      %v3589 = vadd.f32 %v3472, %v3567
      %v3590 = vadd.f32 %v3473, %v3572
      %v3591 = vadd.f32 %v3474, %v3575
      %v3592 = vadd.f32 %v3475, %v3580
      %v3593 = vadd.f32 %v3476, %v3583
      %v3594 = vld [vmem:[%s409] sm:$0xf]
      %v3595 = vld [vmem:[%s409 + $0x4] sm:$0x1]
      %v3596 = vld [vmem:[%s409 + $0x8] sm:$0xf]
      %v3597 = vld [vmem:[%s409 + $0xc] sm:$0x1]
      %v3598 = vld [vmem:[%s409 + $0x10] sm:$0xf]
      %v3599 = vld [vmem:[%s409 + $0x14] sm:$0x1]
      %v3600 = vld [vmem:[%s409 + $0x18] sm:$0xf]
      %v3601 = vld [vmem:[%s409 + $0x1c] sm:$0x1]
      %v3602 = vld [vmem:[%s409 + $0x20] sm:$0xf]
      %v3603 = vld [vmem:[%s409 + $0x24] sm:$0x1]
      %v3604 = vld [vmem:[%s409 + $0x28] sm:$0xf]
      %v3605 = vld [vmem:[%s409 + $0x2c] sm:$0x1]
      %v3606 = vld [vmem:[%s409 + $0x30] sm:$0xf]
      %v3607 = vld [vmem:[%s409 + $0x34] sm:$0x1]
      %v3608 = vld [vmem:[%s409 + $0x38] sm:$0xf]
      %v3609 = vld [vmem:[%s409 + $0x3c] sm:$0x1]
      %v3611 = vshrl.u32 %v3594, 16
      %v3613 = vrot.slane %v3611, 4
      %v3614 = vshll.u32 %v3594, 16
      %v3616 = vrot.slane %v3614, 5
      %v3617 = vor.u32 %v3613, %v3616
      %v3618 = vrot.slane %v3617, 4
      %v3620 = vshll.u32 %v3595, 16
      %v3622 = vrot.slane %v3620, 5
      %v3623 = vsel %vm454, %v3618, %v3622
      %v3625 = vshrl.u32 %v3596, 16
      %v3627 = vrot.slane %v3625, 4
      %v3628 = vshll.u32 %v3596, 16
      %v3630 = vrot.slane %v3628, 5
      %v3631 = vor.u32 %v3627, %v3630
      %v3632 = vrot.slane %v3631, 4
      %v3634 = vshll.u32 %v3597, 16
      %v3636 = vrot.slane %v3634, 5
      %v3637 = vsel %vm454, %v3632, %v3636
      %v3639 = vshrl.u32 %v3598, 16
      %v3641 = vrot.slane %v3639, 4
      %v3642 = vshll.u32 %v3598, 16
      %v3644 = vrot.slane %v3642, 5
      %v3645 = vor.u32 %v3641, %v3644
      %v3646 = vrot.slane %v3645, 4
      %v3648 = vshll.u32 %v3599, 16
      %v3650 = vrot.slane %v3648, 5
      %v3651 = vsel %vm454, %v3646, %v3650
      %v3653 = vshrl.u32 %v3600, 16
      %v3655 = vrot.slane %v3653, 4
      %v3656 = vshll.u32 %v3600, 16
      %v3658 = vrot.slane %v3656, 5
      %v3659 = vor.u32 %v3655, %v3658
      %v3660 = vrot.slane %v3659, 4
      %v3662 = vshll.u32 %v3601, 16
      %v3664 = vrot.slane %v3662, 5
      %v3665 = vsel %vm454, %v3660, %v3664
      %v3667 = vshrl.u32 %v3602, 16
      %v3669 = vrot.slane %v3667, 4
      %v3670 = vshll.u32 %v3602, 16
      %v3672 = vrot.slane %v3670, 5
      %v3673 = vor.u32 %v3669, %v3672
      %v3674 = vrot.slane %v3673, 4
      %v3676 = vshll.u32 %v3603, 16
      %v3678 = vrot.slane %v3676, 5
      %v3679 = vsel %vm454, %v3674, %v3678
      %v3681 = vshrl.u32 %v3604, 16
      %v3683 = vrot.slane %v3681, 4
      %v3684 = vshll.u32 %v3604, 16
      %v3686 = vrot.slane %v3684, 5
      %v3687 = vor.u32 %v3683, %v3686
      %v3688 = vrot.slane %v3687, 4
      %v3690 = vshll.u32 %v3605, 16
      %v3692 = vrot.slane %v3690, 5
      %v3693 = vsel %vm454, %v3688, %v3692
      %v3695 = vshrl.u32 %v3606, 16
      %v3697 = vrot.slane %v3695, 4
      %v3698 = vshll.u32 %v3606, 16
      %v3700 = vrot.slane %v3698, 5
      %v3701 = vor.u32 %v3697, %v3700
      %v3702 = vrot.slane %v3701, 4
      %v3704 = vshll.u32 %v3607, 16
      %v3706 = vrot.slane %v3704, 5
      %v3707 = vsel %vm454, %v3702, %v3706
      %v3709 = vshrl.u32 %v3608, 16
      %v3711 = vrot.slane %v3709, 4
      %v3712 = vshll.u32 %v3608, 16
      %v3714 = vrot.slane %v3712, 5
      %v3715 = vor.u32 %v3711, %v3714
      %v3716 = vrot.slane %v3715, 4
      %v3718 = vshll.u32 %v3609, 16
      %v3720 = vrot.slane %v3718, 5
      %v3721 = vsel %vm454, %v3716, %v3720
      %v3722 = vld [vmem:[%s3 + $0x24] sm:$0xc]
      %v3723 = vunpack.c.l.b16 %v3623
      %v3724 = vunpack.c.l.b16 %v3637
      %v3725 = vunpack.c.l.b16 %v3651
      %v3726 = vunpack.c.l.b16 %v3665
      %v3727 = vunpack.c.l.b16 %v3679
      %v3728 = vunpack.c.l.b16 %v3693
      %v3729 = vunpack.c.l.b16 %v3707
      %v3730 = vunpack.c.l.b16 %v3721
      %v3731 = vpack.c.b16 %v3724, %v3723
      %v3732 = vpack.c.b16 %v3726, %v3725
      %v3733 = vpack.c.b16 %v3728, %v3727
      %v3734 = vpack.c.b16 %v3730, %v3729
      %v3736 = vunpack.c.l.b16 %v3722
      %v3737 = vpack.c.b16 %v3736, %v3736
      %v3738 = vrot.slane %v3737, 2
      %v3740 = vsel %vm584, %v3731, 0
      %v3743 = vsel %vm584, %v3732, 0
      %v3746 = vsel %vm584, %v3733, 0
      %v3749 = vsel %vm584, %v3734, 0
      %v3752 = vsel %vm597, %v3738, 0
      %3754 = vmatprep.subr.bf16.mxu0 0
      %3755 = vmatpush1.bf16.msra.mxu0 %v3752
      %3756 = vmatprep.subr.bf16.mxu0 0
      %3757 = vmatpush1.bf16.msra.mxu0 0
      %3758 = vmatprep.subr.bf16.mxu0 0
      %3759 = vmatpush1.bf16.msra.mxu0 0
      %3760 = vmatprep.subr.bf16.mxu0 0
      %3761 = vmatpush1.bf16.msra.mxu0 0
      %3762 = vmatprep.subr.bf16.mxu0 0
      %3763 = vmatpush1.bf16.msra.mxu0 0
      %3764 = vmatprep.subr.bf16.mxu0 0
      %3765 = vmatpush1.bf16.msra.mxu0 0
      %3766 = vmatprep.subr.bf16.mxu0 0
      %3767 = vmatpush1.bf16.msra.mxu0 0
      %3768 = vmatprep.subr.bf16.mxu0 0
      %3769 = vmatpush1.bf16.msra.mxu0 0
      %3770 = vmatprep.subr.bf16.mxu0 0
      %3771 = vmatpush1.bf16.msra.mxu0 0
      %3772 = vmatprep.subr.bf16.mxu0 0
      %3773 = vmatpush1.bf16.msra.mxu0 0
      %3774 = vmatprep.subr.bf16.mxu0 0
      %3775 = vmatpush1.bf16.msra.mxu0 0
      %3776 = vmatprep.subr.bf16.mxu0 0
      %3777 = vmatpush1.bf16.msra.mxu0 0
      %3778 = vmatprep.subr.bf16.mxu0 0
      %3779 = vmatpush1.bf16.msra.mxu0 0
      %3780 = vmatprep.subr.bf16.mxu0 0
      %3781 = vmatpush1.bf16.msra.mxu0 0
      %3782 = vmatprep.subr.bf16.mxu0 0
      %3783 = vmatpush1.bf16.msra.mxu0 0
      %3784 = vmatprep.subr.bf16.mxu0 0
      %3785 = vmatpush1.bf16.msra.mxu0 0
      %3786 = vmatprep.mubr.bf16.mxu0 0
      %3787 = vmatmul.mubr.bf16.gmra.mrb[0].mxu0 %v3740
      %v3788 = vpop.f32.mrb[0].mxu0
      %v3789 = vadd.f32 0.0, %v3788
      %v3790 = vpop.f32.mrb[0].mxu0
      %v3791 = vpop.f32.mrb[0].mxu0
      %v3792 = vadd.f32 0.0, %v3791
      %v3793 = vpop.f32.mrb[0].mxu0
      %3794 = vmatprep.mubr.bf16.mxu0 0
      %3795 = vmatmul.mubr.bf16.gmra.mrb[0].mxu0 %v3743
      %v3796 = vpop.f32.mrb[0].mxu0
      %v3797 = vadd.f32 0.0, %v3796
      %v3798 = vpop.f32.mrb[0].mxu0
      %v3799 = vpop.f32.mrb[0].mxu0
      %v3800 = vadd.f32 0.0, %v3799
      %v3801 = vpop.f32.mrb[0].mxu0
      %3802 = vmatprep.mubr.bf16.mxu0 0
      %3803 = vmatmul.mubr.bf16.gmra.mrb[0].mxu0 %v3746
      %v3804 = vpop.f32.mrb[0].mxu0
      %v3805 = vadd.f32 0.0, %v3804
      %v3806 = vpop.f32.mrb[0].mxu0
      %v3807 = vpop.f32.mrb[0].mxu0
      %v3808 = vadd.f32 0.0, %v3807
      %v3809 = vpop.f32.mrb[0].mxu0
      %3810 = vmatprep.mubr.bf16.mxu0 0
      %3811 = vmatmul.mubr.bf16.gmra.mrb[0].mxu0 %v3749
      %v3812 = vpop.f32.mrb[0].mxu0
      %v3813 = vadd.f32 0.0, %v3812
      %v3814 = vpop.f32.mrb[0].mxu0
      %v3815 = vpop.f32.mrb[0].mxu0
      %v3816 = vadd.f32 0.0, %v3815
      %v3817 = vpop.f32.mrb[0].mxu0
      %3818 = vdwg.mxu0
      %v3819 = vadd.f32 %v3586, %v3789
      %v3820 = vadd.f32 %v3587, %v3792
      %v3821 = vadd.f32 %v3588, %v3797
      %v3822 = vadd.f32 %v3589, %v3800
      %v3823 = vadd.f32 %v3590, %v3805
      %v3824 = vadd.f32 %v3591, %v3808
      %v3825 = vadd.f32 %v3592, %v3813
      %v3826 = vadd.f32 %v3593, %v3816
      %v3827 = vld [vmem:[%s409] sm:$0xe]
      %v3828 = vld [vmem:[%s409 + $0x8] sm:$0xe]
      %v3829 = vld [vmem:[%s409 + $0x10] sm:$0xe]
      %v3830 = vld [vmem:[%s409 + $0x18] sm:$0xe]
      %v3831 = vld [vmem:[%s409 + $0x20] sm:$0xe]
      %v3832 = vld [vmem:[%s409 + $0x28] sm:$0xe]
      %v3833 = vld [vmem:[%s409 + $0x30] sm:$0xe]
      %v3834 = vld [vmem:[%s409 + $0x38] sm:$0xe]
      %v3851 = vrot.slane %v3827, 5
      %v3852 = vrot.slane %v3851, 4
      %v3853 = vrot.slane %v3595, 5
      %v3854 = vsel %vm792, %v3852, %v3853
      %v3855 = vrot.slane %v3828, 5
      %v3856 = vrot.slane %v3855, 4
      %v3857 = vrot.slane %v3597, 5
      %v3858 = vsel %vm792, %v3856, %v3857
      %v3859 = vrot.slane %v3829, 5
      %v3860 = vrot.slane %v3859, 4
      %v3861 = vrot.slane %v3599, 5
      %v3862 = vsel %vm792, %v3860, %v3861
      %v3863 = vrot.slane %v3830, 5
      %v3864 = vrot.slane %v3863, 4
      %v3865 = vrot.slane %v3601, 5
      %v3866 = vsel %vm792, %v3864, %v3865
      %v3867 = vrot.slane %v3831, 5
      %v3868 = vrot.slane %v3867, 4
      %v3869 = vrot.slane %v3603, 5
      %v3870 = vsel %vm792, %v3868, %v3869
      %v3871 = vrot.slane %v3832, 5
      %v3872 = vrot.slane %v3871, 4
      %v3873 = vrot.slane %v3605, 5
      %v3874 = vsel %vm792, %v3872, %v3873
      %v3875 = vrot.slane %v3833, 5
      %v3876 = vrot.slane %v3875, 4
      %v3877 = vrot.slane %v3607, 5
      %v3878 = vsel %vm792, %v3876, %v3877
      %v3879 = vrot.slane %v3834, 5
      %v3880 = vrot.slane %v3879, 4
      %v3881 = vrot.slane %v3609, 5
      %v3882 = vsel %vm792, %v3880, %v3881
      %v3883 = vld [vmem:[%s3 + $0x28] sm:$0x3]
      %v3884 = vunpack.c.l.b16 %v3854
      %v3885 = vunpack.c.l.b16 %v3858
      %v3886 = vunpack.c.l.b16 %v3862
      %v3887 = vunpack.c.l.b16 %v3866
      %v3888 = vunpack.c.l.b16 %v3870
      %v3889 = vunpack.c.l.b16 %v3874
      %v3890 = vunpack.c.l.b16 %v3878
      %v3891 = vunpack.c.l.b16 %v3882
      %v3892 = vpack.c.b16 %v3885, %v3884
      %v3893 = vpack.c.b16 %v3887, %v3886
      %v3894 = vpack.c.b16 %v3889, %v3888
      %v3895 = vpack.c.b16 %v3891, %v3890
      %v3897 = vsel %vm584, %v3892, 0
      %v3900 = vsel %vm584, %v3893, 0
      %v3903 = vsel %vm584, %v3894, 0
      %v3906 = vsel %vm584, %v3895, 0
      %v3909 = vsel %vm597, %v3883, 0
      %3911 = vmatprep.subr.bf16.mxu0 0
      %3912 = vmatpush1.bf16.msra.mxu0 %v3909
      %3913 = vmatprep.subr.bf16.mxu0 0
      %3914 = vmatpush1.bf16.msra.mxu0 0
      %3915 = vmatprep.subr.bf16.mxu0 0
      %3916 = vmatpush1.bf16.msra.mxu0 0
      %3917 = vmatprep.subr.bf16.mxu0 0
      %3918 = vmatpush1.bf16.msra.mxu0 0
      %3919 = vmatprep.subr.bf16.mxu0 0
      %3920 = vmatpush1.bf16.msra.mxu0 0
      %3921 = vmatprep.subr.bf16.mxu0 0
      %3922 = vmatpush1.bf16.msra.mxu0 0
      %3923 = vmatprep.subr.bf16.mxu0 0
      %3924 = vmatpush1.bf16.msra.mxu0 0
      %3925 = vmatprep.subr.bf16.mxu0 0
      %3926 = vmatpush1.bf16.msra.mxu0 0
      %3927 = vmatprep.subr.bf16.mxu0 0
      %3928 = vmatpush1.bf16.msra.mxu0 0
      %3929 = vmatprep.subr.bf16.mxu0 0
      %3930 = vmatpush1.bf16.msra.mxu0 0
      %3931 = vmatprep.subr.bf16.mxu0 0
      %3932 = vmatpush1.bf16.msra.mxu0 0
      %3933 = vmatprep.subr.bf16.mxu0 0
      %3934 = vmatpush1.bf16.msra.mxu0 0
      %3935 = vmatprep.subr.bf16.mxu0 0
      %3936 = vmatpush1.bf16.msra.mxu0 0
      %3937 = vmatprep.subr.bf16.mxu0 0
      %3938 = vmatpush1.bf16.msra.mxu0 0
      %3939 = vmatprep.subr.bf16.mxu0 0
      %3940 = vmatpush1.bf16.msra.mxu0 0
      %3941 = vmatprep.subr.bf16.mxu0 0
      %3942 = vmatpush1.bf16.msra.mxu0 0
      %3943 = vmatprep.mubr.bf16.mxu0 0
      %3944 = vmatmul.mubr.bf16.gmra.mrb[0].mxu0 %v3897
      %v3945 = vpop.f32.mrb[0].mxu0
      %v3946 = vadd.f32 0.0, %v3945
      %v3947 = vpop.f32.mrb[0].mxu0
      %v3948 = vpop.f32.mrb[0].mxu0
      %v3949 = vadd.f32 0.0, %v3948
      %v3950 = vpop.f32.mrb[0].mxu0
      %3951 = vmatprep.mubr.bf16.mxu0 0
      %3952 = vmatmul.mubr.bf16.gmra.mrb[0].mxu0 %v3900
      %v3953 = vpop.f32.mrb[0].mxu0
      %v3954 = vadd.f32 0.0, %v3953
      %v3955 = vpop.f32.mrb[0].mxu0
      %v3956 = vpop.f32.mrb[0].mxu0
      %v3957 = vadd.f32 0.0, %v3956
      %v3958 = vpop.f32.mrb[0].mxu0
      %3959 = vmatprep.mubr.bf16.mxu0 0
      %3960 = vmatmul.mubr.bf16.gmra.mrb[0].mxu0 %v3903
      %v3961 = vpop.f32.mrb[0].mxu0
      %v3962 = vadd.f32 0.0, %v3961
      %v3963 = vpop.f32.mrb[0].mxu0
      %v3964 = vpop.f32.mrb[0].mxu0
      %v3965 = vadd.f32 0.0, %v3964
      %v3966 = vpop.f32.mrb[0].mxu0
      %3967 = vmatprep.mubr.bf16.mxu0 0
      %3968 = vmatmul.mubr.bf16.gmra.mrb[0].mxu0 %v3906
      %v3969 = vpop.f32.mrb[0].mxu0
      %v3970 = vadd.f32 0.0, %v3969
      %v3971 = vpop.f32.mrb[0].mxu0
      %v3972 = vpop.f32.mrb[0].mxu0
      %v3973 = vadd.f32 0.0, %v3972
      %v3974 = vpop.f32.mrb[0].mxu0
      %3975 = vdwg.mxu0
      %v3976 = vadd.f32 %v3819, %v3946
      %v3977 = vadd.f32 %v3820, %v3949
      %v3978 = vadd.f32 %v3821, %v3954
      %v3979 = vadd.f32 %v3822, %v3957
      %v3980 = vadd.f32 %v3823, %v3962
      %v3981 = vadd.f32 %v3824, %v3965
      %v3982 = vadd.f32 %v3825, %v3970
      %v3983 = vadd.f32 %v3826, %v3973
      %s3984 = scalar_lea.vmem %s409, 8
      %v3985 = vld [vmem:[%s3984] sm:$0xf]
      %v3986 = vld [vmem:[%s3984 + $0x8] sm:$0xf]
      %v3987 = vld [vmem:[%s3984 + $0x10] sm:$0xf]
      %v3988 = vld [vmem:[%s3984 + $0x18] sm:$0xf]
      %v3989 = vld [vmem:[%s3984 + $0x20] sm:$0xf]
      %v3990 = vld [vmem:[%s3984 + $0x28] sm:$0xf]
      %v3991 = vld [vmem:[%s3984 + $0x30] sm:$0xf]
      %v3992 = vld [vmem:[%s3984 + $0x38] sm:$0xf]
      %v3993 = vld [vmem:[%s3 + $0x28] sm:$0xc]
      %v4002 = vunpack.c.l.b16 %v3985
      %v4003 = vunpack.c.l.b16 %v3986
      %v4004 = vunpack.c.l.b16 %v3987
      %v4005 = vunpack.c.l.b16 %v3988
      %v4006 = vunpack.c.l.b16 %v3989
      %v4007 = vunpack.c.l.b16 %v3990
      %v4008 = vunpack.c.l.b16 %v3991
      %v4009 = vunpack.c.l.b16 %v3992
      %v4010 = vpack.c.b16 %v4003, %v4002
      %v4011 = vpack.c.b16 %v4005, %v4004
      %v4012 = vpack.c.b16 %v4007, %v4006
      %v4013 = vpack.c.b16 %v4009, %v4008
      %v4015 = vunpack.c.l.b16 %v3993
      %v4016 = vpack.c.b16 %v4015, %v4015
      %v4017 = vrot.slane %v4016, 2
      %v4019 = vsel %vm584, %v4010, 0
      %v4022 = vsel %vm584, %v4011, 0
      %v4025 = vsel %vm584, %v4012, 0
      %v4028 = vsel %vm584, %v4013, 0
      %v4031 = vsel %vm597, %v4017, 0
      %4033 = vmatprep.subr.bf16.mxu0 0
      %4034 = vmatpush1.bf16.msra.mxu0 %v4031
      %4035 = vmatprep.subr.bf16.mxu0 0
      %4036 = vmatpush1.bf16.msra.mxu0 0
      %4037 = vmatprep.subr.bf16.mxu0 0
      %4038 = vmatpush1.bf16.msra.mxu0 0
      %4039 = vmatprep.subr.bf16.mxu0 0
      %4040 = vmatpush1.bf16.msra.mxu0 0
      %4041 = vmatprep.subr.bf16.mxu0 0
      %4042 = vmatpush1.bf16.msra.mxu0 0
      %4043 = vmatprep.subr.bf16.mxu0 0
      %4044 = vmatpush1.bf16.msra.mxu0 0
      %4045 = vmatprep.subr.bf16.mxu0 0
      %4046 = vmatpush1.bf16.msra.mxu0 0
      %4047 = vmatprep.subr.bf16.mxu0 0
      %4048 = vmatpush1.bf16.msra.mxu0 0
      %4049 = vmatprep.subr.bf16.mxu0 0
      %4050 = vmatpush1.bf16.msra.mxu0 0
      %4051 = vmatprep.subr.bf16.mxu0 0
      %4052 = vmatpush1.bf16.msra.mxu0 0
      %4053 = vmatprep.subr.bf16.mxu0 0
      %4054 = vmatpush1.bf16.msra.mxu0 0
      %4055 = vmatprep.subr.bf16.mxu0 0
      %4056 = vmatpush1.bf16.msra.mxu0 0
      %4057 = vmatprep.subr.bf16.mxu0 0
      %4058 = vmatpush1.bf16.msra.mxu0 0
      %4059 = vmatprep.subr.bf16.mxu0 0
      %4060 = vmatpush1.bf16.msra.mxu0 0
      %4061 = vmatprep.subr.bf16.mxu0 0
      %4062 = vmatpush1.bf16.msra.mxu0 0
      %4063 = vmatprep.subr.bf16.mxu0 0
      %4064 = vmatpush1.bf16.msra.mxu0 0
      %4065 = vmatprep.mubr.bf16.mxu0 0
      %4066 = vmatmul.mubr.bf16.gmra.mrb[0].mxu0 %v4019
      %v4067 = vpop.f32.mrb[0].mxu0
      %v4068 = vadd.f32 0.0, %v4067
      %v4069 = vpop.f32.mrb[0].mxu0
      %v4070 = vpop.f32.mrb[0].mxu0
      %v4071 = vadd.f32 0.0, %v4070
      %v4072 = vpop.f32.mrb[0].mxu0
      %4073 = vmatprep.mubr.bf16.mxu0 0
      %4074 = vmatmul.mubr.bf16.gmra.mrb[0].mxu0 %v4022
      %v4075 = vpop.f32.mrb[0].mxu0
      %v4076 = vadd.f32 0.0, %v4075
      %v4077 = vpop.f32.mrb[0].mxu0
      %v4078 = vpop.f32.mrb[0].mxu0
      %v4079 = vadd.f32 0.0, %v4078
      %v4080 = vpop.f32.mrb[0].mxu0
      %4081 = vmatprep.mubr.bf16.mxu0 0
      %4082 = vmatmul.mubr.bf16.gmra.mrb[0].mxu0 %v4025
      %v4083 = vpop.f32.mrb[0].mxu0
      %v4084 = vadd.f32 0.0, %v4083
      %v4085 = vpop.f32.mrb[0].mxu0
      %v4086 = vpop.f32.mrb[0].mxu0
      %v4087 = vadd.f32 0.0, %v4086
      %v4088 = vpop.f32.mrb[0].mxu0
      %4089 = vmatprep.mubr.bf16.mxu0 0
      %4090 = vmatmul.mubr.bf16.gmra.mrb[0].mxu0 %v4028
      %v4091 = vpop.f32.mrb[0].mxu0
      %v4092 = vadd.f32 0.0, %v4091
      %v4093 = vpop.f32.mrb[0].mxu0
      %v4094 = vpop.f32.mrb[0].mxu0
      %v4095 = vadd.f32 0.0, %v4094
      %v4096 = vpop.f32.mrb[0].mxu0
      %4097 = vdwg.mxu0
      %v4098 = vadd.f32 %v3976, %v4068
      %v4099 = vadd.f32 %v3977, %v4071
      %v4100 = vadd.f32 %v3978, %v4076
      %v4101 = vadd.f32 %v3979, %v4079
      %v4102 = vadd.f32 %v3980, %v4084
      %v4103 = vadd.f32 %v3981, %v4087
      %v4104 = vadd.f32 %v3982, %v4092
      %v4105 = vadd.f32 %v3983, %v4095
      %v4106 = vld [vmem:[%s3984] sm:$0xf]
      %v4107 = vld [vmem:[%s3984 + $0x4] sm:$0x1]
      %v4108 = vld [vmem:[%s3984 + $0x8] sm:$0xf]
      %v4109 = vld [vmem:[%s3984 + $0xc] sm:$0x1]
      %v4110 = vld [vmem:[%s3984 + $0x10] sm:$0xf]
      %v4111 = vld [vmem:[%s3984 + $0x14] sm:$0x1]
      %v4112 = vld [vmem:[%s3984 + $0x18] sm:$0xf]
      %v4113 = vld [vmem:[%s3984 + $0x1c] sm:$0x1]
      %v4114 = vld [vmem:[%s3984 + $0x20] sm:$0xf]
      %v4115 = vld [vmem:[%s3984 + $0x24] sm:$0x1]
      %v4116 = vld [vmem:[%s3984 + $0x28] sm:$0xf]
      %v4117 = vld [vmem:[%s3984 + $0x2c] sm:$0x1]
      %v4118 = vld [vmem:[%s3984 + $0x30] sm:$0xf]
      %v4119 = vld [vmem:[%s3984 + $0x34] sm:$0x1]
      %v4120 = vld [vmem:[%s3984 + $0x38] sm:$0xf]
      %v4121 = vld [vmem:[%s3984 + $0x3c] sm:$0x1]
      %v4123 = vshrl.u32 %v4106, 16
      %v4125 = vrot.slane %v4123, 4
      %v4126 = vshll.u32 %v4106, 16
      %v4128 = vrot.slane %v4126, 5
      %v4129 = vor.u32 %v4125, %v4128
      %v4130 = vrot.slane %v4129, 4
      %v4132 = vshll.u32 %v4107, 16
      %v4134 = vrot.slane %v4132, 5
      %v4135 = vsel %vm454, %v4130, %v4134
      %v4137 = vshrl.u32 %v4108, 16
      %v4139 = vrot.slane %v4137, 4
      %v4140 = vshll.u32 %v4108, 16
      %v4142 = vrot.slane %v4140, 5
      %v4143 = vor.u32 %v4139, %v4142
      %v4144 = vrot.slane %v4143, 4
      %v4146 = vshll.u32 %v4109, 16
      %v4148 = vrot.slane %v4146, 5
      %v4149 = vsel %vm454, %v4144, %v4148
      %v4151 = vshrl.u32 %v4110, 16
      %v4153 = vrot.slane %v4151, 4
      %v4154 = vshll.u32 %v4110, 16
      %v4156 = vrot.slane %v4154, 5
      %v4157 = vor.u32 %v4153, %v4156
      %v4158 = vrot.slane %v4157, 4
      %v4160 = vshll.u32 %v4111, 16
      %v4162 = vrot.slane %v4160, 5
      %v4163 = vsel %vm454, %v4158, %v4162
      %v4165 = vshrl.u32 %v4112, 16
      %v4167 = vrot.slane %v4165, 4
      %v4168 = vshll.u32 %v4112, 16
      %v4170 = vrot.slane %v4168, 5
      %v4171 = vor.u32 %v4167, %v4170
      %v4172 = vrot.slane %v4171, 4
      %v4174 = vshll.u32 %v4113, 16
      %v4176 = vrot.slane %v4174, 5
      %v4177 = vsel %vm454, %v4172, %v4176
      %v4179 = vshrl.u32 %v4114, 16
      %v4181 = vrot.slane %v4179, 4
      %v4182 = vshll.u32 %v4114, 16
      %v4184 = vrot.slane %v4182, 5
      %v4185 = vor.u32 %v4181, %v4184
      %v4186 = vrot.slane %v4185, 4
      %v4188 = vshll.u32 %v4115, 16
      %v4190 = vrot.slane %v4188, 5
      %v4191 = vsel %vm454, %v4186, %v4190
      %v4193 = vshrl.u32 %v4116, 16
      %v4195 = vrot.slane %v4193, 4
      %v4196 = vshll.u32 %v4116, 16
      %v4198 = vrot.slane %v4196, 5
      %v4199 = vor.u32 %v4195, %v4198
      %v4200 = vrot.slane %v4199, 4
      %v4202 = vshll.u32 %v4117, 16
      %v4204 = vrot.slane %v4202, 5
      %v4205 = vsel %vm454, %v4200, %v4204
      %v4207 = vshrl.u32 %v4118, 16
      %v4209 = vrot.slane %v4207, 4
      %v4210 = vshll.u32 %v4118, 16
      %v4212 = vrot.slane %v4210, 5
      %v4213 = vor.u32 %v4209, %v4212
      %v4214 = vrot.slane %v4213, 4
      %v4216 = vshll.u32 %v4119, 16
      %v4218 = vrot.slane %v4216, 5
      %v4219 = vsel %vm454, %v4214, %v4218
      %v4221 = vshrl.u32 %v4120, 16
      %v4223 = vrot.slane %v4221, 4
      %v4224 = vshll.u32 %v4120, 16
      %v4226 = vrot.slane %v4224, 5
      %v4227 = vor.u32 %v4223, %v4226
      %v4228 = vrot.slane %v4227, 4
      %v4230 = vshll.u32 %v4121, 16
      %v4232 = vrot.slane %v4230, 5
      %v4233 = vsel %vm454, %v4228, %v4232
      %v4234 = vld [vmem:[%s3 + $0x2c] sm:$0x3]
      %v4235 = vunpack.c.l.b16 %v4135
      %v4236 = vunpack.c.l.b16 %v4149
      %v4237 = vunpack.c.l.b16 %v4163
      %v4238 = vunpack.c.l.b16 %v4177
      %v4239 = vunpack.c.l.b16 %v4191
      %v4240 = vunpack.c.l.b16 %v4205
      %v4241 = vunpack.c.l.b16 %v4219
      %v4242 = vunpack.c.l.b16 %v4233
      %v4243 = vpack.c.b16 %v4236, %v4235
      %v4244 = vpack.c.b16 %v4238, %v4237
      %v4245 = vpack.c.b16 %v4240, %v4239
      %v4246 = vpack.c.b16 %v4242, %v4241
      %v4248 = vsel %vm584, %v4243, 0
      %v4251 = vsel %vm584, %v4244, 0
      %v4254 = vsel %vm584, %v4245, 0
      %v4257 = vsel %vm584, %v4246, 0
      %v4260 = vsel %vm597, %v4234, 0
      %4262 = vmatprep.subr.bf16.mxu0 0
      %4263 = vmatpush1.bf16.msra.mxu0 %v4260
      %4264 = vmatprep.subr.bf16.mxu0 0
      %4265 = vmatpush1.bf16.msra.mxu0 0
      %4266 = vmatprep.subr.bf16.mxu0 0
      %4267 = vmatpush1.bf16.msra.mxu0 0
      %4268 = vmatprep.subr.bf16.mxu0 0
      %4269 = vmatpush1.bf16.msra.mxu0 0
      %4270 = vmatprep.subr.bf16.mxu0 0
      %4271 = vmatpush1.bf16.msra.mxu0 0
      %4272 = vmatprep.subr.bf16.mxu0 0
      %4273 = vmatpush1.bf16.msra.mxu0 0
      %4274 = vmatprep.subr.bf16.mxu0 0
      %4275 = vmatpush1.bf16.msra.mxu0 0
      %4276 = vmatprep.subr.bf16.mxu0 0
      %4277 = vmatpush1.bf16.msra.mxu0 0
      %4278 = vmatprep.subr.bf16.mxu0 0
      %4279 = vmatpush1.bf16.msra.mxu0 0
      %4280 = vmatprep.subr.bf16.mxu0 0
      %4281 = vmatpush1.bf16.msra.mxu0 0
      %4282 = vmatprep.subr.bf16.mxu0 0
      %4283 = vmatpush1.bf16.msra.mxu0 0
      %4284 = vmatprep.subr.bf16.mxu0 0
      %4285 = vmatpush1.bf16.msra.mxu0 0
      %4286 = vmatprep.subr.bf16.mxu0 0
      %4287 = vmatpush1.bf16.msra.mxu0 0
      %4288 = vmatprep.subr.bf16.mxu0 0
      %4289 = vmatpush1.bf16.msra.mxu0 0
      %4290 = vmatprep.subr.bf16.mxu0 0
      %4291 = vmatpush1.bf16.msra.mxu0 0
      %4292 = vmatprep.subr.bf16.mxu0 0
      %4293 = vmatpush1.bf16.msra.mxu0 0
      %4294 = vmatprep.mubr.bf16.mxu0 0
      %4295 = vmatmul.mubr.bf16.gmra.mrb[0].mxu0 %v4248
      %v4296 = vpop.f32.mrb[0].mxu0
      %v4297 = vadd.f32 0.0, %v4296
      %v4298 = vpop.f32.mrb[0].mxu0
      %v4299 = vpop.f32.mrb[0].mxu0
      %v4300 = vadd.f32 0.0, %v4299
      %v4301 = vpop.f32.mrb[0].mxu0
      %4302 = vmatprep.mubr.bf16.mxu0 0
      %4303 = vmatmul.mubr.bf16.gmra.mrb[0].mxu0 %v4251
      %v4304 = vpop.f32.mrb[0].mxu0
      %v4305 = vadd.f32 0.0, %v4304
      %v4306 = vpop.f32.mrb[0].mxu0
      %v4307 = vpop.f32.mrb[0].mxu0
      %v4308 = vadd.f32 0.0, %v4307
      %v4309 = vpop.f32.mrb[0].mxu0
      %4310 = vmatprep.mubr.bf16.mxu0 0
      %4311 = vmatmul.mubr.bf16.gmra.mrb[0].mxu0 %v4254
      %v4312 = vpop.f32.mrb[0].mxu0
      %v4313 = vadd.f32 0.0, %v4312
      %v4314 = vpop.f32.mrb[0].mxu0
      %v4315 = vpop.f32.mrb[0].mxu0
      %v4316 = vadd.f32 0.0, %v4315
      %v4317 = vpop.f32.mrb[0].mxu0
      %4318 = vmatprep.mubr.bf16.mxu0 0
      %4319 = vmatmul.mubr.bf16.gmra.mrb[0].mxu0 %v4257
      %v4320 = vpop.f32.mrb[0].mxu0
      %v4321 = vadd.f32 0.0, %v4320
      %v4322 = vpop.f32.mrb[0].mxu0
      %v4323 = vpop.f32.mrb[0].mxu0
      %v4324 = vadd.f32 0.0, %v4323
      %v4325 = vpop.f32.mrb[0].mxu0
      %4326 = vdwg.mxu0
      %v4327 = vadd.f32 %v4098, %v4297
      %v4328 = vadd.f32 %v4099, %v4300
      %v4329 = vadd.f32 %v4100, %v4305
      %v4330 = vadd.f32 %v4101, %v4308
      %v4331 = vadd.f32 %v4102, %v4313
      %v4332 = vadd.f32 %v4103, %v4316
      %v4333 = vadd.f32 %v4104, %v4321
      %v4334 = vadd.f32 %v4105, %v4324
      %v4335 = vld [vmem:[%s3984] sm:$0xe]
      %v4336 = vld [vmem:[%s3984 + $0x8] sm:$0xe]
      %v4337 = vld [vmem:[%s3984 + $0x10] sm:$0xe]
      %v4338 = vld [vmem:[%s3984 + $0x18] sm:$0xe]
      %v4339 = vld [vmem:[%s3984 + $0x20] sm:$0xe]
      %v4340 = vld [vmem:[%s3984 + $0x28] sm:$0xe]
      %v4341 = vld [vmem:[%s3984 + $0x30] sm:$0xe]
      %v4342 = vld [vmem:[%s3984 + $0x38] sm:$0xe]
      %v4359 = vrot.slane %v4335, 5
      %v4360 = vrot.slane %v4359, 4
      %v4361 = vrot.slane %v4107, 5
      %v4362 = vsel %vm792, %v4360, %v4361
      %v4363 = vrot.slane %v4336, 5
      %v4364 = vrot.slane %v4363, 4
      %v4365 = vrot.slane %v4109, 5
      %v4366 = vsel %vm792, %v4364, %v4365
      %v4367 = vrot.slane %v4337, 5
      %v4368 = vrot.slane %v4367, 4
      %v4369 = vrot.slane %v4111, 5
      %v4370 = vsel %vm792, %v4368, %v4369
      %v4371 = vrot.slane %v4338, 5
      %v4372 = vrot.slane %v4371, 4
      %v4373 = vrot.slane %v4113, 5
      %v4374 = vsel %vm792, %v4372, %v4373
      %v4375 = vrot.slane %v4339, 5
      %v4376 = vrot.slane %v4375, 4
      %v4377 = vrot.slane %v4115, 5
      %v4378 = vsel %vm792, %v4376, %v4377
      %v4379 = vrot.slane %v4340, 5
      %v4380 = vrot.slane %v4379, 4
      %v4381 = vrot.slane %v4117, 5
      %v4382 = vsel %vm792, %v4380, %v4381
      %v4383 = vrot.slane %v4341, 5
      %v4384 = vrot.slane %v4383, 4
      %v4385 = vrot.slane %v4119, 5
      %v4386 = vsel %vm792, %v4384, %v4385
      %v4387 = vrot.slane %v4342, 5
      %v4388 = vrot.slane %v4387, 4
      %v4389 = vrot.slane %v4121, 5
      %v4390 = vsel %vm792, %v4388, %v4389
      %v4391 = vld [vmem:[%s3 + $0x2c] sm:$0xc]
      %v4392 = vunpack.c.l.b16 %v4362
      %v4393 = vunpack.c.l.b16 %v4366
      %v4394 = vunpack.c.l.b16 %v4370
      %v4395 = vunpack.c.l.b16 %v4374
      %v4396 = vunpack.c.l.b16 %v4378
      %v4397 = vunpack.c.l.b16 %v4382
      %v4398 = vunpack.c.l.b16 %v4386
      %v4399 = vunpack.c.l.b16 %v4390
      %v4400 = vpack.c.b16 %v4393, %v4392
      %v4401 = vpack.c.b16 %v4395, %v4394
      %v4402 = vpack.c.b16 %v4397, %v4396
      %v4403 = vpack.c.b16 %v4399, %v4398
      %v4405 = vunpack.c.l.b16 %v4391
      %v4406 = vpack.c.b16 %v4405, %v4405
      %v4407 = vrot.slane %v4406, 2
      %v4409 = vsel %vm584, %v4400, 0
      %v4412 = vsel %vm584, %v4401, 0
      %v4415 = vsel %vm584, %v4402, 0
      %v4418 = vsel %vm584, %v4403, 0
      %v4421 = vsel %vm597, %v4407, 0
      %4423 = vmatprep.subr.bf16.mxu0 0
      %4424 = vmatpush1.bf16.msra.mxu0 %v4421
      %4425 = vmatprep.subr.bf16.mxu0 0
      %4426 = vmatpush1.bf16.msra.mxu0 0
      %4427 = vmatprep.subr.bf16.mxu0 0
      %4428 = vmatpush1.bf16.msra.mxu0 0
      %4429 = vmatprep.subr.bf16.mxu0 0
      %4430 = vmatpush1.bf16.msra.mxu0 0
      %4431 = vmatprep.subr.bf16.mxu0 0
      %4432 = vmatpush1.bf16.msra.mxu0 0
      %4433 = vmatprep.subr.bf16.mxu0 0
      %4434 = vmatpush1.bf16.msra.mxu0 0
      %4435 = vmatprep.subr.bf16.mxu0 0
      %4436 = vmatpush1.bf16.msra.mxu0 0
      %4437 = vmatprep.subr.bf16.mxu0 0
      %4438 = vmatpush1.bf16.msra.mxu0 0
      %4439 = vmatprep.subr.bf16.mxu0 0
      %4440 = vmatpush1.bf16.msra.mxu0 0
      %4441 = vmatprep.subr.bf16.mxu0 0
      %4442 = vmatpush1.bf16.msra.mxu0 0
      %4443 = vmatprep.subr.bf16.mxu0 0
      %4444 = vmatpush1.bf16.msra.mxu0 0
      %4445 = vmatprep.subr.bf16.mxu0 0
      %4446 = vmatpush1.bf16.msra.mxu0 0
      %4447 = vmatprep.subr.bf16.mxu0 0
      %4448 = vmatpush1.bf16.msra.mxu0 0
      %4449 = vmatprep.subr.bf16.mxu0 0
      %4450 = vmatpush1.bf16.msra.mxu0 0
      %4451 = vmatprep.subr.bf16.mxu0 0
      %4452 = vmatpush1.bf16.msra.mxu0 0
      %4453 = vmatprep.subr.bf16.mxu0 0
      %4454 = vmatpush1.bf16.msra.mxu0 0
      %4455 = vmatprep.mubr.bf16.mxu0 0
      %4456 = vmatmul.mubr.bf16.gmra.mrb[0].mxu0 %v4409
      %v4457 = vpop.f32.mrb[0].mxu0
      %v4458 = vadd.f32 0.0, %v4457
      %v4459 = vpop.f32.mrb[0].mxu0
      %v4460 = vpop.f32.mrb[0].mxu0
      %v4461 = vadd.f32 0.0, %v4460
      %v4462 = vpop.f32.mrb[0].mxu0
      %4463 = vmatprep.mubr.bf16.mxu0 0
      %4464 = vmatmul.mubr.bf16.gmra.mrb[0].mxu0 %v4412
      %v4465 = vpop.f32.mrb[0].mxu0
      %v4466 = vadd.f32 0.0, %v4465
      %v4467 = vpop.f32.mrb[0].mxu0
      %v4468 = vpop.f32.mrb[0].mxu0
      %v4469 = vadd.f32 0.0, %v4468
      %v4470 = vpop.f32.mrb[0].mxu0
      %4471 = vmatprep.mubr.bf16.mxu0 0
      %4472 = vmatmul.mubr.bf16.gmra.mrb[0].mxu0 %v4415
      %v4473 = vpop.f32.mrb[0].mxu0
      %v4474 = vadd.f32 0.0, %v4473
      %v4475 = vpop.f32.mrb[0].mxu0
      %v4476 = vpop.f32.mrb[0].mxu0
      %v4477 = vadd.f32 0.0, %v4476
      %v4478 = vpop.f32.mrb[0].mxu0
      %4479 = vmatprep.mubr.bf16.mxu0 0
      %4480 = vmatmul.mubr.bf16.gmra.mrb[0].mxu0 %v4418
      %v4481 = vpop.f32.mrb[0].mxu0
      %v4482 = vadd.f32 0.0, %v4481
      %v4483 = vpop.f32.mrb[0].mxu0
      %v4484 = vpop.f32.mrb[0].mxu0
      %v4485 = vadd.f32 0.0, %v4484
      %v4486 = vpop.f32.mrb[0].mxu0
      %4487 = vdwg.mxu0
      %v4488 = vadd.f32 %v4327, %v4458
      %v4489 = vadd.f32 %v4328, %v4461
      %v4490 = vadd.f32 %v4329, %v4466
      %v4491 = vadd.f32 %v4330, %v4469
      %v4492 = vadd.f32 %v4331, %v4474
      %v4493 = vadd.f32 %v4332, %v4477
      %v4494 = vadd.f32 %v4333, %v4482
      %v4495 = vadd.f32 %v4334, %v4485
      %s4496 = scalar_lea.vmem %s409, 16
      %v4497 = vld [vmem:[%s4496] sm:$0xf]
      %v4498 = vld [vmem:[%s4496 + $0x8] sm:$0xf]
      %v4499 = vld [vmem:[%s4496 + $0x10] sm:$0xf]
      %v4500 = vld [vmem:[%s4496 + $0x18] sm:$0xf]
      %v4501 = vld [vmem:[%s4496 + $0x20] sm:$0xf]
      %v4502 = vld [vmem:[%s4496 + $0x28] sm:$0xf]
      %v4503 = vld [vmem:[%s4496 + $0x30] sm:$0xf]
      %v4504 = vld [vmem:[%s4496 + $0x38] sm:$0xf]
      %v4505 = vld [vmem:[%s3 + $0x30] sm:$0x3]
      %v4514 = vunpack.c.l.b16 %v4497
      %v4515 = vunpack.c.l.b16 %v4498
      %v4516 = vunpack.c.l.b16 %v4499
      %v4517 = vunpack.c.l.b16 %v4500
      %v4518 = vunpack.c.l.b16 %v4501
      %v4519 = vunpack.c.l.b16 %v4502
      %v4520 = vunpack.c.l.b16 %v4503
      %v4521 = vunpack.c.l.b16 %v4504
      %v4522 = vpack.c.b16 %v4515, %v4514
      %v4523 = vpack.c.b16 %v4517, %v4516
      %v4524 = vpack.c.b16 %v4519, %v4518
      %v4525 = vpack.c.b16 %v4521, %v4520
      %v4527 = vsel %vm584, %v4522, 0
      %v4530 = vsel %vm584, %v4523, 0
      %v4533 = vsel %vm584, %v4524, 0
      %v4536 = vsel %vm584, %v4525, 0
      %v4539 = vsel %vm597, %v4505, 0
      %4541 = vmatprep.subr.bf16.mxu0 0
      %4542 = vmatpush1.bf16.msra.mxu0 %v4539
      %4543 = vmatprep.subr.bf16.mxu0 0
      %4544 = vmatpush1.bf16.msra.mxu0 0
      %4545 = vmatprep.subr.bf16.mxu0 0
      %4546 = vmatpush1.bf16.msra.mxu0 0
      %4547 = vmatprep.subr.bf16.mxu0 0
      %4548 = vmatpush1.bf16.msra.mxu0 0
      %4549 = vmatprep.subr.bf16.mxu0 0
      %4550 = vmatpush1.bf16.msra.mxu0 0
      %4551 = vmatprep.subr.bf16.mxu0 0
      %4552 = vmatpush1.bf16.msra.mxu0 0
      %4553 = vmatprep.subr.bf16.mxu0 0
      %4554 = vmatpush1.bf16.msra.mxu0 0
      %4555 = vmatprep.subr.bf16.mxu0 0
      %4556 = vmatpush1.bf16.msra.mxu0 0
      %4557 = vmatprep.subr.bf16.mxu0 0
      %4558 = vmatpush1.bf16.msra.mxu0 0
      %4559 = vmatprep.subr.bf16.mxu0 0
      %4560 = vmatpush1.bf16.msra.mxu0 0
      %4561 = vmatprep.subr.bf16.mxu0 0
      %4562 = vmatpush1.bf16.msra.mxu0 0
      %4563 = vmatprep.subr.bf16.mxu0 0
      %4564 = vmatpush1.bf16.msra.mxu0 0
      %4565 = vmatprep.subr.bf16.mxu0 0
      %4566 = vmatpush1.bf16.msra.mxu0 0
      %4567 = vmatprep.subr.bf16.mxu0 0
      %4568 = vmatpush1.bf16.msra.mxu0 0
      %4569 = vmatprep.subr.bf16.mxu0 0
      %4570 = vmatpush1.bf16.msra.mxu0 0
      %4571 = vmatprep.subr.bf16.mxu0 0
      %4572 = vmatpush1.bf16.msra.mxu0 0
      %4573 = vmatprep.mubr.bf16.mxu0 0
      %4574 = vmatmul.mubr.bf16.gmra.mrb[0].mxu0 %v4527
      %v4575 = vpop.f32.mrb[0].mxu0
      %v4576 = vadd.f32 0.0, %v4575
      %v4577 = vpop.f32.mrb[0].mxu0
      %v4578 = vpop.f32.mrb[0].mxu0
      %v4579 = vadd.f32 0.0, %v4578
      %v4580 = vpop.f32.mrb[0].mxu0
      %4581 = vmatprep.mubr.bf16.mxu0 0
      %4582 = vmatmul.mubr.bf16.gmra.mrb[0].mxu0 %v4530
      %v4583 = vpop.f32.mrb[0].mxu0
      %v4584 = vadd.f32 0.0, %v4583
      %v4585 = vpop.f32.mrb[0].mxu0
      %v4586 = vpop.f32.mrb[0].mxu0
      %v4587 = vadd.f32 0.0, %v4586
      %v4588 = vpop.f32.mrb[0].mxu0
      %4589 = vmatprep.mubr.bf16.mxu0 0
      %4590 = vmatmul.mubr.bf16.gmra.mrb[0].mxu0 %v4533
      %v4591 = vpop.f32.mrb[0].mxu0
      %v4592 = vadd.f32 0.0, %v4591
      %v4593 = vpop.f32.mrb[0].mxu0
      %v4594 = vpop.f32.mrb[0].mxu0
      %v4595 = vadd.f32 0.0, %v4594
      %v4596 = vpop.f32.mrb[0].mxu0
      %4597 = vmatprep.mubr.bf16.mxu0 0
      %4598 = vmatmul.mubr.bf16.gmra.mrb[0].mxu0 %v4536
      %v4599 = vpop.f32.mrb[0].mxu0
      %v4600 = vadd.f32 0.0, %v4599
      %v4601 = vpop.f32.mrb[0].mxu0
      %v4602 = vpop.f32.mrb[0].mxu0
      %v4603 = vadd.f32 0.0, %v4602
      %v4604 = vpop.f32.mrb[0].mxu0
      %4605 = vdwg.mxu0
      %v4606 = vadd.f32 %v4488, %v4576
      %v4607 = vadd.f32 %v4489, %v4579
      %v4608 = vadd.f32 %v4490, %v4584
      %v4609 = vadd.f32 %v4491, %v4587
      %v4610 = vadd.f32 %v4492, %v4592
      %v4611 = vadd.f32 %v4493, %v4595
      %v4612 = vadd.f32 %v4494, %v4600
      %v4613 = vadd.f32 %v4495, %v4603
      %v4614 = vld [vmem:[%s4496] sm:$0xf]
      %v4615 = vld [vmem:[%s4496 + $0x4] sm:$0x1]
      %v4616 = vld [vmem:[%s4496 + $0x8] sm:$0xf]
      %v4617 = vld [vmem:[%s4496 + $0xc] sm:$0x1]
      %v4618 = vld [vmem:[%s4496 + $0x10] sm:$0xf]
      %v4619 = vld [vmem:[%s4496 + $0x14] sm:$0x1]
      %v4620 = vld [vmem:[%s4496 + $0x18] sm:$0xf]
      %v4621 = vld [vmem:[%s4496 + $0x1c] sm:$0x1]
      %v4622 = vld [vmem:[%s4496 + $0x20] sm:$0xf]
      %v4623 = vld [vmem:[%s4496 + $0x24] sm:$0x1]
      %v4624 = vld [vmem:[%s4496 + $0x28] sm:$0xf]
      %v4625 = vld [vmem:[%s4496 + $0x2c] sm:$0x1]
      %v4626 = vld [vmem:[%s4496 + $0x30] sm:$0xf]
      %v4627 = vld [vmem:[%s4496 + $0x34] sm:$0x1]
      %v4628 = vld [vmem:[%s4496 + $0x38] sm:$0xf]
      %v4629 = vld [vmem:[%s4496 + $0x3c] sm:$0x1]
      %v4631 = vshrl.u32 %v4614, 16
      %v4633 = vrot.slane %v4631, 4
      %v4634 = vshll.u32 %v4614, 16
      %v4636 = vrot.slane %v4634, 5
      %v4637 = vor.u32 %v4633, %v4636
      %v4638 = vrot.slane %v4637, 4
      %v4640 = vshll.u32 %v4615, 16
      %v4642 = vrot.slane %v4640, 5
      %v4643 = vsel %vm454, %v4638, %v4642
      %v4645 = vshrl.u32 %v4616, 16
      %v4647 = vrot.slane %v4645, 4
      %v4648 = vshll.u32 %v4616, 16
      %v4650 = vrot.slane %v4648, 5
      %v4651 = vor.u32 %v4647, %v4650
      %v4652 = vrot.slane %v4651, 4
      %v4654 = vshll.u32 %v4617, 16
      %v4656 = vrot.slane %v4654, 5
      %v4657 = vsel %vm454, %v4652, %v4656
      %v4659 = vshrl.u32 %v4618, 16
      %v4661 = vrot.slane %v4659, 4
      %v4662 = vshll.u32 %v4618, 16
      %v4664 = vrot.slane %v4662, 5
      %v4665 = vor.u32 %v4661, %v4664
      %v4666 = vrot.slane %v4665, 4
      %v4668 = vshll.u32 %v4619, 16
      %v4670 = vrot.slane %v4668, 5
      %v4671 = vsel %vm454, %v4666, %v4670
      %v4673 = vshrl.u32 %v4620, 16
      %v4675 = vrot.slane %v4673, 4
      %v4676 = vshll.u32 %v4620, 16
      %v4678 = vrot.slane %v4676, 5
      %v4679 = vor.u32 %v4675, %v4678
      %v4680 = vrot.slane %v4679, 4
      %v4682 = vshll.u32 %v4621, 16
      %v4684 = vrot.slane %v4682, 5
      %v4685 = vsel %vm454, %v4680, %v4684
      %v4687 = vshrl.u32 %v4622, 16
      %v4689 = vrot.slane %v4687, 4
      %v4690 = vshll.u32 %v4622, 16
      %v4692 = vrot.slane %v4690, 5
      %v4693 = vor.u32 %v4689, %v4692
      %v4694 = vrot.slane %v4693, 4
      %v4696 = vshll.u32 %v4623, 16
      %v4698 = vrot.slane %v4696, 5
      %v4699 = vsel %vm454, %v4694, %v4698
      %v4701 = vshrl.u32 %v4624, 16
      %v4703 = vrot.slane %v4701, 4
      %v4704 = vshll.u32 %v4624, 16
      %v4706 = vrot.slane %v4704, 5
      %v4707 = vor.u32 %v4703, %v4706
      %v4708 = vrot.slane %v4707, 4
      %v4710 = vshll.u32 %v4625, 16
      %v4712 = vrot.slane %v4710, 5
      %v4713 = vsel %vm454, %v4708, %v4712
      %v4715 = vshrl.u32 %v4626, 16
      %v4717 = vrot.slane %v4715, 4
      %v4718 = vshll.u32 %v4626, 16
      %v4720 = vrot.slane %v4718, 5
      %v4721 = vor.u32 %v4717, %v4720
      %v4722 = vrot.slane %v4721, 4
      %v4724 = vshll.u32 %v4627, 16
      %v4726 = vrot.slane %v4724, 5
      %v4727 = vsel %vm454, %v4722, %v4726
      %v4729 = vshrl.u32 %v4628, 16
      %v4731 = vrot.slane %v4729, 4
      %v4732 = vshll.u32 %v4628, 16
      %v4734 = vrot.slane %v4732, 5
      %v4735 = vor.u32 %v4731, %v4734
      %v4736 = vrot.slane %v4735, 4
      %v4738 = vshll.u32 %v4629, 16
      %v4740 = vrot.slane %v4738, 5
      %v4741 = vsel %vm454, %v4736, %v4740
      %v4742 = vld [vmem:[%s3 + $0x30] sm:$0xc]
      %v4743 = vunpack.c.l.b16 %v4643
      %v4744 = vunpack.c.l.b16 %v4657
      %v4745 = vunpack.c.l.b16 %v4671
      %v4746 = vunpack.c.l.b16 %v4685
      %v4747 = vunpack.c.l.b16 %v4699
      %v4748 = vunpack.c.l.b16 %v4713
      %v4749 = vunpack.c.l.b16 %v4727
      %v4750 = vunpack.c.l.b16 %v4741
      %v4751 = vpack.c.b16 %v4744, %v4743
      %v4752 = vpack.c.b16 %v4746, %v4745
      %v4753 = vpack.c.b16 %v4748, %v4747
      %v4754 = vpack.c.b16 %v4750, %v4749
      %v4756 = vunpack.c.l.b16 %v4742
      %v4757 = vpack.c.b16 %v4756, %v4756
      %v4758 = vrot.slane %v4757, 2
      %v4760 = vsel %vm584, %v4751, 0
      %v4763 = vsel %vm584, %v4752, 0
      %v4766 = vsel %vm584, %v4753, 0
      %v4769 = vsel %vm584, %v4754, 0
      %v4772 = vsel %vm597, %v4758, 0
      %4774 = vmatprep.subr.bf16.mxu0 0
      %4775 = vmatpush1.bf16.msra.mxu0 %v4772
      %4776 = vmatprep.subr.bf16.mxu0 0
      %4777 = vmatpush1.bf16.msra.mxu0 0
      %4778 = vmatprep.subr.bf16.mxu0 0
      %4779 = vmatpush1.bf16.msra.mxu0 0
      %4780 = vmatprep.subr.bf16.mxu0 0
      %4781 = vmatpush1.bf16.msra.mxu0 0
      %4782 = vmatprep.subr.bf16.mxu0 0
      %4783 = vmatpush1.bf16.msra.mxu0 0
      %4784 = vmatprep.subr.bf16.mxu0 0
      %4785 = vmatpush1.bf16.msra.mxu0 0
      %4786 = vmatprep.subr.bf16.mxu0 0
      %4787 = vmatpush1.bf16.msra.mxu0 0
      %4788 = vmatprep.subr.bf16.mxu0 0
      %4789 = vmatpush1.bf16.msra.mxu0 0
      %4790 = vmatprep.subr.bf16.mxu0 0
      %4791 = vmatpush1.bf16.msra.mxu0 0
      %4792 = vmatprep.subr.bf16.mxu0 0
      %4793 = vmatpush1.bf16.msra.mxu0 0
      %4794 = vmatprep.subr.bf16.mxu0 0
      %4795 = vmatpush1.bf16.msra.mxu0 0
      %4796 = vmatprep.subr.bf16.mxu0 0
      %4797 = vmatpush1.bf16.msra.mxu0 0
      %4798 = vmatprep.subr.bf16.mxu0 0
      %4799 = vmatpush1.bf16.msra.mxu0 0
      %4800 = vmatprep.subr.bf16.mxu0 0
      %4801 = vmatpush1.bf16.msra.mxu0 0
      %4802 = vmatprep.subr.bf16.mxu0 0
      %4803 = vmatpush1.bf16.msra.mxu0 0
      %4804 = vmatprep.subr.bf16.mxu0 0
      %4805 = vmatpush1.bf16.msra.mxu0 0
      %4806 = vmatprep.mubr.bf16.mxu0 0
      %4807 = vmatmul.mubr.bf16.gmra.mrb[0].mxu0 %v4760
      %v4808 = vpop.f32.mrb[0].mxu0
      %v4809 = vadd.f32 0.0, %v4808
      %v4810 = vpop.f32.mrb[0].mxu0
      %v4811 = vpop.f32.mrb[0].mxu0
      %v4812 = vadd.f32 0.0, %v4811
      %v4813 = vpop.f32.mrb[0].mxu0
      %4814 = vmatprep.mubr.bf16.mxu0 0
      %4815 = vmatmul.mubr.bf16.gmra.mrb[0].mxu0 %v4763
      %v4816 = vpop.f32.mrb[0].mxu0
      %v4817 = vadd.f32 0.0, %v4816
      %v4818 = vpop.f32.mrb[0].mxu0
      %v4819 = vpop.f32.mrb[0].mxu0
      %v4820 = vadd.f32 0.0, %v4819
      %v4821 = vpop.f32.mrb[0].mxu0
      %4822 = vmatprep.mubr.bf16.mxu0 0
      %4823 = vmatmul.mubr.bf16.gmra.mrb[0].mxu0 %v4766
      %v4824 = vpop.f32.mrb[0].mxu0
      %v4825 = vadd.f32 0.0, %v4824
      %v4826 = vpop.f32.mrb[0].mxu0
      %v4827 = vpop.f32.mrb[0].mxu0
      %v4828 = vadd.f32 0.0, %v4827
      %v4829 = vpop.f32.mrb[0].mxu0
      %4830 = vmatprep.mubr.bf16.mxu0 0
      %4831 = vmatmul.mubr.bf16.gmra.mrb[0].mxu0 %v4769
      %v4832 = vpop.f32.mrb[0].mxu0
      %v4833 = vadd.f32 0.0, %v4832
      %v4834 = vpop.f32.mrb[0].mxu0
      %v4835 = vpop.f32.mrb[0].mxu0
      %v4836 = vadd.f32 0.0, %v4835
      %v4837 = vpop.f32.mrb[0].mxu0
      %4838 = vdwg.mxu0
      %v4839 = vadd.f32 %v4606, %v4809
      %v4840 = vadd.f32 %v4607, %v4812
      %v4841 = vadd.f32 %v4608, %v4817
      %v4842 = vadd.f32 %v4609, %v4820
      %v4843 = vadd.f32 %v4610, %v4825
      %v4844 = vadd.f32 %v4611, %v4828
      %v4845 = vadd.f32 %v4612, %v4833
      %v4846 = vadd.f32 %v4613, %v4836
      %v4847 = vld [vmem:[%s4496] sm:$0xe]
      %v4848 = vld [vmem:[%s4496 + $0x8] sm:$0xe]
      %v4849 = vld [vmem:[%s4496 + $0x10] sm:$0xe]
      %v4850 = vld [vmem:[%s4496 + $0x18] sm:$0xe]
      %v4851 = vld [vmem:[%s4496 + $0x20] sm:$0xe]
      %v4852 = vld [vmem:[%s4496 + $0x28] sm:$0xe]
      %v4853 = vld [vmem:[%s4496 + $0x30] sm:$0xe]
      %v4854 = vld [vmem:[%s4496 + $0x38] sm:$0xe]
      %v4871 = vrot.slane %v4847, 5
      %v4872 = vrot.slane %v4871, 4
      %v4873 = vrot.slane %v4615, 5
      %v4874 = vsel %vm792, %v4872, %v4873
      %v4875 = vrot.slane %v4848, 5
      %v4876 = vrot.slane %v4875, 4
      %v4877 = vrot.slane %v4617, 5
      %v4878 = vsel %vm792, %v4876, %v4877
      %v4879 = vrot.slane %v4849, 5
      %v4880 = vrot.slane %v4879, 4
      %v4881 = vrot.slane %v4619, 5
      %v4882 = vsel %vm792, %v4880, %v4881
      %v4883 = vrot.slane %v4850, 5
      %v4884 = vrot.slane %v4883, 4
      %v4885 = vrot.slane %v4621, 5
      %v4886 = vsel %vm792, %v4884, %v4885
      %v4887 = vrot.slane %v4851, 5
      %v4888 = vrot.slane %v4887, 4
      %v4889 = vrot.slane %v4623, 5
      %v4890 = vsel %vm792, %v4888, %v4889
      %v4891 = vrot.slane %v4852, 5
      %v4892 = vrot.slane %v4891, 4
      %v4893 = vrot.slane %v4625, 5
      %v4894 = vsel %vm792, %v4892, %v4893
      %v4895 = vrot.slane %v4853, 5
      %v4896 = vrot.slane %v4895, 4
      %v4897 = vrot.slane %v4627, 5
      %v4898 = vsel %vm792, %v4896, %v4897
      %v4899 = vrot.slane %v4854, 5
      %v4900 = vrot.slane %v4899, 4
      %v4901 = vrot.slane %v4629, 5
      %v4902 = vsel %vm792, %v4900, %v4901
      %v4903 = vld [vmem:[%s3 + $0x34] sm:$0x3]
      %v4904 = vunpack.c.l.b16 %v4874
      %v4905 = vunpack.c.l.b16 %v4878
      %v4906 = vunpack.c.l.b16 %v4882
      %v4907 = vunpack.c.l.b16 %v4886
      %v4908 = vunpack.c.l.b16 %v4890
      %v4909 = vunpack.c.l.b16 %v4894
      %v4910 = vunpack.c.l.b16 %v4898
      %v4911 = vunpack.c.l.b16 %v4902
      %v4912 = vpack.c.b16 %v4905, %v4904
      %v4913 = vpack.c.b16 %v4907, %v4906
      %v4914 = vpack.c.b16 %v4909, %v4908
      %v4915 = vpack.c.b16 %v4911, %v4910
      %v4917 = vsel %vm584, %v4912, 0
      %v4920 = vsel %vm584, %v4913, 0
      %v4923 = vsel %vm584, %v4914, 0
      %v4926 = vsel %vm584, %v4915, 0
      %v4929 = vsel %vm597, %v4903, 0
      %4931 = vmatprep.subr.bf16.mxu0 0
      %4932 = vmatpush1.bf16.msra.mxu0 %v4929
      %4933 = vmatprep.subr.bf16.mxu0 0
      %4934 = vmatpush1.bf16.msra.mxu0 0
      %4935 = vmatprep.subr.bf16.mxu0 0
      %4936 = vmatpush1.bf16.msra.mxu0 0
      %4937 = vmatprep.subr.bf16.mxu0 0
      %4938 = vmatpush1.bf16.msra.mxu0 0
      %4939 = vmatprep.subr.bf16.mxu0 0
      %4940 = vmatpush1.bf16.msra.mxu0 0
      %4941 = vmatprep.subr.bf16.mxu0 0
      %4942 = vmatpush1.bf16.msra.mxu0 0
      %4943 = vmatprep.subr.bf16.mxu0 0
      %4944 = vmatpush1.bf16.msra.mxu0 0
      %4945 = vmatprep.subr.bf16.mxu0 0
      %4946 = vmatpush1.bf16.msra.mxu0 0
      %4947 = vmatprep.subr.bf16.mxu0 0
      %4948 = vmatpush1.bf16.msra.mxu0 0
      %4949 = vmatprep.subr.bf16.mxu0 0
      %4950 = vmatpush1.bf16.msra.mxu0 0
      %4951 = vmatprep.subr.bf16.mxu0 0
      %4952 = vmatpush1.bf16.msra.mxu0 0
      %4953 = vmatprep.subr.bf16.mxu0 0
      %4954 = vmatpush1.bf16.msra.mxu0 0
      %4955 = vmatprep.subr.bf16.mxu0 0
      %4956 = vmatpush1.bf16.msra.mxu0 0
      %4957 = vmatprep.subr.bf16.mxu0 0
      %4958 = vmatpush1.bf16.msra.mxu0 0
      %4959 = vmatprep.subr.bf16.mxu0 0
      %4960 = vmatpush1.bf16.msra.mxu0 0
      %4961 = vmatprep.subr.bf16.mxu0 0
      %4962 = vmatpush1.bf16.msra.mxu0 0
      %4963 = vmatprep.mubr.bf16.mxu0 0
      %4964 = vmatmul.mubr.bf16.gmra.mrb[0].mxu0 %v4917
      %v4965 = vpop.f32.mrb[0].mxu0
      %v4966 = vadd.f32 0.0, %v4965
      %v4967 = vpop.f32.mrb[0].mxu0
      %v4968 = vpop.f32.mrb[0].mxu0
      %v4969 = vadd.f32 0.0, %v4968
      %v4970 = vpop.f32.mrb[0].mxu0
      %4971 = vmatprep.mubr.bf16.mxu0 0
      %4972 = vmatmul.mubr.bf16.gmra.mrb[0].mxu0 %v4920
      %v4973 = vpop.f32.mrb[0].mxu0
      %v4974 = vadd.f32 0.0, %v4973
      %v4975 = vpop.f32.mrb[0].mxu0
      %v4976 = vpop.f32.mrb[0].mxu0
      %v4977 = vadd.f32 0.0, %v4976
      %v4978 = vpop.f32.mrb[0].mxu0
      %4979 = vmatprep.mubr.bf16.mxu0 0
      %4980 = vmatmul.mubr.bf16.gmra.mrb[0].mxu0 %v4923
      %v4981 = vpop.f32.mrb[0].mxu0
      %v4982 = vadd.f32 0.0, %v4981
      %v4983 = vpop.f32.mrb[0].mxu0
      %v4984 = vpop.f32.mrb[0].mxu0
      %v4985 = vadd.f32 0.0, %v4984
      %v4986 = vpop.f32.mrb[0].mxu0
      %4987 = vmatprep.mubr.bf16.mxu0 0
      %4988 = vmatmul.mubr.bf16.gmra.mrb[0].mxu0 %v4926
      %v4989 = vpop.f32.mrb[0].mxu0
      %v4990 = vadd.f32 0.0, %v4989
      %v4991 = vpop.f32.mrb[0].mxu0
      %v4992 = vpop.f32.mrb[0].mxu0
      %v4993 = vadd.f32 0.0, %v4992
      %v4994 = vpop.f32.mrb[0].mxu0
      %4995 = vdwg.mxu0
      %v4996 = vadd.f32 %v4839, %v4966
      %v4997 = vadd.f32 %v4840, %v4969
      %v4998 = vadd.f32 %v4841, %v4974
      %v4999 = vadd.f32 %v4842, %v4977
      %v5000 = vadd.f32 %v4843, %v4982
      %v5001 = vadd.f32 %v4844, %v4985
      %v5002 = vadd.f32 %v4845, %v4990
      %v5003 = vadd.f32 %v4846, %v4993
      %v5004 = vld [vmem:[%s4] sm:$0x1]
      %v5006 = vlaneseq
      %v5007 = vshrl.u32 %v5006, 7
      %v5008 = vsub.s32 0, %v5007
      %v5009 = vrot.slane %v5004, %v5008
      %v5011 = vadd.f32 %v4996, %v5009
      %v5012 = vadd.f32 %v4997, %v5009
      %v5013 = vadd.f32 %v4998, %v5009
      %v5014 = vadd.f32 %v4999, %v5009
      %v5015 = vadd.f32 %v5000, %v5009
      %v5016 = vadd.f32 %v5001, %v5009
      %v5017 = vadd.f32 %v5002, %v5009
      %v5018 = vadd.f32 %v5003, %v5009
      %v5019 = vpack.c.bf16 %v5012, %v5011
      %v5020 = vpack.c.bf16 %v5014, %v5013
      %v5021 = vpack.c.bf16 %v5016, %v5015
      %v5022 = vpack.c.bf16 %v5018, %v5017
      %v5027 = vunpack.c.l.b16 %v5019
      %v5028 = vunpack.c.h.b16 %v5019
      %v5029 = vunpack.c.l.b16 %v5020
      %v5030 = vunpack.c.h.b16 %v5020
      %v5031 = vunpack.c.l.b16 %v5021
      %v5032 = vunpack.c.h.b16 %v5021
      %v5033 = vunpack.c.l.b16 %v5022
      %v5034 = vunpack.c.h.b16 %v5022
      %v5035 = vpack.c.b16 %v5027, %v5027
      %v5036 = vpack.c.b16 %v5028, %v5028
      %v5037 = vpack.c.b16 %v5029, %v5029
      %v5038 = vpack.c.b16 %v5030, %v5030
      %v5039 = vpack.c.b16 %v5031, %v5031
      %v5040 = vpack.c.b16 %v5032, %v5032
      %v5041 = vpack.c.b16 %v5033, %v5033
      %v5042 = vpack.c.b16 %v5034, %v5034
      %vm5051 = vcmask 60416
      %5052 = vst.msk [vmem:[%s419] sm:$0xf] %vm5051, %v5035
      %5053 = vst.msk [vmem:[%s419 + $0x4] sm:$0xf] %vm5051, %v5036
      %5054 = vst.msk [vmem:[%s419 + $0x8] sm:$0xf] %vm5051, %v5037
      %5055 = vst.msk [vmem:[%s419 + $0xc] sm:$0xf] %vm5051, %v5038
      %5056 = vst.msk [vmem:[%s419 + $0x10] sm:$0xf] %vm5051, %v5039
      %5057 = vst.msk [vmem:[%s419 + $0x14] sm:$0xf] %vm5051, %v5040
      %5058 = vst.msk [vmem:[%s419 + $0x18] sm:$0xf] %vm5051, %v5041
      %5059 = vst.msk [vmem:[%s419 + $0x1c] sm:$0xf] %vm5051, %v5042
      %v5060 = vunpack.c.l.bf16 %v5019
      %v5061 = vunpack.c.h.bf16 %v5019
      %v5062 = vunpack.c.l.bf16 %v5020
      %v5063 = vunpack.c.h.bf16 %v5020
      %v5064 = vunpack.c.l.bf16 %v5021
      %v5065 = vunpack.c.h.bf16 %v5021
      %v5066 = vunpack.c.l.bf16 %v5022
      %v5067 = vunpack.c.h.bf16 %v5022
      %vm5068 = vcmask 64512
      %v5069 = vsel %vm5068, %v5060, 0.0
      %v5070 = vsel %vm5068, %v5061, 0.0
      %v5071 = vadd.f32 %v5069, %v5070
      %v5072 = vsel %vm5068, %v5062, 0.0
      %v5073 = vadd.f32 %v5071, %v5072
      %v5074 = vsel %vm5068, %v5063, 0.0
      %v5075 = vadd.f32 %v5073, %v5074
      %v5076 = vsel %vm5068, %v5064, 0.0
      %v5077 = vadd.f32 %v5075, %v5076
      %v5078 = vsel %vm5068, %v5065, 0.0
      %v5079 = vadd.f32 %v5077, %v5078
      %v5080 = vsel %vm5068, %v5066, 0.0
      %v5081 = vadd.f32 %v5079, %v5080
      %v5082 = vsel %vm5068, %v5067, 0.0
      %v5083 = vadd.f32 %v5081, %v5082
      %v5084 = vrot.slane %v5083, 4
      %v5085 = vadd.f32 %v5083, %v5084
      %v5086 = vrot.slane %v5085, 2
      %v5087 = vadd.f32 %v5085, %v5086
      %v5088 = vrot.slane %v5087, 1
      %v5089 = vadd.f32 %v5087, %v5088
      %vm5090 = vcmask 57344
      %5091 = vst.msk [vmem:[%s426] sm:$0x1] %vm5090, %v5089
      %v5092 = vmul.f32 %v5060, %v5060
      %v5093 = vmul.f32 %v5061, %v5061
      %v5094 = vmul.f32 %v5062, %v5062
      %v5095 = vmul.f32 %v5063, %v5063
      %v5096 = vmul.f32 %v5064, %v5064
      %v5097 = vmul.f32 %v5065, %v5065
      %v5098 = vmul.f32 %v5066, %v5066
      %v5099 = vmul.f32 %v5067, %v5067
      %v5100 = vsel %vm5068, %v5092, 0.0
      %v5101 = vsel %vm5068, %v5093, 0.0
      %v5102 = vadd.f32 %v5100, %v5101
      %v5103 = vsel %vm5068, %v5094, 0.0
      %v5104 = vadd.f32 %v5102, %v5103
      %v5105 = vsel %vm5068, %v5095, 0.0
      %v5106 = vadd.f32 %v5104, %v5105
      %v5107 = vsel %vm5068, %v5096, 0.0
      %v5108 = vadd.f32 %v5106, %v5107
      %v5109 = vsel %vm5068, %v5097, 0.0
      %v5110 = vadd.f32 %v5108, %v5109
      %v5111 = vsel %vm5068, %v5098, 0.0
      %v5112 = vadd.f32 %v5110, %v5111
      %v5113 = vsel %vm5068, %v5099, 0.0
      %v5114 = vadd.f32 %v5112, %v5113
      %v5115 = vrot.slane %v5114, 4
      %v5116 = vadd.f32 %v5114, %v5115
      %v5117 = vrot.slane %v5116, 2
      %v5118 = vadd.f32 %v5116, %v5117
      %v5119 = vrot.slane %v5118, 1
      %v5120 = vadd.f32 %v5118, %v5119
      %5121 = vst.msk [vmem:[%s433] sm:$0x1] %vm5090, %v5120
      %p5122 = scmp.lt.s32.totalorder %s23, 1
      %s5123 = scalar_select %p5122, %s23, 1
      %p5124 = scmp.lt.s32.totalorder %s24, 7
      %s5125 = scalar_select %p5124, %s24, 7
      %s5126 = smul.addr %s5125, 8
      %s5127 = smul.addr %s5123, 64
      %s5128 = sadd.s32 %s5126, %s5127
      %s5129 = smul.addr %s5128, 4
      %s5130 = scalar_lea.vmem %s5, %s5129
      %p5131 = scmp.lt.s32.totalorder %s23, 1
      %s5132 = scalar_select %p5131, %s23, 1
      %p5133 = scmp.lt.s32.totalorder %s24, 7
      %s5134 = scalar_select %p5133, %s24, 7
      %s5135 = smul.addr %s5132, 8
      %s5136 = sadd.s32 %s5134, %s5135
      %s5137 = scalar_lea.vmem %s6, %s5136
      %p5138 = scmp.lt.s32.totalorder %s23, 1
      %s5139 = scalar_select %p5138, %s23, 1
      %p5140 = scmp.lt.s32.totalorder %s24, 7
      %s5141 = scalar_select %p5140, %s24, 7
      %s5142 = smul.addr %s5139, 8
      %s5143 = sadd.s32 %s5141, %s5142
      %s5144 = scalar_lea.vmem %s7, %s5143
      // Predicated region
      $region41: #{unet_conv3_forward.4} parent=39 // pred_check
        %p5145 = pneg %p181
      $region42: #{unet_conv3_forward.4} parent=39 // pred_check_branch
        %5147 = sbr.rel (%p5145) target = $region44
      $region43: #{unet_conv3_forward.4} parent=39 // pred_region
        _
      $region44: #{unet_conv3_forward.4} parent=39 // pred_fallthru
        _
      // Predicated region
      $region45: #{unet_conv3_forward.4} parent=39 // pred_check
        %p5148 = pneg %p209
      $region46: #{unet_conv3_forward.4} parent=39 // pred_check_branch
        %5150 = sbr.rel (%p5148) target = $region48
      $region47: #{unet_conv3_forward.4} parent=39 // pred_region
        _
      $region48: #{unet_conv3_forward.4} parent=39 // pred_fallthru
        _
      // Predicated region
      $region49: #{unet_conv3_forward.4} parent=39 // pred_check
        %p5151 = pneg %p237
      $region50: #{unet_conv3_forward.4} parent=39 // pred_check_branch
        %5153 = sbr.rel (%p5151) target = $region52
      $region51: #{unet_conv3_forward.4} parent=39 // pred_region
        _
      $region52: #{unet_conv3_forward.4} parent=39 // pred_fallthru
        _
    $region40: #{unet_conv3_forward.4} parent=5 // pred_fallthru
      _
    %p5154 = scmp.le.s32.totalorder 2, %s14
    // Predicated region
    $region53: #{unet_conv3_forward.4} parent=5 // pred_check
      %p5155 = pneg %p5154
    $region54: #{unet_conv3_forward.4} parent=5 // pred_check_branch
      %5157 = sbr.rel (%p5155) target = $region56
    $region55: #{unet_conv3_forward.4} parent=5 // pred_region
      %s5158 = ssub.s32 %s14, 2
      // Predicated region
      $region57: #{unet_conv3_forward.4} parent=55 // pred_check
        %p5159 = pneg %p187
      $region58: #{unet_conv3_forward.4} parent=55 // pred_check_branch
        %5161 = sbr.rel (%p5159) target = $region60
      $region59: #{unet_conv3_forward.4} parent=55 // pred_region
        %p5162 = scmp.lt.s32.totalorder %s25, 1
        %s5163 = scalar_select %p5162, %s25, 1
        %p5164 = scmp.lt.s32.totalorder %s26, 7
        %s5165 = scalar_select %p5164, %s26, 7
        %s5166 = smul.addr %s5165, 8
        %s5167 = smul.addr %s5163, 64
        %s5168 = sadd.s32 %s5166, %s5167
        %s5169 = smul.addr %s5168, 4
        %s5170 = scalar_lea.vmem %s5, %s5169
      $region60: #{unet_conv3_forward.4} parent=55 // pred_fallthru
        _
      // Predicated region
      $region61: #{unet_conv3_forward.4} parent=55 // pred_check
        %p5171 = pneg %p215
      $region62: #{unet_conv3_forward.4} parent=55 // pred_check_branch
        %5173 = sbr.rel (%p5171) target = $region64
      $region63: #{unet_conv3_forward.4} parent=55 // pred_region
        %p5174 = scmp.lt.s32.totalorder %s25, 1
        %s5175 = scalar_select %p5174, %s25, 1
        %p5176 = scmp.lt.s32.totalorder %s26, 7
        %s5177 = scalar_select %p5176, %s26, 7
        %s5178 = smul.addr %s5175, 8
        %s5179 = sadd.s32 %s5177, %s5178
        %s5180 = scalar_lea.vmem %s6, %s5179
      $region64: #{unet_conv3_forward.4} parent=55 // pred_fallthru
        _
      // Predicated region
      $region65: #{unet_conv3_forward.4} parent=55 // pred_check
        %p5181 = pneg %p243
      $region66: #{unet_conv3_forward.4} parent=55 // pred_check_branch
        %5183 = sbr.rel (%p5181) target = $region68
      $region67: #{unet_conv3_forward.4} parent=55 // pred_region
        %p5184 = scmp.lt.s32.totalorder %s25, 1
        %s5185 = scalar_select %p5184, %s25, 1
        %p5186 = scmp.lt.s32.totalorder %s26, 7
        %s5187 = scalar_select %p5186, %s26, 7
        %s5188 = smul.addr %s5185, 8
        %s5189 = sadd.s32 %s5187, %s5188
        %s5190 = scalar_lea.vmem %s7, %s5189
      $region68: #{unet_conv3_forward.4} parent=55 // pred_fallthru
        _
    $region56: #{unet_conv3_forward.4} parent=5 // pred_fallthru
      _
  $region6: #{unet_conv3_forward.4} parent=0 // loop_footer
    %s18 = sadd.s32 1, %s14
  $region7: #{unet_conv3_forward.4} parent=0 // loop_footer_branch
    %13 = sbr.rel target = $region3
  $region8: #{unet_conv3_forward.4} parent=0 // loop_exit
    _

// kernel: unet_conv3_forward.6
$region0: #{unet_conv3_forward.6}
  #allocation0 [shape = 'u32[]', space=smem, size = 0x4, offset = 0x4, fixed_abs, tag = 'smem constant byte address 0x4 - core index']
  #allocation1 [shape = 'u32[144,128]{1,0:T(1,128)}', space=vmem, size = 0x12000, scoped, tag = 'internal scratch']
  %s0 = inlined_call_operand.vmem [shape: bf16[2,10,10,10,8], index: 0, kind: input, shape index: {}, may-alias: {0,1,2}]
  %s1 = inlined_call_operand.vmem [shape: bf16[2,10,10,10,8], index: 1, kind: input, shape index: {}, may-alias: {0,1,2}]
  %s2 = inlined_call_operand.vmem [shape: bf16[2,10,10,10,8], index: 2, kind: input, shape index: {}, may-alias: {0,1,2}]
  %s3 = inlined_call_operand.vmem [shape: bf16[216,8], index: 3, kind: input, shape index: {}]
  %s4 = inlined_call_operand.vmem [shape: f32[1,8], index: 4, kind: input, shape index: {}]
  %s5 = inlined_call_operand.vmem [shape: bf16[2,8,64,8], index: 5, kind: output, shape index: {0}]
  %s6 = inlined_call_operand.vmem [shape: f32[2,8,1,8], index: 6, kind: output, shape index: {1}]
  %s7 = inlined_call_operand.vmem [shape: f32[2,8,1,8], index: 7, kind: output, shape index: {2}]
  %8 = xla_tuple %s5, %s6, %s7
  %s9 = sld [smem:[#allocation0]]
  $region69: #{unet_conv3_forward.6} parent=0
    _
  %s11 = ssub.s32 1, %s9
  %s12 = scalar_select 0, %s11, %s9
  loop: start=0, step=1, limit=18
  $region2: #{unet_conv3_forward.6} parent=0 // loop_pre_header
    _
  $region3: #{unet_conv3_forward.6} parent=0 // loop_header
    %s14 = sphi 0, %s18
    %p15 = scmp.ge.s32.totalorder %s14, 18
    %s21 = sphi 0, %s33
    %s22 = sphi 0, %s29
    %s23 = sphi 0, %s21
    %s24 = sphi 0, %s22
    %s25 = sphi 0, %s23
    %s26 = sphi 0, %s24
    %s38 = sphi 0, %s40
    %s41 = sphi 0, %s38
    %s42 = sphi 0, %s41
    %s58 = sphi 0, %s42
    %s68 = sphi 0, %s70
    %s71 = sphi 0, %s68
    %s72 = sphi 0, %s71
    %s88 = sphi 0, %s72
    %s98 = sphi 0, %s100
    %s101 = sphi 0, %s98
    %s102 = sphi 0, %s101
    %s118 = sphi 0, %s102
    %s122 = sphi 0, %s122
    %s124 = sphi 0, %s122
    %s125 = sphi 0, %s124
    %s139 = sphi 0, %s125
    %s143 = sphi 0, %s143
    %s145 = sphi 0, %s143
    %s146 = sphi 0, %s145
    %s160 = sphi 0, %s146
    %s168 = sphi 0, %s170
    %s171 = sphi 0, %s168
    %s172 = sphi 0, %s171
    %s188 = sphi 0, %s172
    %s196 = sphi 0, %s198
    %s199 = sphi 0, %s196
    %s200 = sphi 0, %s199
    %s216 = sphi 0, %s200
    %s224 = sphi 0, %s226
    %s227 = sphi 0, %s224
    %s228 = sphi 0, %s227
    %s244 = sphi 0, %s228
  $region4: #{unet_conv3_forward.6} parent=0 // loop_header_branch
    %17 = sbr.rel (%p15) target = $region8
  $region5: #{unet_conv3_forward.6} parent=0 // loop_body
    %s19 = ssub.s32 %s14, 1
    %s20 = ssub.s32 %s14, 2
    %s27 = sadd.s32 1, %s22
    %p28 = scmp.ge.s32.totalorder %s27, 8
    %s29 = scalar_select %p28, 0, %s27
    %s30 = sadd.s32 1, %s21
    %s31 = scalar_select %p28, %s30, %s21
    %p32 = scmp.ge.s32.totalorder %s31, 2
    %s33 = scalar_select %p32, 0, %s31
    %s34 = ssub.s32 %s21, %s33
    %s35 = ssub.s32 %s22, %s29
    %s36 = sor.u32 %s34, %s35
    %p37 = scmp.eq.s32.totalorder %s36, 0
    %s39 = sadd.s32 %s38, 1
    %s40 = scalar_select %p37, %s38, %s39
    %p43 = pneg %p37
    %p44 = scmp.eq.s32.totalorder %s14, 15
    %p45 = por %p43, %p44
    %p46 = scmp.ne.s32.totalorder %s38, %s41
    %p47 = scmp.eq.s32.totalorder %s14, 0
    %p48 = por %p46, %p47
    %p49 = scmp.ne.s32.totalorder %s38, %s41
    %p50 = scmp.eq.s32.totalorder %s19, 15
    %p51 = por %p49, %p50
    %p52 = scmp.ne.s32.totalorder %s41, %s42
    %p53 = scmp.eq.s32.totalorder %s19, 0
    %p54 = por %p52, %p53
    %p55 = scmp.ne.s32.totalorder %s41, %s42
    %p56 = scmp.eq.s32.totalorder %s20, 15
    %p57 = por %p55, %p56
    %p59 = scmp.ne.s32.totalorder %s42, %s58
    %p60 = scmp.eq.s32.totalorder %s20, 0
    %p61 = por %p59, %p60
    %s62 = sadd.s32 %s22, 1
    %s63 = sadd.s32 %s29, 1
    %s64 = ssub.s32 %s21, %s33
    %s65 = ssub.s32 %s62, %s63
    %s66 = sor.u32 %s64, %s65
    %p67 = scmp.eq.s32.totalorder %s66, 0
    %s69 = sadd.s32 %s68, 1
    %s70 = scalar_select %p67, %s68, %s69
    %p73 = pneg %p67
    %p74 = scmp.eq.s32.totalorder %s14, 15
    %p75 = por %p73, %p74
    %p76 = scmp.ne.s32.totalorder %s68, %s71
    %p77 = scmp.eq.s32.totalorder %s14, 0
    %p78 = por %p76, %p77
    %p79 = scmp.ne.s32.totalorder %s68, %s71
    %p80 = scmp.eq.s32.totalorder %s19, 15
    %p81 = por %p79, %p80
    %p82 = scmp.ne.s32.totalorder %s71, %s72
    %p83 = scmp.eq.s32.totalorder %s19, 0
    %p84 = por %p82, %p83
    %p85 = scmp.ne.s32.totalorder %s71, %s72
    %p86 = scmp.eq.s32.totalorder %s20, 15
    %p87 = por %p85, %p86
    %p89 = scmp.ne.s32.totalorder %s72, %s88
    %p90 = scmp.eq.s32.totalorder %s20, 0
    %p91 = por %p89, %p90
    %s92 = sadd.s32 %s22, 2
    %s93 = sadd.s32 %s29, 2
    %s94 = ssub.s32 %s21, %s33
    %s95 = ssub.s32 %s92, %s93
    %s96 = sor.u32 %s94, %s95
    %p97 = scmp.eq.s32.totalorder %s96, 0
    %s99 = sadd.s32 %s98, 1
    %s100 = scalar_select %p97, %s98, %s99
    %p103 = pneg %p97
    %p104 = scmp.eq.s32.totalorder %s14, 15
    %p105 = por %p103, %p104
    %p106 = scmp.ne.s32.totalorder %s98, %s101
    %p107 = scmp.eq.s32.totalorder %s14, 0
    %p108 = por %p106, %p107
    %p109 = scmp.ne.s32.totalorder %s98, %s101
    %p110 = scmp.eq.s32.totalorder %s19, 15
    %p111 = por %p109, %p110
    %p112 = scmp.ne.s32.totalorder %s101, %s102
    %p113 = scmp.eq.s32.totalorder %s19, 0
    %p114 = por %p112, %p113
    %p115 = scmp.ne.s32.totalorder %s101, %s102
    %p116 = scmp.eq.s32.totalorder %s20, 15
    %p117 = por %p115, %p116
    %p119 = scmp.ne.s32.totalorder %s102, %s118
    %p120 = scmp.eq.s32.totalorder %s20, 0
    %p121 = por %p119, %p120
    %s123 = sadd.s32 %s122, 1
    %p126 = scmp.eq.s32.totalorder %s14, 15
    %p127 = scmp.ne.s32.totalorder %s122, %s124
    %p128 = scmp.eq.s32.totalorder %s14, 0
    %p129 = por %p127, %p128
    %p130 = scmp.ne.s32.totalorder %s122, %s124
    %p131 = scmp.eq.s32.totalorder %s19, 15
    %p132 = por %p130, %p131
    %p133 = scmp.ne.s32.totalorder %s124, %s125
    %p134 = scmp.eq.s32.totalorder %s19, 0
    %p135 = por %p133, %p134
    %p136 = scmp.ne.s32.totalorder %s124, %s125
    %p137 = scmp.eq.s32.totalorder %s20, 15
    %p138 = por %p136, %p137
    %p140 = scmp.ne.s32.totalorder %s125, %s139
    %p141 = scmp.eq.s32.totalorder %s20, 0
    %p142 = por %p140, %p141
    %s144 = sadd.s32 %s143, 1
    %p147 = scmp.eq.s32.totalorder %s14, 15
    %p148 = scmp.ne.s32.totalorder %s143, %s145
    %p149 = scmp.eq.s32.totalorder %s14, 0
    %p150 = por %p148, %p149
    %p151 = scmp.ne.s32.totalorder %s143, %s145
    %p152 = scmp.eq.s32.totalorder %s19, 15
    %p153 = por %p151, %p152
    %p154 = scmp.ne.s32.totalorder %s145, %s146
    %p155 = scmp.eq.s32.totalorder %s19, 0
    %p156 = por %p154, %p155
    %p157 = scmp.ne.s32.totalorder %s145, %s146
    %p158 = scmp.eq.s32.totalorder %s20, 15
    %p159 = por %p157, %p158
    %p161 = scmp.ne.s32.totalorder %s146, %s160
    %p162 = scmp.eq.s32.totalorder %s20, 0
    %p163 = por %p161, %p162
    %s164 = ssub.s32 %s21, %s33
    %s165 = ssub.s32 %s22, %s29
    %s166 = sor.u32 %s164, %s165
    %p167 = scmp.eq.s32.totalorder %s166, 0
    %s169 = sadd.s32 %s168, 1
    %s170 = scalar_select %p167, %s168, %s169
    %p173 = pneg %p167
    %p174 = scmp.eq.s32.totalorder %s14, 15
    %p175 = por %p173, %p174
    %p176 = scmp.ne.s32.totalorder %s168, %s171
    %p177 = scmp.eq.s32.totalorder %s14, 0
    %p178 = por %p176, %p177
    %p179 = scmp.ne.s32.totalorder %s168, %s171
    %p180 = scmp.eq.s32.totalorder %s19, 15
    %p181 = por %p179, %p180
    %p182 = scmp.ne.s32.totalorder %s171, %s172
    %p183 = scmp.eq.s32.totalorder %s19, 0
    %p184 = por %p182, %p183
    %p185 = scmp.ne.s32.totalorder %s171, %s172
    %p186 = scmp.eq.s32.totalorder %s20, 15
    %p187 = por %p185, %p186
    %p189 = scmp.ne.s32.totalorder %s172, %s188
    %p190 = scmp.eq.s32.totalorder %s20, 0
    %p191 = por %p189, %p190
    %s192 = ssub.s32 %s21, %s33
    %s193 = ssub.s32 %s22, %s29
    %s194 = sor.u32 %s192, %s193
    %p195 = scmp.eq.s32.totalorder %s194, 0
    %s197 = sadd.s32 %s196, 1
    %s198 = scalar_select %p195, %s196, %s197
    %p201 = pneg %p195
    %p202 = scmp.eq.s32.totalorder %s14, 15
    %p203 = por %p201, %p202
    %p204 = scmp.ne.s32.totalorder %s196, %s199
    %p205 = scmp.eq.s32.totalorder %s14, 0
    %p206 = por %p204, %p205
    %p207 = scmp.ne.s32.totalorder %s196, %s199
    %p208 = scmp.eq.s32.totalorder %s19, 15
    %p209 = por %p207, %p208
    %p210 = scmp.ne.s32.totalorder %s199, %s200
    %p211 = scmp.eq.s32.totalorder %s19, 0
    %p212 = por %p210, %p211
    %p213 = scmp.ne.s32.totalorder %s199, %s200
    %p214 = scmp.eq.s32.totalorder %s20, 15
    %p215 = por %p213, %p214
    %p217 = scmp.ne.s32.totalorder %s200, %s216
    %p218 = scmp.eq.s32.totalorder %s20, 0
    %p219 = por %p217, %p218
    %s220 = ssub.s32 %s21, %s33
    %s221 = ssub.s32 %s22, %s29
    %s222 = sor.u32 %s220, %s221
    %p223 = scmp.eq.s32.totalorder %s222, 0
    %s225 = sadd.s32 %s224, 1
    %s226 = scalar_select %p223, %s224, %s225
    %p229 = pneg %p223
    %p230 = scmp.eq.s32.totalorder %s14, 15
    %p231 = por %p229, %p230
    %p232 = scmp.ne.s32.totalorder %s224, %s227
    %p233 = scmp.eq.s32.totalorder %s14, 0
    %p234 = por %p232, %p233
    %p235 = scmp.ne.s32.totalorder %s224, %s227
    %p236 = scmp.eq.s32.totalorder %s19, 15
    %p237 = por %p235, %p236
    %p238 = scmp.ne.s32.totalorder %s227, %s228
    %p239 = scmp.eq.s32.totalorder %s19, 0
    %p240 = por %p238, %p239
    %p241 = scmp.ne.s32.totalorder %s227, %s228
    %p242 = scmp.eq.s32.totalorder %s20, 15
    %p243 = por %p241, %p242
    %p245 = scmp.ne.s32.totalorder %s228, %s244
    %p246 = scmp.eq.s32.totalorder %s20, 0
    %p247 = por %p245, %p246
    %p248 = scmp.le.s32.totalorder 1, %s14
    %p249 = scmp.lt.s32.totalorder %s14, 17
    %p250 = pnand %p248, %p249
    %p251 = pneg %p250
    // Predicated region
    $region9: #{unet_conv3_forward.6} parent=5 // pred_check
      _
    $region10: #{unet_conv3_forward.6} parent=5 // pred_check_branch
      %253 = sbr.rel (%p250) target = $region12
    $region11: #{unet_conv3_forward.6} parent=5 // pred_region
      %s254 = ssub.s32 %s14, 1
      // Predicated region
      $region13: #{unet_conv3_forward.6} parent=11 // pred_check
        %p255 = pneg %p135
      $region14: #{unet_conv3_forward.6} parent=11 // pred_check_branch
        %257 = sbr.rel (%p255) target = $region16
      $region15: #{unet_conv3_forward.6} parent=11 // pred_region
        _
      $region16: #{unet_conv3_forward.6} parent=11 // pred_fallthru
        _
      // Predicated region
      $region17: #{unet_conv3_forward.6} parent=11 // pred_check
        %p258 = pneg %p156
      $region18: #{unet_conv3_forward.6} parent=11 // pred_check_branch
        %260 = sbr.rel (%p258) target = $region20
      $region19: #{unet_conv3_forward.6} parent=11 // pred_region
        _
      $region20: #{unet_conv3_forward.6} parent=11 // pred_fallthru
        _
    $region12: #{unet_conv3_forward.6} parent=5 // pred_fallthru
      _
    %p261 = scmp.lt.s32.totalorder %s14, 16
    // Predicated region
    $region21: #{unet_conv3_forward.6} parent=5 // pred_check
      %p262 = pneg %p261
    $region22: #{unet_conv3_forward.6} parent=5 // pred_check_branch
      %264 = sbr.rel (%p262) target = $region24
    $region23: #{unet_conv3_forward.6} parent=5 // pred_region
      // Predicated region
      $region25: #{unet_conv3_forward.6} parent=23 // pred_check
        %p265 = pneg %p48
      $region26: #{unet_conv3_forward.6} parent=23 // pred_check_branch
        %267 = sbr.rel (%p265) target = $region28
      $region27: #{unet_conv3_forward.6} parent=23 // pred_region
        %p268 = scmp.lt.s32.totalorder %s21, 1
        %s269 = scalar_select %p268, %s21, 1
        %p270 = scmp.lt.s32.totalorder %s22, 9
        %s271 = scalar_select %p270, %s22, 9
        %s272 = smul.addr %s271, 20
        %s273 = smul.addr %s269, 200
        %s274 = sadd.s32 %s272, %s273
        %s275 = smul.addr %s274, 4
        %s276 = scalar_lea.vmem %s0, %s275
      $region28: #{unet_conv3_forward.6} parent=23 // pred_fallthru
        _
      // Predicated region
      $region29: #{unet_conv3_forward.6} parent=23 // pred_check
        %p277 = pneg %p78
      $region30: #{unet_conv3_forward.6} parent=23 // pred_check_branch
        %279 = sbr.rel (%p277) target = $region32
      $region31: #{unet_conv3_forward.6} parent=23 // pred_region
        %s280 = sadd.s32 %s22, 1
        %p281 = scmp.lt.s32.totalorder %s21, 1
        %s282 = scalar_select %p281, %s21, 1
        %p283 = scmp.lt.s32.totalorder %s280, 9
        %s284 = scalar_select %p283, %s280, 9
        %s285 = smul.addr %s284, 20
        %s286 = smul.addr %s282, 200
        %s287 = sadd.s32 %s285, %s286
        %s288 = smul.addr %s287, 4
        %s289 = scalar_lea.vmem %s1, %s288
        %s290 = sadd.s32 %s22, 1
      $region32: #{unet_conv3_forward.6} parent=23 // pred_fallthru
        _
      // Predicated region
      $region33: #{unet_conv3_forward.6} parent=23 // pred_check
        %p291 = pneg %p108
      $region34: #{unet_conv3_forward.6} parent=23 // pred_check_branch
        %293 = sbr.rel (%p291) target = $region36
      $region35: #{unet_conv3_forward.6} parent=23 // pred_region
        %s294 = sadd.s32 %s22, 2
        %p295 = scmp.lt.s32.totalorder %s21, 1
        %s296 = scalar_select %p295, %s21, 1
        %p297 = scmp.lt.s32.totalorder %s294, 9
        %s298 = scalar_select %p297, %s294, 9
        %s299 = smul.addr %s298, 20
        %s300 = smul.addr %s296, 200
        %s301 = sadd.s32 %s299, %s300
        %s302 = smul.addr %s301, 4
        %s303 = scalar_lea.vmem %s2, %s302
        %s304 = sadd.s32 %s22, 2
      $region36: #{unet_conv3_forward.6} parent=23 // pred_fallthru
        _
    $region24: #{unet_conv3_forward.6} parent=5 // pred_fallthru
      _
    %p305 = scmp.le.s32.totalorder 1, %s14
    %p306 = scmp.lt.s32.totalorder %s14, 17
    %p307 = pnand %p305, %p306
    %p308 = pneg %p307
    // Predicated region
    $region37: #{unet_conv3_forward.6} parent=5 // pred_check
      _
    $region38: #{unet_conv3_forward.6} parent=5 // pred_check_branch
      %310 = sbr.rel (%p307) target = $region40
    $region39: #{unet_conv3_forward.6} parent=5 // pred_region
      %s311 = ssub.s32 %s14, 1
      %p312 = scmp.lt.s32.totalorder %s23, 1
      %s313 = scalar_select %p312, %s23, 1
      %p314 = scmp.lt.s32.totalorder %s24, 9
      %s315 = scalar_select %p314, %s24, 9
      %s316 = smul.addr %s315, 20
      %s317 = smul.addr %s313, 200
      %s318 = sadd.s32 %s316, %s317
      %s319 = smul.addr %s318, 4
      %s320 = scalar_lea.vmem %s0, %s319
      %p321 = pneg %p54
      %p322 = pneg %p51
      %s323 = sadd.s32 %s24, 1
      %p324 = scmp.lt.s32.totalorder %s23, 1
      %s325 = scalar_select %p324, %s23, 1
      %p326 = scmp.lt.s32.totalorder %s323, 9
      %s327 = scalar_select %p326, %s323, 9
      %s328 = smul.addr %s327, 20
      %s329 = smul.addr %s325, 200
      %s330 = sadd.s32 %s328, %s329
      %s331 = smul.addr %s330, 4
      %s332 = scalar_lea.vmem %s1, %s331
      %p333 = pneg %p84
      %p334 = pneg %p81
      %s335 = sadd.s32 %s24, 2
      %p336 = scmp.lt.s32.totalorder %s23, 1
      %s337 = scalar_select %p336, %s23, 1
      %p338 = scmp.lt.s32.totalorder %s335, 9
      %s339 = scalar_select %p338, %s335, 9
      %s340 = smul.addr %s339, 20
      %s341 = smul.addr %s337, 200
      %s342 = sadd.s32 %s340, %s341
      %s343 = smul.addr %s342, 4
      %s344 = scalar_lea.vmem %s2, %s343
      %p345 = pneg %p114
      %p346 = pneg %p111
      %p347 = pneg %p135
      %p348 = pneg %p132
      %p349 = pneg %p156
      %p350 = pneg %p153
      %p351 = pneg %p184
      %p352 = pneg %p181
      %p353 = scmp.lt.s32.totalorder %s23, 1
      %s354 = scalar_select %p353, %s23, 1
      %p355 = scmp.lt.s32.totalorder %s24, 7
      %s356 = scalar_select %p355, %s24, 7
      %s357 = smul.addr %s356, 8
      %s358 = smul.addr %s354, 64
      %s359 = sadd.s32 %s357, %s358
      %s360 = smul.addr %s359, 4
      %s361 = scalar_lea.vmem %s5, %s360
      %p362 = pneg %p212
      %p363 = pneg %p209
      %p364 = scmp.lt.s32.totalorder %s23, 1
      %s365 = scalar_select %p364, %s23, 1
      %p366 = scmp.lt.s32.totalorder %s24, 7
      %s367 = scalar_select %p366, %s24, 7
      %s368 = smul.addr %s365, 8
      %s369 = sadd.s32 %s367, %s368
      %s370 = scalar_lea.vmem %s6, %s369
      %p371 = pneg %p240
      %p372 = pneg %p237
      %p373 = scmp.lt.s32.totalorder %s23, 1
      %s374 = scalar_select %p373, %s23, 1
      %p375 = scmp.lt.s32.totalorder %s24, 7
      %s376 = scalar_select %p375, %s24, 7
      %s377 = smul.addr %s374, 8
      %s378 = sadd.s32 %s376, %s377
      %s379 = scalar_lea.vmem %s7, %s378
      %p380 = scmp.lt.s32.totalorder %s23, 1
      %s381 = scalar_select %p380, %s23, 1
      %p382 = scmp.lt.s32.totalorder %s24, 9
      %s383 = scalar_select %p382, %s24, 9
      %s384 = smul.addr %s383, 20
      %s385 = smul.addr %s381, 200
      %s386 = sadd.s32 %s384, %s385
      %s387 = smul.addr %s386, 4
      %s388 = scalar_lea.vmem %s0, %s387
      %s389 = sadd.s32 %s24, 1
      %p390 = scmp.lt.s32.totalorder %s23, 1
      %s391 = scalar_select %p390, %s23, 1
      %p392 = scmp.lt.s32.totalorder %s389, 9
      %s393 = scalar_select %p392, %s389, 9
      %s394 = smul.addr %s393, 20
      %s395 = smul.addr %s391, 200
      %s396 = sadd.s32 %s394, %s395
      %s397 = smul.addr %s396, 4
      %s398 = scalar_lea.vmem %s1, %s397
      %s399 = sadd.s32 %s24, 1
      %s400 = sadd.s32 %s24, 2
      %p401 = scmp.lt.s32.totalorder %s23, 1
      %s402 = scalar_select %p401, %s23, 1
      %p403 = scmp.lt.s32.totalorder %s400, 9
      %s404 = scalar_select %p403, %s400, 9
      %s405 = smul.addr %s404, 20
      %s406 = smul.addr %s402, 200
      %s407 = sadd.s32 %s405, %s406
      %s408 = smul.addr %s407, 4
      %s409 = scalar_lea.vmem %s2, %s408
      %s410 = sadd.s32 %s24, 2
      %p411 = scmp.lt.s32.totalorder %s23, 1
      %s412 = scalar_select %p411, %s23, 1
      %p413 = scmp.lt.s32.totalorder %s24, 7
      %s414 = scalar_select %p413, %s24, 7
      %s415 = smul.addr %s414, 8
      %s416 = smul.addr %s412, 64
      %s417 = sadd.s32 %s415, %s416
      %s418 = smul.addr %s417, 4
      %s419 = scalar_lea.vmem %s5, %s418
      %p420 = scmp.lt.s32.totalorder %s23, 1
      %s421 = scalar_select %p420, %s23, 1
      %p422 = scmp.lt.s32.totalorder %s24, 7
      %s423 = scalar_select %p422, %s24, 7
      %s424 = smul.addr %s421, 8
      %s425 = sadd.s32 %s423, %s424
      %s426 = scalar_lea.vmem %s6, %s425
      %p427 = scmp.lt.s32.totalorder %s23, 1
      %s428 = scalar_select %p427, %s23, 1
      %p429 = scmp.lt.s32.totalorder %s24, 7
      %s430 = scalar_select %p429, %s24, 7
      %s431 = smul.addr %s428, 8
      %s432 = sadd.s32 %s430, %s431
      %s433 = scalar_lea.vmem %s7, %s432
      %v435 = vld [vmem:[%s388] sm:$0xf]
      %v436 = vld [vmem:[%s388 + $0x8] sm:$0xf]
      %v437 = vld [vmem:[%s388 + $0x10] sm:$0xf]
      %v438 = vld [vmem:[%s388 + $0x18] sm:$0xf]
      %v439 = vld [vmem:[%s388 + $0x20] sm:$0xf]
      %v440 = vld [vmem:[%s388 + $0x28] sm:$0xf]
      %v441 = vld [vmem:[%s388 + $0x30] sm:$0xf]
      %v442 = vld [vmem:[%s388 + $0x38] sm:$0xf]
      %v443 = vld [vmem:[%s3] sm:$0xf]
      %v444 = vld [vmem:[%s388 + $0x4] sm:$0x1]
      %v445 = vld [vmem:[%s388 + $0xc] sm:$0x1]
      %v446 = vld [vmem:[%s388 + $0x14] sm:$0x1]
      %v447 = vld [vmem:[%s388 + $0x1c] sm:$0x1]
      %v448 = vld [vmem:[%s388 + $0x24] sm:$0x1]
      %v449 = vld [vmem:[%s388 + $0x2c] sm:$0x1]
      %v450 = vld [vmem:[%s388 + $0x34] sm:$0x1]
      %v451 = vld [vmem:[%s388 + $0x3c] sm:$0x1]
      %vm452 = vsmask.f32 3328
      %vm453 = vsmask.f32 7440
      %vm454 = vmor %vm452, %vm453
      %v456 = vshrl.u32 %v435, 16
      %v458 = vrot.slane %v456, 4
      %v459 = vshll.u32 %v435, 16
      %v461 = vrot.slane %v459, 5
      %v462 = vor.u32 %v458, %v461
      %v463 = vrot.slane %v462, 4
      %v465 = vshll.u32 %v444, 16
      %v467 = vrot.slane %v465, 5
      %v468 = vsel %vm454, %v463, %v467
      %v470 = vshrl.u32 %v436, 16
      %v472 = vrot.slane %v470, 4
      %v473 = vshll.u32 %v436, 16
      %v475 = vrot.slane %v473, 5
      %v476 = vor.u32 %v472, %v475
      %v477 = vrot.slane %v476, 4
      %v479 = vshll.u32 %v445, 16
      %v481 = vrot.slane %v479, 5
      %v482 = vsel %vm454, %v477, %v481
      %v484 = vshrl.u32 %v437, 16
      %v486 = vrot.slane %v484, 4
      %v487 = vshll.u32 %v437, 16
      %v489 = vrot.slane %v487, 5
      %v490 = vor.u32 %v486, %v489
      %v491 = vrot.slane %v490, 4
      %v493 = vshll.u32 %v446, 16
      %v495 = vrot.slane %v493, 5
      %v496 = vsel %vm454, %v491, %v495
      %v498 = vshrl.u32 %v438, 16
      %v500 = vrot.slane %v498, 4
      %v501 = vshll.u32 %v438, 16
      %v503 = vrot.slane %v501, 5
      %v504 = vor.u32 %v500, %v503
      %v505 = vrot.slane %v504, 4
      %v507 = vshll.u32 %v447, 16
      %v509 = vrot.slane %v507, 5
      %v510 = vsel %vm454, %v505, %v509
      %v512 = vshrl.u32 %v439, 16
      %v514 = vrot.slane %v512, 4
      %v515 = vshll.u32 %v439, 16
      %v517 = vrot.slane %v515, 5
      %v518 = vor.u32 %v514, %v517
      %v519 = vrot.slane %v518, 4
      %v521 = vshll.u32 %v448, 16
      %v523 = vrot.slane %v521, 5
      %v524 = vsel %vm454, %v519, %v523
      %v526 = vshrl.u32 %v440, 16
      %v528 = vrot.slane %v526, 4
      %v529 = vshll.u32 %v440, 16
      %v531 = vrot.slane %v529, 5
      %v532 = vor.u32 %v528, %v531
      %v533 = vrot.slane %v532, 4
      %v535 = vshll.u32 %v449, 16
      %v537 = vrot.slane %v535, 5
      %v538 = vsel %vm454, %v533, %v537
      %v540 = vshrl.u32 %v441, 16
      %v542 = vrot.slane %v540, 4
      %v543 = vshll.u32 %v441, 16
      %v545 = vrot.slane %v543, 5
      %v546 = vor.u32 %v542, %v545
      %v547 = vrot.slane %v546, 4
      %v549 = vshll.u32 %v450, 16
      %v551 = vrot.slane %v549, 5
      %v552 = vsel %vm454, %v547, %v551
      %v554 = vshrl.u32 %v442, 16
      %v556 = vrot.slane %v554, 4
      %v557 = vshll.u32 %v442, 16
      %v559 = vrot.slane %v557, 5
      %v560 = vor.u32 %v556, %v559
      %v561 = vrot.slane %v560, 4
      %v563 = vshll.u32 %v451, 16
      %v565 = vrot.slane %v563, 5
      %v566 = vsel %vm454, %v561, %v565
      %v567 = vld [vmem:[%s3 + $0x4] sm:$0xf]
      %v568 = vunpack.c.l.b16 %v468
      %v569 = vunpack.c.l.b16 %v482
      %v570 = vunpack.c.l.b16 %v496
      %v571 = vunpack.c.l.b16 %v510
      %v572 = vunpack.c.l.b16 %v524
      %v573 = vunpack.c.l.b16 %v538
      %v574 = vunpack.c.l.b16 %v552
      %v575 = vunpack.c.l.b16 %v566
      %v576 = vpack.c.b16 %v569, %v568
      %v577 = vpack.c.b16 %v571, %v570
      %v578 = vpack.c.b16 %v573, %v572
      %v579 = vpack.c.b16 %v575, %v574
      %vm580 = vcmask 64512
      %v582 = vsel %vm580, %v576, 0
      %v585 = vsel %vm580, %v577, 0
      %v588 = vsel %vm580, %v578, 0
      %v591 = vsel %vm580, %v579, 0
      %vm593 = vcmask 1043456
      %v595 = vsel %vm593, %v567, 0
      %597 = vmatprep.subr.bf16.mxu0 0
      %598 = vmatpush1.bf16.msra.mxu0 %v595
      %599 = vmatprep.subr.bf16.mxu0 0
      %600 = vmatpush1.bf16.msra.mxu0 0
      %601 = vmatprep.subr.bf16.mxu0 0
      %602 = vmatpush1.bf16.msra.mxu0 0
      %603 = vmatprep.subr.bf16.mxu0 0
      %604 = vmatpush1.bf16.msra.mxu0 0
      %605 = vmatprep.subr.bf16.mxu0 0
      %606 = vmatpush1.bf16.msra.mxu0 0
      %607 = vmatprep.subr.bf16.mxu0 0
      %608 = vmatpush1.bf16.msra.mxu0 0
      %609 = vmatprep.subr.bf16.mxu0 0
      %610 = vmatpush1.bf16.msra.mxu0 0
      %611 = vmatprep.subr.bf16.mxu0 0
      %612 = vmatpush1.bf16.msra.mxu0 0
      %613 = vmatprep.subr.bf16.mxu0 0
      %614 = vmatpush1.bf16.msra.mxu0 0
      %615 = vmatprep.subr.bf16.mxu0 0
      %616 = vmatpush1.bf16.msra.mxu0 0
      %617 = vmatprep.subr.bf16.mxu0 0
      %618 = vmatpush1.bf16.msra.mxu0 0
      %619 = vmatprep.subr.bf16.mxu0 0
      %620 = vmatpush1.bf16.msra.mxu0 0
      %621 = vmatprep.subr.bf16.mxu0 0
      %622 = vmatpush1.bf16.msra.mxu0 0
      %623 = vmatprep.subr.bf16.mxu0 0
      %624 = vmatpush1.bf16.msra.mxu0 0
      %625 = vmatprep.subr.bf16.mxu0 0
      %626 = vmatpush1.bf16.msra.mxu0 0
      %627 = vmatprep.subr.bf16.mxu0 0
      %628 = vmatpush1.bf16.msra.mxu0 0
      %629 = vmatprep.mubr.bf16.mxu0 0
      %630 = vmatmul.mubr.bf16.gmra.mrb[0].mxu0 %v582
      %v631 = vpop.f32.mrb[0].mxu0
      %v632 = vadd.f32 0.0, %v631
      %v633 = vpop.f32.mrb[0].mxu0
      %v634 = vpop.f32.mrb[0].mxu0
      %v635 = vadd.f32 0.0, %v634
      %v636 = vpop.f32.mrb[0].mxu0
      %637 = vmatprep.mubr.bf16.mxu0 0
      %638 = vmatmul.mubr.bf16.gmra.mrb[0].mxu0 %v585
      %v639 = vpop.f32.mrb[0].mxu0
      %v640 = vadd.f32 0.0, %v639
      %v641 = vpop.f32.mrb[0].mxu0
      %v642 = vpop.f32.mrb[0].mxu0
      %v643 = vadd.f32 0.0, %v642
      %v644 = vpop.f32.mrb[0].mxu0
      %645 = vmatprep.mubr.bf16.mxu0 0
      %646 = vmatmul.mubr.bf16.gmra.mrb[0].mxu0 %v588
      %v647 = vpop.f32.mrb[0].mxu0
      %v648 = vadd.f32 0.0, %v647
      %v649 = vpop.f32.mrb[0].mxu0
      %v650 = vpop.f32.mrb[0].mxu0
      %v651 = vadd.f32 0.0, %v650
      %v652 = vpop.f32.mrb[0].mxu0
      %653 = vmatprep.mubr.bf16.mxu0 0
      %654 = vmatmul.mubr.bf16.gmra.mrb[0].mxu0 %v591
      %v655 = vpop.f32.mrb[0].mxu0
      %v656 = vadd.f32 0.0, %v655
      %v657 = vpop.f32.mrb[0].mxu0
      %v658 = vpop.f32.mrb[0].mxu0
      %v659 = vadd.f32 0.0, %v658
      %v660 = vpop.f32.mrb[0].mxu0
      %661 = vdwg.mxu0
      %v670 = vunpack.c.l.b16 %v435
      %v671 = vunpack.c.l.b16 %v436
      %v672 = vunpack.c.l.b16 %v437
      %v673 = vunpack.c.l.b16 %v438
      %v674 = vunpack.c.l.b16 %v439
      %v675 = vunpack.c.l.b16 %v440
      %v676 = vunpack.c.l.b16 %v441
      %v677 = vunpack.c.l.b16 %v442
      %v678 = vpack.c.b16 %v671, %v670
      %v679 = vpack.c.b16 %v673, %v672
      %v680 = vpack.c.b16 %v675, %v674
      %v681 = vpack.c.b16 %v677, %v676
      %v683 = vsel %vm580, %v678, 0
      %v686 = vsel %vm580, %v679, 0
      %v689 = vsel %vm580, %v680, 0
      %v692 = vsel %vm580, %v681, 0
      %v695 = vsel %vm593, %v443, 0
      %697 = vmatprep.subr.bf16.mxu0 0
      %698 = vmatpush1.bf16.msra.mxu0 %v695
      %699 = vmatprep.subr.bf16.mxu0 0
      %700 = vmatpush1.bf16.msra.mxu0 0
      %701 = vmatprep.subr.bf16.mxu0 0
      %702 = vmatpush1.bf16.msra.mxu0 0
      %703 = vmatprep.subr.bf16.mxu0 0
      %704 = vmatpush1.bf16.msra.mxu0 0
      %705 = vmatprep.subr.bf16.mxu0 0
      %706 = vmatpush1.bf16.msra.mxu0 0
      %707 = vmatprep.subr.bf16.mxu0 0
      %708 = vmatpush1.bf16.msra.mxu0 0
      %709 = vmatprep.subr.bf16.mxu0 0
      %710 = vmatpush1.bf16.msra.mxu0 0
      %711 = vmatprep.subr.bf16.mxu0 0
      %712 = vmatpush1.bf16.msra.mxu0 0
      %713 = vmatprep.subr.bf16.mxu0 0
      %714 = vmatpush1.bf16.msra.mxu0 0
      %715 = vmatprep.subr.bf16.mxu0 0
      %716 = vmatpush1.bf16.msra.mxu0 0
      %717 = vmatprep.subr.bf16.mxu0 0
      %718 = vmatpush1.bf16.msra.mxu0 0
      %719 = vmatprep.subr.bf16.mxu0 0
      %720 = vmatpush1.bf16.msra.mxu0 0
      %721 = vmatprep.subr.bf16.mxu0 0
      %722 = vmatpush1.bf16.msra.mxu0 0
      %723 = vmatprep.subr.bf16.mxu0 0
      %724 = vmatpush1.bf16.msra.mxu0 0
      %725 = vmatprep.subr.bf16.mxu0 0
      %726 = vmatpush1.bf16.msra.mxu0 0
      %727 = vmatprep.subr.bf16.mxu0 0
      %728 = vmatpush1.bf16.msra.mxu0 0
      %729 = vmatprep.mubr.bf16.mxu0 0
      %730 = vmatmul.mubr.bf16.gmra.mrb[0].mxu0 %v683
      %v731 = vpop.f32.mrb[0].mxu0
      %v732 = vadd.f32 %v632, %v731
      %v733 = vpop.f32.mrb[0].mxu0
      %v734 = vpop.f32.mrb[0].mxu0
      %v735 = vadd.f32 %v635, %v734
      %v736 = vpop.f32.mrb[0].mxu0
      %737 = vmatprep.mubr.bf16.mxu0 0
      %738 = vmatmul.mubr.bf16.gmra.mrb[0].mxu0 %v686
      %v739 = vpop.f32.mrb[0].mxu0
      %v740 = vadd.f32 %v640, %v739
      %v741 = vpop.f32.mrb[0].mxu0
      %v742 = vpop.f32.mrb[0].mxu0
      %v743 = vadd.f32 %v643, %v742
      %v744 = vpop.f32.mrb[0].mxu0
      %745 = vmatprep.mubr.bf16.mxu0 0
      %746 = vmatmul.mubr.bf16.gmra.mrb[0].mxu0 %v689
      %v747 = vpop.f32.mrb[0].mxu0
      %v748 = vadd.f32 %v648, %v747
      %v749 = vpop.f32.mrb[0].mxu0
      %v750 = vpop.f32.mrb[0].mxu0
      %v751 = vadd.f32 %v651, %v750
      %v752 = vpop.f32.mrb[0].mxu0
      %753 = vmatprep.mubr.bf16.mxu0 0
      %754 = vmatmul.mubr.bf16.gmra.mrb[0].mxu0 %v692
      %v755 = vpop.f32.mrb[0].mxu0
      %v756 = vadd.f32 %v656, %v755
      %v757 = vpop.f32.mrb[0].mxu0
      %v758 = vpop.f32.mrb[0].mxu0
      %v759 = vadd.f32 %v659, %v758
      %v760 = vpop.f32.mrb[0].mxu0
      %761 = vdwg.mxu0
      %v762 = vld [vmem:[%s388] sm:$0xe]
      %v763 = vld [vmem:[%s388 + $0x8] sm:$0xe]
      %v764 = vld [vmem:[%s388 + $0x10] sm:$0xe]
      %v765 = vld [vmem:[%s388 + $0x18] sm:$0xe]
      %v766 = vld [vmem:[%s388 + $0x20] sm:$0xe]
      %v767 = vld [vmem:[%s388 + $0x28] sm:$0xe]
      %v768 = vld [vmem:[%s388 + $0x30] sm:$0xe]
      %v769 = vld [vmem:[%s388 + $0x38] sm:$0xe]
      %vm786 = vcmask 1042432
      %vm787 = vcmask 1046532
      %vm788 = vmor %vm786, %vm787
      %v789 = vrot.slane %v762, 5
      %v790 = vrot.slane %v789, 4
      %v791 = vrot.slane %v444, 5
      %v792 = vsel %vm788, %v790, %v791
      %v793 = vrot.slane %v763, 5
      %v794 = vrot.slane %v793, 4
      %v795 = vrot.slane %v445, 5
      %v796 = vsel %vm788, %v794, %v795
      %v797 = vrot.slane %v764, 5
      %v798 = vrot.slane %v797, 4
      %v799 = vrot.slane %v446, 5
      %v800 = vsel %vm788, %v798, %v799
      %v801 = vrot.slane %v765, 5
      %v802 = vrot.slane %v801, 4
      %v803 = vrot.slane %v447, 5
      %v804 = vsel %vm788, %v802, %v803
      %v805 = vrot.slane %v766, 5
      %v806 = vrot.slane %v805, 4
      %v807 = vrot.slane %v448, 5
      %v808 = vsel %vm788, %v806, %v807
      %v809 = vrot.slane %v767, 5
      %v810 = vrot.slane %v809, 4
      %v811 = vrot.slane %v449, 5
      %v812 = vsel %vm788, %v810, %v811
      %v813 = vrot.slane %v768, 5
      %v814 = vrot.slane %v813, 4
      %v815 = vrot.slane %v450, 5
      %v816 = vsel %vm788, %v814, %v815
      %v817 = vrot.slane %v769, 5
      %v818 = vrot.slane %v817, 4
      %v819 = vrot.slane %v451, 5
      %v820 = vsel %vm788, %v818, %v819
      %v821 = vld [vmem:[%s3 + $0x8] sm:$0xf]
      %v822 = vunpack.c.l.b16 %v792
      %v823 = vunpack.c.l.b16 %v796
      %v824 = vunpack.c.l.b16 %v800
      %v825 = vunpack.c.l.b16 %v804
      %v826 = vunpack.c.l.b16 %v808
      %v827 = vunpack.c.l.b16 %v812
      %v828 = vunpack.c.l.b16 %v816
      %v829 = vunpack.c.l.b16 %v820
      %v830 = vpack.c.b16 %v823, %v822
      %v831 = vpack.c.b16 %v825, %v824
      %v832 = vpack.c.b16 %v827, %v826
      %v833 = vpack.c.b16 %v829, %v828
      %v835 = vsel %vm580, %v830, 0
      %v838 = vsel %vm580, %v831, 0
      %v841 = vsel %vm580, %v832, 0
      %v844 = vsel %vm580, %v833, 0
      %v847 = vsel %vm593, %v821, 0
      %849 = vmatprep.subr.bf16.mxu0 0
      %850 = vmatpush1.bf16.msra.mxu0 %v847
      %851 = vmatprep.subr.bf16.mxu0 0
      %852 = vmatpush1.bf16.msra.mxu0 0
      %853 = vmatprep.subr.bf16.mxu0 0
      %854 = vmatpush1.bf16.msra.mxu0 0
      %855 = vmatprep.subr.bf16.mxu0 0
      %856 = vmatpush1.bf16.msra.mxu0 0
      %857 = vmatprep.subr.bf16.mxu0 0
      %858 = vmatpush1.bf16.msra.mxu0 0
      %859 = vmatprep.subr.bf16.mxu0 0
      %860 = vmatpush1.bf16.msra.mxu0 0
      %861 = vmatprep.subr.bf16.mxu0 0
      %862 = vmatpush1.bf16.msra.mxu0 0
      %863 = vmatprep.subr.bf16.mxu0 0
      %864 = vmatpush1.bf16.msra.mxu0 0
      %865 = vmatprep.subr.bf16.mxu0 0
      %866 = vmatpush1.bf16.msra.mxu0 0
      %867 = vmatprep.subr.bf16.mxu0 0
      %868 = vmatpush1.bf16.msra.mxu0 0
      %869 = vmatprep.subr.bf16.mxu0 0
      %870 = vmatpush1.bf16.msra.mxu0 0
      %871 = vmatprep.subr.bf16.mxu0 0
      %872 = vmatpush1.bf16.msra.mxu0 0
      %873 = vmatprep.subr.bf16.mxu0 0
      %874 = vmatpush1.bf16.msra.mxu0 0
      %875 = vmatprep.subr.bf16.mxu0 0
      %876 = vmatpush1.bf16.msra.mxu0 0
      %877 = vmatprep.subr.bf16.mxu0 0
      %878 = vmatpush1.bf16.msra.mxu0 0
      %879 = vmatprep.subr.bf16.mxu0 0
      %880 = vmatpush1.bf16.msra.mxu0 0
      %881 = vmatprep.mubr.bf16.mxu0 0
      %882 = vmatmul.mubr.bf16.gmra.mrb[0].mxu0 %v835
      %v883 = vpop.f32.mrb[0].mxu0
      %v884 = vadd.f32 0.0, %v883
      %v885 = vpop.f32.mrb[0].mxu0
      %v886 = vpop.f32.mrb[0].mxu0
      %v887 = vadd.f32 0.0, %v886
      %v888 = vpop.f32.mrb[0].mxu0
      %889 = vmatprep.mubr.bf16.mxu0 0
      %890 = vmatmul.mubr.bf16.gmra.mrb[0].mxu0 %v838
      %v891 = vpop.f32.mrb[0].mxu0
      %v892 = vadd.f32 0.0, %v891
      %v893 = vpop.f32.mrb[0].mxu0
      %v894 = vpop.f32.mrb[0].mxu0
      %v895 = vadd.f32 0.0, %v894
      %v896 = vpop.f32.mrb[0].mxu0
      %897 = vmatprep.mubr.bf16.mxu0 0
      %898 = vmatmul.mubr.bf16.gmra.mrb[0].mxu0 %v841
      %v899 = vpop.f32.mrb[0].mxu0
      %v900 = vadd.f32 0.0, %v899
      %v901 = vpop.f32.mrb[0].mxu0
      %v902 = vpop.f32.mrb[0].mxu0
      %v903 = vadd.f32 0.0, %v902
      %v904 = vpop.f32.mrb[0].mxu0
      %905 = vmatprep.mubr.bf16.mxu0 0
      %906 = vmatmul.mubr.bf16.gmra.mrb[0].mxu0 %v844
      %v907 = vpop.f32.mrb[0].mxu0
      %v908 = vadd.f32 0.0, %v907
      %v909 = vpop.f32.mrb[0].mxu0
      %v910 = vpop.f32.mrb[0].mxu0
      %v911 = vadd.f32 0.0, %v910
      %v912 = vpop.f32.mrb[0].mxu0
      %913 = vdwg.mxu0
      %v914 = vadd.f32 %v732, %v884
      %v915 = vadd.f32 %v735, %v887
      %v916 = vadd.f32 %v740, %v892
      %v917 = vadd.f32 %v743, %v895
      %v918 = vadd.f32 %v748, %v900
      %v919 = vadd.f32 %v751, %v903
      %v920 = vadd.f32 %v756, %v908
      %v921 = vadd.f32 %v759, %v911
      %s922 = scalar_lea.vmem %s388, 8
      %v923 = vld [vmem:[%s922] sm:$0xf]
      %v924 = vld [vmem:[%s922 + $0x8] sm:$0xf]
      %v925 = vld [vmem:[%s922 + $0x10] sm:$0xf]
      %v926 = vld [vmem:[%s922 + $0x18] sm:$0xf]
      %v927 = vld [vmem:[%s922 + $0x20] sm:$0xf]
      %v928 = vld [vmem:[%s922 + $0x28] sm:$0xf]
      %v929 = vld [vmem:[%s922 + $0x30] sm:$0xf]
      %v930 = vld [vmem:[%s922 + $0x38] sm:$0xf]
      %v931 = vld [vmem:[%s3 + $0xc] sm:$0xf]
      %v940 = vunpack.c.l.b16 %v923
      %v941 = vunpack.c.l.b16 %v924
      %v942 = vunpack.c.l.b16 %v925
      %v943 = vunpack.c.l.b16 %v926
      %v944 = vunpack.c.l.b16 %v927
      %v945 = vunpack.c.l.b16 %v928
      %v946 = vunpack.c.l.b16 %v929
      %v947 = vunpack.c.l.b16 %v930
      %v948 = vpack.c.b16 %v941, %v940
      %v949 = vpack.c.b16 %v943, %v942
      %v950 = vpack.c.b16 %v945, %v944
      %v951 = vpack.c.b16 %v947, %v946
      %v953 = vsel %vm580, %v948, 0
      %v956 = vsel %vm580, %v949, 0
      %v959 = vsel %vm580, %v950, 0
      %v962 = vsel %vm580, %v951, 0
      %v965 = vsel %vm593, %v931, 0
      %967 = vmatprep.subr.bf16.mxu0 0
      %968 = vmatpush1.bf16.msra.mxu0 %v965
      %969 = vmatprep.subr.bf16.mxu0 0
      %970 = vmatpush1.bf16.msra.mxu0 0
      %971 = vmatprep.subr.bf16.mxu0 0
      %972 = vmatpush1.bf16.msra.mxu0 0
      %973 = vmatprep.subr.bf16.mxu0 0
      %974 = vmatpush1.bf16.msra.mxu0 0
      %975 = vmatprep.subr.bf16.mxu0 0
      %976 = vmatpush1.bf16.msra.mxu0 0
      %977 = vmatprep.subr.bf16.mxu0 0
      %978 = vmatpush1.bf16.msra.mxu0 0
      %979 = vmatprep.subr.bf16.mxu0 0
      %980 = vmatpush1.bf16.msra.mxu0 0
      %981 = vmatprep.subr.bf16.mxu0 0
      %982 = vmatpush1.bf16.msra.mxu0 0
      %983 = vmatprep.subr.bf16.mxu0 0
      %984 = vmatpush1.bf16.msra.mxu0 0
      %985 = vmatprep.subr.bf16.mxu0 0
      %986 = vmatpush1.bf16.msra.mxu0 0
      %987 = vmatprep.subr.bf16.mxu0 0
      %988 = vmatpush1.bf16.msra.mxu0 0
      %989 = vmatprep.subr.bf16.mxu0 0
      %990 = vmatpush1.bf16.msra.mxu0 0
      %991 = vmatprep.subr.bf16.mxu0 0
      %992 = vmatpush1.bf16.msra.mxu0 0
      %993 = vmatprep.subr.bf16.mxu0 0
      %994 = vmatpush1.bf16.msra.mxu0 0
      %995 = vmatprep.subr.bf16.mxu0 0
      %996 = vmatpush1.bf16.msra.mxu0 0
      %997 = vmatprep.subr.bf16.mxu0 0
      %998 = vmatpush1.bf16.msra.mxu0 0
      %999 = vmatprep.mubr.bf16.mxu0 0
      %1000 = vmatmul.mubr.bf16.gmra.mrb[0].mxu0 %v953
      %v1001 = vpop.f32.mrb[0].mxu0
      %v1002 = vadd.f32 0.0, %v1001
      %v1003 = vpop.f32.mrb[0].mxu0
      %v1004 = vpop.f32.mrb[0].mxu0
      %v1005 = vadd.f32 0.0, %v1004
      %v1006 = vpop.f32.mrb[0].mxu0
      %1007 = vmatprep.mubr.bf16.mxu0 0
      %1008 = vmatmul.mubr.bf16.gmra.mrb[0].mxu0 %v956
      %v1009 = vpop.f32.mrb[0].mxu0
      %v1010 = vadd.f32 0.0, %v1009
      %v1011 = vpop.f32.mrb[0].mxu0
      %v1012 = vpop.f32.mrb[0].mxu0
      %v1013 = vadd.f32 0.0, %v1012
      %v1014 = vpop.f32.mrb[0].mxu0
      %1015 = vmatprep.mubr.bf16.mxu0 0
      %1016 = vmatmul.mubr.bf16.gmra.mrb[0].mxu0 %v959
      %v1017 = vpop.f32.mrb[0].mxu0
      %v1018 = vadd.f32 0.0, %v1017
      %v1019 = vpop.f32.mrb[0].mxu0
      %v1020 = vpop.f32.mrb[0].mxu0
      %v1021 = vadd.f32 0.0, %v1020
      %v1022 = vpop.f32.mrb[0].mxu0
      %1023 = vmatprep.mubr.bf16.mxu0 0
      %1024 = vmatmul.mubr.bf16.gmra.mrb[0].mxu0 %v962
      %v1025 = vpop.f32.mrb[0].mxu0
      %v1026 = vadd.f32 0.0, %v1025
      %v1027 = vpop.f32.mrb[0].mxu0
      %v1028 = vpop.f32.mrb[0].mxu0
      %v1029 = vadd.f32 0.0, %v1028
      %v1030 = vpop.f32.mrb[0].mxu0
      %1031 = vdwg.mxu0
      %v1032 = vadd.f32 %v914, %v1002
      %v1033 = vadd.f32 %v915, %v1005
      %v1034 = vadd.f32 %v916, %v1010
      %v1035 = vadd.f32 %v917, %v1013
      %v1036 = vadd.f32 %v918, %v1018
      %v1037 = vadd.f32 %v919, %v1021
      %v1038 = vadd.f32 %v920, %v1026
      %v1039 = vadd.f32 %v921, %v1029
      %v1040 = vld [vmem:[%s922] sm:$0xf]
      %v1041 = vld [vmem:[%s922 + $0x4] sm:$0x1]
      %v1042 = vld [vmem:[%s922 + $0x8] sm:$0xf]
      %v1043 = vld [vmem:[%s922 + $0xc] sm:$0x1]
      %v1044 = vld [vmem:[%s922 + $0x10] sm:$0xf]
      %v1045 = vld [vmem:[%s922 + $0x14] sm:$0x1]
      %v1046 = vld [vmem:[%s922 + $0x18] sm:$0xf]
      %v1047 = vld [vmem:[%s922 + $0x1c] sm:$0x1]
      %v1048 = vld [vmem:[%s922 + $0x20] sm:$0xf]
      %v1049 = vld [vmem:[%s922 + $0x24] sm:$0x1]
      %v1050 = vld [vmem:[%s922 + $0x28] sm:$0xf]
      %v1051 = vld [vmem:[%s922 + $0x2c] sm:$0x1]
      %v1052 = vld [vmem:[%s922 + $0x30] sm:$0xf]
      %v1053 = vld [vmem:[%s922 + $0x34] sm:$0x1]
      %v1054 = vld [vmem:[%s922 + $0x38] sm:$0xf]
      %v1055 = vld [vmem:[%s922 + $0x3c] sm:$0x1]
      %v1057 = vshrl.u32 %v1040, 16
      %v1059 = vrot.slane %v1057, 4
      %v1060 = vshll.u32 %v1040, 16
      %v1062 = vrot.slane %v1060, 5
      %v1063 = vor.u32 %v1059, %v1062
      %v1064 = vrot.slane %v1063, 4
      %v1066 = vshll.u32 %v1041, 16
      %v1068 = vrot.slane %v1066, 5
      %v1069 = vsel %vm454, %v1064, %v1068
      %v1071 = vshrl.u32 %v1042, 16
      %v1073 = vrot.slane %v1071, 4
      %v1074 = vshll.u32 %v1042, 16
      %v1076 = vrot.slane %v1074, 5
      %v1077 = vor.u32 %v1073, %v1076
      %v1078 = vrot.slane %v1077, 4
      %v1080 = vshll.u32 %v1043, 16
      %v1082 = vrot.slane %v1080, 5
      %v1083 = vsel %vm454, %v1078, %v1082
      %v1085 = vshrl.u32 %v1044, 16
      %v1087 = vrot.slane %v1085, 4
      %v1088 = vshll.u32 %v1044, 16
      %v1090 = vrot.slane %v1088, 5
      %v1091 = vor.u32 %v1087, %v1090
      %v1092 = vrot.slane %v1091, 4
      %v1094 = vshll.u32 %v1045, 16
      %v1096 = vrot.slane %v1094, 5
      %v1097 = vsel %vm454, %v1092, %v1096
      %v1099 = vshrl.u32 %v1046, 16
      %v1101 = vrot.slane %v1099, 4
      %v1102 = vshll.u32 %v1046, 16
      %v1104 = vrot.slane %v1102, 5
      %v1105 = vor.u32 %v1101, %v1104
      %v1106 = vrot.slane %v1105, 4
      %v1108 = vshll.u32 %v1047, 16
      %v1110 = vrot.slane %v1108, 5
      %v1111 = vsel %vm454, %v1106, %v1110
      %v1113 = vshrl.u32 %v1048, 16
      %v1115 = vrot.slane %v1113, 4
      %v1116 = vshll.u32 %v1048, 16
      %v1118 = vrot.slane %v1116, 5
      %v1119 = vor.u32 %v1115, %v1118
      %v1120 = vrot.slane %v1119, 4
      %v1122 = vshll.u32 %v1049, 16
      %v1124 = vrot.slane %v1122, 5
      %v1125 = vsel %vm454, %v1120, %v1124
      %v1127 = vshrl.u32 %v1050, 16
      %v1129 = vrot.slane %v1127, 4
      %v1130 = vshll.u32 %v1050, 16
      %v1132 = vrot.slane %v1130, 5
      %v1133 = vor.u32 %v1129, %v1132
      %v1134 = vrot.slane %v1133, 4
      %v1136 = vshll.u32 %v1051, 16
      %v1138 = vrot.slane %v1136, 5
      %v1139 = vsel %vm454, %v1134, %v1138
      %v1141 = vshrl.u32 %v1052, 16
      %v1143 = vrot.slane %v1141, 4
      %v1144 = vshll.u32 %v1052, 16
      %v1146 = vrot.slane %v1144, 5
      %v1147 = vor.u32 %v1143, %v1146
      %v1148 = vrot.slane %v1147, 4
      %v1150 = vshll.u32 %v1053, 16
      %v1152 = vrot.slane %v1150, 5
      %v1153 = vsel %vm454, %v1148, %v1152
      %v1155 = vshrl.u32 %v1054, 16
      %v1157 = vrot.slane %v1155, 4
      %v1158 = vshll.u32 %v1054, 16
      %v1160 = vrot.slane %v1158, 5
      %v1161 = vor.u32 %v1157, %v1160
      %v1162 = vrot.slane %v1161, 4
      %v1164 = vshll.u32 %v1055, 16
      %v1166 = vrot.slane %v1164, 5
      %v1167 = vsel %vm454, %v1162, %v1166
      %v1168 = vld [vmem:[%s3 + $0x10] sm:$0xf]
      %v1169 = vunpack.c.l.b16 %v1069
      %v1170 = vunpack.c.l.b16 %v1083
      %v1171 = vunpack.c.l.b16 %v1097
      %v1172 = vunpack.c.l.b16 %v1111
      %v1173 = vunpack.c.l.b16 %v1125
      %v1174 = vunpack.c.l.b16 %v1139
      %v1175 = vunpack.c.l.b16 %v1153
      %v1176 = vunpack.c.l.b16 %v1167
      %v1177 = vpack.c.b16 %v1170, %v1169
      %v1178 = vpack.c.b16 %v1172, %v1171
      %v1179 = vpack.c.b16 %v1174, %v1173
      %v1180 = vpack.c.b16 %v1176, %v1175
      %v1182 = vsel %vm580, %v1177, 0
      %v1185 = vsel %vm580, %v1178, 0
      %v1188 = vsel %vm580, %v1179, 0
      %v1191 = vsel %vm580, %v1180, 0
      %v1194 = vsel %vm593, %v1168, 0
      %1196 = vmatprep.subr.bf16.mxu0 0
      %1197 = vmatpush1.bf16.msra.mxu0 %v1194
      %1198 = vmatprep.subr.bf16.mxu0 0
      %1199 = vmatpush1.bf16.msra.mxu0 0
      %1200 = vmatprep.subr.bf16.mxu0 0
      %1201 = vmatpush1.bf16.msra.mxu0 0
      %1202 = vmatprep.subr.bf16.mxu0 0
      %1203 = vmatpush1.bf16.msra.mxu0 0
      %1204 = vmatprep.subr.bf16.mxu0 0
      %1205 = vmatpush1.bf16.msra.mxu0 0
      %1206 = vmatprep.subr.bf16.mxu0 0
      %1207 = vmatpush1.bf16.msra.mxu0 0
      %1208 = vmatprep.subr.bf16.mxu0 0
      %1209 = vmatpush1.bf16.msra.mxu0 0
      %1210 = vmatprep.subr.bf16.mxu0 0
      %1211 = vmatpush1.bf16.msra.mxu0 0
      %1212 = vmatprep.subr.bf16.mxu0 0
      %1213 = vmatpush1.bf16.msra.mxu0 0
      %1214 = vmatprep.subr.bf16.mxu0 0
      %1215 = vmatpush1.bf16.msra.mxu0 0
      %1216 = vmatprep.subr.bf16.mxu0 0
      %1217 = vmatpush1.bf16.msra.mxu0 0
      %1218 = vmatprep.subr.bf16.mxu0 0
      %1219 = vmatpush1.bf16.msra.mxu0 0
      %1220 = vmatprep.subr.bf16.mxu0 0
      %1221 = vmatpush1.bf16.msra.mxu0 0
      %1222 = vmatprep.subr.bf16.mxu0 0
      %1223 = vmatpush1.bf16.msra.mxu0 0
      %1224 = vmatprep.subr.bf16.mxu0 0
      %1225 = vmatpush1.bf16.msra.mxu0 0
      %1226 = vmatprep.subr.bf16.mxu0 0
      %1227 = vmatpush1.bf16.msra.mxu0 0
      %1228 = vmatprep.mubr.bf16.mxu0 0
      %1229 = vmatmul.mubr.bf16.gmra.mrb[0].mxu0 %v1182
      %v1230 = vpop.f32.mrb[0].mxu0
      %v1231 = vadd.f32 0.0, %v1230
      %v1232 = vpop.f32.mrb[0].mxu0
      %v1233 = vpop.f32.mrb[0].mxu0
      %v1234 = vadd.f32 0.0, %v1233
      %v1235 = vpop.f32.mrb[0].mxu0
      %1236 = vmatprep.mubr.bf16.mxu0 0
      %1237 = vmatmul.mubr.bf16.gmra.mrb[0].mxu0 %v1185
      %v1238 = vpop.f32.mrb[0].mxu0
      %v1239 = vadd.f32 0.0, %v1238
      %v1240 = vpop.f32.mrb[0].mxu0
      %v1241 = vpop.f32.mrb[0].mxu0
      %v1242 = vadd.f32 0.0, %v1241
      %v1243 = vpop.f32.mrb[0].mxu0
      %1244 = vmatprep.mubr.bf16.mxu0 0
      %1245 = vmatmul.mubr.bf16.gmra.mrb[0].mxu0 %v1188
      %v1246 = vpop.f32.mrb[0].mxu0
      %v1247 = vadd.f32 0.0, %v1246
      %v1248 = vpop.f32.mrb[0].mxu0
      %v1249 = vpop.f32.mrb[0].mxu0
      %v1250 = vadd.f32 0.0, %v1249
      %v1251 = vpop.f32.mrb[0].mxu0
      %1252 = vmatprep.mubr.bf16.mxu0 0
      %1253 = vmatmul.mubr.bf16.gmra.mrb[0].mxu0 %v1191
      %v1254 = vpop.f32.mrb[0].mxu0
      %v1255 = vadd.f32 0.0, %v1254
      %v1256 = vpop.f32.mrb[0].mxu0
      %v1257 = vpop.f32.mrb[0].mxu0
      %v1258 = vadd.f32 0.0, %v1257
      %v1259 = vpop.f32.mrb[0].mxu0
      %1260 = vdwg.mxu0
      %v1261 = vadd.f32 %v1032, %v1231
      %v1262 = vadd.f32 %v1033, %v1234
      %v1263 = vadd.f32 %v1034, %v1239
      %v1264 = vadd.f32 %v1035, %v1242
      %v1265 = vadd.f32 %v1036, %v1247
      %v1266 = vadd.f32 %v1037, %v1250
      %v1267 = vadd.f32 %v1038, %v1255
      %v1268 = vadd.f32 %v1039, %v1258
      %v1269 = vld [vmem:[%s922] sm:$0xe]
      %v1270 = vld [vmem:[%s922 + $0x8] sm:$0xe]
      %v1271 = vld [vmem:[%s922 + $0x10] sm:$0xe]
      %v1272 = vld [vmem:[%s922 + $0x18] sm:$0xe]
      %v1273 = vld [vmem:[%s922 + $0x20] sm:$0xe]
      %v1274 = vld [vmem:[%s922 + $0x28] sm:$0xe]
      %v1275 = vld [vmem:[%s922 + $0x30] sm:$0xe]
      %v1276 = vld [vmem:[%s922 + $0x38] sm:$0xe]
      %v1293 = vrot.slane %v1269, 5
      %v1294 = vrot.slane %v1293, 4
      %v1295 = vrot.slane %v1041, 5
      %v1296 = vsel %vm788, %v1294, %v1295
      %v1297 = vrot.slane %v1270, 5
      %v1298 = vrot.slane %v1297, 4
      %v1299 = vrot.slane %v1043, 5
      %v1300 = vsel %vm788, %v1298, %v1299
      %v1301 = vrot.slane %v1271, 5
      %v1302 = vrot.slane %v1301, 4
      %v1303 = vrot.slane %v1045, 5
      %v1304 = vsel %vm788, %v1302, %v1303
      %v1305 = vrot.slane %v1272, 5
      %v1306 = vrot.slane %v1305, 4
      %v1307 = vrot.slane %v1047, 5
      %v1308 = vsel %vm788, %v1306, %v1307
      %v1309 = vrot.slane %v1273, 5
      %v1310 = vrot.slane %v1309, 4
      %v1311 = vrot.slane %v1049, 5
      %v1312 = vsel %vm788, %v1310, %v1311
      %v1313 = vrot.slane %v1274, 5
      %v1314 = vrot.slane %v1313, 4
      %v1315 = vrot.slane %v1051, 5
      %v1316 = vsel %vm788, %v1314, %v1315
      %v1317 = vrot.slane %v1275, 5
      %v1318 = vrot.slane %v1317, 4
      %v1319 = vrot.slane %v1053, 5
      %v1320 = vsel %vm788, %v1318, %v1319
      %v1321 = vrot.slane %v1276, 5
      %v1322 = vrot.slane %v1321, 4
      %v1323 = vrot.slane %v1055, 5
      %v1324 = vsel %vm788, %v1322, %v1323
      %v1325 = vld [vmem:[%s3 + $0x14] sm:$0xf]
      %v1326 = vunpack.c.l.b16 %v1296
      %v1327 = vunpack.c.l.b16 %v1300
      %v1328 = vunpack.c.l.b16 %v1304
      %v1329 = vunpack.c.l.b16 %v1308
      %v1330 = vunpack.c.l.b16 %v1312
      %v1331 = vunpack.c.l.b16 %v1316
      %v1332 = vunpack.c.l.b16 %v1320
      %v1333 = vunpack.c.l.b16 %v1324
      %v1334 = vpack.c.b16 %v1327, %v1326
      %v1335 = vpack.c.b16 %v1329, %v1328
      %v1336 = vpack.c.b16 %v1331, %v1330
      %v1337 = vpack.c.b16 %v1333, %v1332
      %v1339 = vsel %vm580, %v1334, 0
      %v1342 = vsel %vm580, %v1335, 0
      %v1345 = vsel %vm580, %v1336, 0
      %v1348 = vsel %vm580, %v1337, 0
      %v1351 = vsel %vm593, %v1325, 0
      %1353 = vmatprep.subr.bf16.mxu0 0
      %1354 = vmatpush1.bf16.msra.mxu0 %v1351
      %1355 = vmatprep.subr.bf16.mxu0 0
      %1356 = vmatpush1.bf16.msra.mxu0 0
      %1357 = vmatprep.subr.bf16.mxu0 0
      %1358 = vmatpush1.bf16.msra.mxu0 0
      %1359 = vmatprep.subr.bf16.mxu0 0
      %1360 = vmatpush1.bf16.msra.mxu0 0
      %1361 = vmatprep.subr.bf16.mxu0 0
      %1362 = vmatpush1.bf16.msra.mxu0 0
      %1363 = vmatprep.subr.bf16.mxu0 0
      %1364 = vmatpush1.bf16.msra.mxu0 0
      %1365 = vmatprep.subr.bf16.mxu0 0
      %1366 = vmatpush1.bf16.msra.mxu0 0
      %1367 = vmatprep.subr.bf16.mxu0 0
      %1368 = vmatpush1.bf16.msra.mxu0 0
      %1369 = vmatprep.subr.bf16.mxu0 0
      %1370 = vmatpush1.bf16.msra.mxu0 0
      %1371 = vmatprep.subr.bf16.mxu0 0
      %1372 = vmatpush1.bf16.msra.mxu0 0
      %1373 = vmatprep.subr.bf16.mxu0 0
      %1374 = vmatpush1.bf16.msra.mxu0 0
      %1375 = vmatprep.subr.bf16.mxu0 0
      %1376 = vmatpush1.bf16.msra.mxu0 0
      %1377 = vmatprep.subr.bf16.mxu0 0
      %1378 = vmatpush1.bf16.msra.mxu0 0
      %1379 = vmatprep.subr.bf16.mxu0 0
      %1380 = vmatpush1.bf16.msra.mxu0 0
      %1381 = vmatprep.subr.bf16.mxu0 0
      %1382 = vmatpush1.bf16.msra.mxu0 0
      %1383 = vmatprep.subr.bf16.mxu0 0
      %1384 = vmatpush1.bf16.msra.mxu0 0
      %1385 = vmatprep.mubr.bf16.mxu0 0
      %1386 = vmatmul.mubr.bf16.gmra.mrb[0].mxu0 %v1339
      %v1387 = vpop.f32.mrb[0].mxu0
      %v1388 = vadd.f32 0.0, %v1387
      %v1389 = vpop.f32.mrb[0].mxu0
      %v1390 = vpop.f32.mrb[0].mxu0
      %v1391 = vadd.f32 0.0, %v1390
      %v1392 = vpop.f32.mrb[0].mxu0
      %1393 = vmatprep.mubr.bf16.mxu0 0
      %1394 = vmatmul.mubr.bf16.gmra.mrb[0].mxu0 %v1342
      %v1395 = vpop.f32.mrb[0].mxu0
      %v1396 = vadd.f32 0.0, %v1395
      %v1397 = vpop.f32.mrb[0].mxu0
      %v1398 = vpop.f32.mrb[0].mxu0
      %v1399 = vadd.f32 0.0, %v1398
      %v1400 = vpop.f32.mrb[0].mxu0
      %1401 = vmatprep.mubr.bf16.mxu0 0
      %1402 = vmatmul.mubr.bf16.gmra.mrb[0].mxu0 %v1345
      %v1403 = vpop.f32.mrb[0].mxu0
      %v1404 = vadd.f32 0.0, %v1403
      %v1405 = vpop.f32.mrb[0].mxu0
      %v1406 = vpop.f32.mrb[0].mxu0
      %v1407 = vadd.f32 0.0, %v1406
      %v1408 = vpop.f32.mrb[0].mxu0
      %1409 = vmatprep.mubr.bf16.mxu0 0
      %1410 = vmatmul.mubr.bf16.gmra.mrb[0].mxu0 %v1348
      %v1411 = vpop.f32.mrb[0].mxu0
      %v1412 = vadd.f32 0.0, %v1411
      %v1413 = vpop.f32.mrb[0].mxu0
      %v1414 = vpop.f32.mrb[0].mxu0
      %v1415 = vadd.f32 0.0, %v1414
      %v1416 = vpop.f32.mrb[0].mxu0
      %1417 = vdwg.mxu0
      %v1418 = vadd.f32 %v1261, %v1388
      %v1419 = vadd.f32 %v1262, %v1391
      %v1420 = vadd.f32 %v1263, %v1396
      %v1421 = vadd.f32 %v1264, %v1399
      %v1422 = vadd.f32 %v1265, %v1404
      %v1423 = vadd.f32 %v1266, %v1407
      %v1424 = vadd.f32 %v1267, %v1412
      %v1425 = vadd.f32 %v1268, %v1415
      %s1426 = scalar_lea.vmem %s388, 16
      %v1427 = vld [vmem:[%s1426] sm:$0xf]
      %v1428 = vld [vmem:[%s1426 + $0x8] sm:$0xf]
      %v1429 = vld [vmem:[%s1426 + $0x10] sm:$0xf]
      %v1430 = vld [vmem:[%s1426 + $0x18] sm:$0xf]
      %v1431 = vld [vmem:[%s1426 + $0x20] sm:$0xf]
      %v1432 = vld [vmem:[%s1426 + $0x28] sm:$0xf]
      %v1433 = vld [vmem:[%s1426 + $0x30] sm:$0xf]
      %v1434 = vld [vmem:[%s1426 + $0x38] sm:$0xf]
      %v1435 = vld [vmem:[%s3 + $0x18] sm:$0xf]
      %v1444 = vunpack.c.l.b16 %v1427
      %v1445 = vunpack.c.l.b16 %v1428
      %v1446 = vunpack.c.l.b16 %v1429
      %v1447 = vunpack.c.l.b16 %v1430
      %v1448 = vunpack.c.l.b16 %v1431
      %v1449 = vunpack.c.l.b16 %v1432
      %v1450 = vunpack.c.l.b16 %v1433
      %v1451 = vunpack.c.l.b16 %v1434
      %v1452 = vpack.c.b16 %v1445, %v1444
      %v1453 = vpack.c.b16 %v1447, %v1446
      %v1454 = vpack.c.b16 %v1449, %v1448
      %v1455 = vpack.c.b16 %v1451, %v1450
      %v1457 = vsel %vm580, %v1452, 0
      %v1460 = vsel %vm580, %v1453, 0
      %v1463 = vsel %vm580, %v1454, 0
      %v1466 = vsel %vm580, %v1455, 0
      %v1469 = vsel %vm593, %v1435, 0
      %1471 = vmatprep.subr.bf16.mxu0 0
      %1472 = vmatpush1.bf16.msra.mxu0 %v1469
      %1473 = vmatprep.subr.bf16.mxu0 0
      %1474 = vmatpush1.bf16.msra.mxu0 0
      %1475 = vmatprep.subr.bf16.mxu0 0
      %1476 = vmatpush1.bf16.msra.mxu0 0
      %1477 = vmatprep.subr.bf16.mxu0 0
      %1478 = vmatpush1.bf16.msra.mxu0 0
      %1479 = vmatprep.subr.bf16.mxu0 0
      %1480 = vmatpush1.bf16.msra.mxu0 0
      %1481 = vmatprep.subr.bf16.mxu0 0
      %1482 = vmatpush1.bf16.msra.mxu0 0
      %1483 = vmatprep.subr.bf16.mxu0 0
      %1484 = vmatpush1.bf16.msra.mxu0 0
      %1485 = vmatprep.subr.bf16.mxu0 0
      %1486 = vmatpush1.bf16.msra.mxu0 0
      %1487 = vmatprep.subr.bf16.mxu0 0
      %1488 = vmatpush1.bf16.msra.mxu0 0
      %1489 = vmatprep.subr.bf16.mxu0 0
      %1490 = vmatpush1.bf16.msra.mxu0 0
      %1491 = vmatprep.subr.bf16.mxu0 0
      %1492 = vmatpush1.bf16.msra.mxu0 0
      %1493 = vmatprep.subr.bf16.mxu0 0
      %1494 = vmatpush1.bf16.msra.mxu0 0
      %1495 = vmatprep.subr.bf16.mxu0 0
      %1496 = vmatpush1.bf16.msra.mxu0 0
      %1497 = vmatprep.subr.bf16.mxu0 0
      %1498 = vmatpush1.bf16.msra.mxu0 0
      %1499 = vmatprep.subr.bf16.mxu0 0
      %1500 = vmatpush1.bf16.msra.mxu0 0
      %1501 = vmatprep.subr.bf16.mxu0 0
      %1502 = vmatpush1.bf16.msra.mxu0 0
      %1503 = vmatprep.mubr.bf16.mxu0 0
      %1504 = vmatmul.mubr.bf16.gmra.mrb[0].mxu0 %v1457
      %v1505 = vpop.f32.mrb[0].mxu0
      %v1506 = vadd.f32 0.0, %v1505
      %v1507 = vpop.f32.mrb[0].mxu0
      %v1508 = vpop.f32.mrb[0].mxu0
      %v1509 = vadd.f32 0.0, %v1508
      %v1510 = vpop.f32.mrb[0].mxu0
      %1511 = vmatprep.mubr.bf16.mxu0 0
      %1512 = vmatmul.mubr.bf16.gmra.mrb[0].mxu0 %v1460
      %v1513 = vpop.f32.mrb[0].mxu0
      %v1514 = vadd.f32 0.0, %v1513
      %v1515 = vpop.f32.mrb[0].mxu0
      %v1516 = vpop.f32.mrb[0].mxu0
      %v1517 = vadd.f32 0.0, %v1516
      %v1518 = vpop.f32.mrb[0].mxu0
      %1519 = vmatprep.mubr.bf16.mxu0 0
      %1520 = vmatmul.mubr.bf16.gmra.mrb[0].mxu0 %v1463
      %v1521 = vpop.f32.mrb[0].mxu0
      %v1522 = vadd.f32 0.0, %v1521
      %v1523 = vpop.f32.mrb[0].mxu0
      %v1524 = vpop.f32.mrb[0].mxu0
      %v1525 = vadd.f32 0.0, %v1524
      %v1526 = vpop.f32.mrb[0].mxu0
      %1527 = vmatprep.mubr.bf16.mxu0 0
      %1528 = vmatmul.mubr.bf16.gmra.mrb[0].mxu0 %v1466
      %v1529 = vpop.f32.mrb[0].mxu0
      %v1530 = vadd.f32 0.0, %v1529
      %v1531 = vpop.f32.mrb[0].mxu0
      %v1532 = vpop.f32.mrb[0].mxu0
      %v1533 = vadd.f32 0.0, %v1532
      %v1534 = vpop.f32.mrb[0].mxu0
      %1535 = vdwg.mxu0
      %v1536 = vadd.f32 %v1418, %v1506
      %v1537 = vadd.f32 %v1419, %v1509
      %v1538 = vadd.f32 %v1420, %v1514
      %v1539 = vadd.f32 %v1421, %v1517
      %v1540 = vadd.f32 %v1422, %v1522
      %v1541 = vadd.f32 %v1423, %v1525
      %v1542 = vadd.f32 %v1424, %v1530
      %v1543 = vadd.f32 %v1425, %v1533
      %v1544 = vld [vmem:[%s1426] sm:$0xf]
      %v1545 = vld [vmem:[%s1426 + $0x4] sm:$0x1]
      %v1546 = vld [vmem:[%s1426 + $0x8] sm:$0xf]
      %v1547 = vld [vmem:[%s1426 + $0xc] sm:$0x1]
      %v1548 = vld [vmem:[%s1426 + $0x10] sm:$0xf]
      %v1549 = vld [vmem:[%s1426 + $0x14] sm:$0x1]
      %v1550 = vld [vmem:[%s1426 + $0x18] sm:$0xf]
      %v1551 = vld [vmem:[%s1426 + $0x1c] sm:$0x1]
      %v1552 = vld [vmem:[%s1426 + $0x20] sm:$0xf]
      %v1553 = vld [vmem:[%s1426 + $0x24] sm:$0x1]
      %v1554 = vld [vmem:[%s1426 + $0x28] sm:$0xf]
      %v1555 = vld [vmem:[%s1426 + $0x2c] sm:$0x1]
      %v1556 = vld [vmem:[%s1426 + $0x30] sm:$0xf]
      %v1557 = vld [vmem:[%s1426 + $0x34] sm:$0x1]
      %v1558 = vld [vmem:[%s1426 + $0x38] sm:$0xf]
      %v1559 = vld [vmem:[%s1426 + $0x3c] sm:$0x1]
      %v1561 = vshrl.u32 %v1544, 16
      %v1563 = vrot.slane %v1561, 4
      %v1564 = vshll.u32 %v1544, 16
      %v1566 = vrot.slane %v1564, 5
      %v1567 = vor.u32 %v1563, %v1566
      %v1568 = vrot.slane %v1567, 4
      %v1570 = vshll.u32 %v1545, 16
      %v1572 = vrot.slane %v1570, 5
      %v1573 = vsel %vm454, %v1568, %v1572
      %v1575 = vshrl.u32 %v1546, 16
      %v1577 = vrot.slane %v1575, 4
      %v1578 = vshll.u32 %v1546, 16
      %v1580 = vrot.slane %v1578, 5
      %v1581 = vor.u32 %v1577, %v1580
      %v1582 = vrot.slane %v1581, 4
      %v1584 = vshll.u32 %v1547, 16
      %v1586 = vrot.slane %v1584, 5
      %v1587 = vsel %vm454, %v1582, %v1586
      %v1589 = vshrl.u32 %v1548, 16
      %v1591 = vrot.slane %v1589, 4
      %v1592 = vshll.u32 %v1548, 16
      %v1594 = vrot.slane %v1592, 5
      %v1595 = vor.u32 %v1591, %v1594
      %v1596 = vrot.slane %v1595, 4
      %v1598 = vshll.u32 %v1549, 16
      %v1600 = vrot.slane %v1598, 5
      %v1601 = vsel %vm454, %v1596, %v1600
      %v1603 = vshrl.u32 %v1550, 16
      %v1605 = vrot.slane %v1603, 4
      %v1606 = vshll.u32 %v1550, 16
      %v1608 = vrot.slane %v1606, 5
      %v1609 = vor.u32 %v1605, %v1608
      %v1610 = vrot.slane %v1609, 4
      %v1612 = vshll.u32 %v1551, 16
      %v1614 = vrot.slane %v1612, 5
      %v1615 = vsel %vm454, %v1610, %v1614
      %v1617 = vshrl.u32 %v1552, 16
      %v1619 = vrot.slane %v1617, 4
      %v1620 = vshll.u32 %v1552, 16
      %v1622 = vrot.slane %v1620, 5
      %v1623 = vor.u32 %v1619, %v1622
      %v1624 = vrot.slane %v1623, 4
      %v1626 = vshll.u32 %v1553, 16
      %v1628 = vrot.slane %v1626, 5
      %v1629 = vsel %vm454, %v1624, %v1628
      %v1631 = vshrl.u32 %v1554, 16
      %v1633 = vrot.slane %v1631, 4
      %v1634 = vshll.u32 %v1554, 16
      %v1636 = vrot.slane %v1634, 5
      %v1637 = vor.u32 %v1633, %v1636
      %v1638 = vrot.slane %v1637, 4
      %v1640 = vshll.u32 %v1555, 16
      %v1642 = vrot.slane %v1640, 5
      %v1643 = vsel %vm454, %v1638, %v1642
      %v1645 = vshrl.u32 %v1556, 16
      %v1647 = vrot.slane %v1645, 4
      %v1648 = vshll.u32 %v1556, 16
      %v1650 = vrot.slane %v1648, 5
      %v1651 = vor.u32 %v1647, %v1650
      %v1652 = vrot.slane %v1651, 4
      %v1654 = vshll.u32 %v1557, 16
      %v1656 = vrot.slane %v1654, 5
      %v1657 = vsel %vm454, %v1652, %v1656
      %v1659 = vshrl.u32 %v1558, 16
      %v1661 = vrot.slane %v1659, 4
      %v1662 = vshll.u32 %v1558, 16
      %v1664 = vrot.slane %v1662, 5
      %v1665 = vor.u32 %v1661, %v1664
      %v1666 = vrot.slane %v1665, 4
      %v1668 = vshll.u32 %v1559, 16
      %v1670 = vrot.slane %v1668, 5
      %v1671 = vsel %vm454, %v1666, %v1670
      %v1672 = vld [vmem:[%s3 + $0x1c] sm:$0xf]
      %v1673 = vunpack.c.l.b16 %v1573
      %v1674 = vunpack.c.l.b16 %v1587
      %v1675 = vunpack.c.l.b16 %v1601
      %v1676 = vunpack.c.l.b16 %v1615
      %v1677 = vunpack.c.l.b16 %v1629
      %v1678 = vunpack.c.l.b16 %v1643
      %v1679 = vunpack.c.l.b16 %v1657
      %v1680 = vunpack.c.l.b16 %v1671
      %v1681 = vpack.c.b16 %v1674, %v1673
      %v1682 = vpack.c.b16 %v1676, %v1675
      %v1683 = vpack.c.b16 %v1678, %v1677
      %v1684 = vpack.c.b16 %v1680, %v1679
      %v1686 = vsel %vm580, %v1681, 0
      %v1689 = vsel %vm580, %v1682, 0
      %v1692 = vsel %vm580, %v1683, 0
      %v1695 = vsel %vm580, %v1684, 0
      %v1698 = vsel %vm593, %v1672, 0
      %1700 = vmatprep.subr.bf16.mxu0 0
      %1701 = vmatpush1.bf16.msra.mxu0 %v1698
      %1702 = vmatprep.subr.bf16.mxu0 0
      %1703 = vmatpush1.bf16.msra.mxu0 0
      %1704 = vmatprep.subr.bf16.mxu0 0
      %1705 = vmatpush1.bf16.msra.mxu0 0
      %1706 = vmatprep.subr.bf16.mxu0 0
      %1707 = vmatpush1.bf16.msra.mxu0 0
      %1708 = vmatprep.subr.bf16.mxu0 0
      %1709 = vmatpush1.bf16.msra.mxu0 0
      %1710 = vmatprep.subr.bf16.mxu0 0
      %1711 = vmatpush1.bf16.msra.mxu0 0
      %1712 = vmatprep.subr.bf16.mxu0 0
      %1713 = vmatpush1.bf16.msra.mxu0 0
      %1714 = vmatprep.subr.bf16.mxu0 0
      %1715 = vmatpush1.bf16.msra.mxu0 0
      %1716 = vmatprep.subr.bf16.mxu0 0
      %1717 = vmatpush1.bf16.msra.mxu0 0
      %1718 = vmatprep.subr.bf16.mxu0 0
      %1719 = vmatpush1.bf16.msra.mxu0 0
      %1720 = vmatprep.subr.bf16.mxu0 0
      %1721 = vmatpush1.bf16.msra.mxu0 0
      %1722 = vmatprep.subr.bf16.mxu0 0
      %1723 = vmatpush1.bf16.msra.mxu0 0
      %1724 = vmatprep.subr.bf16.mxu0 0
      %1725 = vmatpush1.bf16.msra.mxu0 0
      %1726 = vmatprep.subr.bf16.mxu0 0
      %1727 = vmatpush1.bf16.msra.mxu0 0
      %1728 = vmatprep.subr.bf16.mxu0 0
      %1729 = vmatpush1.bf16.msra.mxu0 0
      %1730 = vmatprep.subr.bf16.mxu0 0
      %1731 = vmatpush1.bf16.msra.mxu0 0
      %1732 = vmatprep.mubr.bf16.mxu0 0
      %1733 = vmatmul.mubr.bf16.gmra.mrb[0].mxu0 %v1686
      %v1734 = vpop.f32.mrb[0].mxu0
      %v1735 = vadd.f32 0.0, %v1734
      %v1736 = vpop.f32.mrb[0].mxu0
      %v1737 = vpop.f32.mrb[0].mxu0
      %v1738 = vadd.f32 0.0, %v1737
      %v1739 = vpop.f32.mrb[0].mxu0
      %1740 = vmatprep.mubr.bf16.mxu0 0
      %1741 = vmatmul.mubr.bf16.gmra.mrb[0].mxu0 %v1689
      %v1742 = vpop.f32.mrb[0].mxu0
      %v1743 = vadd.f32 0.0, %v1742
      %v1744 = vpop.f32.mrb[0].mxu0
      %v1745 = vpop.f32.mrb[0].mxu0
      %v1746 = vadd.f32 0.0, %v1745
      %v1747 = vpop.f32.mrb[0].mxu0
      %1748 = vmatprep.mubr.bf16.mxu0 0
      %1749 = vmatmul.mubr.bf16.gmra.mrb[0].mxu0 %v1692
      %v1750 = vpop.f32.mrb[0].mxu0
      %v1751 = vadd.f32 0.0, %v1750
      %v1752 = vpop.f32.mrb[0].mxu0
      %v1753 = vpop.f32.mrb[0].mxu0
      %v1754 = vadd.f32 0.0, %v1753
      %v1755 = vpop.f32.mrb[0].mxu0
      %1756 = vmatprep.mubr.bf16.mxu0 0
      %1757 = vmatmul.mubr.bf16.gmra.mrb[0].mxu0 %v1695
      %v1758 = vpop.f32.mrb[0].mxu0
      %v1759 = vadd.f32 0.0, %v1758
      %v1760 = vpop.f32.mrb[0].mxu0
      %v1761 = vpop.f32.mrb[0].mxu0
      %v1762 = vadd.f32 0.0, %v1761
      %v1763 = vpop.f32.mrb[0].mxu0
      %1764 = vdwg.mxu0
      %v1765 = vadd.f32 %v1536, %v1735
      %v1766 = vadd.f32 %v1537, %v1738
      %v1767 = vadd.f32 %v1538, %v1743
      %v1768 = vadd.f32 %v1539, %v1746
      %v1769 = vadd.f32 %v1540, %v1751
      %v1770 = vadd.f32 %v1541, %v1754
      %v1771 = vadd.f32 %v1542, %v1759
      %v1772 = vadd.f32 %v1543, %v1762
      %v1773 = vld [vmem:[%s1426] sm:$0xe]
      %v1774 = vld [vmem:[%s1426 + $0x8] sm:$0xe]
      %v1775 = vld [vmem:[%s1426 + $0x10] sm:$0xe]
      %v1776 = vld [vmem:[%s1426 + $0x18] sm:$0xe]
      %v1777 = vld [vmem:[%s1426 + $0x20] sm:$0xe]
      %v1778 = vld [vmem:[%s1426 + $0x28] sm:$0xe]
      %v1779 = vld [vmem:[%s1426 + $0x30] sm:$0xe]
      %v1780 = vld [vmem:[%s1426 + $0x38] sm:$0xe]
      %v1797 = vrot.slane %v1773, 5
      %v1798 = vrot.slane %v1797, 4
      %v1799 = vrot.slane %v1545, 5
      %v1800 = vsel %vm788, %v1798, %v1799
      %v1801 = vrot.slane %v1774, 5
      %v1802 = vrot.slane %v1801, 4
      %v1803 = vrot.slane %v1547, 5
      %v1804 = vsel %vm788, %v1802, %v1803
      %v1805 = vrot.slane %v1775, 5
      %v1806 = vrot.slane %v1805, 4
      %v1807 = vrot.slane %v1549, 5
      %v1808 = vsel %vm788, %v1806, %v1807
      %v1809 = vrot.slane %v1776, 5
      %v1810 = vrot.slane %v1809, 4
      %v1811 = vrot.slane %v1551, 5
      %v1812 = vsel %vm788, %v1810, %v1811
      %v1813 = vrot.slane %v1777, 5
      %v1814 = vrot.slane %v1813, 4
      %v1815 = vrot.slane %v1553, 5
      %v1816 = vsel %vm788, %v1814, %v1815
      %v1817 = vrot.slane %v1778, 5
      %v1818 = vrot.slane %v1817, 4
      %v1819 = vrot.slane %v1555, 5
      %v1820 = vsel %vm788, %v1818, %v1819
      %v1821 = vrot.slane %v1779, 5
      %v1822 = vrot.slane %v1821, 4
      %v1823 = vrot.slane %v1557, 5
      %v1824 = vsel %vm788, %v1822, %v1823
      %v1825 = vrot.slane %v1780, 5
      %v1826 = vrot.slane %v1825, 4
      %v1827 = vrot.slane %v1559, 5
      %v1828 = vsel %vm788, %v1826, %v1827
      %v1829 = vld [vmem:[%s3 + $0x20] sm:$0xf]
      %v1830 = vunpack.c.l.b16 %v1800
      %v1831 = vunpack.c.l.b16 %v1804
      %v1832 = vunpack.c.l.b16 %v1808
      %v1833 = vunpack.c.l.b16 %v1812
      %v1834 = vunpack.c.l.b16 %v1816
      %v1835 = vunpack.c.l.b16 %v1820
      %v1836 = vunpack.c.l.b16 %v1824
      %v1837 = vunpack.c.l.b16 %v1828
      %v1838 = vpack.c.b16 %v1831, %v1830
      %v1839 = vpack.c.b16 %v1833, %v1832
      %v1840 = vpack.c.b16 %v1835, %v1834
      %v1841 = vpack.c.b16 %v1837, %v1836
      %v1843 = vsel %vm580, %v1838, 0
      %v1846 = vsel %vm580, %v1839, 0
      %v1849 = vsel %vm580, %v1840, 0
      %v1852 = vsel %vm580, %v1841, 0
      %v1855 = vsel %vm593, %v1829, 0
      %1857 = vmatprep.subr.bf16.mxu0 0
      %1858 = vmatpush1.bf16.msra.mxu0 %v1855
      %1859 = vmatprep.subr.bf16.mxu0 0
      %1860 = vmatpush1.bf16.msra.mxu0 0
      %1861 = vmatprep.subr.bf16.mxu0 0
      %1862 = vmatpush1.bf16.msra.mxu0 0
      %1863 = vmatprep.subr.bf16.mxu0 0
      %1864 = vmatpush1.bf16.msra.mxu0 0
      %1865 = vmatprep.subr.bf16.mxu0 0
      %1866 = vmatpush1.bf16.msra.mxu0 0
      %1867 = vmatprep.subr.bf16.mxu0 0
      %1868 = vmatpush1.bf16.msra.mxu0 0
      %1869 = vmatprep.subr.bf16.mxu0 0
      %1870 = vmatpush1.bf16.msra.mxu0 0
      %1871 = vmatprep.subr.bf16.mxu0 0
      %1872 = vmatpush1.bf16.msra.mxu0 0
      %1873 = vmatprep.subr.bf16.mxu0 0
      %1874 = vmatpush1.bf16.msra.mxu0 0
      %1875 = vmatprep.subr.bf16.mxu0 0
      %1876 = vmatpush1.bf16.msra.mxu0 0
      %1877 = vmatprep.subr.bf16.mxu0 0
      %1878 = vmatpush1.bf16.msra.mxu0 0
      %1879 = vmatprep.subr.bf16.mxu0 0
      %1880 = vmatpush1.bf16.msra.mxu0 0
      %1881 = vmatprep.subr.bf16.mxu0 0
      %1882 = vmatpush1.bf16.msra.mxu0 0
      %1883 = vmatprep.subr.bf16.mxu0 0
      %1884 = vmatpush1.bf16.msra.mxu0 0
      %1885 = vmatprep.subr.bf16.mxu0 0
      %1886 = vmatpush1.bf16.msra.mxu0 0
      %1887 = vmatprep.subr.bf16.mxu0 0
      %1888 = vmatpush1.bf16.msra.mxu0 0
      %1889 = vmatprep.mubr.bf16.mxu0 0
      %1890 = vmatmul.mubr.bf16.gmra.mrb[0].mxu0 %v1843
      %v1891 = vpop.f32.mrb[0].mxu0
      %v1892 = vadd.f32 0.0, %v1891
      %v1893 = vpop.f32.mrb[0].mxu0
      %v1894 = vpop.f32.mrb[0].mxu0
      %v1895 = vadd.f32 0.0, %v1894
      %v1896 = vpop.f32.mrb[0].mxu0
      %1897 = vmatprep.mubr.bf16.mxu0 0
      %1898 = vmatmul.mubr.bf16.gmra.mrb[0].mxu0 %v1846
      %v1899 = vpop.f32.mrb[0].mxu0
      %v1900 = vadd.f32 0.0, %v1899
      %v1901 = vpop.f32.mrb[0].mxu0
      %v1902 = vpop.f32.mrb[0].mxu0
      %v1903 = vadd.f32 0.0, %v1902
      %v1904 = vpop.f32.mrb[0].mxu0
      %1905 = vmatprep.mubr.bf16.mxu0 0
      %1906 = vmatmul.mubr.bf16.gmra.mrb[0].mxu0 %v1849
      %v1907 = vpop.f32.mrb[0].mxu0
      %v1908 = vadd.f32 0.0, %v1907
      %v1909 = vpop.f32.mrb[0].mxu0
      %v1910 = vpop.f32.mrb[0].mxu0
      %v1911 = vadd.f32 0.0, %v1910
      %v1912 = vpop.f32.mrb[0].mxu0
      %1913 = vmatprep.mubr.bf16.mxu0 0
      %1914 = vmatmul.mubr.bf16.gmra.mrb[0].mxu0 %v1852
      %v1915 = vpop.f32.mrb[0].mxu0
      %v1916 = vadd.f32 0.0, %v1915
      %v1917 = vpop.f32.mrb[0].mxu0
      %v1918 = vpop.f32.mrb[0].mxu0
      %v1919 = vadd.f32 0.0, %v1918
      %v1920 = vpop.f32.mrb[0].mxu0
      %1921 = vdwg.mxu0
      %v1922 = vadd.f32 %v1765, %v1892
      %v1923 = vadd.f32 %v1766, %v1895
      %v1924 = vadd.f32 %v1767, %v1900
      %v1925 = vadd.f32 %v1768, %v1903
      %v1926 = vadd.f32 %v1769, %v1908
      %v1927 = vadd.f32 %v1770, %v1911
      %v1928 = vadd.f32 %v1771, %v1916
      %v1929 = vadd.f32 %v1772, %v1919
      %v1930 = vld [vmem:[%s398] sm:$0xf]
      %v1931 = vld [vmem:[%s398 + $0x8] sm:$0xf]
      %v1932 = vld [vmem:[%s398 + $0x10] sm:$0xf]
      %v1933 = vld [vmem:[%s398 + $0x18] sm:$0xf]
      %v1934 = vld [vmem:[%s398 + $0x20] sm:$0xf]
      %v1935 = vld [vmem:[%s398 + $0x28] sm:$0xf]
      %v1936 = vld [vmem:[%s398 + $0x30] sm:$0xf]
      %v1937 = vld [vmem:[%s398 + $0x38] sm:$0xf]
      %v1938 = vld [vmem:[%s3 + $0x24] sm:$0xf]
      %v1947 = vunpack.c.l.b16 %v1930
      %v1948 = vunpack.c.l.b16 %v1931
      %v1949 = vunpack.c.l.b16 %v1932
      %v1950 = vunpack.c.l.b16 %v1933
      %v1951 = vunpack.c.l.b16 %v1934
      %v1952 = vunpack.c.l.b16 %v1935
      %v1953 = vunpack.c.l.b16 %v1936
      %v1954 = vunpack.c.l.b16 %v1937
      %v1955 = vpack.c.b16 %v1948, %v1947
      %v1956 = vpack.c.b16 %v1950, %v1949
      %v1957 = vpack.c.b16 %v1952, %v1951
      %v1958 = vpack.c.b16 %v1954, %v1953
      %v1960 = vsel %vm580, %v1955, 0
      %v1963 = vsel %vm580, %v1956, 0
      %v1966 = vsel %vm580, %v1957, 0
      %v1969 = vsel %vm580, %v1958, 0
      %v1972 = vsel %vm593, %v1938, 0
      %1974 = vmatprep.subr.bf16.mxu0 0
      %1975 = vmatpush1.bf16.msra.mxu0 %v1972
      %1976 = vmatprep.subr.bf16.mxu0 0
      %1977 = vmatpush1.bf16.msra.mxu0 0
      %1978 = vmatprep.subr.bf16.mxu0 0
      %1979 = vmatpush1.bf16.msra.mxu0 0
      %1980 = vmatprep.subr.bf16.mxu0 0
      %1981 = vmatpush1.bf16.msra.mxu0 0
      %1982 = vmatprep.subr.bf16.mxu0 0
      %1983 = vmatpush1.bf16.msra.mxu0 0
      %1984 = vmatprep.subr.bf16.mxu0 0
      %1985 = vmatpush1.bf16.msra.mxu0 0
      %1986 = vmatprep.subr.bf16.mxu0 0
      %1987 = vmatpush1.bf16.msra.mxu0 0
      %1988 = vmatprep.subr.bf16.mxu0 0
      %1989 = vmatpush1.bf16.msra.mxu0 0
      %1990 = vmatprep.subr.bf16.mxu0 0
      %1991 = vmatpush1.bf16.msra.mxu0 0
      %1992 = vmatprep.subr.bf16.mxu0 0
      %1993 = vmatpush1.bf16.msra.mxu0 0
      %1994 = vmatprep.subr.bf16.mxu0 0
      %1995 = vmatpush1.bf16.msra.mxu0 0
      %1996 = vmatprep.subr.bf16.mxu0 0
      %1997 = vmatpush1.bf16.msra.mxu0 0
      %1998 = vmatprep.subr.bf16.mxu0 0
      %1999 = vmatpush1.bf16.msra.mxu0 0
      %2000 = vmatprep.subr.bf16.mxu0 0
      %2001 = vmatpush1.bf16.msra.mxu0 0
      %2002 = vmatprep.subr.bf16.mxu0 0
      %2003 = vmatpush1.bf16.msra.mxu0 0
      %2004 = vmatprep.subr.bf16.mxu0 0
      %2005 = vmatpush1.bf16.msra.mxu0 0
      %2006 = vmatprep.mubr.bf16.mxu0 0
      %2007 = vmatmul.mubr.bf16.gmra.mrb[0].mxu0 %v1960
      %v2008 = vpop.f32.mrb[0].mxu0
      %v2009 = vadd.f32 0.0, %v2008
      %v2010 = vpop.f32.mrb[0].mxu0
      %v2011 = vpop.f32.mrb[0].mxu0
      %v2012 = vadd.f32 0.0, %v2011
      %v2013 = vpop.f32.mrb[0].mxu0
      %2014 = vmatprep.mubr.bf16.mxu0 0
      %2015 = vmatmul.mubr.bf16.gmra.mrb[0].mxu0 %v1963
      %v2016 = vpop.f32.mrb[0].mxu0
      %v2017 = vadd.f32 0.0, %v2016
      %v2018 = vpop.f32.mrb[0].mxu0
      %v2019 = vpop.f32.mrb[0].mxu0
      %v2020 = vadd.f32 0.0, %v2019
      %v2021 = vpop.f32.mrb[0].mxu0
      %2022 = vmatprep.mubr.bf16.mxu0 0
      %2023 = vmatmul.mubr.bf16.gmra.mrb[0].mxu0 %v1966
      %v2024 = vpop.f32.mrb[0].mxu0
      %v2025 = vadd.f32 0.0, %v2024
      %v2026 = vpop.f32.mrb[0].mxu0
      %v2027 = vpop.f32.mrb[0].mxu0
      %v2028 = vadd.f32 0.0, %v2027
      %v2029 = vpop.f32.mrb[0].mxu0
      %2030 = vmatprep.mubr.bf16.mxu0 0
      %2031 = vmatmul.mubr.bf16.gmra.mrb[0].mxu0 %v1969
      %v2032 = vpop.f32.mrb[0].mxu0
      %v2033 = vadd.f32 0.0, %v2032
      %v2034 = vpop.f32.mrb[0].mxu0
      %v2035 = vpop.f32.mrb[0].mxu0
      %v2036 = vadd.f32 0.0, %v2035
      %v2037 = vpop.f32.mrb[0].mxu0
      %2038 = vdwg.mxu0
      %v2039 = vadd.f32 %v1922, %v2009
      %v2040 = vadd.f32 %v1923, %v2012
      %v2041 = vadd.f32 %v1924, %v2017
      %v2042 = vadd.f32 %v1925, %v2020
      %v2043 = vadd.f32 %v1926, %v2025
      %v2044 = vadd.f32 %v1927, %v2028
      %v2045 = vadd.f32 %v1928, %v2033
      %v2046 = vadd.f32 %v1929, %v2036
      %v2047 = vld [vmem:[%s398] sm:$0xf]
      %v2048 = vld [vmem:[%s398 + $0x4] sm:$0x1]
      %v2049 = vld [vmem:[%s398 + $0x8] sm:$0xf]
      %v2050 = vld [vmem:[%s398 + $0xc] sm:$0x1]
      %v2051 = vld [vmem:[%s398 + $0x10] sm:$0xf]
      %v2052 = vld [vmem:[%s398 + $0x14] sm:$0x1]
      %v2053 = vld [vmem:[%s398 + $0x18] sm:$0xf]
      %v2054 = vld [vmem:[%s398 + $0x1c] sm:$0x1]
      %v2055 = vld [vmem:[%s398 + $0x20] sm:$0xf]
      %v2056 = vld [vmem:[%s398 + $0x24] sm:$0x1]
      %v2057 = vld [vmem:[%s398 + $0x28] sm:$0xf]
      %v2058 = vld [vmem:[%s398 + $0x2c] sm:$0x1]
      %v2059 = vld [vmem:[%s398 + $0x30] sm:$0xf]
      %v2060 = vld [vmem:[%s398 + $0x34] sm:$0x1]
      %v2061 = vld [vmem:[%s398 + $0x38] sm:$0xf]
      %v2062 = vld [vmem:[%s398 + $0x3c] sm:$0x1]
      %v2064 = vshrl.u32 %v2047, 16
      %v2066 = vrot.slane %v2064, 4
      %v2067 = vshll.u32 %v2047, 16
      %v2069 = vrot.slane %v2067, 5
      %v2070 = vor.u32 %v2066, %v2069
      %v2071 = vrot.slane %v2070, 4
      %v2073 = vshll.u32 %v2048, 16
      %v2075 = vrot.slane %v2073, 5
      %v2076 = vsel %vm454, %v2071, %v2075
      %v2078 = vshrl.u32 %v2049, 16
      %v2080 = vrot.slane %v2078, 4
      %v2081 = vshll.u32 %v2049, 16
      %v2083 = vrot.slane %v2081, 5
      %v2084 = vor.u32 %v2080, %v2083
      %v2085 = vrot.slane %v2084, 4
      %v2087 = vshll.u32 %v2050, 16
      %v2089 = vrot.slane %v2087, 5
      %v2090 = vsel %vm454, %v2085, %v2089
      %v2092 = vshrl.u32 %v2051, 16
      %v2094 = vrot.slane %v2092, 4
      %v2095 = vshll.u32 %v2051, 16
      %v2097 = vrot.slane %v2095, 5
      %v2098 = vor.u32 %v2094, %v2097
      %v2099 = vrot.slane %v2098, 4
      %v2101 = vshll.u32 %v2052, 16
      %v2103 = vrot.slane %v2101, 5
      %v2104 = vsel %vm454, %v2099, %v2103
      %v2106 = vshrl.u32 %v2053, 16
      %v2108 = vrot.slane %v2106, 4
      %v2109 = vshll.u32 %v2053, 16
      %v2111 = vrot.slane %v2109, 5
      %v2112 = vor.u32 %v2108, %v2111
      %v2113 = vrot.slane %v2112, 4
      %v2115 = vshll.u32 %v2054, 16
      %v2117 = vrot.slane %v2115, 5
      %v2118 = vsel %vm454, %v2113, %v2117
      %v2120 = vshrl.u32 %v2055, 16
      %v2122 = vrot.slane %v2120, 4
      %v2123 = vshll.u32 %v2055, 16
      %v2125 = vrot.slane %v2123, 5
      %v2126 = vor.u32 %v2122, %v2125
      %v2127 = vrot.slane %v2126, 4
      %v2129 = vshll.u32 %v2056, 16
      %v2131 = vrot.slane %v2129, 5
      %v2132 = vsel %vm454, %v2127, %v2131
      %v2134 = vshrl.u32 %v2057, 16
      %v2136 = vrot.slane %v2134, 4
      %v2137 = vshll.u32 %v2057, 16
      %v2139 = vrot.slane %v2137, 5
      %v2140 = vor.u32 %v2136, %v2139
      %v2141 = vrot.slane %v2140, 4
      %v2143 = vshll.u32 %v2058, 16
      %v2145 = vrot.slane %v2143, 5
      %v2146 = vsel %vm454, %v2141, %v2145
      %v2148 = vshrl.u32 %v2059, 16
      %v2150 = vrot.slane %v2148, 4
      %v2151 = vshll.u32 %v2059, 16
      %v2153 = vrot.slane %v2151, 5
      %v2154 = vor.u32 %v2150, %v2153
      %v2155 = vrot.slane %v2154, 4
      %v2157 = vshll.u32 %v2060, 16
      %v2159 = vrot.slane %v2157, 5
      %v2160 = vsel %vm454, %v2155, %v2159
      %v2162 = vshrl.u32 %v2061, 16
      %v2164 = vrot.slane %v2162, 4
      %v2165 = vshll.u32 %v2061, 16
      %v2167 = vrot.slane %v2165, 5
      %v2168 = vor.u32 %v2164, %v2167
      %v2169 = vrot.slane %v2168, 4
      %v2171 = vshll.u32 %v2062, 16
      %v2173 = vrot.slane %v2171, 5
      %v2174 = vsel %vm454, %v2169, %v2173
      %v2175 = vld [vmem:[%s3 + $0x28] sm:$0xf]
      %v2176 = vunpack.c.l.b16 %v2076
      %v2177 = vunpack.c.l.b16 %v2090
      %v2178 = vunpack.c.l.b16 %v2104
      %v2179 = vunpack.c.l.b16 %v2118
      %v2180 = vunpack.c.l.b16 %v2132
      %v2181 = vunpack.c.l.b16 %v2146
      %v2182 = vunpack.c.l.b16 %v2160
      %v2183 = vunpack.c.l.b16 %v2174
      %v2184 = vpack.c.b16 %v2177, %v2176
      %v2185 = vpack.c.b16 %v2179, %v2178
      %v2186 = vpack.c.b16 %v2181, %v2180
      %v2187 = vpack.c.b16 %v2183, %v2182
      %v2189 = vsel %vm580, %v2184, 0
      %v2192 = vsel %vm580, %v2185, 0
      %v2195 = vsel %vm580, %v2186, 0
      %v2198 = vsel %vm580, %v2187, 0
      %v2201 = vsel %vm593, %v2175, 0
      %2203 = vmatprep.subr.bf16.mxu0 0
      %2204 = vmatpush1.bf16.msra.mxu0 %v2201
      %2205 = vmatprep.subr.bf16.mxu0 0
      %2206 = vmatpush1.bf16.msra.mxu0 0
      %2207 = vmatprep.subr.bf16.mxu0 0
      %2208 = vmatpush1.bf16.msra.mxu0 0
      %2209 = vmatprep.subr.bf16.mxu0 0
      %2210 = vmatpush1.bf16.msra.mxu0 0
      %2211 = vmatprep.subr.bf16.mxu0 0
      %2212 = vmatpush1.bf16.msra.mxu0 0
      %2213 = vmatprep.subr.bf16.mxu0 0
      %2214 = vmatpush1.bf16.msra.mxu0 0
      %2215 = vmatprep.subr.bf16.mxu0 0
      %2216 = vmatpush1.bf16.msra.mxu0 0
      %2217 = vmatprep.subr.bf16.mxu0 0
      %2218 = vmatpush1.bf16.msra.mxu0 0
      %2219 = vmatprep.subr.bf16.mxu0 0
      %2220 = vmatpush1.bf16.msra.mxu0 0
      %2221 = vmatprep.subr.bf16.mxu0 0
      %2222 = vmatpush1.bf16.msra.mxu0 0
      %2223 = vmatprep.subr.bf16.mxu0 0
      %2224 = vmatpush1.bf16.msra.mxu0 0
      %2225 = vmatprep.subr.bf16.mxu0 0
      %2226 = vmatpush1.bf16.msra.mxu0 0
      %2227 = vmatprep.subr.bf16.mxu0 0
      %2228 = vmatpush1.bf16.msra.mxu0 0
      %2229 = vmatprep.subr.bf16.mxu0 0
      %2230 = vmatpush1.bf16.msra.mxu0 0
      %2231 = vmatprep.subr.bf16.mxu0 0
      %2232 = vmatpush1.bf16.msra.mxu0 0
      %2233 = vmatprep.subr.bf16.mxu0 0
      %2234 = vmatpush1.bf16.msra.mxu0 0
      %2235 = vmatprep.mubr.bf16.mxu0 0
      %2236 = vmatmul.mubr.bf16.gmra.mrb[0].mxu0 %v2189
      %v2237 = vpop.f32.mrb[0].mxu0
      %v2238 = vadd.f32 0.0, %v2237
      %v2239 = vpop.f32.mrb[0].mxu0
      %v2240 = vpop.f32.mrb[0].mxu0
      %v2241 = vadd.f32 0.0, %v2240
      %v2242 = vpop.f32.mrb[0].mxu0
      %2243 = vmatprep.mubr.bf16.mxu0 0
      %2244 = vmatmul.mubr.bf16.gmra.mrb[0].mxu0 %v2192
      %v2245 = vpop.f32.mrb[0].mxu0
      %v2246 = vadd.f32 0.0, %v2245
      %v2247 = vpop.f32.mrb[0].mxu0
      %v2248 = vpop.f32.mrb[0].mxu0
      %v2249 = vadd.f32 0.0, %v2248
      %v2250 = vpop.f32.mrb[0].mxu0
      %2251 = vmatprep.mubr.bf16.mxu0 0
      %2252 = vmatmul.mubr.bf16.gmra.mrb[0].mxu0 %v2195
      %v2253 = vpop.f32.mrb[0].mxu0
      %v2254 = vadd.f32 0.0, %v2253
      %v2255 = vpop.f32.mrb[0].mxu0
      %v2256 = vpop.f32.mrb[0].mxu0
      %v2257 = vadd.f32 0.0, %v2256
      %v2258 = vpop.f32.mrb[0].mxu0
      %2259 = vmatprep.mubr.bf16.mxu0 0
      %2260 = vmatmul.mubr.bf16.gmra.mrb[0].mxu0 %v2198
      %v2261 = vpop.f32.mrb[0].mxu0
      %v2262 = vadd.f32 0.0, %v2261
      %v2263 = vpop.f32.mrb[0].mxu0
      %v2264 = vpop.f32.mrb[0].mxu0
      %v2265 = vadd.f32 0.0, %v2264
      %v2266 = vpop.f32.mrb[0].mxu0
      %2267 = vdwg.mxu0
      %v2268 = vadd.f32 %v2039, %v2238
      %v2269 = vadd.f32 %v2040, %v2241
      %v2270 = vadd.f32 %v2041, %v2246
      %v2271 = vadd.f32 %v2042, %v2249
      %v2272 = vadd.f32 %v2043, %v2254
      %v2273 = vadd.f32 %v2044, %v2257
      %v2274 = vadd.f32 %v2045, %v2262
      %v2275 = vadd.f32 %v2046, %v2265
      %v2276 = vld [vmem:[%s398] sm:$0xe]
      %v2277 = vld [vmem:[%s398 + $0x8] sm:$0xe]
      %v2278 = vld [vmem:[%s398 + $0x10] sm:$0xe]
      %v2279 = vld [vmem:[%s398 + $0x18] sm:$0xe]
      %v2280 = vld [vmem:[%s398 + $0x20] sm:$0xe]
      %v2281 = vld [vmem:[%s398 + $0x28] sm:$0xe]
      %v2282 = vld [vmem:[%s398 + $0x30] sm:$0xe]
      %v2283 = vld [vmem:[%s398 + $0x38] sm:$0xe]
      %v2300 = vrot.slane %v2276, 5
      %v2301 = vrot.slane %v2300, 4
      %v2302 = vrot.slane %v2048, 5
      %v2303 = vsel %vm788, %v2301, %v2302
      %v2304 = vrot.slane %v2277, 5
      %v2305 = vrot.slane %v2304, 4
      %v2306 = vrot.slane %v2050, 5
      %v2307 = vsel %vm788, %v2305, %v2306
      %v2308 = vrot.slane %v2278, 5
      %v2309 = vrot.slane %v2308, 4
      %v2310 = vrot.slane %v2052, 5
      %v2311 = vsel %vm788, %v2309, %v2310
      %v2312 = vrot.slane %v2279, 5
      %v2313 = vrot.slane %v2312, 4
      %v2314 = vrot.slane %v2054, 5
      %v2315 = vsel %vm788, %v2313, %v2314
      %v2316 = vrot.slane %v2280, 5
      %v2317 = vrot.slane %v2316, 4
      %v2318 = vrot.slane %v2056, 5
      %v2319 = vsel %vm788, %v2317, %v2318
      %v2320 = vrot.slane %v2281, 5
      %v2321 = vrot.slane %v2320, 4
      %v2322 = vrot.slane %v2058, 5
      %v2323 = vsel %vm788, %v2321, %v2322
      %v2324 = vrot.slane %v2282, 5
      %v2325 = vrot.slane %v2324, 4
      %v2326 = vrot.slane %v2060, 5
      %v2327 = vsel %vm788, %v2325, %v2326
      %v2328 = vrot.slane %v2283, 5
      %v2329 = vrot.slane %v2328, 4
      %v2330 = vrot.slane %v2062, 5
      %v2331 = vsel %vm788, %v2329, %v2330
      %v2332 = vld [vmem:[%s3 + $0x2c] sm:$0xf]
      %v2333 = vunpack.c.l.b16 %v2303
      %v2334 = vunpack.c.l.b16 %v2307
      %v2335 = vunpack.c.l.b16 %v2311
      %v2336 = vunpack.c.l.b16 %v2315
      %v2337 = vunpack.c.l.b16 %v2319
      %v2338 = vunpack.c.l.b16 %v2323
      %v2339 = vunpack.c.l.b16 %v2327
      %v2340 = vunpack.c.l.b16 %v2331
      %v2341 = vpack.c.b16 %v2334, %v2333
      %v2342 = vpack.c.b16 %v2336, %v2335
      %v2343 = vpack.c.b16 %v2338, %v2337
      %v2344 = vpack.c.b16 %v2340, %v2339
      %v2346 = vsel %vm580, %v2341, 0
      %v2349 = vsel %vm580, %v2342, 0
      %v2352 = vsel %vm580, %v2343, 0
      %v2355 = vsel %vm580, %v2344, 0
      %v2358 = vsel %vm593, %v2332, 0
      %2360 = vmatprep.subr.bf16.mxu0 0
      %2361 = vmatpush1.bf16.msra.mxu0 %v2358
      %2362 = vmatprep.subr.bf16.mxu0 0
      %2363 = vmatpush1.bf16.msra.mxu0 0
      %2364 = vmatprep.subr.bf16.mxu0 0
      %2365 = vmatpush1.bf16.msra.mxu0 0
      %2366 = vmatprep.subr.bf16.mxu0 0
      %2367 = vmatpush1.bf16.msra.mxu0 0
      %2368 = vmatprep.subr.bf16.mxu0 0
      %2369 = vmatpush1.bf16.msra.mxu0 0
      %2370 = vmatprep.subr.bf16.mxu0 0
      %2371 = vmatpush1.bf16.msra.mxu0 0
      %2372 = vmatprep.subr.bf16.mxu0 0
      %2373 = vmatpush1.bf16.msra.mxu0 0
      %2374 = vmatprep.subr.bf16.mxu0 0
      %2375 = vmatpush1.bf16.msra.mxu0 0
      %2376 = vmatprep.subr.bf16.mxu0 0
      %2377 = vmatpush1.bf16.msra.mxu0 0
      %2378 = vmatprep.subr.bf16.mxu0 0
      %2379 = vmatpush1.bf16.msra.mxu0 0
      %2380 = vmatprep.subr.bf16.mxu0 0
      %2381 = vmatpush1.bf16.msra.mxu0 0
      %2382 = vmatprep.subr.bf16.mxu0 0
      %2383 = vmatpush1.bf16.msra.mxu0 0
      %2384 = vmatprep.subr.bf16.mxu0 0
      %2385 = vmatpush1.bf16.msra.mxu0 0
      %2386 = vmatprep.subr.bf16.mxu0 0
      %2387 = vmatpush1.bf16.msra.mxu0 0
      %2388 = vmatprep.subr.bf16.mxu0 0
      %2389 = vmatpush1.bf16.msra.mxu0 0
      %2390 = vmatprep.subr.bf16.mxu0 0
      %2391 = vmatpush1.bf16.msra.mxu0 0
      %2392 = vmatprep.mubr.bf16.mxu0 0
      %2393 = vmatmul.mubr.bf16.gmra.mrb[0].mxu0 %v2346
      %v2394 = vpop.f32.mrb[0].mxu0
      %v2395 = vadd.f32 0.0, %v2394
      %v2396 = vpop.f32.mrb[0].mxu0
      %v2397 = vpop.f32.mrb[0].mxu0
      %v2398 = vadd.f32 0.0, %v2397
      %v2399 = vpop.f32.mrb[0].mxu0
      %2400 = vmatprep.mubr.bf16.mxu0 0
      %2401 = vmatmul.mubr.bf16.gmra.mrb[0].mxu0 %v2349
      %v2402 = vpop.f32.mrb[0].mxu0
      %v2403 = vadd.f32 0.0, %v2402
      %v2404 = vpop.f32.mrb[0].mxu0
      %v2405 = vpop.f32.mrb[0].mxu0
      %v2406 = vadd.f32 0.0, %v2405
      %v2407 = vpop.f32.mrb[0].mxu0
      %2408 = vmatprep.mubr.bf16.mxu0 0
      %2409 = vmatmul.mubr.bf16.gmra.mrb[0].mxu0 %v2352
      %v2410 = vpop.f32.mrb[0].mxu0
      %v2411 = vadd.f32 0.0, %v2410
      %v2412 = vpop.f32.mrb[0].mxu0
      %v2413 = vpop.f32.mrb[0].mxu0
      %v2414 = vadd.f32 0.0, %v2413
      %v2415 = vpop.f32.mrb[0].mxu0
      %2416 = vmatprep.mubr.bf16.mxu0 0
      %2417 = vmatmul.mubr.bf16.gmra.mrb[0].mxu0 %v2355
      %v2418 = vpop.f32.mrb[0].mxu0
      %v2419 = vadd.f32 0.0, %v2418
      %v2420 = vpop.f32.mrb[0].mxu0
      %v2421 = vpop.f32.mrb[0].mxu0
      %v2422 = vadd.f32 0.0, %v2421
      %v2423 = vpop.f32.mrb[0].mxu0
      %2424 = vdwg.mxu0
      %v2425 = vadd.f32 %v2268, %v2395
      %v2426 = vadd.f32 %v2269, %v2398
      %v2427 = vadd.f32 %v2270, %v2403
      %v2428 = vadd.f32 %v2271, %v2406
      %v2429 = vadd.f32 %v2272, %v2411
      %v2430 = vadd.f32 %v2273, %v2414
      %v2431 = vadd.f32 %v2274, %v2419
      %v2432 = vadd.f32 %v2275, %v2422
      %s2433 = scalar_lea.vmem %s398, 8
      %v2434 = vld [vmem:[%s2433] sm:$0xf]
      %v2435 = vld [vmem:[%s2433 + $0x8] sm:$0xf]
      %v2436 = vld [vmem:[%s2433 + $0x10] sm:$0xf]
      %v2437 = vld [vmem:[%s2433 + $0x18] sm:$0xf]
      %v2438 = vld [vmem:[%s2433 + $0x20] sm:$0xf]
      %v2439 = vld [vmem:[%s2433 + $0x28] sm:$0xf]
      %v2440 = vld [vmem:[%s2433 + $0x30] sm:$0xf]
      %v2441 = vld [vmem:[%s2433 + $0x38] sm:$0xf]
      %v2442 = vld [vmem:[%s3 + $0x30] sm:$0xf]
      %v2451 = vunpack.c.l.b16 %v2434
      %v2452 = vunpack.c.l.b16 %v2435
      %v2453 = vunpack.c.l.b16 %v2436
      %v2454 = vunpack.c.l.b16 %v2437
      %v2455 = vunpack.c.l.b16 %v2438
      %v2456 = vunpack.c.l.b16 %v2439
      %v2457 = vunpack.c.l.b16 %v2440
      %v2458 = vunpack.c.l.b16 %v2441
      %v2459 = vpack.c.b16 %v2452, %v2451
      %v2460 = vpack.c.b16 %v2454, %v2453
      %v2461 = vpack.c.b16 %v2456, %v2455
      %v2462 = vpack.c.b16 %v2458, %v2457
      %v2464 = vsel %vm580, %v2459, 0
      %v2467 = vsel %vm580, %v2460, 0
      %v2470 = vsel %vm580, %v2461, 0
      %v2473 = vsel %vm580, %v2462, 0
      %v2476 = vsel %vm593, %v2442, 0
      %2478 = vmatprep.subr.bf16.mxu0 0
      %2479 = vmatpush1.bf16.msra.mxu0 %v2476
      %2480 = vmatprep.subr.bf16.mxu0 0
      %2481 = vmatpush1.bf16.msra.mxu0 0
      %2482 = vmatprep.subr.bf16.mxu0 0
      %2483 = vmatpush1.bf16.msra.mxu0 0
      %2484 = vmatprep.subr.bf16.mxu0 0
      %2485 = vmatpush1.bf16.msra.mxu0 0
      %2486 = vmatprep.subr.bf16.mxu0 0
      %2487 = vmatpush1.bf16.msra.mxu0 0
      %2488 = vmatprep.subr.bf16.mxu0 0
      %2489 = vmatpush1.bf16.msra.mxu0 0
      %2490 = vmatprep.subr.bf16.mxu0 0
      %2491 = vmatpush1.bf16.msra.mxu0 0
      %2492 = vmatprep.subr.bf16.mxu0 0
      %2493 = vmatpush1.bf16.msra.mxu0 0
      %2494 = vmatprep.subr.bf16.mxu0 0
      %2495 = vmatpush1.bf16.msra.mxu0 0
      %2496 = vmatprep.subr.bf16.mxu0 0
      %2497 = vmatpush1.bf16.msra.mxu0 0
      %2498 = vmatprep.subr.bf16.mxu0 0
      %2499 = vmatpush1.bf16.msra.mxu0 0
      %2500 = vmatprep.subr.bf16.mxu0 0
      %2501 = vmatpush1.bf16.msra.mxu0 0
      %2502 = vmatprep.subr.bf16.mxu0 0
      %2503 = vmatpush1.bf16.msra.mxu0 0
      %2504 = vmatprep.subr.bf16.mxu0 0
      %2505 = vmatpush1.bf16.msra.mxu0 0
      %2506 = vmatprep.subr.bf16.mxu0 0
      %2507 = vmatpush1.bf16.msra.mxu0 0
      %2508 = vmatprep.subr.bf16.mxu0 0
      %2509 = vmatpush1.bf16.msra.mxu0 0
      %2510 = vmatprep.mubr.bf16.mxu0 0
      %2511 = vmatmul.mubr.bf16.gmra.mrb[0].mxu0 %v2464
      %v2512 = vpop.f32.mrb[0].mxu0
      %v2513 = vadd.f32 0.0, %v2512
      %v2514 = vpop.f32.mrb[0].mxu0
      %v2515 = vpop.f32.mrb[0].mxu0
      %v2516 = vadd.f32 0.0, %v2515
      %v2517 = vpop.f32.mrb[0].mxu0
      %2518 = vmatprep.mubr.bf16.mxu0 0
      %2519 = vmatmul.mubr.bf16.gmra.mrb[0].mxu0 %v2467
      %v2520 = vpop.f32.mrb[0].mxu0
      %v2521 = vadd.f32 0.0, %v2520
      %v2522 = vpop.f32.mrb[0].mxu0
      %v2523 = vpop.f32.mrb[0].mxu0
      %v2524 = vadd.f32 0.0, %v2523
      %v2525 = vpop.f32.mrb[0].mxu0
      %2526 = vmatprep.mubr.bf16.mxu0 0
      %2527 = vmatmul.mubr.bf16.gmra.mrb[0].mxu0 %v2470
      %v2528 = vpop.f32.mrb[0].mxu0
      %v2529 = vadd.f32 0.0, %v2528
      %v2530 = vpop.f32.mrb[0].mxu0
      %v2531 = vpop.f32.mrb[0].mxu0
      %v2532 = vadd.f32 0.0, %v2531
      %v2533 = vpop.f32.mrb[0].mxu0
      %2534 = vmatprep.mubr.bf16.mxu0 0
      %2535 = vmatmul.mubr.bf16.gmra.mrb[0].mxu0 %v2473
      %v2536 = vpop.f32.mrb[0].mxu0
      %v2537 = vadd.f32 0.0, %v2536
      %v2538 = vpop.f32.mrb[0].mxu0
      %v2539 = vpop.f32.mrb[0].mxu0
      %v2540 = vadd.f32 0.0, %v2539
      %v2541 = vpop.f32.mrb[0].mxu0
      %2542 = vdwg.mxu0
      %v2543 = vadd.f32 %v2425, %v2513
      %v2544 = vadd.f32 %v2426, %v2516
      %v2545 = vadd.f32 %v2427, %v2521
      %v2546 = vadd.f32 %v2428, %v2524
      %v2547 = vadd.f32 %v2429, %v2529
      %v2548 = vadd.f32 %v2430, %v2532
      %v2549 = vadd.f32 %v2431, %v2537
      %v2550 = vadd.f32 %v2432, %v2540
      %v2551 = vld [vmem:[%s2433] sm:$0xf]
      %v2552 = vld [vmem:[%s2433 + $0x4] sm:$0x1]
      %v2553 = vld [vmem:[%s2433 + $0x8] sm:$0xf]
      %v2554 = vld [vmem:[%s2433 + $0xc] sm:$0x1]
      %v2555 = vld [vmem:[%s2433 + $0x10] sm:$0xf]
      %v2556 = vld [vmem:[%s2433 + $0x14] sm:$0x1]
      %v2557 = vld [vmem:[%s2433 + $0x18] sm:$0xf]
      %v2558 = vld [vmem:[%s2433 + $0x1c] sm:$0x1]
      %v2559 = vld [vmem:[%s2433 + $0x20] sm:$0xf]
      %v2560 = vld [vmem:[%s2433 + $0x24] sm:$0x1]
      %v2561 = vld [vmem:[%s2433 + $0x28] sm:$0xf]
      %v2562 = vld [vmem:[%s2433 + $0x2c] sm:$0x1]
      %v2563 = vld [vmem:[%s2433 + $0x30] sm:$0xf]
      %v2564 = vld [vmem:[%s2433 + $0x34] sm:$0x1]
      %v2565 = vld [vmem:[%s2433 + $0x38] sm:$0xf]
      %v2566 = vld [vmem:[%s2433 + $0x3c] sm:$0x1]
      %v2568 = vshrl.u32 %v2551, 16
      %v2570 = vrot.slane %v2568, 4
      %v2571 = vshll.u32 %v2551, 16
      %v2573 = vrot.slane %v2571, 5
      %v2574 = vor.u32 %v2570, %v2573
      %v2575 = vrot.slane %v2574, 4
      %v2577 = vshll.u32 %v2552, 16
      %v2579 = vrot.slane %v2577, 5
      %v2580 = vsel %vm454, %v2575, %v2579
      %v2582 = vshrl.u32 %v2553, 16
      %v2584 = vrot.slane %v2582, 4
      %v2585 = vshll.u32 %v2553, 16
      %v2587 = vrot.slane %v2585, 5
      %v2588 = vor.u32 %v2584, %v2587
      %v2589 = vrot.slane %v2588, 4
      %v2591 = vshll.u32 %v2554, 16
      %v2593 = vrot.slane %v2591, 5
      %v2594 = vsel %vm454, %v2589, %v2593
      %v2596 = vshrl.u32 %v2555, 16
      %v2598 = vrot.slane %v2596, 4
      %v2599 = vshll.u32 %v2555, 16
      %v2601 = vrot.slane %v2599, 5
      %v2602 = vor.u32 %v2598, %v2601
      %v2603 = vrot.slane %v2602, 4
      %v2605 = vshll.u32 %v2556, 16
      %v2607 = vrot.slane %v2605, 5
      %v2608 = vsel %vm454, %v2603, %v2607
      %v2610 = vshrl.u32 %v2557, 16
      %v2612 = vrot.slane %v2610, 4
      %v2613 = vshll.u32 %v2557, 16
      %v2615 = vrot.slane %v2613, 5
      %v2616 = vor.u32 %v2612, %v2615
      %v2617 = vrot.slane %v2616, 4
      %v2619 = vshll.u32 %v2558, 16
      %v2621 = vrot.slane %v2619, 5
      %v2622 = vsel %vm454, %v2617, %v2621
      %v2624 = vshrl.u32 %v2559, 16
      %v2626 = vrot.slane %v2624, 4
      %v2627 = vshll.u32 %v2559, 16
      %v2629 = vrot.slane %v2627, 5
      %v2630 = vor.u32 %v2626, %v2629
      %v2631 = vrot.slane %v2630, 4
      %v2633 = vshll.u32 %v2560, 16
      %v2635 = vrot.slane %v2633, 5
      %v2636 = vsel %vm454, %v2631, %v2635
      %v2638 = vshrl.u32 %v2561, 16
      %v2640 = vrot.slane %v2638, 4
      %v2641 = vshll.u32 %v2561, 16
      %v2643 = vrot.slane %v2641, 5
      %v2644 = vor.u32 %v2640, %v2643
      %v2645 = vrot.slane %v2644, 4
      %v2647 = vshll.u32 %v2562, 16
      %v2649 = vrot.slane %v2647, 5
      %v2650 = vsel %vm454, %v2645, %v2649
      %v2652 = vshrl.u32 %v2563, 16
      %v2654 = vrot.slane %v2652, 4
      %v2655 = vshll.u32 %v2563, 16
      %v2657 = vrot.slane %v2655, 5
      %v2658 = vor.u32 %v2654, %v2657
      %v2659 = vrot.slane %v2658, 4
      %v2661 = vshll.u32 %v2564, 16
      %v2663 = vrot.slane %v2661, 5
      %v2664 = vsel %vm454, %v2659, %v2663
      %v2666 = vshrl.u32 %v2565, 16
      %v2668 = vrot.slane %v2666, 4
      %v2669 = vshll.u32 %v2565, 16
      %v2671 = vrot.slane %v2669, 5
      %v2672 = vor.u32 %v2668, %v2671
      %v2673 = vrot.slane %v2672, 4
      %v2675 = vshll.u32 %v2566, 16
      %v2677 = vrot.slane %v2675, 5
      %v2678 = vsel %vm454, %v2673, %v2677
      %v2679 = vld [vmem:[%s3 + $0x34] sm:$0xf]
      %v2680 = vunpack.c.l.b16 %v2580
      %v2681 = vunpack.c.l.b16 %v2594
      %v2682 = vunpack.c.l.b16 %v2608
      %v2683 = vunpack.c.l.b16 %v2622
      %v2684 = vunpack.c.l.b16 %v2636
      %v2685 = vunpack.c.l.b16 %v2650
      %v2686 = vunpack.c.l.b16 %v2664
      %v2687 = vunpack.c.l.b16 %v2678
      %v2688 = vpack.c.b16 %v2681, %v2680
      %v2689 = vpack.c.b16 %v2683, %v2682
      %v2690 = vpack.c.b16 %v2685, %v2684
      %v2691 = vpack.c.b16 %v2687, %v2686
      %v2693 = vsel %vm580, %v2688, 0
      %v2696 = vsel %vm580, %v2689, 0
      %v2699 = vsel %vm580, %v2690, 0
      %v2702 = vsel %vm580, %v2691, 0
      %v2705 = vsel %vm593, %v2679, 0
      %2707 = vmatprep.subr.bf16.mxu0 0
      %2708 = vmatpush1.bf16.msra.mxu0 %v2705
      %2709 = vmatprep.subr.bf16.mxu0 0
      %2710 = vmatpush1.bf16.msra.mxu0 0
      %2711 = vmatprep.subr.bf16.mxu0 0
      %2712 = vmatpush1.bf16.msra.mxu0 0
      %2713 = vmatprep.subr.bf16.mxu0 0
      %2714 = vmatpush1.bf16.msra.mxu0 0
      %2715 = vmatprep.subr.bf16.mxu0 0
      %2716 = vmatpush1.bf16.msra.mxu0 0
      %2717 = vmatprep.subr.bf16.mxu0 0
      %2718 = vmatpush1.bf16.msra.mxu0 0
      %2719 = vmatprep.subr.bf16.mxu0 0
      %2720 = vmatpush1.bf16.msra.mxu0 0
      %2721 = vmatprep.subr.bf16.mxu0 0
      %2722 = vmatpush1.bf16.msra.mxu0 0
      %2723 = vmatprep.subr.bf16.mxu0 0
      %2724 = vmatpush1.bf16.msra.mxu0 0
      %2725 = vmatprep.subr.bf16.mxu0 0
      %2726 = vmatpush1.bf16.msra.mxu0 0
      %2727 = vmatprep.subr.bf16.mxu0 0
      %2728 = vmatpush1.bf16.msra.mxu0 0
      %2729 = vmatprep.subr.bf16.mxu0 0
      %2730 = vmatpush1.bf16.msra.mxu0 0
      %2731 = vmatprep.subr.bf16.mxu0 0
      %2732 = vmatpush1.bf16.msra.mxu0 0
      %2733 = vmatprep.subr.bf16.mxu0 0
      %2734 = vmatpush1.bf16.msra.mxu0 0
      %2735 = vmatprep.subr.bf16.mxu0 0
      %2736 = vmatpush1.bf16.msra.mxu0 0
      %2737 = vmatprep.subr.bf16.mxu0 0
      %2738 = vmatpush1.bf16.msra.mxu0 0
      %2739 = vmatprep.mubr.bf16.mxu0 0
      %2740 = vmatmul.mubr.bf16.gmra.mrb[0].mxu0 %v2693
      %v2741 = vpop.f32.mrb[0].mxu0
      %v2742 = vadd.f32 0.0, %v2741
      %v2743 = vpop.f32.mrb[0].mxu0
      %v2744 = vpop.f32.mrb[0].mxu0
      %v2745 = vadd.f32 0.0, %v2744
      %v2746 = vpop.f32.mrb[0].mxu0
      %2747 = vmatprep.mubr.bf16.mxu0 0
      %2748 = vmatmul.mubr.bf16.gmra.mrb[0].mxu0 %v2696
      %v2749 = vpop.f32.mrb[0].mxu0
      %v2750 = vadd.f32 0.0, %v2749
      %v2751 = vpop.f32.mrb[0].mxu0
      %v2752 = vpop.f32.mrb[0].mxu0
      %v2753 = vadd.f32 0.0, %v2752
      %v2754 = vpop.f32.mrb[0].mxu0
      %2755 = vmatprep.mubr.bf16.mxu0 0
      %2756 = vmatmul.mubr.bf16.gmra.mrb[0].mxu0 %v2699
      %v2757 = vpop.f32.mrb[0].mxu0
      %v2758 = vadd.f32 0.0, %v2757
      %v2759 = vpop.f32.mrb[0].mxu0
      %v2760 = vpop.f32.mrb[0].mxu0
      %v2761 = vadd.f32 0.0, %v2760
      %v2762 = vpop.f32.mrb[0].mxu0
      %2763 = vmatprep.mubr.bf16.mxu0 0
      %2764 = vmatmul.mubr.bf16.gmra.mrb[0].mxu0 %v2702
      %v2765 = vpop.f32.mrb[0].mxu0
      %v2766 = vadd.f32 0.0, %v2765
      %v2767 = vpop.f32.mrb[0].mxu0
      %v2768 = vpop.f32.mrb[0].mxu0
      %v2769 = vadd.f32 0.0, %v2768
      %v2770 = vpop.f32.mrb[0].mxu0
      %2771 = vdwg.mxu0
      %v2772 = vadd.f32 %v2543, %v2742
      %v2773 = vadd.f32 %v2544, %v2745
      %v2774 = vadd.f32 %v2545, %v2750
      %v2775 = vadd.f32 %v2546, %v2753
      %v2776 = vadd.f32 %v2547, %v2758
      %v2777 = vadd.f32 %v2548, %v2761
      %v2778 = vadd.f32 %v2549, %v2766
      %v2779 = vadd.f32 %v2550, %v2769
      %v2780 = vld [vmem:[%s2433] sm:$0xe]
      %v2781 = vld [vmem:[%s2433 + $0x8] sm:$0xe]
      %v2782 = vld [vmem:[%s2433 + $0x10] sm:$0xe]
      %v2783 = vld [vmem:[%s2433 + $0x18] sm:$0xe]
      %v2784 = vld [vmem:[%s2433 + $0x20] sm:$0xe]
      %v2785 = vld [vmem:[%s2433 + $0x28] sm:$0xe]
      %v2786 = vld [vmem:[%s2433 + $0x30] sm:$0xe]
      %v2787 = vld [vmem:[%s2433 + $0x38] sm:$0xe]
      %v2804 = vrot.slane %v2780, 5
      %v2805 = vrot.slane %v2804, 4
      %v2806 = vrot.slane %v2552, 5
      %v2807 = vsel %vm788, %v2805, %v2806
      %v2808 = vrot.slane %v2781, 5
      %v2809 = vrot.slane %v2808, 4
      %v2810 = vrot.slane %v2554, 5
      %v2811 = vsel %vm788, %v2809, %v2810
      %v2812 = vrot.slane %v2782, 5
      %v2813 = vrot.slane %v2812, 4
      %v2814 = vrot.slane %v2556, 5
      %v2815 = vsel %vm788, %v2813, %v2814
      %v2816 = vrot.slane %v2783, 5
      %v2817 = vrot.slane %v2816, 4
      %v2818 = vrot.slane %v2558, 5
      %v2819 = vsel %vm788, %v2817, %v2818
      %v2820 = vrot.slane %v2784, 5
      %v2821 = vrot.slane %v2820, 4
      %v2822 = vrot.slane %v2560, 5
      %v2823 = vsel %vm788, %v2821, %v2822
      %v2824 = vrot.slane %v2785, 5
      %v2825 = vrot.slane %v2824, 4
      %v2826 = vrot.slane %v2562, 5
      %v2827 = vsel %vm788, %v2825, %v2826
      %v2828 = vrot.slane %v2786, 5
      %v2829 = vrot.slane %v2828, 4
      %v2830 = vrot.slane %v2564, 5
      %v2831 = vsel %vm788, %v2829, %v2830
      %v2832 = vrot.slane %v2787, 5
      %v2833 = vrot.slane %v2832, 4
      %v2834 = vrot.slane %v2566, 5
      %v2835 = vsel %vm788, %v2833, %v2834
      %v2836 = vld [vmem:[%s3 + $0x38] sm:$0xf]
      %v2837 = vunpack.c.l.b16 %v2807
      %v2838 = vunpack.c.l.b16 %v2811
      %v2839 = vunpack.c.l.b16 %v2815
      %v2840 = vunpack.c.l.b16 %v2819
      %v2841 = vunpack.c.l.b16 %v2823
      %v2842 = vunpack.c.l.b16 %v2827
      %v2843 = vunpack.c.l.b16 %v2831
      %v2844 = vunpack.c.l.b16 %v2835
      %v2845 = vpack.c.b16 %v2838, %v2837
      %v2846 = vpack.c.b16 %v2840, %v2839
      %v2847 = vpack.c.b16 %v2842, %v2841
      %v2848 = vpack.c.b16 %v2844, %v2843
      %v2850 = vsel %vm580, %v2845, 0
      %v2853 = vsel %vm580, %v2846, 0
      %v2856 = vsel %vm580, %v2847, 0
      %v2859 = vsel %vm580, %v2848, 0
      %v2862 = vsel %vm593, %v2836, 0
      %2864 = vmatprep.subr.bf16.mxu0 0
      %2865 = vmatpush1.bf16.msra.mxu0 %v2862
      %2866 = vmatprep.subr.bf16.mxu0 0
      %2867 = vmatpush1.bf16.msra.mxu0 0
      %2868 = vmatprep.subr.bf16.mxu0 0
      %2869 = vmatpush1.bf16.msra.mxu0 0
      %2870 = vmatprep.subr.bf16.mxu0 0
      %2871 = vmatpush1.bf16.msra.mxu0 0
      %2872 = vmatprep.subr.bf16.mxu0 0
      %2873 = vmatpush1.bf16.msra.mxu0 0
      %2874 = vmatprep.subr.bf16.mxu0 0
      %2875 = vmatpush1.bf16.msra.mxu0 0
      %2876 = vmatprep.subr.bf16.mxu0 0
      %2877 = vmatpush1.bf16.msra.mxu0 0
      %2878 = vmatprep.subr.bf16.mxu0 0
      %2879 = vmatpush1.bf16.msra.mxu0 0
      %2880 = vmatprep.subr.bf16.mxu0 0
      %2881 = vmatpush1.bf16.msra.mxu0 0
      %2882 = vmatprep.subr.bf16.mxu0 0
      %2883 = vmatpush1.bf16.msra.mxu0 0
      %2884 = vmatprep.subr.bf16.mxu0 0
      %2885 = vmatpush1.bf16.msra.mxu0 0
      %2886 = vmatprep.subr.bf16.mxu0 0
      %2887 = vmatpush1.bf16.msra.mxu0 0
      %2888 = vmatprep.subr.bf16.mxu0 0
      %2889 = vmatpush1.bf16.msra.mxu0 0
      %2890 = vmatprep.subr.bf16.mxu0 0
      %2891 = vmatpush1.bf16.msra.mxu0 0
      %2892 = vmatprep.subr.bf16.mxu0 0
      %2893 = vmatpush1.bf16.msra.mxu0 0
      %2894 = vmatprep.subr.bf16.mxu0 0
      %2895 = vmatpush1.bf16.msra.mxu0 0
      %2896 = vmatprep.mubr.bf16.mxu0 0
      %2897 = vmatmul.mubr.bf16.gmra.mrb[0].mxu0 %v2850
      %v2898 = vpop.f32.mrb[0].mxu0
      %v2899 = vadd.f32 0.0, %v2898
      %v2900 = vpop.f32.mrb[0].mxu0
      %v2901 = vpop.f32.mrb[0].mxu0
      %v2902 = vadd.f32 0.0, %v2901
      %v2903 = vpop.f32.mrb[0].mxu0
      %2904 = vmatprep.mubr.bf16.mxu0 0
      %2905 = vmatmul.mubr.bf16.gmra.mrb[0].mxu0 %v2853
      %v2906 = vpop.f32.mrb[0].mxu0
      %v2907 = vadd.f32 0.0, %v2906
      %v2908 = vpop.f32.mrb[0].mxu0
      %v2909 = vpop.f32.mrb[0].mxu0
      %v2910 = vadd.f32 0.0, %v2909
      %v2911 = vpop.f32.mrb[0].mxu0
      %2912 = vmatprep.mubr.bf16.mxu0 0
      %2913 = vmatmul.mubr.bf16.gmra.mrb[0].mxu0 %v2856
      %v2914 = vpop.f32.mrb[0].mxu0
      %v2915 = vadd.f32 0.0, %v2914
      %v2916 = vpop.f32.mrb[0].mxu0
      %v2917 = vpop.f32.mrb[0].mxu0
      %v2918 = vadd.f32 0.0, %v2917
      %v2919 = vpop.f32.mrb[0].mxu0
      %2920 = vmatprep.mubr.bf16.mxu0 0
      %2921 = vmatmul.mubr.bf16.gmra.mrb[0].mxu0 %v2859
      %v2922 = vpop.f32.mrb[0].mxu0
      %v2923 = vadd.f32 0.0, %v2922
      %v2924 = vpop.f32.mrb[0].mxu0
      %v2925 = vpop.f32.mrb[0].mxu0
      %v2926 = vadd.f32 0.0, %v2925
      %v2927 = vpop.f32.mrb[0].mxu0
      %2928 = vdwg.mxu0
      %v2929 = vadd.f32 %v2772, %v2899
      %v2930 = vadd.f32 %v2773, %v2902
      %v2931 = vadd.f32 %v2774, %v2907
      %v2932 = vadd.f32 %v2775, %v2910
      %v2933 = vadd.f32 %v2776, %v2915
      %v2934 = vadd.f32 %v2777, %v2918
      %v2935 = vadd.f32 %v2778, %v2923
      %v2936 = vadd.f32 %v2779, %v2926
      %s2937 = scalar_lea.vmem %s398, 16
      %v2938 = vld [vmem:[%s2937] sm:$0xf]
      %v2939 = vld [vmem:[%s2937 + $0x8] sm:$0xf]
      %v2940 = vld [vmem:[%s2937 + $0x10] sm:$0xf]
      %v2941 = vld [vmem:[%s2937 + $0x18] sm:$0xf]
      %v2942 = vld [vmem:[%s2937 + $0x20] sm:$0xf]
      %v2943 = vld [vmem:[%s2937 + $0x28] sm:$0xf]
      %v2944 = vld [vmem:[%s2937 + $0x30] sm:$0xf]
      %v2945 = vld [vmem:[%s2937 + $0x38] sm:$0xf]
      %v2946 = vld [vmem:[%s3 + $0x3c] sm:$0xf]
      %v2955 = vunpack.c.l.b16 %v2938
      %v2956 = vunpack.c.l.b16 %v2939
      %v2957 = vunpack.c.l.b16 %v2940
      %v2958 = vunpack.c.l.b16 %v2941
      %v2959 = vunpack.c.l.b16 %v2942
      %v2960 = vunpack.c.l.b16 %v2943
      %v2961 = vunpack.c.l.b16 %v2944
      %v2962 = vunpack.c.l.b16 %v2945
      %v2963 = vpack.c.b16 %v2956, %v2955
      %v2964 = vpack.c.b16 %v2958, %v2957
      %v2965 = vpack.c.b16 %v2960, %v2959
      %v2966 = vpack.c.b16 %v2962, %v2961
      %v2968 = vsel %vm580, %v2963, 0
      %v2971 = vsel %vm580, %v2964, 0
      %v2974 = vsel %vm580, %v2965, 0
      %v2977 = vsel %vm580, %v2966, 0
      %v2980 = vsel %vm593, %v2946, 0
      %2982 = vmatprep.subr.bf16.mxu0 0
      %2983 = vmatpush1.bf16.msra.mxu0 %v2980
      %2984 = vmatprep.subr.bf16.mxu0 0
      %2985 = vmatpush1.bf16.msra.mxu0 0
      %2986 = vmatprep.subr.bf16.mxu0 0
      %2987 = vmatpush1.bf16.msra.mxu0 0
      %2988 = vmatprep.subr.bf16.mxu0 0
      %2989 = vmatpush1.bf16.msra.mxu0 0
      %2990 = vmatprep.subr.bf16.mxu0 0
      %2991 = vmatpush1.bf16.msra.mxu0 0
      %2992 = vmatprep.subr.bf16.mxu0 0
      %2993 = vmatpush1.bf16.msra.mxu0 0
      %2994 = vmatprep.subr.bf16.mxu0 0
      %2995 = vmatpush1.bf16.msra.mxu0 0
      %2996 = vmatprep.subr.bf16.mxu0 0
      %2997 = vmatpush1.bf16.msra.mxu0 0
      %2998 = vmatprep.subr.bf16.mxu0 0
      %2999 = vmatpush1.bf16.msra.mxu0 0
      %3000 = vmatprep.subr.bf16.mxu0 0
      %3001 = vmatpush1.bf16.msra.mxu0 0
      %3002 = vmatprep.subr.bf16.mxu0 0
      %3003 = vmatpush1.bf16.msra.mxu0 0
      %3004 = vmatprep.subr.bf16.mxu0 0
      %3005 = vmatpush1.bf16.msra.mxu0 0
      %3006 = vmatprep.subr.bf16.mxu0 0
      %3007 = vmatpush1.bf16.msra.mxu0 0
      %3008 = vmatprep.subr.bf16.mxu0 0
      %3009 = vmatpush1.bf16.msra.mxu0 0
      %3010 = vmatprep.subr.bf16.mxu0 0
      %3011 = vmatpush1.bf16.msra.mxu0 0
      %3012 = vmatprep.subr.bf16.mxu0 0
      %3013 = vmatpush1.bf16.msra.mxu0 0
      %3014 = vmatprep.mubr.bf16.mxu0 0
      %3015 = vmatmul.mubr.bf16.gmra.mrb[0].mxu0 %v2968
      %v3016 = vpop.f32.mrb[0].mxu0
      %v3017 = vadd.f32 0.0, %v3016
      %v3018 = vpop.f32.mrb[0].mxu0
      %v3019 = vpop.f32.mrb[0].mxu0
      %v3020 = vadd.f32 0.0, %v3019
      %v3021 = vpop.f32.mrb[0].mxu0
      %3022 = vmatprep.mubr.bf16.mxu0 0
      %3023 = vmatmul.mubr.bf16.gmra.mrb[0].mxu0 %v2971
      %v3024 = vpop.f32.mrb[0].mxu0
      %v3025 = vadd.f32 0.0, %v3024
      %v3026 = vpop.f32.mrb[0].mxu0
      %v3027 = vpop.f32.mrb[0].mxu0
      %v3028 = vadd.f32 0.0, %v3027
      %v3029 = vpop.f32.mrb[0].mxu0
      %3030 = vmatprep.mubr.bf16.mxu0 0
      %3031 = vmatmul.mubr.bf16.gmra.mrb[0].mxu0 %v2974
      %v3032 = vpop.f32.mrb[0].mxu0
      %v3033 = vadd.f32 0.0, %v3032
      %v3034 = vpop.f32.mrb[0].mxu0
      %v3035 = vpop.f32.mrb[0].mxu0
      %v3036 = vadd.f32 0.0, %v3035
      %v3037 = vpop.f32.mrb[0].mxu0
      %3038 = vmatprep.mubr.bf16.mxu0 0
      %3039 = vmatmul.mubr.bf16.gmra.mrb[0].mxu0 %v2977
      %v3040 = vpop.f32.mrb[0].mxu0
      %v3041 = vadd.f32 0.0, %v3040
      %v3042 = vpop.f32.mrb[0].mxu0
      %v3043 = vpop.f32.mrb[0].mxu0
      %v3044 = vadd.f32 0.0, %v3043
      %v3045 = vpop.f32.mrb[0].mxu0
      %3046 = vdwg.mxu0
      %v3047 = vadd.f32 %v2929, %v3017
      %v3048 = vadd.f32 %v2930, %v3020
      %v3049 = vadd.f32 %v2931, %v3025
      %v3050 = vadd.f32 %v2932, %v3028
      %v3051 = vadd.f32 %v2933, %v3033
      %v3052 = vadd.f32 %v2934, %v3036
      %v3053 = vadd.f32 %v2935, %v3041
      %v3054 = vadd.f32 %v2936, %v3044
      %v3055 = vld [vmem:[%s2937] sm:$0xf]
      %v3056 = vld [vmem:[%s2937 + $0x4] sm:$0x1]
      %v3057 = vld [vmem:[%s2937 + $0x8] sm:$0xf]
      %v3058 = vld [vmem:[%s2937 + $0xc] sm:$0x1]
      %v3059 = vld [vmem:[%s2937 + $0x10] sm:$0xf]
      %v3060 = vld [vmem:[%s2937 + $0x14] sm:$0x1]
      %v3061 = vld [vmem:[%s2937 + $0x18] sm:$0xf]
      %v3062 = vld [vmem:[%s2937 + $0x1c] sm:$0x1]
      %v3063 = vld [vmem:[%s2937 + $0x20] sm:$0xf]
      %v3064 = vld [vmem:[%s2937 + $0x24] sm:$0x1]
      %v3065 = vld [vmem:[%s2937 + $0x28] sm:$0xf]
      %v3066 = vld [vmem:[%s2937 + $0x2c] sm:$0x1]
      %v3067 = vld [vmem:[%s2937 + $0x30] sm:$0xf]
      %v3068 = vld [vmem:[%s2937 + $0x34] sm:$0x1]
      %v3069 = vld [vmem:[%s2937 + $0x38] sm:$0xf]
      %v3070 = vld [vmem:[%s2937 + $0x3c] sm:$0x1]
      %v3072 = vshrl.u32 %v3055, 16
      %v3074 = vrot.slane %v3072, 4
      %v3075 = vshll.u32 %v3055, 16
      %v3077 = vrot.slane %v3075, 5
      %v3078 = vor.u32 %v3074, %v3077
      %v3079 = vrot.slane %v3078, 4
      %v3081 = vshll.u32 %v3056, 16
      %v3083 = vrot.slane %v3081, 5
      %v3084 = vsel %vm454, %v3079, %v3083
      %v3086 = vshrl.u32 %v3057, 16
      %v3088 = vrot.slane %v3086, 4
      %v3089 = vshll.u32 %v3057, 16
      %v3091 = vrot.slane %v3089, 5
      %v3092 = vor.u32 %v3088, %v3091
      %v3093 = vrot.slane %v3092, 4
      %v3095 = vshll.u32 %v3058, 16
      %v3097 = vrot.slane %v3095, 5
      %v3098 = vsel %vm454, %v3093, %v3097
      %v3100 = vshrl.u32 %v3059, 16
      %v3102 = vrot.slane %v3100, 4
      %v3103 = vshll.u32 %v3059, 16
      %v3105 = vrot.slane %v3103, 5
      %v3106 = vor.u32 %v3102, %v3105
      %v3107 = vrot.slane %v3106, 4
      %v3109 = vshll.u32 %v3060, 16
      %v3111 = vrot.slane %v3109, 5
      %v3112 = vsel %vm454, %v3107, %v3111
      %v3114 = vshrl.u32 %v3061, 16
      %v3116 = vrot.slane %v3114, 4
      %v3117 = vshll.u32 %v3061, 16
      %v3119 = vrot.slane %v3117, 5
      %v3120 = vor.u32 %v3116, %v3119
      %v3121 = vrot.slane %v3120, 4
      %v3123 = vshll.u32 %v3062, 16
      %v3125 = vrot.slane %v3123, 5
      %v3126 = vsel %vm454, %v3121, %v3125
      %v3128 = vshrl.u32 %v3063, 16
      %v3130 = vrot.slane %v3128, 4
      %v3131 = vshll.u32 %v3063, 16
      %v3133 = vrot.slane %v3131, 5
      %v3134 = vor.u32 %v3130, %v3133
      %v3135 = vrot.slane %v3134, 4
      %v3137 = vshll.u32 %v3064, 16
      %v3139 = vrot.slane %v3137, 5
      %v3140 = vsel %vm454, %v3135, %v3139
      %v3142 = vshrl.u32 %v3065, 16
      %v3144 = vrot.slane %v3142, 4
      %v3145 = vshll.u32 %v3065, 16
      %v3147 = vrot.slane %v3145, 5
      %v3148 = vor.u32 %v3144, %v3147
      %v3149 = vrot.slane %v3148, 4
      %v3151 = vshll.u32 %v3066, 16
      %v3153 = vrot.slane %v3151, 5
      %v3154 = vsel %vm454, %v3149, %v3153
      %v3156 = vshrl.u32 %v3067, 16
      %v3158 = vrot.slane %v3156, 4
      %v3159 = vshll.u32 %v3067, 16
      %v3161 = vrot.slane %v3159, 5
      %v3162 = vor.u32 %v3158, %v3161
      %v3163 = vrot.slane %v3162, 4
      %v3165 = vshll.u32 %v3068, 16
      %v3167 = vrot.slane %v3165, 5
      %v3168 = vsel %vm454, %v3163, %v3167
      %v3170 = vshrl.u32 %v3069, 16
      %v3172 = vrot.slane %v3170, 4
      %v3173 = vshll.u32 %v3069, 16
      %v3175 = vrot.slane %v3173, 5
      %v3176 = vor.u32 %v3172, %v3175
      %v3177 = vrot.slane %v3176, 4
      %v3179 = vshll.u32 %v3070, 16
      %v3181 = vrot.slane %v3179, 5
      %v3182 = vsel %vm454, %v3177, %v3181
      %v3183 = vld [vmem:[%s3 + $0x40] sm:$0xf]
      %v3184 = vunpack.c.l.b16 %v3084
      %v3185 = vunpack.c.l.b16 %v3098
      %v3186 = vunpack.c.l.b16 %v3112
      %v3187 = vunpack.c.l.b16 %v3126
      %v3188 = vunpack.c.l.b16 %v3140
      %v3189 = vunpack.c.l.b16 %v3154
      %v3190 = vunpack.c.l.b16 %v3168
      %v3191 = vunpack.c.l.b16 %v3182
      %v3192 = vpack.c.b16 %v3185, %v3184
      %v3193 = vpack.c.b16 %v3187, %v3186
      %v3194 = vpack.c.b16 %v3189, %v3188
      %v3195 = vpack.c.b16 %v3191, %v3190
      %v3197 = vsel %vm580, %v3192, 0
      %v3200 = vsel %vm580, %v3193, 0
      %v3203 = vsel %vm580, %v3194, 0
      %v3206 = vsel %vm580, %v3195, 0
      %v3209 = vsel %vm593, %v3183, 0
      %3211 = vmatprep.subr.bf16.mxu0 0
      %3212 = vmatpush1.bf16.msra.mxu0 %v3209
      %3213 = vmatprep.subr.bf16.mxu0 0
      %3214 = vmatpush1.bf16.msra.mxu0 0
      %3215 = vmatprep.subr.bf16.mxu0 0
      %3216 = vmatpush1.bf16.msra.mxu0 0
      %3217 = vmatprep.subr.bf16.mxu0 0
      %3218 = vmatpush1.bf16.msra.mxu0 0
      %3219 = vmatprep.subr.bf16.mxu0 0
      %3220 = vmatpush1.bf16.msra.mxu0 0
      %3221 = vmatprep.subr.bf16.mxu0 0
      %3222 = vmatpush1.bf16.msra.mxu0 0
      %3223 = vmatprep.subr.bf16.mxu0 0
      %3224 = vmatpush1.bf16.msra.mxu0 0
      %3225 = vmatprep.subr.bf16.mxu0 0
      %3226 = vmatpush1.bf16.msra.mxu0 0
      %3227 = vmatprep.subr.bf16.mxu0 0
      %3228 = vmatpush1.bf16.msra.mxu0 0
      %3229 = vmatprep.subr.bf16.mxu0 0
      %3230 = vmatpush1.bf16.msra.mxu0 0
      %3231 = vmatprep.subr.bf16.mxu0 0
      %3232 = vmatpush1.bf16.msra.mxu0 0
      %3233 = vmatprep.subr.bf16.mxu0 0
      %3234 = vmatpush1.bf16.msra.mxu0 0
      %3235 = vmatprep.subr.bf16.mxu0 0
      %3236 = vmatpush1.bf16.msra.mxu0 0
      %3237 = vmatprep.subr.bf16.mxu0 0
      %3238 = vmatpush1.bf16.msra.mxu0 0
      %3239 = vmatprep.subr.bf16.mxu0 0
      %3240 = vmatpush1.bf16.msra.mxu0 0
      %3241 = vmatprep.subr.bf16.mxu0 0
      %3242 = vmatpush1.bf16.msra.mxu0 0
      %3243 = vmatprep.mubr.bf16.mxu0 0
      %3244 = vmatmul.mubr.bf16.gmra.mrb[0].mxu0 %v3197
      %v3245 = vpop.f32.mrb[0].mxu0
      %v3246 = vadd.f32 0.0, %v3245
      %v3247 = vpop.f32.mrb[0].mxu0
      %v3248 = vpop.f32.mrb[0].mxu0
      %v3249 = vadd.f32 0.0, %v3248
      %v3250 = vpop.f32.mrb[0].mxu0
      %3251 = vmatprep.mubr.bf16.mxu0 0
      %3252 = vmatmul.mubr.bf16.gmra.mrb[0].mxu0 %v3200
      %v3253 = vpop.f32.mrb[0].mxu0
      %v3254 = vadd.f32 0.0, %v3253
      %v3255 = vpop.f32.mrb[0].mxu0
      %v3256 = vpop.f32.mrb[0].mxu0
      %v3257 = vadd.f32 0.0, %v3256
      %v3258 = vpop.f32.mrb[0].mxu0
      %3259 = vmatprep.mubr.bf16.mxu0 0
      %3260 = vmatmul.mubr.bf16.gmra.mrb[0].mxu0 %v3203
      %v3261 = vpop.f32.mrb[0].mxu0
      %v3262 = vadd.f32 0.0, %v3261
      %v3263 = vpop.f32.mrb[0].mxu0
      %v3264 = vpop.f32.mrb[0].mxu0
      %v3265 = vadd.f32 0.0, %v3264
      %v3266 = vpop.f32.mrb[0].mxu0
      %3267 = vmatprep.mubr.bf16.mxu0 0
      %3268 = vmatmul.mubr.bf16.gmra.mrb[0].mxu0 %v3206
      %v3269 = vpop.f32.mrb[0].mxu0
      %v3270 = vadd.f32 0.0, %v3269
      %v3271 = vpop.f32.mrb[0].mxu0
      %v3272 = vpop.f32.mrb[0].mxu0
      %v3273 = vadd.f32 0.0, %v3272
      %v3274 = vpop.f32.mrb[0].mxu0
      %3275 = vdwg.mxu0
      %v3276 = vadd.f32 %v3047, %v3246
      %v3277 = vadd.f32 %v3048, %v3249
      %v3278 = vadd.f32 %v3049, %v3254
      %v3279 = vadd.f32 %v3050, %v3257
      %v3280 = vadd.f32 %v3051, %v3262
      %v3281 = vadd.f32 %v3052, %v3265
      %v3282 = vadd.f32 %v3053, %v3270
      %v3283 = vadd.f32 %v3054, %v3273
      %v3284 = vld [vmem:[%s2937] sm:$0xe]
      %v3285 = vld [vmem:[%s2937 + $0x8] sm:$0xe]
      %v3286 = vld [vmem:[%s2937 + $0x10] sm:$0xe]
      %v3287 = vld [vmem:[%s2937 + $0x18] sm:$0xe]
      %v3288 = vld [vmem:[%s2937 + $0x20] sm:$0xe]
      %v3289 = vld [vmem:[%s2937 + $0x28] sm:$0xe]
      %v3290 = vld [vmem:[%s2937 + $0x30] sm:$0xe]
      %v3291 = vld [vmem:[%s2937 + $0x38] sm:$0xe]
      %v3308 = vrot.slane %v3284, 5
      %v3309 = vrot.slane %v3308, 4
      %v3310 = vrot.slane %v3056, 5
      %v3311 = vsel %vm788, %v3309, %v3310
      %v3312 = vrot.slane %v3285, 5
      %v3313 = vrot.slane %v3312, 4
      %v3314 = vrot.slane %v3058, 5
      %v3315 = vsel %vm788, %v3313, %v3314
      %v3316 = vrot.slane %v3286, 5
      %v3317 = vrot.slane %v3316, 4
      %v3318 = vrot.slane %v3060, 5
      %v3319 = vsel %vm788, %v3317, %v3318
      %v3320 = vrot.slane %v3287, 5
      %v3321 = vrot.slane %v3320, 4
      %v3322 = vrot.slane %v3062, 5
      %v3323 = vsel %vm788, %v3321, %v3322
      %v3324 = vrot.slane %v3288, 5
      %v3325 = vrot.slane %v3324, 4
      %v3326 = vrot.slane %v3064, 5
      %v3327 = vsel %vm788, %v3325, %v3326
      %v3328 = vrot.slane %v3289, 5
      %v3329 = vrot.slane %v3328, 4
      %v3330 = vrot.slane %v3066, 5
      %v3331 = vsel %vm788, %v3329, %v3330
      %v3332 = vrot.slane %v3290, 5
      %v3333 = vrot.slane %v3332, 4
      %v3334 = vrot.slane %v3068, 5
      %v3335 = vsel %vm788, %v3333, %v3334
      %v3336 = vrot.slane %v3291, 5
      %v3337 = vrot.slane %v3336, 4
      %v3338 = vrot.slane %v3070, 5
      %v3339 = vsel %vm788, %v3337, %v3338
      %v3340 = vld [vmem:[%s3 + $0x44] sm:$0xf]
      %v3341 = vunpack.c.l.b16 %v3311
      %v3342 = vunpack.c.l.b16 %v3315
      %v3343 = vunpack.c.l.b16 %v3319
      %v3344 = vunpack.c.l.b16 %v3323
      %v3345 = vunpack.c.l.b16 %v3327
      %v3346 = vunpack.c.l.b16 %v3331
      %v3347 = vunpack.c.l.b16 %v3335
      %v3348 = vunpack.c.l.b16 %v3339
      %v3349 = vpack.c.b16 %v3342, %v3341
      %v3350 = vpack.c.b16 %v3344, %v3343
      %v3351 = vpack.c.b16 %v3346, %v3345
      %v3352 = vpack.c.b16 %v3348, %v3347
      %v3354 = vsel %vm580, %v3349, 0
      %v3357 = vsel %vm580, %v3350, 0
      %v3360 = vsel %vm580, %v3351, 0
      %v3363 = vsel %vm580, %v3352, 0
      %v3366 = vsel %vm593, %v3340, 0
      %3368 = vmatprep.subr.bf16.mxu0 0
      %3369 = vmatpush1.bf16.msra.mxu0 %v3366
      %3370 = vmatprep.subr.bf16.mxu0 0
      %3371 = vmatpush1.bf16.msra.mxu0 0
      %3372 = vmatprep.subr.bf16.mxu0 0
      %3373 = vmatpush1.bf16.msra.mxu0 0
      %3374 = vmatprep.subr.bf16.mxu0 0
      %3375 = vmatpush1.bf16.msra.mxu0 0
      %3376 = vmatprep.subr.bf16.mxu0 0
      %3377 = vmatpush1.bf16.msra.mxu0 0
      %3378 = vmatprep.subr.bf16.mxu0 0
      %3379 = vmatpush1.bf16.msra.mxu0 0
      %3380 = vmatprep.subr.bf16.mxu0 0
      %3381 = vmatpush1.bf16.msra.mxu0 0
      %3382 = vmatprep.subr.bf16.mxu0 0
      %3383 = vmatpush1.bf16.msra.mxu0 0
      %3384 = vmatprep.subr.bf16.mxu0 0
      %3385 = vmatpush1.bf16.msra.mxu0 0
      %3386 = vmatprep.subr.bf16.mxu0 0
      %3387 = vmatpush1.bf16.msra.mxu0 0
      %3388 = vmatprep.subr.bf16.mxu0 0
      %3389 = vmatpush1.bf16.msra.mxu0 0
      %3390 = vmatprep.subr.bf16.mxu0 0
      %3391 = vmatpush1.bf16.msra.mxu0 0
      %3392 = vmatprep.subr.bf16.mxu0 0
      %3393 = vmatpush1.bf16.msra.mxu0 0
      %3394 = vmatprep.subr.bf16.mxu0 0
      %3395 = vmatpush1.bf16.msra.mxu0 0
      %3396 = vmatprep.subr.bf16.mxu0 0
      %3397 = vmatpush1.bf16.msra.mxu0 0
      %3398 = vmatprep.subr.bf16.mxu0 0
      %3399 = vmatpush1.bf16.msra.mxu0 0
      %3400 = vmatprep.mubr.bf16.mxu0 0
      %3401 = vmatmul.mubr.bf16.gmra.mrb[0].mxu0 %v3354
      %v3402 = vpop.f32.mrb[0].mxu0
      %v3403 = vadd.f32 0.0, %v3402
      %v3404 = vpop.f32.mrb[0].mxu0
      %v3405 = vpop.f32.mrb[0].mxu0
      %v3406 = vadd.f32 0.0, %v3405
      %v3407 = vpop.f32.mrb[0].mxu0
      %3408 = vmatprep.mubr.bf16.mxu0 0
      %3409 = vmatmul.mubr.bf16.gmra.mrb[0].mxu0 %v3357
      %v3410 = vpop.f32.mrb[0].mxu0
      %v3411 = vadd.f32 0.0, %v3410
      %v3412 = vpop.f32.mrb[0].mxu0
      %v3413 = vpop.f32.mrb[0].mxu0
      %v3414 = vadd.f32 0.0, %v3413
      %v3415 = vpop.f32.mrb[0].mxu0
      %3416 = vmatprep.mubr.bf16.mxu0 0
      %3417 = vmatmul.mubr.bf16.gmra.mrb[0].mxu0 %v3360
      %v3418 = vpop.f32.mrb[0].mxu0
      %v3419 = vadd.f32 0.0, %v3418
      %v3420 = vpop.f32.mrb[0].mxu0
      %v3421 = vpop.f32.mrb[0].mxu0
      %v3422 = vadd.f32 0.0, %v3421
      %v3423 = vpop.f32.mrb[0].mxu0
      %3424 = vmatprep.mubr.bf16.mxu0 0
      %3425 = vmatmul.mubr.bf16.gmra.mrb[0].mxu0 %v3363
      %v3426 = vpop.f32.mrb[0].mxu0
      %v3427 = vadd.f32 0.0, %v3426
      %v3428 = vpop.f32.mrb[0].mxu0
      %v3429 = vpop.f32.mrb[0].mxu0
      %v3430 = vadd.f32 0.0, %v3429
      %v3431 = vpop.f32.mrb[0].mxu0
      %3432 = vdwg.mxu0
      %v3433 = vadd.f32 %v3276, %v3403
      %v3434 = vadd.f32 %v3277, %v3406
      %v3435 = vadd.f32 %v3278, %v3411
      %v3436 = vadd.f32 %v3279, %v3414
      %v3437 = vadd.f32 %v3280, %v3419
      %v3438 = vadd.f32 %v3281, %v3422
      %v3439 = vadd.f32 %v3282, %v3427
      %v3440 = vadd.f32 %v3283, %v3430
      %v3441 = vld [vmem:[%s409] sm:$0xf]
      %v3442 = vld [vmem:[%s409 + $0x8] sm:$0xf]
      %v3443 = vld [vmem:[%s409 + $0x10] sm:$0xf]
      %v3444 = vld [vmem:[%s409 + $0x18] sm:$0xf]
      %v3445 = vld [vmem:[%s409 + $0x20] sm:$0xf]
      %v3446 = vld [vmem:[%s409 + $0x28] sm:$0xf]
      %v3447 = vld [vmem:[%s409 + $0x30] sm:$0xf]
      %v3448 = vld [vmem:[%s409 + $0x38] sm:$0xf]
      %v3449 = vld [vmem:[%s3 + $0x48] sm:$0xf]
      %v3458 = vunpack.c.l.b16 %v3441
      %v3459 = vunpack.c.l.b16 %v3442
      %v3460 = vunpack.c.l.b16 %v3443
      %v3461 = vunpack.c.l.b16 %v3444
      %v3462 = vunpack.c.l.b16 %v3445
      %v3463 = vunpack.c.l.b16 %v3446
      %v3464 = vunpack.c.l.b16 %v3447
      %v3465 = vunpack.c.l.b16 %v3448
      %v3466 = vpack.c.b16 %v3459, %v3458
      %v3467 = vpack.c.b16 %v3461, %v3460
      %v3468 = vpack.c.b16 %v3463, %v3462
      %v3469 = vpack.c.b16 %v3465, %v3464
      %v3471 = vsel %vm580, %v3466, 0
      %v3474 = vsel %vm580, %v3467, 0
      %v3477 = vsel %vm580, %v3468, 0
      %v3480 = vsel %vm580, %v3469, 0
      %v3483 = vsel %vm593, %v3449, 0
      %3485 = vmatprep.subr.bf16.mxu0 0
      %3486 = vmatpush1.bf16.msra.mxu0 %v3483
      %3487 = vmatprep.subr.bf16.mxu0 0
      %3488 = vmatpush1.bf16.msra.mxu0 0
      %3489 = vmatprep.subr.bf16.mxu0 0
      %3490 = vmatpush1.bf16.msra.mxu0 0
      %3491 = vmatprep.subr.bf16.mxu0 0
      %3492 = vmatpush1.bf16.msra.mxu0 0
      %3493 = vmatprep.subr.bf16.mxu0 0
      %3494 = vmatpush1.bf16.msra.mxu0 0
      %3495 = vmatprep.subr.bf16.mxu0 0
      %3496 = vmatpush1.bf16.msra.mxu0 0
      %3497 = vmatprep.subr.bf16.mxu0 0
      %3498 = vmatpush1.bf16.msra.mxu0 0
      %3499 = vmatprep.subr.bf16.mxu0 0
      %3500 = vmatpush1.bf16.msra.mxu0 0
      %3501 = vmatprep.subr.bf16.mxu0 0
      %3502 = vmatpush1.bf16.msra.mxu0 0
      %3503 = vmatprep.subr.bf16.mxu0 0
      %3504 = vmatpush1.bf16.msra.mxu0 0
      %3505 = vmatprep.subr.bf16.mxu0 0
      %3506 = vmatpush1.bf16.msra.mxu0 0
      %3507 = vmatprep.subr.bf16.mxu0 0
      %3508 = vmatpush1.bf16.msra.mxu0 0
      %3509 = vmatprep.subr.bf16.mxu0 0
      %3510 = vmatpush1.bf16.msra.mxu0 0
      %3511 = vmatprep.subr.bf16.mxu0 0
      %3512 = vmatpush1.bf16.msra.mxu0 0
      %3513 = vmatprep.subr.bf16.mxu0 0
      %3514 = vmatpush1.bf16.msra.mxu0 0
      %3515 = vmatprep.subr.bf16.mxu0 0
      %3516 = vmatpush1.bf16.msra.mxu0 0
      %3517 = vmatprep.mubr.bf16.mxu0 0
      %3518 = vmatmul.mubr.bf16.gmra.mrb[0].mxu0 %v3471
      %v3519 = vpop.f32.mrb[0].mxu0
      %v3520 = vadd.f32 0.0, %v3519
      %v3521 = vpop.f32.mrb[0].mxu0
      %v3522 = vpop.f32.mrb[0].mxu0
      %v3523 = vadd.f32 0.0, %v3522
      %v3524 = vpop.f32.mrb[0].mxu0
      %3525 = vmatprep.mubr.bf16.mxu0 0
      %3526 = vmatmul.mubr.bf16.gmra.mrb[0].mxu0 %v3474
      %v3527 = vpop.f32.mrb[0].mxu0
      %v3528 = vadd.f32 0.0, %v3527
      %v3529 = vpop.f32.mrb[0].mxu0
      %v3530 = vpop.f32.mrb[0].mxu0
      %v3531 = vadd.f32 0.0, %v3530
      %v3532 = vpop.f32.mrb[0].mxu0
      %3533 = vmatprep.mubr.bf16.mxu0 0
      %3534 = vmatmul.mubr.bf16.gmra.mrb[0].mxu0 %v3477
      %v3535 = vpop.f32.mrb[0].mxu0
      %v3536 = vadd.f32 0.0, %v3535
      %v3537 = vpop.f32.mrb[0].mxu0
      %v3538 = vpop.f32.mrb[0].mxu0
      %v3539 = vadd.f32 0.0, %v3538
      %v3540 = vpop.f32.mrb[0].mxu0
      %3541 = vmatprep.mubr.bf16.mxu0 0
      %3542 = vmatmul.mubr.bf16.gmra.mrb[0].mxu0 %v3480
      %v3543 = vpop.f32.mrb[0].mxu0
      %v3544 = vadd.f32 0.0, %v3543
      %v3545 = vpop.f32.mrb[0].mxu0
      %v3546 = vpop.f32.mrb[0].mxu0
      %v3547 = vadd.f32 0.0, %v3546
      %v3548 = vpop.f32.mrb[0].mxu0
      %3549 = vdwg.mxu0
      %v3550 = vadd.f32 %v3433, %v3520
      %v3551 = vadd.f32 %v3434, %v3523
      %v3552 = vadd.f32 %v3435, %v3528
      %v3553 = vadd.f32 %v3436, %v3531
      %v3554 = vadd.f32 %v3437, %v3536
      %v3555 = vadd.f32 %v3438, %v3539
      %v3556 = vadd.f32 %v3439, %v3544
      %v3557 = vadd.f32 %v3440, %v3547
      %v3558 = vld [vmem:[%s409] sm:$0xf]
      %v3559 = vld [vmem:[%s409 + $0x4] sm:$0x1]
      %v3560 = vld [vmem:[%s409 + $0x8] sm:$0xf]
      %v3561 = vld [vmem:[%s409 + $0xc] sm:$0x1]
      %v3562 = vld [vmem:[%s409 + $0x10] sm:$0xf]
      %v3563 = vld [vmem:[%s409 + $0x14] sm:$0x1]
      %v3564 = vld [vmem:[%s409 + $0x18] sm:$0xf]
      %v3565 = vld [vmem:[%s409 + $0x1c] sm:$0x1]
      %v3566 = vld [vmem:[%s409 + $0x20] sm:$0xf]
      %v3567 = vld [vmem:[%s409 + $0x24] sm:$0x1]
      %v3568 = vld [vmem:[%s409 + $0x28] sm:$0xf]
      %v3569 = vld [vmem:[%s409 + $0x2c] sm:$0x1]
      %v3570 = vld [vmem:[%s409 + $0x30] sm:$0xf]
      %v3571 = vld [vmem:[%s409 + $0x34] sm:$0x1]
      %v3572 = vld [vmem:[%s409 + $0x38] sm:$0xf]
      %v3573 = vld [vmem:[%s409 + $0x3c] sm:$0x1]
      %v3575 = vshrl.u32 %v3558, 16
      %v3577 = vrot.slane %v3575, 4
      %v3578 = vshll.u32 %v3558, 16
      %v3580 = vrot.slane %v3578, 5
      %v3581 = vor.u32 %v3577, %v3580
      %v3582 = vrot.slane %v3581, 4
      %v3584 = vshll.u32 %v3559, 16
      %v3586 = vrot.slane %v3584, 5
      %v3587 = vsel %vm454, %v3582, %v3586
      %v3589 = vshrl.u32 %v3560, 16
      %v3591 = vrot.slane %v3589, 4
      %v3592 = vshll.u32 %v3560, 16
      %v3594 = vrot.slane %v3592, 5
      %v3595 = vor.u32 %v3591, %v3594
      %v3596 = vrot.slane %v3595, 4
      %v3598 = vshll.u32 %v3561, 16
      %v3600 = vrot.slane %v3598, 5
      %v3601 = vsel %vm454, %v3596, %v3600
      %v3603 = vshrl.u32 %v3562, 16
      %v3605 = vrot.slane %v3603, 4
      %v3606 = vshll.u32 %v3562, 16
      %v3608 = vrot.slane %v3606, 5
      %v3609 = vor.u32 %v3605, %v3608
      %v3610 = vrot.slane %v3609, 4
      %v3612 = vshll.u32 %v3563, 16
      %v3614 = vrot.slane %v3612, 5
      %v3615 = vsel %vm454, %v3610, %v3614
      %v3617 = vshrl.u32 %v3564, 16
      %v3619 = vrot.slane %v3617, 4
      %v3620 = vshll.u32 %v3564, 16
      %v3622 = vrot.slane %v3620, 5
      %v3623 = vor.u32 %v3619, %v3622
      %v3624 = vrot.slane %v3623, 4
      %v3626 = vshll.u32 %v3565, 16
      %v3628 = vrot.slane %v3626, 5
      %v3629 = vsel %vm454, %v3624, %v3628
      %v3631 = vshrl.u32 %v3566, 16
      %v3633 = vrot.slane %v3631, 4
      %v3634 = vshll.u32 %v3566, 16
      %v3636 = vrot.slane %v3634, 5
      %v3637 = vor.u32 %v3633, %v3636
      %v3638 = vrot.slane %v3637, 4
      %v3640 = vshll.u32 %v3567, 16
      %v3642 = vrot.slane %v3640, 5
      %v3643 = vsel %vm454, %v3638, %v3642
      %v3645 = vshrl.u32 %v3568, 16
      %v3647 = vrot.slane %v3645, 4
      %v3648 = vshll.u32 %v3568, 16
      %v3650 = vrot.slane %v3648, 5
      %v3651 = vor.u32 %v3647, %v3650
      %v3652 = vrot.slane %v3651, 4
      %v3654 = vshll.u32 %v3569, 16
      %v3656 = vrot.slane %v3654, 5
      %v3657 = vsel %vm454, %v3652, %v3656
      %v3659 = vshrl.u32 %v3570, 16
      %v3661 = vrot.slane %v3659, 4
      %v3662 = vshll.u32 %v3570, 16
      %v3664 = vrot.slane %v3662, 5
      %v3665 = vor.u32 %v3661, %v3664
      %v3666 = vrot.slane %v3665, 4
      %v3668 = vshll.u32 %v3571, 16
      %v3670 = vrot.slane %v3668, 5
      %v3671 = vsel %vm454, %v3666, %v3670
      %v3673 = vshrl.u32 %v3572, 16
      %v3675 = vrot.slane %v3673, 4
      %v3676 = vshll.u32 %v3572, 16
      %v3678 = vrot.slane %v3676, 5
      %v3679 = vor.u32 %v3675, %v3678
      %v3680 = vrot.slane %v3679, 4
      %v3682 = vshll.u32 %v3573, 16
      %v3684 = vrot.slane %v3682, 5
      %v3685 = vsel %vm454, %v3680, %v3684
      %v3686 = vld [vmem:[%s3 + $0x4c] sm:$0xf]
      %v3687 = vunpack.c.l.b16 %v3587
      %v3688 = vunpack.c.l.b16 %v3601
      %v3689 = vunpack.c.l.b16 %v3615
      %v3690 = vunpack.c.l.b16 %v3629
      %v3691 = vunpack.c.l.b16 %v3643
      %v3692 = vunpack.c.l.b16 %v3657
      %v3693 = vunpack.c.l.b16 %v3671
      %v3694 = vunpack.c.l.b16 %v3685
      %v3695 = vpack.c.b16 %v3688, %v3687
      %v3696 = vpack.c.b16 %v3690, %v3689
      %v3697 = vpack.c.b16 %v3692, %v3691
      %v3698 = vpack.c.b16 %v3694, %v3693
      %v3700 = vsel %vm580, %v3695, 0
      %v3703 = vsel %vm580, %v3696, 0
      %v3706 = vsel %vm580, %v3697, 0
      %v3709 = vsel %vm580, %v3698, 0
      %v3712 = vsel %vm593, %v3686, 0
      %3714 = vmatprep.subr.bf16.mxu0 0
      %3715 = vmatpush1.bf16.msra.mxu0 %v3712
      %3716 = vmatprep.subr.bf16.mxu0 0
      %3717 = vmatpush1.bf16.msra.mxu0 0
      %3718 = vmatprep.subr.bf16.mxu0 0
      %3719 = vmatpush1.bf16.msra.mxu0 0
      %3720 = vmatprep.subr.bf16.mxu0 0
      %3721 = vmatpush1.bf16.msra.mxu0 0
      %3722 = vmatprep.subr.bf16.mxu0 0
      %3723 = vmatpush1.bf16.msra.mxu0 0
      %3724 = vmatprep.subr.bf16.mxu0 0
      %3725 = vmatpush1.bf16.msra.mxu0 0
      %3726 = vmatprep.subr.bf16.mxu0 0
      %3727 = vmatpush1.bf16.msra.mxu0 0
      %3728 = vmatprep.subr.bf16.mxu0 0
      %3729 = vmatpush1.bf16.msra.mxu0 0
      %3730 = vmatprep.subr.bf16.mxu0 0
      %3731 = vmatpush1.bf16.msra.mxu0 0
      %3732 = vmatprep.subr.bf16.mxu0 0
      %3733 = vmatpush1.bf16.msra.mxu0 0
      %3734 = vmatprep.subr.bf16.mxu0 0
      %3735 = vmatpush1.bf16.msra.mxu0 0
      %3736 = vmatprep.subr.bf16.mxu0 0
      %3737 = vmatpush1.bf16.msra.mxu0 0
      %3738 = vmatprep.subr.bf16.mxu0 0
      %3739 = vmatpush1.bf16.msra.mxu0 0
      %3740 = vmatprep.subr.bf16.mxu0 0
      %3741 = vmatpush1.bf16.msra.mxu0 0
      %3742 = vmatprep.subr.bf16.mxu0 0
      %3743 = vmatpush1.bf16.msra.mxu0 0
      %3744 = vmatprep.subr.bf16.mxu0 0
      %3745 = vmatpush1.bf16.msra.mxu0 0
      %3746 = vmatprep.mubr.bf16.mxu0 0
      %3747 = vmatmul.mubr.bf16.gmra.mrb[0].mxu0 %v3700
      %v3748 = vpop.f32.mrb[0].mxu0
      %v3749 = vadd.f32 0.0, %v3748
      %v3750 = vpop.f32.mrb[0].mxu0
      %v3751 = vpop.f32.mrb[0].mxu0
      %v3752 = vadd.f32 0.0, %v3751
      %v3753 = vpop.f32.mrb[0].mxu0
      %3754 = vmatprep.mubr.bf16.mxu0 0
      %3755 = vmatmul.mubr.bf16.gmra.mrb[0].mxu0 %v3703
      %v3756 = vpop.f32.mrb[0].mxu0
      %v3757 = vadd.f32 0.0, %v3756
      %v3758 = vpop.f32.mrb[0].mxu0
      %v3759 = vpop.f32.mrb[0].mxu0
      %v3760 = vadd.f32 0.0, %v3759
      %v3761 = vpop.f32.mrb[0].mxu0
      %3762 = vmatprep.mubr.bf16.mxu0 0
      %3763 = vmatmul.mubr.bf16.gmra.mrb[0].mxu0 %v3706
      %v3764 = vpop.f32.mrb[0].mxu0
      %v3765 = vadd.f32 0.0, %v3764
      %v3766 = vpop.f32.mrb[0].mxu0
      %v3767 = vpop.f32.mrb[0].mxu0
      %v3768 = vadd.f32 0.0, %v3767
      %v3769 = vpop.f32.mrb[0].mxu0
      %3770 = vmatprep.mubr.bf16.mxu0 0
      %3771 = vmatmul.mubr.bf16.gmra.mrb[0].mxu0 %v3709
      %v3772 = vpop.f32.mrb[0].mxu0
      %v3773 = vadd.f32 0.0, %v3772
      %v3774 = vpop.f32.mrb[0].mxu0
      %v3775 = vpop.f32.mrb[0].mxu0
      %v3776 = vadd.f32 0.0, %v3775
      %v3777 = vpop.f32.mrb[0].mxu0
      %3778 = vdwg.mxu0
      %v3779 = vadd.f32 %v3550, %v3749
      %v3780 = vadd.f32 %v3551, %v3752
      %v3781 = vadd.f32 %v3552, %v3757
      %v3782 = vadd.f32 %v3553, %v3760
      %v3783 = vadd.f32 %v3554, %v3765
      %v3784 = vadd.f32 %v3555, %v3768
      %v3785 = vadd.f32 %v3556, %v3773
      %v3786 = vadd.f32 %v3557, %v3776
      %v3787 = vld [vmem:[%s409] sm:$0xe]
      %v3788 = vld [vmem:[%s409 + $0x8] sm:$0xe]
      %v3789 = vld [vmem:[%s409 + $0x10] sm:$0xe]
      %v3790 = vld [vmem:[%s409 + $0x18] sm:$0xe]
      %v3791 = vld [vmem:[%s409 + $0x20] sm:$0xe]
      %v3792 = vld [vmem:[%s409 + $0x28] sm:$0xe]
      %v3793 = vld [vmem:[%s409 + $0x30] sm:$0xe]
      %v3794 = vld [vmem:[%s409 + $0x38] sm:$0xe]
      %v3811 = vrot.slane %v3787, 5
      %v3812 = vrot.slane %v3811, 4
      %v3813 = vrot.slane %v3559, 5
      %v3814 = vsel %vm788, %v3812, %v3813
      %v3815 = vrot.slane %v3788, 5
      %v3816 = vrot.slane %v3815, 4
      %v3817 = vrot.slane %v3561, 5
      %v3818 = vsel %vm788, %v3816, %v3817
      %v3819 = vrot.slane %v3789, 5
      %v3820 = vrot.slane %v3819, 4
      %v3821 = vrot.slane %v3563, 5
      %v3822 = vsel %vm788, %v3820, %v3821
      %v3823 = vrot.slane %v3790, 5
      %v3824 = vrot.slane %v3823, 4
      %v3825 = vrot.slane %v3565, 5
      %v3826 = vsel %vm788, %v3824, %v3825
      %v3827 = vrot.slane %v3791, 5
      %v3828 = vrot.slane %v3827, 4
      %v3829 = vrot.slane %v3567, 5
      %v3830 = vsel %vm788, %v3828, %v3829
      %v3831 = vrot.slane %v3792, 5
      %v3832 = vrot.slane %v3831, 4
      %v3833 = vrot.slane %v3569, 5
      %v3834 = vsel %vm788, %v3832, %v3833
      %v3835 = vrot.slane %v3793, 5
      %v3836 = vrot.slane %v3835, 4
      %v3837 = vrot.slane %v3571, 5
      %v3838 = vsel %vm788, %v3836, %v3837
      %v3839 = vrot.slane %v3794, 5
      %v3840 = vrot.slane %v3839, 4
      %v3841 = vrot.slane %v3573, 5
      %v3842 = vsel %vm788, %v3840, %v3841
      %v3843 = vld [vmem:[%s3 + $0x50] sm:$0xf]
      %v3844 = vunpack.c.l.b16 %v3814
      %v3845 = vunpack.c.l.b16 %v3818
      %v3846 = vunpack.c.l.b16 %v3822
      %v3847 = vunpack.c.l.b16 %v3826
      %v3848 = vunpack.c.l.b16 %v3830
      %v3849 = vunpack.c.l.b16 %v3834
      %v3850 = vunpack.c.l.b16 %v3838
      %v3851 = vunpack.c.l.b16 %v3842
      %v3852 = vpack.c.b16 %v3845, %v3844
      %v3853 = vpack.c.b16 %v3847, %v3846
      %v3854 = vpack.c.b16 %v3849, %v3848
      %v3855 = vpack.c.b16 %v3851, %v3850
      %v3857 = vsel %vm580, %v3852, 0
      %v3860 = vsel %vm580, %v3853, 0
      %v3863 = vsel %vm580, %v3854, 0
      %v3866 = vsel %vm580, %v3855, 0
      %v3869 = vsel %vm593, %v3843, 0
      %3871 = vmatprep.subr.bf16.mxu0 0
      %3872 = vmatpush1.bf16.msra.mxu0 %v3869
      %3873 = vmatprep.subr.bf16.mxu0 0
      %3874 = vmatpush1.bf16.msra.mxu0 0
      %3875 = vmatprep.subr.bf16.mxu0 0
      %3876 = vmatpush1.bf16.msra.mxu0 0
      %3877 = vmatprep.subr.bf16.mxu0 0
      %3878 = vmatpush1.bf16.msra.mxu0 0
      %3879 = vmatprep.subr.bf16.mxu0 0
      %3880 = vmatpush1.bf16.msra.mxu0 0
      %3881 = vmatprep.subr.bf16.mxu0 0
      %3882 = vmatpush1.bf16.msra.mxu0 0
      %3883 = vmatprep.subr.bf16.mxu0 0
      %3884 = vmatpush1.bf16.msra.mxu0 0
      %3885 = vmatprep.subr.bf16.mxu0 0
      %3886 = vmatpush1.bf16.msra.mxu0 0
      %3887 = vmatprep.subr.bf16.mxu0 0
      %3888 = vmatpush1.bf16.msra.mxu0 0
      %3889 = vmatprep.subr.bf16.mxu0 0
      %3890 = vmatpush1.bf16.msra.mxu0 0
      %3891 = vmatprep.subr.bf16.mxu0 0
      %3892 = vmatpush1.bf16.msra.mxu0 0
      %3893 = vmatprep.subr.bf16.mxu0 0
      %3894 = vmatpush1.bf16.msra.mxu0 0
      %3895 = vmatprep.subr.bf16.mxu0 0
      %3896 = vmatpush1.bf16.msra.mxu0 0
      %3897 = vmatprep.subr.bf16.mxu0 0
      %3898 = vmatpush1.bf16.msra.mxu0 0
      %3899 = vmatprep.subr.bf16.mxu0 0
      %3900 = vmatpush1.bf16.msra.mxu0 0
      %3901 = vmatprep.subr.bf16.mxu0 0
      %3902 = vmatpush1.bf16.msra.mxu0 0
      %3903 = vmatprep.mubr.bf16.mxu0 0
      %3904 = vmatmul.mubr.bf16.gmra.mrb[0].mxu0 %v3857
      %v3905 = vpop.f32.mrb[0].mxu0
      %v3906 = vadd.f32 0.0, %v3905
      %v3907 = vpop.f32.mrb[0].mxu0
      %v3908 = vpop.f32.mrb[0].mxu0
      %v3909 = vadd.f32 0.0, %v3908
      %v3910 = vpop.f32.mrb[0].mxu0
      %3911 = vmatprep.mubr.bf16.mxu0 0
      %3912 = vmatmul.mubr.bf16.gmra.mrb[0].mxu0 %v3860
      %v3913 = vpop.f32.mrb[0].mxu0
      %v3914 = vadd.f32 0.0, %v3913
      %v3915 = vpop.f32.mrb[0].mxu0
      %v3916 = vpop.f32.mrb[0].mxu0
      %v3917 = vadd.f32 0.0, %v3916
      %v3918 = vpop.f32.mrb[0].mxu0
      %3919 = vmatprep.mubr.bf16.mxu0 0
      %3920 = vmatmul.mubr.bf16.gmra.mrb[0].mxu0 %v3863
      %v3921 = vpop.f32.mrb[0].mxu0
      %v3922 = vadd.f32 0.0, %v3921
      %v3923 = vpop.f32.mrb[0].mxu0
      %v3924 = vpop.f32.mrb[0].mxu0
      %v3925 = vadd.f32 0.0, %v3924
      %v3926 = vpop.f32.mrb[0].mxu0
      %3927 = vmatprep.mubr.bf16.mxu0 0
      %3928 = vmatmul.mubr.bf16.gmra.mrb[0].mxu0 %v3866
      %v3929 = vpop.f32.mrb[0].mxu0
      %v3930 = vadd.f32 0.0, %v3929
      %v3931 = vpop.f32.mrb[0].mxu0
      %v3932 = vpop.f32.mrb[0].mxu0
      %v3933 = vadd.f32 0.0, %v3932
      %v3934 = vpop.f32.mrb[0].mxu0
      %3935 = vdwg.mxu0
      %v3936 = vadd.f32 %v3779, %v3906
      %v3937 = vadd.f32 %v3780, %v3909
      %v3938 = vadd.f32 %v3781, %v3914
      %v3939 = vadd.f32 %v3782, %v3917
      %v3940 = vadd.f32 %v3783, %v3922
      %v3941 = vadd.f32 %v3784, %v3925
      %v3942 = vadd.f32 %v3785, %v3930
      %v3943 = vadd.f32 %v3786, %v3933
      %s3944 = scalar_lea.vmem %s409, 8
      %v3945 = vld [vmem:[%s3944] sm:$0xf]
      %v3946 = vld [vmem:[%s3944 + $0x8] sm:$0xf]
      %v3947 = vld [vmem:[%s3944 + $0x10] sm:$0xf]
      %v3948 = vld [vmem:[%s3944 + $0x18] sm:$0xf]
      %v3949 = vld [vmem:[%s3944 + $0x20] sm:$0xf]
      %v3950 = vld [vmem:[%s3944 + $0x28] sm:$0xf]
      %v3951 = vld [vmem:[%s3944 + $0x30] sm:$0xf]
      %v3952 = vld [vmem:[%s3944 + $0x38] sm:$0xf]
      %v3953 = vld [vmem:[%s3 + $0x54] sm:$0xf]
      %v3962 = vunpack.c.l.b16 %v3945
      %v3963 = vunpack.c.l.b16 %v3946
      %v3964 = vunpack.c.l.b16 %v3947
      %v3965 = vunpack.c.l.b16 %v3948
      %v3966 = vunpack.c.l.b16 %v3949
      %v3967 = vunpack.c.l.b16 %v3950
      %v3968 = vunpack.c.l.b16 %v3951
      %v3969 = vunpack.c.l.b16 %v3952
      %v3970 = vpack.c.b16 %v3963, %v3962
      %v3971 = vpack.c.b16 %v3965, %v3964
      %v3972 = vpack.c.b16 %v3967, %v3966
      %v3973 = vpack.c.b16 %v3969, %v3968
      %v3975 = vsel %vm580, %v3970, 0
      %v3978 = vsel %vm580, %v3971, 0
      %v3981 = vsel %vm580, %v3972, 0
      %v3984 = vsel %vm580, %v3973, 0
      %v3987 = vsel %vm593, %v3953, 0
      %3989 = vmatprep.subr.bf16.mxu0 0
      %3990 = vmatpush1.bf16.msra.mxu0 %v3987
      %3991 = vmatprep.subr.bf16.mxu0 0
      %3992 = vmatpush1.bf16.msra.mxu0 0
      %3993 = vmatprep.subr.bf16.mxu0 0
      %3994 = vmatpush1.bf16.msra.mxu0 0
      %3995 = vmatprep.subr.bf16.mxu0 0
      %3996 = vmatpush1.bf16.msra.mxu0 0
      %3997 = vmatprep.subr.bf16.mxu0 0
      %3998 = vmatpush1.bf16.msra.mxu0 0
      %3999 = vmatprep.subr.bf16.mxu0 0
      %4000 = vmatpush1.bf16.msra.mxu0 0
      %4001 = vmatprep.subr.bf16.mxu0 0
      %4002 = vmatpush1.bf16.msra.mxu0 0
      %4003 = vmatprep.subr.bf16.mxu0 0
      %4004 = vmatpush1.bf16.msra.mxu0 0
      %4005 = vmatprep.subr.bf16.mxu0 0
      %4006 = vmatpush1.bf16.msra.mxu0 0
      %4007 = vmatprep.subr.bf16.mxu0 0
      %4008 = vmatpush1.bf16.msra.mxu0 0
      %4009 = vmatprep.subr.bf16.mxu0 0
      %4010 = vmatpush1.bf16.msra.mxu0 0
      %4011 = vmatprep.subr.bf16.mxu0 0
      %4012 = vmatpush1.bf16.msra.mxu0 0
      %4013 = vmatprep.subr.bf16.mxu0 0
      %4014 = vmatpush1.bf16.msra.mxu0 0
      %4015 = vmatprep.subr.bf16.mxu0 0
      %4016 = vmatpush1.bf16.msra.mxu0 0
      %4017 = vmatprep.subr.bf16.mxu0 0
      %4018 = vmatpush1.bf16.msra.mxu0 0
      %4019 = vmatprep.subr.bf16.mxu0 0
      %4020 = vmatpush1.bf16.msra.mxu0 0
      %4021 = vmatprep.mubr.bf16.mxu0 0
      %4022 = vmatmul.mubr.bf16.gmra.mrb[0].mxu0 %v3975
      %v4023 = vpop.f32.mrb[0].mxu0
      %v4024 = vadd.f32 0.0, %v4023
      %v4025 = vpop.f32.mrb[0].mxu0
      %v4026 = vpop.f32.mrb[0].mxu0
      %v4027 = vadd.f32 0.0, %v4026
      %v4028 = vpop.f32.mrb[0].mxu0
      %4029 = vmatprep.mubr.bf16.mxu0 0
      %4030 = vmatmul.mubr.bf16.gmra.mrb[0].mxu0 %v3978
      %v4031 = vpop.f32.mrb[0].mxu0
      %v4032 = vadd.f32 0.0, %v4031
      %v4033 = vpop.f32.mrb[0].mxu0
      %v4034 = vpop.f32.mrb[0].mxu0
      %v4035 = vadd.f32 0.0, %v4034
      %v4036 = vpop.f32.mrb[0].mxu0
      %4037 = vmatprep.mubr.bf16.mxu0 0
      %4038 = vmatmul.mubr.bf16.gmra.mrb[0].mxu0 %v3981
      %v4039 = vpop.f32.mrb[0].mxu0
      %v4040 = vadd.f32 0.0, %v4039
      %v4041 = vpop.f32.mrb[0].mxu0
      %v4042 = vpop.f32.mrb[0].mxu0
      %v4043 = vadd.f32 0.0, %v4042
      %v4044 = vpop.f32.mrb[0].mxu0
      %4045 = vmatprep.mubr.bf16.mxu0 0
      %4046 = vmatmul.mubr.bf16.gmra.mrb[0].mxu0 %v3984
      %v4047 = vpop.f32.mrb[0].mxu0
      %v4048 = vadd.f32 0.0, %v4047
      %v4049 = vpop.f32.mrb[0].mxu0
      %v4050 = vpop.f32.mrb[0].mxu0
      %v4051 = vadd.f32 0.0, %v4050
      %v4052 = vpop.f32.mrb[0].mxu0
      %4053 = vdwg.mxu0
      %v4054 = vadd.f32 %v3936, %v4024
      %v4055 = vadd.f32 %v3937, %v4027
      %v4056 = vadd.f32 %v3938, %v4032
      %v4057 = vadd.f32 %v3939, %v4035
      %v4058 = vadd.f32 %v3940, %v4040
      %v4059 = vadd.f32 %v3941, %v4043
      %v4060 = vadd.f32 %v3942, %v4048
      %v4061 = vadd.f32 %v3943, %v4051
      %v4062 = vld [vmem:[%s3944] sm:$0xf]
      %v4063 = vld [vmem:[%s3944 + $0x4] sm:$0x1]
      %v4064 = vld [vmem:[%s3944 + $0x8] sm:$0xf]
      %v4065 = vld [vmem:[%s3944 + $0xc] sm:$0x1]
      %v4066 = vld [vmem:[%s3944 + $0x10] sm:$0xf]
      %v4067 = vld [vmem:[%s3944 + $0x14] sm:$0x1]
      %v4068 = vld [vmem:[%s3944 + $0x18] sm:$0xf]
      %v4069 = vld [vmem:[%s3944 + $0x1c] sm:$0x1]
      %v4070 = vld [vmem:[%s3944 + $0x20] sm:$0xf]
      %v4071 = vld [vmem:[%s3944 + $0x24] sm:$0x1]
      %v4072 = vld [vmem:[%s3944 + $0x28] sm:$0xf]
      %v4073 = vld [vmem:[%s3944 + $0x2c] sm:$0x1]
      %v4074 = vld [vmem:[%s3944 + $0x30] sm:$0xf]
      %v4075 = vld [vmem:[%s3944 + $0x34] sm:$0x1]
      %v4076 = vld [vmem:[%s3944 + $0x38] sm:$0xf]
      %v4077 = vld [vmem:[%s3944 + $0x3c] sm:$0x1]
      %v4079 = vshrl.u32 %v4062, 16
      %v4081 = vrot.slane %v4079, 4
      %v4082 = vshll.u32 %v4062, 16
      %v4084 = vrot.slane %v4082, 5
      %v4085 = vor.u32 %v4081, %v4084
      %v4086 = vrot.slane %v4085, 4
      %v4088 = vshll.u32 %v4063, 16
      %v4090 = vrot.slane %v4088, 5
      %v4091 = vsel %vm454, %v4086, %v4090
      %v4093 = vshrl.u32 %v4064, 16
      %v4095 = vrot.slane %v4093, 4
      %v4096 = vshll.u32 %v4064, 16
      %v4098 = vrot.slane %v4096, 5
      %v4099 = vor.u32 %v4095, %v4098
      %v4100 = vrot.slane %v4099, 4
      %v4102 = vshll.u32 %v4065, 16
      %v4104 = vrot.slane %v4102, 5
      %v4105 = vsel %vm454, %v4100, %v4104
      %v4107 = vshrl.u32 %v4066, 16
      %v4109 = vrot.slane %v4107, 4
      %v4110 = vshll.u32 %v4066, 16
      %v4112 = vrot.slane %v4110, 5
      %v4113 = vor.u32 %v4109, %v4112
      %v4114 = vrot.slane %v4113, 4
      %v4116 = vshll.u32 %v4067, 16
      %v4118 = vrot.slane %v4116, 5
      %v4119 = vsel %vm454, %v4114, %v4118
      %v4121 = vshrl.u32 %v4068, 16
      %v4123 = vrot.slane %v4121, 4
      %v4124 = vshll.u32 %v4068, 16
      %v4126 = vrot.slane %v4124, 5
      %v4127 = vor.u32 %v4123, %v4126
      %v4128 = vrot.slane %v4127, 4
      %v4130 = vshll.u32 %v4069, 16
      %v4132 = vrot.slane %v4130, 5
      %v4133 = vsel %vm454, %v4128, %v4132
      %v4135 = vshrl.u32 %v4070, 16
      %v4137 = vrot.slane %v4135, 4
      %v4138 = vshll.u32 %v4070, 16
      %v4140 = vrot.slane %v4138, 5
      %v4141 = vor.u32 %v4137, %v4140
      %v4142 = vrot.slane %v4141, 4
      %v4144 = vshll.u32 %v4071, 16
      %v4146 = vrot.slane %v4144, 5
      %v4147 = vsel %vm454, %v4142, %v4146
      %v4149 = vshrl.u32 %v4072, 16
      %v4151 = vrot.slane %v4149, 4
      %v4152 = vshll.u32 %v4072, 16
      %v4154 = vrot.slane %v4152, 5
      %v4155 = vor.u32 %v4151, %v4154
      %v4156 = vrot.slane %v4155, 4
      %v4158 = vshll.u32 %v4073, 16
      %v4160 = vrot.slane %v4158, 5
      %v4161 = vsel %vm454, %v4156, %v4160
      %v4163 = vshrl.u32 %v4074, 16
      %v4165 = vrot.slane %v4163, 4
      %v4166 = vshll.u32 %v4074, 16
      %v4168 = vrot.slane %v4166, 5
      %v4169 = vor.u32 %v4165, %v4168
      %v4170 = vrot.slane %v4169, 4
      %v4172 = vshll.u32 %v4075, 16
      %v4174 = vrot.slane %v4172, 5
      %v4175 = vsel %vm454, %v4170, %v4174
      %v4177 = vshrl.u32 %v4076, 16
      %v4179 = vrot.slane %v4177, 4
      %v4180 = vshll.u32 %v4076, 16
      %v4182 = vrot.slane %v4180, 5
      %v4183 = vor.u32 %v4179, %v4182
      %v4184 = vrot.slane %v4183, 4
      %v4186 = vshll.u32 %v4077, 16
      %v4188 = vrot.slane %v4186, 5
      %v4189 = vsel %vm454, %v4184, %v4188
      %v4190 = vld [vmem:[%s3 + $0x58] sm:$0xf]
      %v4191 = vunpack.c.l.b16 %v4091
      %v4192 = vunpack.c.l.b16 %v4105
      %v4193 = vunpack.c.l.b16 %v4119
      %v4194 = vunpack.c.l.b16 %v4133
      %v4195 = vunpack.c.l.b16 %v4147
      %v4196 = vunpack.c.l.b16 %v4161
      %v4197 = vunpack.c.l.b16 %v4175
      %v4198 = vunpack.c.l.b16 %v4189
      %v4199 = vpack.c.b16 %v4192, %v4191
      %v4200 = vpack.c.b16 %v4194, %v4193
      %v4201 = vpack.c.b16 %v4196, %v4195
      %v4202 = vpack.c.b16 %v4198, %v4197
      %v4204 = vsel %vm580, %v4199, 0
      %v4207 = vsel %vm580, %v4200, 0
      %v4210 = vsel %vm580, %v4201, 0
      %v4213 = vsel %vm580, %v4202, 0
      %v4216 = vsel %vm593, %v4190, 0
      %4218 = vmatprep.subr.bf16.mxu0 0
      %4219 = vmatpush1.bf16.msra.mxu0 %v4216
      %4220 = vmatprep.subr.bf16.mxu0 0
      %4221 = vmatpush1.bf16.msra.mxu0 0
      %4222 = vmatprep.subr.bf16.mxu0 0
      %4223 = vmatpush1.bf16.msra.mxu0 0
      %4224 = vmatprep.subr.bf16.mxu0 0
      %4225 = vmatpush1.bf16.msra.mxu0 0
      %4226 = vmatprep.subr.bf16.mxu0 0
      %4227 = vmatpush1.bf16.msra.mxu0 0
      %4228 = vmatprep.subr.bf16.mxu0 0
      %4229 = vmatpush1.bf16.msra.mxu0 0
      %4230 = vmatprep.subr.bf16.mxu0 0
      %4231 = vmatpush1.bf16.msra.mxu0 0
      %4232 = vmatprep.subr.bf16.mxu0 0
      %4233 = vmatpush1.bf16.msra.mxu0 0
      %4234 = vmatprep.subr.bf16.mxu0 0
      %4235 = vmatpush1.bf16.msra.mxu0 0
      %4236 = vmatprep.subr.bf16.mxu0 0
      %4237 = vmatpush1.bf16.msra.mxu0 0
      %4238 = vmatprep.subr.bf16.mxu0 0
      %4239 = vmatpush1.bf16.msra.mxu0 0
      %4240 = vmatprep.subr.bf16.mxu0 0
      %4241 = vmatpush1.bf16.msra.mxu0 0
      %4242 = vmatprep.subr.bf16.mxu0 0
      %4243 = vmatpush1.bf16.msra.mxu0 0
      %4244 = vmatprep.subr.bf16.mxu0 0
      %4245 = vmatpush1.bf16.msra.mxu0 0
      %4246 = vmatprep.subr.bf16.mxu0 0
      %4247 = vmatpush1.bf16.msra.mxu0 0
      %4248 = vmatprep.subr.bf16.mxu0 0
      %4249 = vmatpush1.bf16.msra.mxu0 0
      %4250 = vmatprep.mubr.bf16.mxu0 0
      %4251 = vmatmul.mubr.bf16.gmra.mrb[0].mxu0 %v4204
      %v4252 = vpop.f32.mrb[0].mxu0
      %v4253 = vadd.f32 0.0, %v4252
      %v4254 = vpop.f32.mrb[0].mxu0
      %v4255 = vpop.f32.mrb[0].mxu0
      %v4256 = vadd.f32 0.0, %v4255
      %v4257 = vpop.f32.mrb[0].mxu0
      %4258 = vmatprep.mubr.bf16.mxu0 0
      %4259 = vmatmul.mubr.bf16.gmra.mrb[0].mxu0 %v4207
      %v4260 = vpop.f32.mrb[0].mxu0
      %v4261 = vadd.f32 0.0, %v4260
      %v4262 = vpop.f32.mrb[0].mxu0
      %v4263 = vpop.f32.mrb[0].mxu0
      %v4264 = vadd.f32 0.0, %v4263
      %v4265 = vpop.f32.mrb[0].mxu0
      %4266 = vmatprep.mubr.bf16.mxu0 0
      %4267 = vmatmul.mubr.bf16.gmra.mrb[0].mxu0 %v4210
      %v4268 = vpop.f32.mrb[0].mxu0
      %v4269 = vadd.f32 0.0, %v4268
      %v4270 = vpop.f32.mrb[0].mxu0
      %v4271 = vpop.f32.mrb[0].mxu0
      %v4272 = vadd.f32 0.0, %v4271
      %v4273 = vpop.f32.mrb[0].mxu0
      %4274 = vmatprep.mubr.bf16.mxu0 0
      %4275 = vmatmul.mubr.bf16.gmra.mrb[0].mxu0 %v4213
      %v4276 = vpop.f32.mrb[0].mxu0
      %v4277 = vadd.f32 0.0, %v4276
      %v4278 = vpop.f32.mrb[0].mxu0
      %v4279 = vpop.f32.mrb[0].mxu0
      %v4280 = vadd.f32 0.0, %v4279
      %v4281 = vpop.f32.mrb[0].mxu0
      %4282 = vdwg.mxu0
      %v4283 = vadd.f32 %v4054, %v4253
      %v4284 = vadd.f32 %v4055, %v4256
      %v4285 = vadd.f32 %v4056, %v4261
      %v4286 = vadd.f32 %v4057, %v4264
      %v4287 = vadd.f32 %v4058, %v4269
      %v4288 = vadd.f32 %v4059, %v4272
      %v4289 = vadd.f32 %v4060, %v4277
      %v4290 = vadd.f32 %v4061, %v4280
      %v4291 = vld [vmem:[%s3944] sm:$0xe]
      %v4292 = vld [vmem:[%s3944 + $0x8] sm:$0xe]
      %v4293 = vld [vmem:[%s3944 + $0x10] sm:$0xe]
      %v4294 = vld [vmem:[%s3944 + $0x18] sm:$0xe]
      %v4295 = vld [vmem:[%s3944 + $0x20] sm:$0xe]
      %v4296 = vld [vmem:[%s3944 + $0x28] sm:$0xe]
      %v4297 = vld [vmem:[%s3944 + $0x30] sm:$0xe]
      %v4298 = vld [vmem:[%s3944 + $0x38] sm:$0xe]
      %v4315 = vrot.slane %v4291, 5
      %v4316 = vrot.slane %v4315, 4
      %v4317 = vrot.slane %v4063, 5
      %v4318 = vsel %vm788, %v4316, %v4317
      %v4319 = vrot.slane %v4292, 5
      %v4320 = vrot.slane %v4319, 4
      %v4321 = vrot.slane %v4065, 5
      %v4322 = vsel %vm788, %v4320, %v4321
      %v4323 = vrot.slane %v4293, 5
      %v4324 = vrot.slane %v4323, 4
      %v4325 = vrot.slane %v4067, 5
      %v4326 = vsel %vm788, %v4324, %v4325
      %v4327 = vrot.slane %v4294, 5
      %v4328 = vrot.slane %v4327, 4
      %v4329 = vrot.slane %v4069, 5
      %v4330 = vsel %vm788, %v4328, %v4329
      %v4331 = vrot.slane %v4295, 5
      %v4332 = vrot.slane %v4331, 4
      %v4333 = vrot.slane %v4071, 5
      %v4334 = vsel %vm788, %v4332, %v4333
      %v4335 = vrot.slane %v4296, 5
      %v4336 = vrot.slane %v4335, 4
      %v4337 = vrot.slane %v4073, 5
      %v4338 = vsel %vm788, %v4336, %v4337
      %v4339 = vrot.slane %v4297, 5
      %v4340 = vrot.slane %v4339, 4
      %v4341 = vrot.slane %v4075, 5
      %v4342 = vsel %vm788, %v4340, %v4341
      %v4343 = vrot.slane %v4298, 5
      %v4344 = vrot.slane %v4343, 4
      %v4345 = vrot.slane %v4077, 5
      %v4346 = vsel %vm788, %v4344, %v4345
      %v4347 = vld [vmem:[%s3 + $0x5c] sm:$0xf]
      %v4348 = vunpack.c.l.b16 %v4318
      %v4349 = vunpack.c.l.b16 %v4322
      %v4350 = vunpack.c.l.b16 %v4326
      %v4351 = vunpack.c.l.b16 %v4330
      %v4352 = vunpack.c.l.b16 %v4334
      %v4353 = vunpack.c.l.b16 %v4338
      %v4354 = vunpack.c.l.b16 %v4342
      %v4355 = vunpack.c.l.b16 %v4346
      %v4356 = vpack.c.b16 %v4349, %v4348
      %v4357 = vpack.c.b16 %v4351, %v4350
      %v4358 = vpack.c.b16 %v4353, %v4352
      %v4359 = vpack.c.b16 %v4355, %v4354
      %v4361 = vsel %vm580, %v4356, 0
      %v4364 = vsel %vm580, %v4357, 0
      %v4367 = vsel %vm580, %v4358, 0
      %v4370 = vsel %vm580, %v4359, 0
      %v4373 = vsel %vm593, %v4347, 0
      %4375 = vmatprep.subr.bf16.mxu0 0
      %4376 = vmatpush1.bf16.msra.mxu0 %v4373
      %4377 = vmatprep.subr.bf16.mxu0 0
      %4378 = vmatpush1.bf16.msra.mxu0 0
      %4379 = vmatprep.subr.bf16.mxu0 0
      %4380 = vmatpush1.bf16.msra.mxu0 0
      %4381 = vmatprep.subr.bf16.mxu0 0
      %4382 = vmatpush1.bf16.msra.mxu0 0
      %4383 = vmatprep.subr.bf16.mxu0 0
      %4384 = vmatpush1.bf16.msra.mxu0 0
      %4385 = vmatprep.subr.bf16.mxu0 0
      %4386 = vmatpush1.bf16.msra.mxu0 0
      %4387 = vmatprep.subr.bf16.mxu0 0
      %4388 = vmatpush1.bf16.msra.mxu0 0
      %4389 = vmatprep.subr.bf16.mxu0 0
      %4390 = vmatpush1.bf16.msra.mxu0 0
      %4391 = vmatprep.subr.bf16.mxu0 0
      %4392 = vmatpush1.bf16.msra.mxu0 0
      %4393 = vmatprep.subr.bf16.mxu0 0
      %4394 = vmatpush1.bf16.msra.mxu0 0
      %4395 = vmatprep.subr.bf16.mxu0 0
      %4396 = vmatpush1.bf16.msra.mxu0 0
      %4397 = vmatprep.subr.bf16.mxu0 0
      %4398 = vmatpush1.bf16.msra.mxu0 0
      %4399 = vmatprep.subr.bf16.mxu0 0
      %4400 = vmatpush1.bf16.msra.mxu0 0
      %4401 = vmatprep.subr.bf16.mxu0 0
      %4402 = vmatpush1.bf16.msra.mxu0 0
      %4403 = vmatprep.subr.bf16.mxu0 0
      %4404 = vmatpush1.bf16.msra.mxu0 0
      %4405 = vmatprep.subr.bf16.mxu0 0
      %4406 = vmatpush1.bf16.msra.mxu0 0
      %4407 = vmatprep.mubr.bf16.mxu0 0
      %4408 = vmatmul.mubr.bf16.gmra.mrb[0].mxu0 %v4361
      %v4409 = vpop.f32.mrb[0].mxu0
      %v4410 = vadd.f32 0.0, %v4409
      %v4411 = vpop.f32.mrb[0].mxu0
      %v4412 = vpop.f32.mrb[0].mxu0
      %v4413 = vadd.f32 0.0, %v4412
      %v4414 = vpop.f32.mrb[0].mxu0
      %4415 = vmatprep.mubr.bf16.mxu0 0
      %4416 = vmatmul.mubr.bf16.gmra.mrb[0].mxu0 %v4364
      %v4417 = vpop.f32.mrb[0].mxu0
      %v4418 = vadd.f32 0.0, %v4417
      %v4419 = vpop.f32.mrb[0].mxu0
      %v4420 = vpop.f32.mrb[0].mxu0
      %v4421 = vadd.f32 0.0, %v4420
      %v4422 = vpop.f32.mrb[0].mxu0
      %4423 = vmatprep.mubr.bf16.mxu0 0
      %4424 = vmatmul.mubr.bf16.gmra.mrb[0].mxu0 %v4367
      %v4425 = vpop.f32.mrb[0].mxu0
      %v4426 = vadd.f32 0.0, %v4425
      %v4427 = vpop.f32.mrb[0].mxu0
      %v4428 = vpop.f32.mrb[0].mxu0
      %v4429 = vadd.f32 0.0, %v4428
      %v4430 = vpop.f32.mrb[0].mxu0
      %4431 = vmatprep.mubr.bf16.mxu0 0
      %4432 = vmatmul.mubr.bf16.gmra.mrb[0].mxu0 %v4370
      %v4433 = vpop.f32.mrb[0].mxu0
      %v4434 = vadd.f32 0.0, %v4433
      %v4435 = vpop.f32.mrb[0].mxu0
      %v4436 = vpop.f32.mrb[0].mxu0
      %v4437 = vadd.f32 0.0, %v4436
      %v4438 = vpop.f32.mrb[0].mxu0
      %4439 = vdwg.mxu0
      %v4440 = vadd.f32 %v4283, %v4410
      %v4441 = vadd.f32 %v4284, %v4413
      %v4442 = vadd.f32 %v4285, %v4418
      %v4443 = vadd.f32 %v4286, %v4421
      %v4444 = vadd.f32 %v4287, %v4426
      %v4445 = vadd.f32 %v4288, %v4429
      %v4446 = vadd.f32 %v4289, %v4434
      %v4447 = vadd.f32 %v4290, %v4437
      %s4448 = scalar_lea.vmem %s409, 16
      %v4449 = vld [vmem:[%s4448] sm:$0xf]
      %v4450 = vld [vmem:[%s4448 + $0x8] sm:$0xf]
      %v4451 = vld [vmem:[%s4448 + $0x10] sm:$0xf]
      %v4452 = vld [vmem:[%s4448 + $0x18] sm:$0xf]
      %v4453 = vld [vmem:[%s4448 + $0x20] sm:$0xf]
      %v4454 = vld [vmem:[%s4448 + $0x28] sm:$0xf]
      %v4455 = vld [vmem:[%s4448 + $0x30] sm:$0xf]
      %v4456 = vld [vmem:[%s4448 + $0x38] sm:$0xf]
      %v4457 = vld [vmem:[%s3 + $0x60] sm:$0xf]
      %v4466 = vunpack.c.l.b16 %v4449
      %v4467 = vunpack.c.l.b16 %v4450
      %v4468 = vunpack.c.l.b16 %v4451
      %v4469 = vunpack.c.l.b16 %v4452
      %v4470 = vunpack.c.l.b16 %v4453
      %v4471 = vunpack.c.l.b16 %v4454
      %v4472 = vunpack.c.l.b16 %v4455
      %v4473 = vunpack.c.l.b16 %v4456
      %v4474 = vpack.c.b16 %v4467, %v4466
      %v4475 = vpack.c.b16 %v4469, %v4468
      %v4476 = vpack.c.b16 %v4471, %v4470
      %v4477 = vpack.c.b16 %v4473, %v4472
      %v4479 = vsel %vm580, %v4474, 0
      %v4482 = vsel %vm580, %v4475, 0
      %v4485 = vsel %vm580, %v4476, 0
      %v4488 = vsel %vm580, %v4477, 0
      %v4491 = vsel %vm593, %v4457, 0
      %4493 = vmatprep.subr.bf16.mxu0 0
      %4494 = vmatpush1.bf16.msra.mxu0 %v4491
      %4495 = vmatprep.subr.bf16.mxu0 0
      %4496 = vmatpush1.bf16.msra.mxu0 0
      %4497 = vmatprep.subr.bf16.mxu0 0
      %4498 = vmatpush1.bf16.msra.mxu0 0
      %4499 = vmatprep.subr.bf16.mxu0 0
      %4500 = vmatpush1.bf16.msra.mxu0 0
      %4501 = vmatprep.subr.bf16.mxu0 0
      %4502 = vmatpush1.bf16.msra.mxu0 0
      %4503 = vmatprep.subr.bf16.mxu0 0
      %4504 = vmatpush1.bf16.msra.mxu0 0
      %4505 = vmatprep.subr.bf16.mxu0 0
      %4506 = vmatpush1.bf16.msra.mxu0 0
      %4507 = vmatprep.subr.bf16.mxu0 0
      %4508 = vmatpush1.bf16.msra.mxu0 0
      %4509 = vmatprep.subr.bf16.mxu0 0
      %4510 = vmatpush1.bf16.msra.mxu0 0
      %4511 = vmatprep.subr.bf16.mxu0 0
      %4512 = vmatpush1.bf16.msra.mxu0 0
      %4513 = vmatprep.subr.bf16.mxu0 0
      %4514 = vmatpush1.bf16.msra.mxu0 0
      %4515 = vmatprep.subr.bf16.mxu0 0
      %4516 = vmatpush1.bf16.msra.mxu0 0
      %4517 = vmatprep.subr.bf16.mxu0 0
      %4518 = vmatpush1.bf16.msra.mxu0 0
      %4519 = vmatprep.subr.bf16.mxu0 0
      %4520 = vmatpush1.bf16.msra.mxu0 0
      %4521 = vmatprep.subr.bf16.mxu0 0
      %4522 = vmatpush1.bf16.msra.mxu0 0
      %4523 = vmatprep.subr.bf16.mxu0 0
      %4524 = vmatpush1.bf16.msra.mxu0 0
      %4525 = vmatprep.mubr.bf16.mxu0 0
      %4526 = vmatmul.mubr.bf16.gmra.mrb[0].mxu0 %v4479
      %v4527 = vpop.f32.mrb[0].mxu0
      %v4528 = vadd.f32 0.0, %v4527
      %v4529 = vpop.f32.mrb[0].mxu0
      %v4530 = vpop.f32.mrb[0].mxu0
      %v4531 = vadd.f32 0.0, %v4530
      %v4532 = vpop.f32.mrb[0].mxu0
      %4533 = vmatprep.mubr.bf16.mxu0 0
      %4534 = vmatmul.mubr.bf16.gmra.mrb[0].mxu0 %v4482
      %v4535 = vpop.f32.mrb[0].mxu0
      %v4536 = vadd.f32 0.0, %v4535
      %v4537 = vpop.f32.mrb[0].mxu0
      %v4538 = vpop.f32.mrb[0].mxu0
      %v4539 = vadd.f32 0.0, %v4538
      %v4540 = vpop.f32.mrb[0].mxu0
      %4541 = vmatprep.mubr.bf16.mxu0 0
      %4542 = vmatmul.mubr.bf16.gmra.mrb[0].mxu0 %v4485
      %v4543 = vpop.f32.mrb[0].mxu0
      %v4544 = vadd.f32 0.0, %v4543
      %v4545 = vpop.f32.mrb[0].mxu0
      %v4546 = vpop.f32.mrb[0].mxu0
      %v4547 = vadd.f32 0.0, %v4546
      %v4548 = vpop.f32.mrb[0].mxu0
      %4549 = vmatprep.mubr.bf16.mxu0 0
      %4550 = vmatmul.mubr.bf16.gmra.mrb[0].mxu0 %v4488
      %v4551 = vpop.f32.mrb[0].mxu0
      %v4552 = vadd.f32 0.0, %v4551
      %v4553 = vpop.f32.mrb[0].mxu0
      %v4554 = vpop.f32.mrb[0].mxu0
      %v4555 = vadd.f32 0.0, %v4554
      %v4556 = vpop.f32.mrb[0].mxu0
      %4557 = vdwg.mxu0
      %v4558 = vadd.f32 %v4440, %v4528
      %v4559 = vadd.f32 %v4441, %v4531
      %v4560 = vadd.f32 %v4442, %v4536
      %v4561 = vadd.f32 %v4443, %v4539
      %v4562 = vadd.f32 %v4444, %v4544
      %v4563 = vadd.f32 %v4445, %v4547
      %v4564 = vadd.f32 %v4446, %v4552
      %v4565 = vadd.f32 %v4447, %v4555
      %v4566 = vld [vmem:[%s4448] sm:$0xf]
      %v4567 = vld [vmem:[%s4448 + $0x4] sm:$0x1]
      %v4568 = vld [vmem:[%s4448 + $0x8] sm:$0xf]
      %v4569 = vld [vmem:[%s4448 + $0xc] sm:$0x1]
      %v4570 = vld [vmem:[%s4448 + $0x10] sm:$0xf]
      %v4571 = vld [vmem:[%s4448 + $0x14] sm:$0x1]
      %v4572 = vld [vmem:[%s4448 + $0x18] sm:$0xf]
      %v4573 = vld [vmem:[%s4448 + $0x1c] sm:$0x1]
      %v4574 = vld [vmem:[%s4448 + $0x20] sm:$0xf]
      %v4575 = vld [vmem:[%s4448 + $0x24] sm:$0x1]
      %v4576 = vld [vmem:[%s4448 + $0x28] sm:$0xf]
      %v4577 = vld [vmem:[%s4448 + $0x2c] sm:$0x1]
      %v4578 = vld [vmem:[%s4448 + $0x30] sm:$0xf]
      %v4579 = vld [vmem:[%s4448 + $0x34] sm:$0x1]
      %v4580 = vld [vmem:[%s4448 + $0x38] sm:$0xf]
      %v4581 = vld [vmem:[%s4448 + $0x3c] sm:$0x1]
      %v4583 = vshrl.u32 %v4566, 16
      %v4585 = vrot.slane %v4583, 4
      %v4586 = vshll.u32 %v4566, 16
      %v4588 = vrot.slane %v4586, 5
      %v4589 = vor.u32 %v4585, %v4588
      %v4590 = vrot.slane %v4589, 4
      %v4592 = vshll.u32 %v4567, 16
      %v4594 = vrot.slane %v4592, 5
      %v4595 = vsel %vm454, %v4590, %v4594
      %v4597 = vshrl.u32 %v4568, 16
      %v4599 = vrot.slane %v4597, 4
      %v4600 = vshll.u32 %v4568, 16
      %v4602 = vrot.slane %v4600, 5
      %v4603 = vor.u32 %v4599, %v4602
      %v4604 = vrot.slane %v4603, 4
      %v4606 = vshll.u32 %v4569, 16
      %v4608 = vrot.slane %v4606, 5
      %v4609 = vsel %vm454, %v4604, %v4608
      %v4611 = vshrl.u32 %v4570, 16
      %v4613 = vrot.slane %v4611, 4
      %v4614 = vshll.u32 %v4570, 16
      %v4616 = vrot.slane %v4614, 5
      %v4617 = vor.u32 %v4613, %v4616
      %v4618 = vrot.slane %v4617, 4
      %v4620 = vshll.u32 %v4571, 16
      %v4622 = vrot.slane %v4620, 5
      %v4623 = vsel %vm454, %v4618, %v4622
      %v4625 = vshrl.u32 %v4572, 16
      %v4627 = vrot.slane %v4625, 4
      %v4628 = vshll.u32 %v4572, 16
      %v4630 = vrot.slane %v4628, 5
      %v4631 = vor.u32 %v4627, %v4630
      %v4632 = vrot.slane %v4631, 4
      %v4634 = vshll.u32 %v4573, 16
      %v4636 = vrot.slane %v4634, 5
      %v4637 = vsel %vm454, %v4632, %v4636
      %v4639 = vshrl.u32 %v4574, 16
      %v4641 = vrot.slane %v4639, 4
      %v4642 = vshll.u32 %v4574, 16
      %v4644 = vrot.slane %v4642, 5
      %v4645 = vor.u32 %v4641, %v4644
      %v4646 = vrot.slane %v4645, 4
      %v4648 = vshll.u32 %v4575, 16
      %v4650 = vrot.slane %v4648, 5
      %v4651 = vsel %vm454, %v4646, %v4650
      %v4653 = vshrl.u32 %v4576, 16
      %v4655 = vrot.slane %v4653, 4
      %v4656 = vshll.u32 %v4576, 16
      %v4658 = vrot.slane %v4656, 5
      %v4659 = vor.u32 %v4655, %v4658
      %v4660 = vrot.slane %v4659, 4
      %v4662 = vshll.u32 %v4577, 16
      %v4664 = vrot.slane %v4662, 5
      %v4665 = vsel %vm454, %v4660, %v4664
      %v4667 = vshrl.u32 %v4578, 16
      %v4669 = vrot.slane %v4667, 4
      %v4670 = vshll.u32 %v4578, 16
      %v4672 = vrot.slane %v4670, 5
      %v4673 = vor.u32 %v4669, %v4672
      %v4674 = vrot.slane %v4673, 4
      %v4676 = vshll.u32 %v4579, 16
      %v4678 = vrot.slane %v4676, 5
      %v4679 = vsel %vm454, %v4674, %v4678
      %v4681 = vshrl.u32 %v4580, 16
      %v4683 = vrot.slane %v4681, 4
      %v4684 = vshll.u32 %v4580, 16
      %v4686 = vrot.slane %v4684, 5
      %v4687 = vor.u32 %v4683, %v4686
      %v4688 = vrot.slane %v4687, 4
      %v4690 = vshll.u32 %v4581, 16
      %v4692 = vrot.slane %v4690, 5
      %v4693 = vsel %vm454, %v4688, %v4692
      %v4694 = vld [vmem:[%s3 + $0x64] sm:$0xf]
      %v4695 = vunpack.c.l.b16 %v4595
      %v4696 = vunpack.c.l.b16 %v4609
      %v4697 = vunpack.c.l.b16 %v4623
      %v4698 = vunpack.c.l.b16 %v4637
      %v4699 = vunpack.c.l.b16 %v4651
      %v4700 = vunpack.c.l.b16 %v4665
      %v4701 = vunpack.c.l.b16 %v4679
      %v4702 = vunpack.c.l.b16 %v4693
      %v4703 = vpack.c.b16 %v4696, %v4695
      %v4704 = vpack.c.b16 %v4698, %v4697
      %v4705 = vpack.c.b16 %v4700, %v4699
      %v4706 = vpack.c.b16 %v4702, %v4701
      %v4708 = vsel %vm580, %v4703, 0
      %v4711 = vsel %vm580, %v4704, 0
      %v4714 = vsel %vm580, %v4705, 0
      %v4717 = vsel %vm580, %v4706, 0
      %v4720 = vsel %vm593, %v4694, 0
      %4722 = vmatprep.subr.bf16.mxu0 0
      %4723 = vmatpush1.bf16.msra.mxu0 %v4720
      %4724 = vmatprep.subr.bf16.mxu0 0
      %4725 = vmatpush1.bf16.msra.mxu0 0
      %4726 = vmatprep.subr.bf16.mxu0 0
      %4727 = vmatpush1.bf16.msra.mxu0 0
      %4728 = vmatprep.subr.bf16.mxu0 0
      %4729 = vmatpush1.bf16.msra.mxu0 0
      %4730 = vmatprep.subr.bf16.mxu0 0
      %4731 = vmatpush1.bf16.msra.mxu0 0
      %4732 = vmatprep.subr.bf16.mxu0 0
      %4733 = vmatpush1.bf16.msra.mxu0 0
      %4734 = vmatprep.subr.bf16.mxu0 0
      %4735 = vmatpush1.bf16.msra.mxu0 0
      %4736 = vmatprep.subr.bf16.mxu0 0
      %4737 = vmatpush1.bf16.msra.mxu0 0
      %4738 = vmatprep.subr.bf16.mxu0 0
      %4739 = vmatpush1.bf16.msra.mxu0 0
      %4740 = vmatprep.subr.bf16.mxu0 0
      %4741 = vmatpush1.bf16.msra.mxu0 0
      %4742 = vmatprep.subr.bf16.mxu0 0
      %4743 = vmatpush1.bf16.msra.mxu0 0
      %4744 = vmatprep.subr.bf16.mxu0 0
      %4745 = vmatpush1.bf16.msra.mxu0 0
      %4746 = vmatprep.subr.bf16.mxu0 0
      %4747 = vmatpush1.bf16.msra.mxu0 0
      %4748 = vmatprep.subr.bf16.mxu0 0
      %4749 = vmatpush1.bf16.msra.mxu0 0
      %4750 = vmatprep.subr.bf16.mxu0 0
      %4751 = vmatpush1.bf16.msra.mxu0 0
      %4752 = vmatprep.subr.bf16.mxu0 0
      %4753 = vmatpush1.bf16.msra.mxu0 0
      %4754 = vmatprep.mubr.bf16.mxu0 0
      %4755 = vmatmul.mubr.bf16.gmra.mrb[0].mxu0 %v4708
      %v4756 = vpop.f32.mrb[0].mxu0
      %v4757 = vadd.f32 0.0, %v4756
      %v4758 = vpop.f32.mrb[0].mxu0
      %v4759 = vpop.f32.mrb[0].mxu0
      %v4760 = vadd.f32 0.0, %v4759
      %v4761 = vpop.f32.mrb[0].mxu0
      %4762 = vmatprep.mubr.bf16.mxu0 0
      %4763 = vmatmul.mubr.bf16.gmra.mrb[0].mxu0 %v4711
      %v4764 = vpop.f32.mrb[0].mxu0
      %v4765 = vadd.f32 0.0, %v4764
      %v4766 = vpop.f32.mrb[0].mxu0
      %v4767 = vpop.f32.mrb[0].mxu0
      %v4768 = vadd.f32 0.0, %v4767
      %v4769 = vpop.f32.mrb[0].mxu0
      %4770 = vmatprep.mubr.bf16.mxu0 0
      %4771 = vmatmul.mubr.bf16.gmra.mrb[0].mxu0 %v4714
      %v4772 = vpop.f32.mrb[0].mxu0
      %v4773 = vadd.f32 0.0, %v4772
      %v4774 = vpop.f32.mrb[0].mxu0
      %v4775 = vpop.f32.mrb[0].mxu0
      %v4776 = vadd.f32 0.0, %v4775
      %v4777 = vpop.f32.mrb[0].mxu0
      %4778 = vmatprep.mubr.bf16.mxu0 0
      %4779 = vmatmul.mubr.bf16.gmra.mrb[0].mxu0 %v4717
      %v4780 = vpop.f32.mrb[0].mxu0
      %v4781 = vadd.f32 0.0, %v4780
      %v4782 = vpop.f32.mrb[0].mxu0
      %v4783 = vpop.f32.mrb[0].mxu0
      %v4784 = vadd.f32 0.0, %v4783
      %v4785 = vpop.f32.mrb[0].mxu0
      %4786 = vdwg.mxu0
      %v4787 = vadd.f32 %v4558, %v4757
      %v4788 = vadd.f32 %v4559, %v4760
      %v4789 = vadd.f32 %v4560, %v4765
      %v4790 = vadd.f32 %v4561, %v4768
      %v4791 = vadd.f32 %v4562, %v4773
      %v4792 = vadd.f32 %v4563, %v4776
      %v4793 = vadd.f32 %v4564, %v4781
      %v4794 = vadd.f32 %v4565, %v4784
      %v4795 = vld [vmem:[%s4448] sm:$0xe]
      %v4796 = vld [vmem:[%s4448 + $0x8] sm:$0xe]
      %v4797 = vld [vmem:[%s4448 + $0x10] sm:$0xe]
      %v4798 = vld [vmem:[%s4448 + $0x18] sm:$0xe]
      %v4799 = vld [vmem:[%s4448 + $0x20] sm:$0xe]
      %v4800 = vld [vmem:[%s4448 + $0x28] sm:$0xe]
      %v4801 = vld [vmem:[%s4448 + $0x30] sm:$0xe]
      %v4802 = vld [vmem:[%s4448 + $0x38] sm:$0xe]
      %v4819 = vrot.slane %v4795, 5
      %v4820 = vrot.slane %v4819, 4
      %v4821 = vrot.slane %v4567, 5
      %v4822 = vsel %vm788, %v4820, %v4821
      %v4823 = vrot.slane %v4796, 5
      %v4824 = vrot.slane %v4823, 4
      %v4825 = vrot.slane %v4569, 5
      %v4826 = vsel %vm788, %v4824, %v4825
      %v4827 = vrot.slane %v4797, 5
      %v4828 = vrot.slane %v4827, 4
      %v4829 = vrot.slane %v4571, 5
      %v4830 = vsel %vm788, %v4828, %v4829
      %v4831 = vrot.slane %v4798, 5
      %v4832 = vrot.slane %v4831, 4
      %v4833 = vrot.slane %v4573, 5
      %v4834 = vsel %vm788, %v4832, %v4833
      %v4835 = vrot.slane %v4799, 5
      %v4836 = vrot.slane %v4835, 4
      %v4837 = vrot.slane %v4575, 5
      %v4838 = vsel %vm788, %v4836, %v4837
      %v4839 = vrot.slane %v4800, 5
      %v4840 = vrot.slane %v4839, 4
      %v4841 = vrot.slane %v4577, 5
      %v4842 = vsel %vm788, %v4840, %v4841
      %v4843 = vrot.slane %v4801, 5
      %v4844 = vrot.slane %v4843, 4
      %v4845 = vrot.slane %v4579, 5
      %v4846 = vsel %vm788, %v4844, %v4845
      %v4847 = vrot.slane %v4802, 5
      %v4848 = vrot.slane %v4847, 4
      %v4849 = vrot.slane %v4581, 5
      %v4850 = vsel %vm788, %v4848, %v4849
      %v4851 = vld [vmem:[%s3 + $0x68] sm:$0xf]
      %v4852 = vunpack.c.l.b16 %v4822
      %v4853 = vunpack.c.l.b16 %v4826
      %v4854 = vunpack.c.l.b16 %v4830
      %v4855 = vunpack.c.l.b16 %v4834
      %v4856 = vunpack.c.l.b16 %v4838
      %v4857 = vunpack.c.l.b16 %v4842
      %v4858 = vunpack.c.l.b16 %v4846
      %v4859 = vunpack.c.l.b16 %v4850
      %v4860 = vpack.c.b16 %v4853, %v4852
      %v4861 = vpack.c.b16 %v4855, %v4854
      %v4862 = vpack.c.b16 %v4857, %v4856
      %v4863 = vpack.c.b16 %v4859, %v4858
      %v4865 = vsel %vm580, %v4860, 0
      %v4868 = vsel %vm580, %v4861, 0
      %v4871 = vsel %vm580, %v4862, 0
      %v4874 = vsel %vm580, %v4863, 0
      %v4877 = vsel %vm593, %v4851, 0
      %4879 = vmatprep.subr.bf16.mxu0 0
      %4880 = vmatpush1.bf16.msra.mxu0 %v4877
      %4881 = vmatprep.subr.bf16.mxu0 0
      %4882 = vmatpush1.bf16.msra.mxu0 0
      %4883 = vmatprep.subr.bf16.mxu0 0
      %4884 = vmatpush1.bf16.msra.mxu0 0
      %4885 = vmatprep.subr.bf16.mxu0 0
      %4886 = vmatpush1.bf16.msra.mxu0 0
      %4887 = vmatprep.subr.bf16.mxu0 0
      %4888 = vmatpush1.bf16.msra.mxu0 0
      %4889 = vmatprep.subr.bf16.mxu0 0
      %4890 = vmatpush1.bf16.msra.mxu0 0
      %4891 = vmatprep.subr.bf16.mxu0 0
      %4892 = vmatpush1.bf16.msra.mxu0 0
      %4893 = vmatprep.subr.bf16.mxu0 0
      %4894 = vmatpush1.bf16.msra.mxu0 0
      %4895 = vmatprep.subr.bf16.mxu0 0
      %4896 = vmatpush1.bf16.msra.mxu0 0
      %4897 = vmatprep.subr.bf16.mxu0 0
      %4898 = vmatpush1.bf16.msra.mxu0 0
      %4899 = vmatprep.subr.bf16.mxu0 0
      %4900 = vmatpush1.bf16.msra.mxu0 0
      %4901 = vmatprep.subr.bf16.mxu0 0
      %4902 = vmatpush1.bf16.msra.mxu0 0
      %4903 = vmatprep.subr.bf16.mxu0 0
      %4904 = vmatpush1.bf16.msra.mxu0 0
      %4905 = vmatprep.subr.bf16.mxu0 0
      %4906 = vmatpush1.bf16.msra.mxu0 0
      %4907 = vmatprep.subr.bf16.mxu0 0
      %4908 = vmatpush1.bf16.msra.mxu0 0
      %4909 = vmatprep.subr.bf16.mxu0 0
      %4910 = vmatpush1.bf16.msra.mxu0 0
      %4911 = vmatprep.mubr.bf16.mxu0 0
      %4912 = vmatmul.mubr.bf16.gmra.mrb[0].mxu0 %v4865
      %v4913 = vpop.f32.mrb[0].mxu0
      %v4914 = vadd.f32 0.0, %v4913
      %v4915 = vpop.f32.mrb[0].mxu0
      %v4916 = vpop.f32.mrb[0].mxu0
      %v4917 = vadd.f32 0.0, %v4916
      %v4918 = vpop.f32.mrb[0].mxu0
      %4919 = vmatprep.mubr.bf16.mxu0 0
      %4920 = vmatmul.mubr.bf16.gmra.mrb[0].mxu0 %v4868
      %v4921 = vpop.f32.mrb[0].mxu0
      %v4922 = vadd.f32 0.0, %v4921
      %v4923 = vpop.f32.mrb[0].mxu0
      %v4924 = vpop.f32.mrb[0].mxu0
      %v4925 = vadd.f32 0.0, %v4924
      %v4926 = vpop.f32.mrb[0].mxu0
      %4927 = vmatprep.mubr.bf16.mxu0 0
      %4928 = vmatmul.mubr.bf16.gmra.mrb[0].mxu0 %v4871
      %v4929 = vpop.f32.mrb[0].mxu0
      %v4930 = vadd.f32 0.0, %v4929
      %v4931 = vpop.f32.mrb[0].mxu0
      %v4932 = vpop.f32.mrb[0].mxu0
      %v4933 = vadd.f32 0.0, %v4932
      %v4934 = vpop.f32.mrb[0].mxu0
      %4935 = vmatprep.mubr.bf16.mxu0 0
      %4936 = vmatmul.mubr.bf16.gmra.mrb[0].mxu0 %v4874
      %v4937 = vpop.f32.mrb[0].mxu0
      %v4938 = vadd.f32 0.0, %v4937
      %v4939 = vpop.f32.mrb[0].mxu0
      %v4940 = vpop.f32.mrb[0].mxu0
      %v4941 = vadd.f32 0.0, %v4940
      %v4942 = vpop.f32.mrb[0].mxu0
      %4943 = vdwg.mxu0
      %v4944 = vadd.f32 %v4787, %v4914
      %v4945 = vadd.f32 %v4788, %v4917
      %v4946 = vadd.f32 %v4789, %v4922
      %v4947 = vadd.f32 %v4790, %v4925
      %v4948 = vadd.f32 %v4791, %v4930
      %v4949 = vadd.f32 %v4792, %v4933
      %v4950 = vadd.f32 %v4793, %v4938
      %v4951 = vadd.f32 %v4794, %v4941
      %v4952 = vld [vmem:[%s4] sm:$0x1]
      %v4954 = vlaneseq
      %v4955 = vshrl.u32 %v4954, 7
      %v4956 = vsub.s32 0, %v4955
      %v4957 = vrot.slane %v4952, %v4956
      %v4959 = vadd.f32 %v4944, %v4957
      %v4960 = vadd.f32 %v4945, %v4957
      %v4961 = vadd.f32 %v4946, %v4957
      %v4962 = vadd.f32 %v4947, %v4957
      %v4963 = vadd.f32 %v4948, %v4957
      %v4964 = vadd.f32 %v4949, %v4957
      %v4965 = vadd.f32 %v4950, %v4957
      %v4966 = vadd.f32 %v4951, %v4957
      %v4967 = vpack.c.bf16 %v4960, %v4959
      %v4968 = vpack.c.bf16 %v4962, %v4961
      %v4969 = vpack.c.bf16 %v4964, %v4963
      %v4970 = vpack.c.bf16 %v4966, %v4965
      %v4975 = vunpack.c.l.b16 %v4967
      %v4976 = vunpack.c.h.b16 %v4967
      %v4977 = vunpack.c.l.b16 %v4968
      %v4978 = vunpack.c.h.b16 %v4968
      %v4979 = vunpack.c.l.b16 %v4969
      %v4980 = vunpack.c.h.b16 %v4969
      %v4981 = vunpack.c.l.b16 %v4970
      %v4982 = vunpack.c.h.b16 %v4970
      %v4983 = vpack.c.b16 %v4975, %v4975
      %v4984 = vpack.c.b16 %v4976, %v4976
      %v4985 = vpack.c.b16 %v4977, %v4977
      %v4986 = vpack.c.b16 %v4978, %v4978
      %v4987 = vpack.c.b16 %v4979, %v4979
      %v4988 = vpack.c.b16 %v4980, %v4980
      %v4989 = vpack.c.b16 %v4981, %v4981
      %v4990 = vpack.c.b16 %v4982, %v4982
      %vm4999 = vcmask 60416
      %5000 = vst.msk [vmem:[%s419] sm:$0xf] %vm4999, %v4983
      %5001 = vst.msk [vmem:[%s419 + $0x4] sm:$0xf] %vm4999, %v4984
      %5002 = vst.msk [vmem:[%s419 + $0x8] sm:$0xf] %vm4999, %v4985
      %5003 = vst.msk [vmem:[%s419 + $0xc] sm:$0xf] %vm4999, %v4986
      %5004 = vst.msk [vmem:[%s419 + $0x10] sm:$0xf] %vm4999, %v4987
      %5005 = vst.msk [vmem:[%s419 + $0x14] sm:$0xf] %vm4999, %v4988
      %5006 = vst.msk [vmem:[%s419 + $0x18] sm:$0xf] %vm4999, %v4989
      %5007 = vst.msk [vmem:[%s419 + $0x1c] sm:$0xf] %vm4999, %v4990
      %v5008 = vunpack.c.l.bf16 %v4967
      %v5009 = vunpack.c.h.bf16 %v4967
      %v5010 = vunpack.c.l.bf16 %v4968
      %v5011 = vunpack.c.h.bf16 %v4968
      %v5012 = vunpack.c.l.bf16 %v4969
      %v5013 = vunpack.c.h.bf16 %v4969
      %v5014 = vunpack.c.l.bf16 %v4970
      %v5015 = vunpack.c.h.bf16 %v4970
      %v5016 = vsel %vm580, %v5008, 0.0
      %v5017 = vsel %vm580, %v5009, 0.0
      %v5018 = vadd.f32 %v5016, %v5017
      %v5019 = vsel %vm580, %v5010, 0.0
      %v5020 = vadd.f32 %v5018, %v5019
      %v5021 = vsel %vm580, %v5011, 0.0
      %v5022 = vadd.f32 %v5020, %v5021
      %v5023 = vsel %vm580, %v5012, 0.0
      %v5024 = vadd.f32 %v5022, %v5023
      %v5025 = vsel %vm580, %v5013, 0.0
      %v5026 = vadd.f32 %v5024, %v5025
      %v5027 = vsel %vm580, %v5014, 0.0
      %v5028 = vadd.f32 %v5026, %v5027
      %v5029 = vsel %vm580, %v5015, 0.0
      %v5030 = vadd.f32 %v5028, %v5029
      %v5031 = vrot.slane %v5030, 4
      %v5032 = vadd.f32 %v5030, %v5031
      %v5033 = vrot.slane %v5032, 2
      %v5034 = vadd.f32 %v5032, %v5033
      %v5035 = vrot.slane %v5034, 1
      %v5036 = vadd.f32 %v5034, %v5035
      %vm5037 = vcmask 57344
      %5038 = vst.msk [vmem:[%s426] sm:$0x1] %vm5037, %v5036
      %v5039 = vmul.f32 %v5008, %v5008
      %v5040 = vmul.f32 %v5009, %v5009
      %v5041 = vmul.f32 %v5010, %v5010
      %v5042 = vmul.f32 %v5011, %v5011
      %v5043 = vmul.f32 %v5012, %v5012
      %v5044 = vmul.f32 %v5013, %v5013
      %v5045 = vmul.f32 %v5014, %v5014
      %v5046 = vmul.f32 %v5015, %v5015
      %v5047 = vsel %vm580, %v5039, 0.0
      %v5048 = vsel %vm580, %v5040, 0.0
      %v5049 = vadd.f32 %v5047, %v5048
      %v5050 = vsel %vm580, %v5041, 0.0
      %v5051 = vadd.f32 %v5049, %v5050
      %v5052 = vsel %vm580, %v5042, 0.0
      %v5053 = vadd.f32 %v5051, %v5052
      %v5054 = vsel %vm580, %v5043, 0.0
      %v5055 = vadd.f32 %v5053, %v5054
      %v5056 = vsel %vm580, %v5044, 0.0
      %v5057 = vadd.f32 %v5055, %v5056
      %v5058 = vsel %vm580, %v5045, 0.0
      %v5059 = vadd.f32 %v5057, %v5058
      %v5060 = vsel %vm580, %v5046, 0.0
      %v5061 = vadd.f32 %v5059, %v5060
      %v5062 = vrot.slane %v5061, 4
      %v5063 = vadd.f32 %v5061, %v5062
      %v5064 = vrot.slane %v5063, 2
      %v5065 = vadd.f32 %v5063, %v5064
      %v5066 = vrot.slane %v5065, 1
      %v5067 = vadd.f32 %v5065, %v5066
      %5068 = vst.msk [vmem:[%s433] sm:$0x1] %vm5037, %v5067
      %p5069 = scmp.lt.s32.totalorder %s23, 1
      %s5070 = scalar_select %p5069, %s23, 1
      %p5071 = scmp.lt.s32.totalorder %s24, 7
      %s5072 = scalar_select %p5071, %s24, 7
      %s5073 = smul.addr %s5072, 8
      %s5074 = smul.addr %s5070, 64
      %s5075 = sadd.s32 %s5073, %s5074
      %s5076 = smul.addr %s5075, 4
      %s5077 = scalar_lea.vmem %s5, %s5076
      %p5078 = scmp.lt.s32.totalorder %s23, 1
      %s5079 = scalar_select %p5078, %s23, 1
      %p5080 = scmp.lt.s32.totalorder %s24, 7
      %s5081 = scalar_select %p5080, %s24, 7
      %s5082 = smul.addr %s5079, 8
      %s5083 = sadd.s32 %s5081, %s5082
      %s5084 = scalar_lea.vmem %s6, %s5083
      %p5085 = scmp.lt.s32.totalorder %s23, 1
      %s5086 = scalar_select %p5085, %s23, 1
      %p5087 = scmp.lt.s32.totalorder %s24, 7
      %s5088 = scalar_select %p5087, %s24, 7
      %s5089 = smul.addr %s5086, 8
      %s5090 = sadd.s32 %s5088, %s5089
      %s5091 = scalar_lea.vmem %s7, %s5090
      // Predicated region
      $region41: #{unet_conv3_forward.6} parent=39 // pred_check
        %p5092 = pneg %p181
      $region42: #{unet_conv3_forward.6} parent=39 // pred_check_branch
        %5094 = sbr.rel (%p5092) target = $region44
      $region43: #{unet_conv3_forward.6} parent=39 // pred_region
        _
      $region44: #{unet_conv3_forward.6} parent=39 // pred_fallthru
        _
      // Predicated region
      $region45: #{unet_conv3_forward.6} parent=39 // pred_check
        %p5095 = pneg %p209
      $region46: #{unet_conv3_forward.6} parent=39 // pred_check_branch
        %5097 = sbr.rel (%p5095) target = $region48
      $region47: #{unet_conv3_forward.6} parent=39 // pred_region
        _
      $region48: #{unet_conv3_forward.6} parent=39 // pred_fallthru
        _
      // Predicated region
      $region49: #{unet_conv3_forward.6} parent=39 // pred_check
        %p5098 = pneg %p237
      $region50: #{unet_conv3_forward.6} parent=39 // pred_check_branch
        %5100 = sbr.rel (%p5098) target = $region52
      $region51: #{unet_conv3_forward.6} parent=39 // pred_region
        _
      $region52: #{unet_conv3_forward.6} parent=39 // pred_fallthru
        _
    $region40: #{unet_conv3_forward.6} parent=5 // pred_fallthru
      _
    %p5101 = scmp.le.s32.totalorder 2, %s14
    // Predicated region
    $region53: #{unet_conv3_forward.6} parent=5 // pred_check
      %p5102 = pneg %p5101
    $region54: #{unet_conv3_forward.6} parent=5 // pred_check_branch
      %5104 = sbr.rel (%p5102) target = $region56
    $region55: #{unet_conv3_forward.6} parent=5 // pred_region
      %s5105 = ssub.s32 %s14, 2
      // Predicated region
      $region57: #{unet_conv3_forward.6} parent=55 // pred_check
        %p5106 = pneg %p187
      $region58: #{unet_conv3_forward.6} parent=55 // pred_check_branch
        %5108 = sbr.rel (%p5106) target = $region60
      $region59: #{unet_conv3_forward.6} parent=55 // pred_region
        %p5109 = scmp.lt.s32.totalorder %s25, 1
        %s5110 = scalar_select %p5109, %s25, 1
        %p5111 = scmp.lt.s32.totalorder %s26, 7
        %s5112 = scalar_select %p5111, %s26, 7
        %s5113 = smul.addr %s5112, 8
        %s5114 = smul.addr %s5110, 64
        %s5115 = sadd.s32 %s5113, %s5114
        %s5116 = smul.addr %s5115, 4
        %s5117 = scalar_lea.vmem %s5, %s5116
      $region60: #{unet_conv3_forward.6} parent=55 // pred_fallthru
        _
      // Predicated region
      $region61: #{unet_conv3_forward.6} parent=55 // pred_check
        %p5118 = pneg %p215
      $region62: #{unet_conv3_forward.6} parent=55 // pred_check_branch
        %5120 = sbr.rel (%p5118) target = $region64
      $region63: #{unet_conv3_forward.6} parent=55 // pred_region
        %p5121 = scmp.lt.s32.totalorder %s25, 1
        %s5122 = scalar_select %p5121, %s25, 1
        %p5123 = scmp.lt.s32.totalorder %s26, 7
        %s5124 = scalar_select %p5123, %s26, 7
        %s5125 = smul.addr %s5122, 8
        %s5126 = sadd.s32 %s5124, %s5125
        %s5127 = scalar_lea.vmem %s6, %s5126
      $region64: #{unet_conv3_forward.6} parent=55 // pred_fallthru
        _
      // Predicated region
      $region65: #{unet_conv3_forward.6} parent=55 // pred_check
        %p5128 = pneg %p243
      $region66: #{unet_conv3_forward.6} parent=55 // pred_check_branch
        %5130 = sbr.rel (%p5128) target = $region68
      $region67: #{unet_conv3_forward.6} parent=55 // pred_region
        %p5131 = scmp.lt.s32.totalorder %s25, 1
        %s5132 = scalar_select %p5131, %s25, 1
        %p5133 = scmp.lt.s32.totalorder %s26, 7
        %s5134 = scalar_select %p5133, %s26, 7
        %s5135 = smul.addr %s5132, 8
        %s5136 = sadd.s32 %s5134, %s5135
        %s5137 = scalar_lea.vmem %s7, %s5136
      $region68: #{unet_conv3_forward.6} parent=55 // pred_fallthru
        _
    $region56: #{unet_conv3_forward.6} parent=5 // pred_fallthru
      _
  $region6: #{unet_conv3_forward.6} parent=0 // loop_footer
    %s18 = sadd.s32 1, %s14
  $region7: #{unet_conv3_forward.6} parent=0 // loop_footer_branch
    %13 = sbr.rel target = $region3
  $region8: #{unet_conv3_forward.6} parent=0 // loop_exit
    _

</llo_original>
